<compile_context>
chip_gen: v7x
topology: tpu7x:2x2x1
jax: 0.10.0
libtpu: 0.0.40
codegen_flags: <defaults>
</compile_context>

<pallas_src>
import functools
import numpy as np
import jax
import jax.numpy as jnp
from jax import lax
from jax.experimental import pallas as pl
from jax.experimental.pallas import tpu as pltpu

BN_EPS = 1e-5
# Eval-mode BatchNorm with default running stats (mean=0, var=1, gamma=1, beta=0).
# TODO(synk): fold gamma/sqrt(var+eps) + (beta - mean*scale) for trained checkpoints.
BN_SCALE = float(1.0 / np.sqrt(1.0 + BN_EPS))

_NT = (((1,), (1,)), ((), ()))   # contract the last dim of both operands (q @ k^T form)


# --------------------------- in-kernel helpers ------------------------------ #

def _silu(x):
    # numerically-stable SiLU; reciprocal on the EUP slot.
    e = jnp.exp(-jnp.abs(x))
    r = pl.reciprocal(1.0 + e, approx=True)
    sig = jnp.where(x >= 0, r, e * r)
    return x * sig


def _im2col(xpad_ref, H, W):
    """(H+2, W+2, Cin) zero-ring padded VMEM ref -> (H*W, 9*Cin) bf16 patches."""
    cin = xpad_ref.shape[-1]
    taps = []
    for dy in range(3):
        for dx in range(3):
            taps.append(xpad_ref[dy:dy + H, dx:dx + W, :].reshape(H * W, cin))
    return jnp.concatenate(taps, axis=1).astype(jnp.bfloat16)


def _conv3x3(xpad_ref, wT_ref, H, W):
    """3x3 'same' conv as ONE K=9*Cin bf16 MXU matmul -> (H*W, Cout) f32.
    wT_ref is (Cout, 9*Cin), tap-major columns (t = dy*3+dx)."""
    return lax.dot_general(_im2col(xpad_ref, H, W), wT_ref[...], _NT,
                           preferred_element_type=jnp.float32)


def _conv3x3_t(xpad_ref, wT_ref, H, W):
    """Same conv, channel-major result (Cout, H*W) straight from the MXU."""
    return lax.dot_general(wT_ref[...], _im2col(xpad_ref, H, W), _NT,
                           preferred_element_type=jnp.float32)


def _write_padded(scr, val_hwc, H, W):
    """Write the (H, W, C) interior of a (H+2, W+2, C) VMEM scratch and zero
    only its 1-pixel ring (3 stores; no full-scratch zeroing per grid step)."""
    Hp, Wp, C = scr.shape
    zrow = jnp.zeros((1, Wp, C), scr.dtype)
    zcol = jnp.zeros((H, 1, C), scr.dtype)
    scr[0:1, :, :] = zrow
    scr[H + 1:H + 2, :, :] = zrow
    scr[1:H + 1, :, :] = jnp.concatenate([zcol, val_hwc, zcol], axis=1)


# ------------------------------ CFC_CRB kernel ------------------------------ #

def _cfc_crb_kernel(x_ref, smask_ref, pm_ref, wred_ref, wq_ref, bq_ref,
                    wk_ref, bk_ref, wv_ref, bv_ref, wla1_ref, wla2_ref,
                    o_ref, xpad_scr, lapad_scr, *, H, W):
    C = x_ref.shape[1]
    C8 = wla1_ref.shape[0]

    # flat NCHW block (C, HW) -> spatial-major (H, W, C) with in-kernel ring pad.
    x_hwc = jnp.transpose(x_ref[0], (1, 0)).reshape(H, W, C)
    _write_padded(xpad_scr, x_hwc, H, W)

    # reduce_channel: Conv3x3(no bias)+BN+SiLU as one K=9C bf16 MXU dot.
    xr = _silu(_conv3x3(xpad_scr, wred_ref, H, W))                     # (HW, C) f32
    xr_b = xr.astype(jnp.bfloat16)

    # query / PSP pooling / key / value projections (bf16 MXU, f32 accum).
    q = lax.dot_general(xr_b, wq_ref[...], _NT,
                        preferred_element_type=jnp.float32) + bq_ref[...]
    pooled = jnp.dot(pm_ref[...], xr_b,
                     preferred_element_type=jnp.float32)               # (S_pad, C)
    pooled_b = pooled.astype(jnp.bfloat16)
    key = lax.dot_general(pooled_b, wk_ref[...], _NT,
                          preferred_element_type=jnp.float32) + bk_ref[...]
    value = lax.dot_general(pooled_b, wv_ref[...], _NT,
                            preferred_element_type=jnp.float32) + bv_ref[...]

    # softmax attention over the 128-padded pooled axis; padding is killed by
    # the precomputed additive -inf row (no per-step iota / where).
    sim = lax.dot_general(q.astype(jnp.bfloat16), key.astype(jnp.bfloat16),
                          _NT, preferred_element_type=jnp.float32)     # (HW, S_pad)
    sim = sim + smask_ref[...]
    sim = sim - jnp.max(sim, axis=-1, keepdims=True)
    prob = jnp.exp(sim)
    prob = prob * pl.reciprocal(jnp.sum(prob, axis=-1, keepdims=True), approx=True)
    context = jnp.dot(prob.astype(jnp.bfloat16), value.astype(jnp.bfloat16),
                      preferred_element_type=jnp.float32)              # (HW, C)

    # LocalAttenModule: Conv1x1+BN+SiLU -> Conv3x3(no bias) -> tanh gate.
    y1 = _silu(lax.dot_general(context.astype(jnp.bfloat16), wla1_ref[...], _NT,
                               preferred_element_type=jnp.float32))    # (HW, C8)
    _write_padded(lapad_scr, y1.reshape(H, W, C8), H, W)
    y2 = _conv3x3(lapad_scr, wla2_ref, H, W)                           # (HW, C)

    # LocalAtten residuals + final residual: xr + context * (1 + tanh(y2)).
    out = xr + context * (1.0 + jnp.tanh(y2))
    o_ref[0] = jnp.transpose(out, (1, 0))                              # (C, HW)


def cfc_crb_forward(x_nchw, w, grids=(6, 3, 2, 1)):
    B, C, H, W = x_nchw.shape
    HW = H * W
    Ck = w["q_w"].shape[0]
    C8 = w["la1_w"].shape[0]
    _, pm_np, mask_np = _psp_matrix_padded(H, W, grids)
    S_pad = pm_np.shape[0]
    pm = jnp.asarray(pm_np, dtype=jnp.bfloat16)
    smask = jnp.asarray(mask_np)                                       # (1, S_pad) f32

    full = lambda b: (0, 0)
    kernel = functools.partial(_cfc_crb_kernel, H=H, W=W)
    out = pl.pallas_call(
        kernel,
        out_shape=jax.ShapeDtypeStruct((B, C, HW), jnp.float32),
        grid=(B,),
        in_specs=[
            pl.BlockSpec((1, C, HW), lambda b: (b, 0, 0)),
            pl.BlockSpec((1, S_pad), full),
            pl.BlockSpec((S_pad, HW), full),
            pl.BlockSpec((C, 9 * C), full),
            pl.BlockSpec((Ck, C), full),
            pl.BlockSpec((1, Ck), full),
            pl.BlockSpec((Ck, C), full),
            pl.BlockSpec((1, Ck), full),
            pl.BlockSpec((C, C), full),
            pl.BlockSpec((1, C), full),
            pl.BlockSpec((C8, C), full),
            pl.BlockSpec((C, 9 * C8), full),
        ],
        out_specs=pl.BlockSpec((1, C, HW), lambda b: (b, 0, 0)),
        scratch_shapes=[pltpu.VMEM((H + 2, W + 2, C), jnp.float32),
                        pltpu.VMEM((H + 2, W + 2, C8), jnp.float32)],
        compiler_params=pltpu.CompilerParams(dimension_semantics=("parallel",)),
    )(x_nchw.reshape(B, C, HW), smask, pm, w["red_w"], w["q_w"], w["q_b"],
      w["k_w"], w["k_b"], w["v_w"], w["v_b"], w["la1_w"], w["la2_w"])
    return out                                                          # (B, C, HW)


# ------------------------------ SFC_G2 kernel ------------------------------- #

def _sfc_g2_kernel(sp_ref, cp_ref, up_ref, w32_ref, w8_ref, w1cp_ref,
                   w1sp_ref, w2_ref, spu_ref, cpo_ref, res_ref,
                   sp_pad, cp_pad, y_pad, *, hi, wi, ho, wo):
    ci = sp_ref.shape[1]
    c5 = cp_ref.shape[1]
    hid = w1cp_ref.shape[0]

    # flat NCHW blocks -> spatial-major padded VMEM tiles (in-kernel ring pad).
    _write_padded(sp_pad, jnp.transpose(sp_ref[0], (1, 0)).reshape(hi, wi, ci),
                  hi, wi)
    _write_padded(cp_pad, jnp.transpose(cp_ref[0], (1, 0)).reshape(ho, wo, c5),
                  ho, wo)

    # conv_32 (3x3+BN+SiLU) on the low-res CFC output, then bilinear
    # up-sample (align_corners=True) as one MXU matmul.
    sp_c = _silu(_conv3x3(sp_pad, w32_ref, hi, wi))                    # (hi*wi, ouc)
    sp_up = jnp.dot(up_ref[...], sp_c.astype(jnp.bfloat16),
                    preferred_element_type=jnp.float32)                # (ho*wo, ouc)

    # conv_8 (3x3+BN+SiLU) on the high-res input.
    cp_c = _silu(_conv3x3(cp_pad, w8_ref, ho, wo))                     # (ho*wo, ouc)

    # Early, lane-dense channel-major stores (last dim = ho*wo, multiple of
    # 128) so the writeback DMA overlaps the offset-branch compute below.
    spu_ref[0] = jnp.transpose(sp_up, (1, 0))                          # (ouc, HWo)
    cpo_ref[0] = jnp.transpose(cp_c, (1, 0))                           # (ouc, HWo)

    # conv_offset[0]: 1x1 Conv+BN+SiLU on concat([cp, sp]) as a split matmul.
    y = _silu(lax.dot_general(cp_c.astype(jnp.bfloat16), w1cp_ref[...], _NT,
                              preferred_element_type=jnp.float32)
              + lax.dot_general(sp_up.astype(jnp.bfloat16), w1sp_ref[...], _NT,
                                preferred_element_type=jnp.float32))   # (HWo, hid)

    # conv_offset[1]: plain 3x3 -> [offset_l(4), offset_h(4), att(2)],
    # produced channel-major directly by the MXU (no masked stores).
    _write_padded(y_pad, y.reshape(ho, wo, hid), ho, wo)
    res_ref[0] = _conv3x3_t(y_pad, w2_ref, ho, wo)                     # (n_off, HWo)


def grid_sample_bilinear(img, grid):
    # F.grid_sample(mode='bilinear', padding_mode='zeros', align_corners=True)
    # TODO(synk): data-dependent gather; kept in plain JAX/XLA rather than Pallas.
    N, C, H, W = img.shape
    Ho, Wo = grid.shape[1], grid.shape[2]
    gx, gy = grid[..., 0], grid[..., 1]
    ix = (gx + 1.0) * 0.5 * (W - 1)
    iy = (gy + 1.0) * 0.5 * (H - 1)
    ix0 = jnp.floor(ix)
    iy0 = jnp.floor(iy)
    flat = img.reshape(N, C, H * W)

    def gather(iyf, ixf):
        valid = (ixf >= 0) & (ixf <= W - 1) & (iyf >= 0) & (iyf <= H - 1)
        ixc = jnp.clip(ixf, 0, W - 1).astype(jnp.int32)
        iyc = jnp.clip(iyf, 0, H - 1).astype(jnp.int32)
        idx = (iyc * W + ixc).reshape(N, 1, Ho * Wo)
        g = jnp.take_along_axis(flat, idx, axis=2).reshape(N, C, Ho, Wo)
        return g * valid.reshape(N, 1, Ho, Wo).astype(img.dtype)

    wx1 = (ix - ix0)[:, None]
    wy1 = (iy - iy0)[:, None]
    wx0 = 1.0 - wx1
    wy0 = 1.0 - wy1
    return (gather(iy0, ix0) * wy0 * wx0 +
            gather(iy0, ix0 + 1) * wy0 * wx1 +
            gather(iy0 + 1, ix0) * wy1 * wx0 +
            gather(iy0 + 1, ix0 + 1) * wy1 * wx1)


def sfc_g2_forward(sp_cm, p5_nchw, w, hi, wi):
    # sp_cm: (B, Ci, hi*wi) channel-major CFC_CRB output.
    B, Ci, HWi = sp_cm.shape
    _, C5, ho, wo = p5_nchw.shape
    HWo = ho * wo
    ouc = w["c32_w"].shape[0]
    hid = w["off1_cp"].shape[0]
    n_off = w["off2_w"].shape[0]
    groups = 2

    up = jnp.asarray(_bilinear_matrix(hi, wi, ho, wo), dtype=jnp.bfloat16)
    full = lambda b: (0, 0)
    kernel = functools.partial(_sfc_g2_kernel, hi=hi, wi=wi, ho=ho, wo=wo)
    sp_up, cp_c, res = pl.pallas_call(
        kernel,
        out_shape=(jax.ShapeDtypeStruct((B, ouc, HWo), jnp.float32),
                   jax.ShapeDtypeStruct((B, ouc, HWo), jnp.float32),
                   jax.ShapeDtypeStruct((B, n_off, HWo), jnp.float32)),
        grid=(B,),
        in_specs=[
            pl.BlockSpec((1, Ci, HWi), lambda b: (b, 0, 0)),
            pl.BlockSpec((1, C5, HWo), lambda b: (b, 0, 0)),
            pl.BlockSpec((HWo, HWi), full),
            pl.BlockSpec((ouc, 9 * Ci), full),
            pl.BlockSpec((ouc, 9 * C5), full),
            pl.BlockSpec((hid, ouc), full),
            pl.BlockSpec((hid, ouc), full),
            pl.BlockSpec((n_off, 9 * hid), full),
        ],
        out_specs=(pl.BlockSpec((1, ouc, HWo), lambda b: (b, 0, 0)),
                   pl.BlockSpec((1, ouc, HWo), lambda b: (b, 0, 0)),
                   pl.BlockSpec((1, n_off, HWo), lambda b: (b, 0, 0))),
        scratch_shapes=[pltpu.VMEM((hi + 2, wi + 2, Ci), jnp.float32),
                        pltpu.VMEM((ho + 2, wo + 2, C5), jnp.float32),
                        pltpu.VMEM((ho + 2, wo + 2, hid), jnp.float32)],
        compiler_params=pltpu.CompilerParams(dimension_semantics=("parallel",)),
    )(sp_cm, p5_nchw.reshape(B, C5, HWo), up, w["c32_w"], w["c8_w"],
      w["off1_cp"], w["off1_sp"], w["off2_w"])

    # Channel-major kernel outputs reshape straight to NCHW (no XLA transposes).
    conv_results = res.reshape(B, n_off, ho, wo)
    spg = sp_up.reshape(B * groups, -1, ho, wo)
    cpg = cp_c.reshape(B * groups, -1, ho, wo)
    offset_l = conv_results[:, 0:groups * 2].reshape(B * groups, 2, ho, wo)
    offset_h = conv_results[:, groups * 2:groups * 4].reshape(B * groups, 2, ho, wo)
    norm = jnp.array([wo, ho], jnp.float32).reshape(1, 1, 1, 2)
    ys = np.linspace(-1.0, 1.0, ho, dtype=np.float32)
    xs = np.linspace(-1.0, 1.0, wo, dtype=np.float32)
    base = np.stack([np.tile(xs[None, :], (ho, 1)),
                     np.tile(ys[:, None], (1, wo))], axis=2)     # [...,0]=x, [...,1]=y
    grid = jnp.broadcast_to(jnp.asarray(base)[None], (B * groups, ho, wo, 2))
    grid_l = grid + jnp.transpose(offset_l, (0, 2, 3, 1)) / norm
    grid_h = grid + jnp.transpose(offset_h, (0, 2, 3, 1)) / norm
    cp_s = grid_sample_bilinear(cpg, grid_l).reshape(B, -1, ho, wo)
    sp_s = grid_sample_bilinear(spg, grid_h).reshape(B, -1, ho, wo)
    # attention fuse folded into the gather epilogue (no extra pallas_call).
    att = 1.0 + jnp.tanh(conv_results[:, groups * 4:])           # (B, 2, ho, wo)
    return sp_s * att[:, 0:1] + cp_s * att[:, 1:2]


# ------------------- host-side constant matrices (cached) ------------------- #

def _adaptive_pool_matrix(H, W, gh, gw):
    P = np.zeros((gh * gw, H * W), dtype=np.float32)
    for i in range(gh):
        hs = (i * H) // gh
        he = ((i + 1) * H + gh - 1) // gh
        for j in range(gw):
            ws = (j * W) // gw
            we = ((j + 1) * W + gw - 1) // gw
            val = 1.0 / ((he - hs) * (we - ws))
            for y in range(hs, he):
                for xx in range(ws, we):
                    P[i * gw + j, y * W + xx] = val
    return P


@functools.lru_cache(maxsize=None)
def _psp_matrix_padded(H, W, grids):
    ar = W / H
    mats = []
    for g in grids:
        gw = max(1, round(ar * g))
        mats.append(_adaptive_pool_matrix(H, W, g, gw))
    P = np.concatenate(mats, axis=0)                 # (S, H*W)
    S = P.shape[0]
    S_pad = max(128, ((S + 127) // 128) * 128)       # fill the MXU M / softmax lanes
    Pp = np.zeros((S_pad, H * W), np.float32)
    Pp[:S] = P
    mask = np.full((1, S_pad), -1e30, np.float32)    # additive softmax mask
    mask[0, :S] = 0.0
    return S, Pp, mask


@functools.lru_cache(maxsize=None)
def _interp_matrix_1d(n_in, n_out):
    R = np.zeros((n_out, n_in), dtype=np.float32)
    for i in range(n_out):
        src = i * (n_in - 1) / (n_out - 1) if n_out > 1 else 0.0
        i0 = int(np.floor(src))
        i1 = min(i0 + 1, n_in - 1)
        f = src - i0
        R[i, i0] += 1.0 - f
        R[i, i1] += f
    return R


@functools.lru_cache(maxsize=None)
def _bilinear_matrix(h_in, w_in, h_out, w_out):
    # F.interpolate(mode='bilinear', align_corners=True): separable -> kron.
    return np.kron(_interp_matrix_1d(h_in, h_out),
                   _interp_matrix_1d(w_in, w_out)).astype(np.float32)


# --------------------------------- params ----------------------------------- #

def xavier_normal(key, shape):
    rf = int(np.prod(shape[2:])) if len(shape) > 2 else 1
    fan_out, fan_in = shape[0] * rf, shape[1] * rf
    std = float(np.sqrt(2.0 / (fan_in + fan_out)))
    return jax.random.normal(key, shape, dtype=jnp.float32) * std


def init_params(key, inc, ouc):
    """PyTorch-layout parameters of CSFCN (zero-init convs kept zero, as in __init__)."""
    ci, c5 = inc
    ks = jax.random.split(key, 8)
    p = {}
    p["reduce_w"] = xavier_normal(ks[0], (ci, ci, 3, 3))           # Conv(ci,ci,3)+BN+SiLU
    p["query_w"] = xavier_normal(ks[1], (32, ci, 1, 1))
    p["query_b"] = jnp.zeros((32,), jnp.float32)
    p["key_w"] = xavier_normal(ks[2], (32, ci, 1))
    p["key_b"] = jnp.zeros((32,), jnp.float32)
    p["value_w"] = xavier_normal(ks[3], (ci, ci, 1))
    p["value_b"] = jnp.zeros((ci,), jnp.float32)
    p["la_w1"] = xavier_normal(ks[4], (ci // 8, ci, 1, 1))         # LocalAtten Conv 1x1
    p["la_w2"] = jnp.zeros((ci, ci // 8, 3, 3), jnp.float32)       # zeroed in __init__
    p["conv32_w"] = xavier_normal(ks[5], (ouc, ci, 3, 3))
    p["conv8_w"] = xavier_normal(ks[6], (ouc, c5, 3, 3))
    p["off_w1"] = xavier_normal(ks[7], (64, ouc * 2, 1, 1))
    p["off_w2"] = jnp.zeros((2 * 4 + 2, 64, 3, 3), jnp.float32)    # zeroed in __init__
    return p


def prepare_params(p):
    """Fold eval-mode BN into the conv weights and lay everything out as
    (Cout, K) bf16 matrices for the NT MXU matmuls (done ONCE, outside jit)."""
    def convT(wt, scale=1.0):                 # (Cout,Cin,3,3) -> (Cout, 9*Cin) bf16
        cout = wt.shape[0]
        return (jnp.transpose(wt, (0, 2, 3, 1)).reshape(cout, -1)
                * scale).astype(jnp.bfloat16)

    ouc = p["conv32_w"].shape[0]
    w = {}
    w["red_w"] = convT(p["reduce_w"], BN_SCALE)
    w["q_w"] = p["query_w"].reshape(p["query_w"].shape[0], -1).astype(jnp.bfloat16)
    w["q_b"] = p["query_b"].reshape(1, -1).astype(jnp.float32)
    w["k_w"] = p["key_w"].reshape(p["key_w"].shape[0], -1).astype(jnp.bfloat16)
    w["k_b"] = p["key_b"].reshape(1, -1).astype(jnp.float32)
    w["v_w"] = p["value_w"].reshape(p["value_w"].shape[0], -1).astype(jnp.bfloat16)
    w["v_b"] = p["value_b"].reshape(1, -1).astype(jnp.float32)
    w["la1_w"] = (p["la_w1"].reshape(p["la_w1"].shape[0], -1)
                  * BN_SCALE).astype(jnp.bfloat16)
    w["la2_w"] = convT(p["la_w2"])
    w["c32_w"] = convT(p["conv32_w"], BN_SCALE)
    w["c8_w"] = convT(p["conv8_w"], BN_SCALE)
    off1 = p["off_w1"].reshape(p["off_w1"].shape[0], -1) * BN_SCALE   # (64, 2*ouc)
    w["off1_cp"] = off1[:, :ouc].astype(jnp.bfloat16)                 # cat order [cp, sp]
    w["off1_sp"] = off1[:, ouc:].astype(jnp.bfloat16)
    w["off2_w"] = convT(p["off_w2"])
    return w


# --------------------------------- forward ---------------------------------- #

def csfcn_forward(p3, p5, w):
    B, C, H, W = p3.shape
    p3o = cfc_crb_forward(p3, w)                 # (B, C, H*W) channel-major
    p3_out = p3o.reshape(B, C, H, W)             # NCHW (module output 1, free reshape)
    p5_out = sfc_g2_forward(p3o, p5, w, H, W)    # NCHW (module output 2)
    return p3_out, p5_out


if __name__ == "__main__":
    key = jax.random.PRNGKey(0)
    k_p3, k_p5, k_w = jax.random.split(key, 3)
    inc = (64, 32)   # (channels of p3, channels of p5)
    ouc = 32
    B = 2
    p3 = jax.random.normal(k_p3, (B, inc[0], 8, 8), dtype=jnp.float32)     # low-res feature
    p5 = jax.random.normal(k_p5, (B, inc[1], 16, 16), dtype=jnp.float32)   # high-res feature
    params = init_params(k_w, inc, ouc)
    w = prepare_params(params)
    fwd = jax.jit(csfcn_forward)
    out3, out5 = fwd(p3, p5, w)
    jax.block_until_ready((out3, out5))
    assert out3.shape == (B, inc[0], 8, 8)
    assert out5.shape == (B, ouc, 16, 16)
    assert bool(jnp.all(jnp.isfinite(out3))) and bool(jnp.all(jnp.isfinite(out5)))
    print("KERNEL_OK")
</pallas_src>

<mosaic_0001>
module attributes {stable_mosaic.version = 11 : i64} {
  func.func @_cfc_crb_kernel(%arg0: i32, %arg1: memref<1x64x64xf32, #tpu.memory_space<vmem>>, %arg2: memref<1x128xf32, #tpu.memory_space<vmem>>, %arg3: memref<128x64xbf16, #tpu.memory_space<vmem>>, %arg4: memref<64x576xbf16, #tpu.memory_space<vmem>>, %arg5: memref<32x64xbf16, #tpu.memory_space<vmem>>, %arg6: memref<1x32xf32, #tpu.memory_space<vmem>>, %arg7: memref<32x64xbf16, #tpu.memory_space<vmem>>, %arg8: memref<1x32xf32, #tpu.memory_space<vmem>>, %arg9: memref<64x64xbf16, #tpu.memory_space<vmem>>, %arg10: memref<1x64xf32, #tpu.memory_space<vmem>>, %arg11: memref<8x64xbf16, #tpu.memory_space<vmem>>, %arg12: memref<64x72xbf16, #tpu.memory_space<vmem>>, %arg13: memref<1x64x64xf32, #tpu.memory_space<vmem>>, %arg14: memref<10x10x64xf32, #tpu.memory_space<vmem>>, %arg15: memref<10x10x8xf32, #tpu.memory_space<vmem>>) attributes {dimension_semantics = [#tpu.dimension_semantics<parallel>], iteration_bounds = array<i64: 2>, scalar_prefetch = 0 : i64, scratch_operands = 2 : i64, tpu.core_type = #tpu.core_type<tc>, window_params = [{transform_indices = @transform_0, window_bounds = array<i64: 1, 64, 64>}, {pipeline_mode = #tpu.pipeline_mode<synchronous>, transform_indices = @transform_1, window_bounds = array<i64: 1, 128>}, {pipeline_mode = #tpu.pipeline_mode<synchronous>, transform_indices = @transform_2, window_bounds = array<i64: 128, 64>}, {pipeline_mode = #tpu.pipeline_mode<synchronous>, transform_indices = @transform_3, window_bounds = array<i64: 64, 576>}, {pipeline_mode = #tpu.pipeline_mode<synchronous>, transform_indices = @transform_4, window_bounds = array<i64: 32, 64>}, {pipeline_mode = #tpu.pipeline_mode<synchronous>, transform_indices = @transform_5, window_bounds = array<i64: 1, 32>}, {pipeline_mode = #tpu.pipeline_mode<synchronous>, transform_indices = @transform_6, window_bounds = array<i64: 32, 64>}, {pipeline_mode = #tpu.pipeline_mode<synchronous>, transform_indices = @transform_7, window_bounds = array<i64: 1, 32>}, {pipeline_mode = #tpu.pipeline_mode<synchronous>, transform_indices = @transform_8, window_bounds = array<i64: 64, 64>}, {pipeline_mode = #tpu.pipeline_mode<synchronous>, transform_indices = @transform_9, window_bounds = array<i64: 1, 64>}, {pipeline_mode = #tpu.pipeline_mode<synchronous>, transform_indices = @transform_10, window_bounds = array<i64: 8, 64>}, {pipeline_mode = #tpu.pipeline_mode<synchronous>, transform_indices = @transform_11, window_bounds = array<i64: 64, 72>}, {transform_indices = @transform_12, window_bounds = array<i64: 1, 64, 64>}]} {
    %c0 = arith.constant 0 : index
    %c0_0 = arith.constant 0 : index
    %c0_1 = arith.constant 0 : index
    %0 = vector.load %arg1[%c0, %c0_0, %c0_1] : memref<1x64x64xf32, #tpu.memory_space<vmem>>, vector<1x64x64xf32>
    %1 = vector.shape_cast %0 : vector<1x64x64xf32> to vector<64x64xf32>
    %2 = tpu.transpose %1, [1, 0] : vector<64x64xf32> -> vector<64x64xf32>
    %3 = vector.shape_cast %2 : vector<64x64xf32> to vector<8x8x64xf32>
    %cst = arith.constant 0.000000e+00 : f32
    %4 = vector.broadcast %cst : f32 to vector<1x10x64xf32>
    %cst_2 = arith.constant 0.000000e+00 : f32
    %5 = vector.broadcast %cst_2 : f32 to vector<8x1x64xf32>
    %c0_3 = arith.constant 0 : index
    %c0_4 = arith.constant 0 : index
    %c0_5 = arith.constant 0 : index
    %6 = vector.load %arg14[%c0_3, %c0_4, %c0_5] : memref<10x10x64xf32, #tpu.memory_space<vmem>>, vector<1x10x64xf32>
    tpu.vector_store %arg14[%c0_3, %c0_4, %c0_5], %4 {strides = array<i32>} : memref<10x10x64xf32, #tpu.memory_space<vmem>>, vector<1x10x64xf32>,
    %c9 = arith.constant 9 : index
    %c0_6 = arith.constant 0 : index
    %c0_7 = arith.constant 0 : index
    %7 = vector.load %arg14[%c9, %c0_6, %c0_7] : memref<10x10x64xf32, #tpu.memory_space<vmem>>, vector<1x10x64xf32>
    tpu.vector_store %arg14[%c9, %c0_6, %c0_7], %4 {strides = array<i32>} : memref<10x10x64xf32, #tpu.memory_space<vmem>>, vector<1x10x64xf32>,
    %8 = tpu.concatenate %5, %3, %5 in 1 : vector<8x1x64xf32>, vector<8x8x64xf32>, vector<8x1x64xf32> -> vector<8x10x64xf32>
    %c1 = arith.constant 1 : index
    %c0_8 = arith.constant 0 : index
    %c0_9 = arith.constant 0 : index
    %9 = vector.load %arg14[%c1, %c0_8, %c0_9] : memref<10x10x64xf32, #tpu.memory_space<vmem>>, vector<8x10x64xf32>
    tpu.vector_store %arg14[%c1, %c0_8, %c0_9], %8 {strides = array<i32>} : memref<10x10x64xf32, #tpu.memory_space<vmem>>, vector<8x10x64xf32>,
    %c0_10 = arith.constant 0 : index
    %c0_11 = arith.constant 0 : index
    %c0_12 = arith.constant 0 : index
    %10 = vector.load %arg14[%c0_10, %c0_11, %c0_12] : memref<10x10x64xf32, #tpu.memory_space<vmem>>, vector<8x8x64xf32>
    %11 = vector.shape_cast %10 : vector<8x8x64xf32> to vector<64x64xf32>
    %c0_13 = arith.constant 0 : index
    %c1_14 = arith.constant 1 : index
    %c0_15 = arith.constant 0 : index
    %12 = vector.load %arg14[%c0_13, %c1_14, %c0_15] : memref<10x10x64xf32, #tpu.memory_space<vmem>>, vector<8x8x64xf32>
    %13 = vector.shape_cast %12 : vector<8x8x64xf32> to vector<64x64xf32>
    %c0_16 = arith.constant 0 : index
    %c2 = arith.constant 2 : index
    %c0_17 = arith.constant 0 : index
    %14 = vector.load %arg14[%c0_16, %c2, %c0_17] : memref<10x10x64xf32, #tpu.memory_space<vmem>>, vector<8x8x64xf32>
    %15 = vector.shape_cast %14 : vector<8x8x64xf32> to vector<64x64xf32>
    %c1_18 = arith.constant 1 : index
    %c0_19 = arith.constant 0 : index
    %c0_20 = arith.constant 0 : index
    %16 = vector.load %arg14[%c1_18, %c0_19, %c0_20] : memref<10x10x64xf32, #tpu.memory_space<vmem>>, vector<8x8x64xf32>
    %17 = vector.shape_cast %16 : vector<8x8x64xf32> to vector<64x64xf32>
    %c1_21 = arith.constant 1 : index
    %c1_22 = arith.constant 1 : index
    %c0_23 = arith.constant 0 : index
    %18 = vector.load %arg14[%c1_21, %c1_22, %c0_23] : memref<10x10x64xf32, #tpu.memory_space<vmem>>, vector<8x8x64xf32>
    %19 = vector.shape_cast %18 : vector<8x8x64xf32> to vector<64x64xf32>
    %c1_24 = arith.constant 1 : index
    %c2_25 = arith.constant 2 : index
    %c0_26 = arith.constant 0 : index
    %20 = vector.load %arg14[%c1_24, %c2_25, %c0_26] : memref<10x10x64xf32, #tpu.memory_space<vmem>>, vector<8x8x64xf32>
    %21 = vector.shape_cast %20 : vector<8x8x64xf32> to vector<64x64xf32>
    %c2_27 = arith.constant 2 : index
    %c0_28 = arith.constant 0 : index
    %c0_29 = arith.constant 0 : index
    %22 = vector.load %arg14[%c2_27, %c0_28, %c0_29] : memref<10x10x64xf32, #tpu.memory_space<vmem>>, vector<8x8x64xf32>
    %23 = vector.shape_cast %22 : vector<8x8x64xf32> to vector<64x64xf32>
    %c2_30 = arith.constant 2 : index
    %c1_31 = arith.constant 1 : index
    %c0_32 = arith.constant 0 : index
    %24 = vector.load %arg14[%c2_30, %c1_31, %c0_32] : memref<10x10x64xf32, #tpu.memory_space<vmem>>, vector<8x8x64xf32>
    %25 = vector.shape_cast %24 : vector<8x8x64xf32> to vector<64x64xf32>
    %c2_33 = arith.constant 2 : index
    %c2_34 = arith.constant 2 : index
    %c0_35 = arith.constant 0 : index
    %26 = vector.load %arg14[%c2_33, %c2_34, %c0_35] : memref<10x10x64xf32, #tpu.memory_space<vmem>>, vector<8x8x64xf32>
    %27 = vector.shape_cast %26 : vector<8x8x64xf32> to vector<64x64xf32>
    %28 = tpu.concatenate %11, %13, %15, %17, %19, %21, %23, %25, %27 in 1 : vector<64x64xf32>, vector<64x64xf32>, vector<64x64xf32>, vector<64x64xf32>, vector<64x64xf32>, vector<64x64xf32>, vector<64x64xf32>, vector<64x64xf32>, vector<64x64xf32> -> vector<64x576xf32>
    %29 = arith.truncf %28 : vector<64x576xf32> to vector<64x576xbf16>
    %c0_36 = arith.constant 0 : index
    %c0_37 = arith.constant 0 : index
    %30 = vector.load %arg4[%c0_36, %c0_37] : memref<64x576xbf16, #tpu.memory_space<vmem>>, vector<64x576xbf16>
    %cst_38 = arith.constant dense<0.000000e+00> : vector<64x64xf32>
    %31 = tpu.matmul %29, %30, %cst_38 {dimension_numbers = #tpu.dot_dimension_numbers<[1], [1], [0], [0], [0, 0, 1, 0], [], []>} : vector<64x576xbf16>, vector<64x576xbf16>, vector<64x64xf32> -> vector<64x64xf32>
    %32 = math.absf %31 : vector<64x64xf32>
    %cst_39 = arith.constant 0.000000e+00 : f32
    %33 = vector.broadcast %cst_39 : f32 to vector<64x64xf32>
    %34 = arith.subf %33, %32 : vector<64x64xf32>
    %35 = math.exp %34 : vector<64x64xf32>
    %cst_40 = arith.constant 1.000000e+00 : f32
    %36 = vector.broadcast %cst_40 : f32 to vector<64x64xf32>
    %37 = arith.addf %36, %35 : vector<64x64xf32>
    %38 = tpu.reciprocal %37 {approx = true} : vector<64x64xf32> -> vector<64x64xf32>
    %cst_41 = arith.constant 0.000000e+00 : f32
    %39 = vector.broadcast %cst_41 : f32 to vector<64x64xf32>
    %40 = arith.cmpf oge, %31, %39 : vector<64x64xf32>
    %41 = arith.mulf %35, %38 : vector<64x64xf32>
    %42 = arith.select %40, %38, %41 : vector<64x64xi1>, vector<64x64xf32>
    %43 = arith.mulf %31, %42 : vector<64x64xf32>
    %44 = arith.truncf %43 : vector<64x64xf32> to vector<64x64xbf16>
    %c0_42 = arith.constant 0 : index
    %c0_43 = arith.constant 0 : index
    %45 = vector.load %arg5[%c0_42, %c0_43] : memref<32x64xbf16, #tpu.memory_space<vmem>>, vector<32x64xbf16>
    %cst_44 = arith.constant dense<0.000000e+00> : vector<64x32xf32>
    %46 = tpu.matmul %44, %45, %cst_44 {dimension_numbers = #tpu.dot_dimension_numbers<[1], [1], [0], [0], [0, 0, 1, 0], [], []>} : vector<64x64xbf16>, vector<32x64xbf16>, vector<64x32xf32> -> vector<64x32xf32>
    %c0_45 = arith.constant 0 : index
    %c0_46 = arith.constant 0 : index
    %47 = vector.load %arg6[%c0_45, %c0_46] : memref<1x32xf32, #tpu.memory_space<vmem>>, vector<1x32xf32>
    %48 = vector.broadcast %47 : vector<1x32xf32> to vector<64x32xf32>
    %49 = arith.addf %46, %48 : vector<64x32xf32>
    %c0_47 = arith.constant 0 : index
    %c0_48 = arith.constant 0 : index
    %50 = vector.load %arg3[%c0_47, %c0_48] : memref<128x64xbf16, #tpu.memory_space<vmem>>, vector<128x64xbf16>
    %cst_49 = arith.constant dense<0.000000e+00> : vector<128x64xf32>
    %51 = tpu.matmul %50, %44, %cst_49 {dimension_numbers = #tpu.dot_dimension_numbers<[1], [0], [0], [1], [0, 0, 1, 1], [], []>} : vector<128x64xbf16>, vector<64x64xbf16>, vector<128x64xf32> -> vector<128x64xf32>
    %52 = arith.truncf %51 : vector<128x64xf32> to vector<128x64xbf16>
    %c0_50 = arith.constant 0 : index
    %c0_51 = arith.constant 0 : index
    %53 = vector.load %arg7[%c0_50, %c0_51] : memref<32x64xbf16, #tpu.memory_space<vmem>>, vector<32x64xbf16>
    %cst_52 = arith.constant dense<0.000000e+00> : vector<128x32xf32>
    %54 = tpu.matmul %52, %53, %cst_52 {dimension_numbers = #tpu.dot_dimension_numbers<[1], [1], [0], [0], [0, 0, 1, 0], [], []>} : vector<128x64xbf16>, vector<32x64xbf16>, vector<128x32xf32> -> vector<128x32xf32>
    %c0_53 = arith.constant 0 : index
    %c0_54 = arith.constant 0 : index
    %55 = vector.load %arg8[%c0_53, %c0_54] : memref<1x32xf32, #tpu.memory_space<vmem>>, vector<1x32xf32>
    %56 = vector.broadcast %55 : vector<1x32xf32> to vector<128x32xf32>
    %57 = arith.addf %54, %56 : vector<128x32xf32>
    %c0_55 = arith.constant 0 : index
    %c0_56 = arith.constant 0 : index
    %58 = vector.load %arg9[%c0_55, %c0_56] : memref<64x64xbf16, #tpu.memory_space<vmem>>, vector<64x64xbf16>
    %cst_57 = arith.constant dense<0.000000e+00> : vector<128x64xf32>
    %59 = tpu.matmul %52, %58, %cst_57 {dimension_numbers = #tpu.dot_dimension_numbers<[1], [1], [0], [0], [0, 0, 1, 0], [], []>} : vector<128x64xbf16>, vector<64x64xbf16>, vector<128x64xf32> -> vector<128x64xf32>
    %c0_58 = arith.constant 0 : index
    %c0_59 = arith.constant 0 : index
    %60 = vector.load %arg10[%c0_58, %c0_59] : memref<1x64xf32, #tpu.memory_space<vmem>>, vector<1x64xf32>
    %61 = vector.broadcast %60 : vector<1x64xf32> to vector<128x64xf32>
    %62 = arith.addf %59, %61 : vector<128x64xf32>
    %63 = arith.truncf %49 : vector<64x32xf32> to vector<64x32xbf16>
    %64 = arith.truncf %57 : vector<128x32xf32> to vector<128x32xbf16>
    %cst_60 = arith.constant dense<0.000000e+00> : vector<64x128xf32>
    %65 = tpu.matmul %63, %64, %cst_60 {dimension_numbers = #tpu.dot_dimension_numbers<[1], [1], [0], [0], [0, 0, 1, 0], [], []>} : vector<64x32xbf16>, vector<128x32xbf16>, vector<64x128xf32> -> vector<64x128xf32>
    %c0_61 = arith.constant 0 : index
    %c0_62 = arith.constant 0 : index
    %66 = vector.load %arg2[%c0_61, %c0_62] : memref<1x128xf32, #tpu.memory_space<vmem>>, vector<1x128xf32>
    %67 = vector.broadcast %66 : vector<1x128xf32> to vector<64x128xf32>
    %68 = arith.addf %65, %67 : vector<64x128xf32>
    %cst_63 = arith.constant dense<0xFF800000> : vector<64xf32>
    %69 = vector.multi_reduction <maximumf>, %68, %cst_63 [1] : vector<64x128xf32> to vector<64xf32>
    %70 = vector.shape_cast %69 : vector<64xf32> to vector<64x1xf32>
    %71 = vector.broadcast %70 : vector<64x1xf32> to vector<64x128xf32>
    %72 = arith.subf %68, %71 : vector<64x128xf32>
    %73 = math.exp %72 : vector<64x128xf32>
    %cst_64 = arith.constant dense<0.000000e+00> : vector<64xf32>
    %74 = vector.multi_reduction <add>, %73, %cst_64 [1] : vector<64x128xf32> to vector<64xf32>
    %75 = vector.shape_cast %74 : vector<64xf32> to vector<64x1xf32>
    %76 = tpu.reciprocal %75 {approx = true} : vector<64x1xf32> -> vector<64x1xf32>
    %77 = vector.broadcast %76 : vector<64x1xf32> to vector<64x128xf32>
    %78 = arith.mulf %73, %77 : vector<64x128xf32>
    %79 = arith.truncf %78 : vector<64x128xf32> to vector<64x128xbf16>
    %80 = arith.truncf %62 : vector<128x64xf32> to vector<128x64xbf16>
    %cst_65 = arith.constant dense<0.000000e+00> : vector<64x64xf32>
    %81 = tpu.matmul %79, %80, %cst_65 {dimension_numbers = #tpu.dot_dimension_numbers<[1], [0], [0], [1], [0, 0, 1, 1], [], []>} : vector<64x128xbf16>, vector<128x64xbf16>, vector<64x64xf32> -> vector<64x64xf32>
    %82 = arith.truncf %81 : vector<64x64xf32> to vector<64x64xbf16>
    %c0_66 = arith.constant 0 : index
    %c0_67 = arith.constant 0 : index
    %83 = vector.load %arg11[%c0_66, %c0_67] : memref<8x64xbf16, #tpu.memory_space<vmem>>, vector<8x64xbf16>
    %cst_68 = arith.constant dense<0.000000e+00> : vector<64x8xf32>
    %84 = tpu.matmul %82, %83, %cst_68 {dimension_numbers = #tpu.dot_dimension_numbers<[1], [1], [0], [0], [0, 0, 1, 0], [], []>} : vector<64x64xbf16>, vector<8x64xbf16>, vector<64x8xf32> -> vector<64x8xf32>
    %85 = math.absf %84 : vector<64x8xf32>
    %cst_69 = arith.constant 0.000000e+00 : f32
    %86 = vector.broadcast %cst_69 : f32 to vector<64x8xf32>
    %87 = arith.subf %86, %85 : vector<64x8xf32>
    %88 = math.exp %87 : vector<64x8xf32>
    %cst_70 = arith.constant 1.000000e+00 : f32
    %89 = vector.broadcast %cst_70 : f32 to vector<64x8xf32>
    %90 = arith.addf %89, %88 : vector<64x8xf32>
    %91 = tpu.reciprocal %90 {approx = true} : vector<64x8xf32> -> vector<64x8xf32>
    %cst_71 = arith.constant 0.000000e+00 : f32
    %92 = vector.broadcast %cst_71 : f32 to vector<64x8xf32>
    %93 = arith.cmpf oge, %84, %92 : vector<64x8xf32>
    %94 = arith.mulf %88, %91 : vector<64x8xf32>
    %95 = arith.select %93, %91, %94 : vector<64x8xi1>, vector<64x8xf32>
    %96 = arith.mulf %84, %95 : vector<64x8xf32>
    %97 = vector.shape_cast %96 : vector<64x8xf32> to vector<8x8x8xf32>
    %cst_72 = arith.constant 0.000000e+00 : f32
    %98 = vector.broadcast %cst_72 : f32 to vector<1x10x8xf32>
    %cst_73 = arith.constant 0.000000e+00 : f32
    %99 = vector.broadcast %cst_73 : f32 to vector<8x1x8xf32>
    %c0_74 = arith.constant 0 : index
    %c0_75 = arith.constant 0 : index
    %c0_76 = arith.constant 0 : index
    %100 = vector.load %arg15[%c0_74, %c0_75, %c0_76] : memref<10x10x8xf32, #tpu.memory_space<vmem>>, vector<1x10x8xf32>
    tpu.vector_store %arg15[%c0_74, %c0_75, %c0_76], %98 {strides = array<i32>} : memref<10x10x8xf32, #tpu.memory_space<vmem>>, vector<1x10x8xf32>,
    %c9_77 = arith.constant 9 : index
    %c0_78 = arith.constant 0 : index
    %c0_79 = arith.constant 0 : index
    %101 = vector.load %arg15[%c9_77, %c0_78, %c0_79] : memref<10x10x8xf32, #tpu.memory_space<vmem>>, vector<1x10x8xf32>
    tpu.vector_store %arg15[%c9_77, %c0_78, %c0_79], %98 {strides = array<i32>} : memref<10x10x8xf32, #tpu.memory_space<vmem>>, vector<1x10x8xf32>,
    %102 = tpu.concatenate %99, %97, %99 in 1 : vector<8x1x8xf32>, vector<8x8x8xf32>, vector<8x1x8xf32> -> vector<8x10x8xf32>
    %c1_80 = arith.constant 1 : index
    %c0_81 = arith.constant 0 : index
    %c0_82 = arith.constant 0 : index
    %103 = vector.load %arg15[%c1_80, %c0_81, %c0_82] : memref<10x10x8xf32, #tpu.memory_space<vmem>>, vector<8x10x8xf32>
    tpu.vector_store %arg15[%c1_80, %c0_81, %c0_82], %102 {strides = array<i32>} : memref<10x10x8xf32, #tpu.memory_space<vmem>>, vector<8x10x8xf32>,
    %c0_83 = arith.constant 0 : index
    %c0_84 = arith.constant 0 : index
    %c0_85 = arith.constant 0 : index
    %104 = vector.load %arg15[%c0_83, %c0_84, %c0_85] : memref<10x10x8xf32, #tpu.memory_space<vmem>>, vector<8x8x8xf32>
    %105 = vector.shape_cast %104 : vector<8x8x8xf32> to vector<64x8xf32>
    %c0_86 = arith.constant 0 : index
    %c1_87 = arith.constant 1 : index
    %c0_88 = arith.constant 0 : index
    %106 = vector.load %arg15[%c0_86, %c1_87, %c0_88] : memref<10x10x8xf32, #tpu.memory_space<vmem>>, vector<8x8x8xf32>
    %107 = vector.shape_cast %106 : vector<8x8x8xf32> to vector<64x8xf32>
    %c0_89 = arith.constant 0 : index
    %c2_90 = arith.constant 2 : index
    %c0_91 = arith.constant 0 : index
    %108 = vector.load %arg15[%c0_89, %c2_90, %c0_91] : memref<10x10x8xf32, #tpu.memory_space<vmem>>, vector<8x8x8xf32>
    %109 = vector.shape_cast %108 : vector<8x8x8xf32> to vector<64x8xf32>
    %c1_92 = arith.constant 1 : index
    %c0_93 = arith.constant 0 : index
    %c0_94 = arith.constant 0 : index
    %110 = vector.load %arg15[%c1_92, %c0_93, %c0_94] : memref<10x10x8xf32, #tpu.memory_space<vmem>>, vector<8x8x8xf32>
    %111 = vector.shape_cast %110 : vector<8x8x8xf32> to vector<64x8xf32>
    %c1_95 = arith.constant 1 : index
    %c1_96 = arith.constant 1 : index
    %c0_97 = arith.constant 0 : index
    %112 = vector.load %arg15[%c1_95, %c1_96, %c0_97] : memref<10x10x8xf32, #tpu.memory_space<vmem>>, vector<8x8x8xf32>
    %113 = vector.shape_cast %112 : vector<8x8x8xf32> to vector<64x8xf32>
    %c1_98 = arith.constant 1 : index
    %c2_99 = arith.constant 2 : index
    %c0_100 = arith.constant 0 : index
    %114 = vector.load %arg15[%c1_98, %c2_99, %c0_100] : memref<10x10x8xf32, #tpu.memory_space<vmem>>, vector<8x8x8xf32>
    %115 = vector.shape_cast %114 : vector<8x8x8xf32> to vector<64x8xf32>
    %c2_101 = arith.constant 2 : index
    %c0_102 = arith.constant 0 : index
    %c0_103 = arith.constant 0 : index
    %116 = vector.load %arg15[%c2_101, %c0_102, %c0_103] : memref<10x10x8xf32, #tpu.memory_space<vmem>>, vector<8x8x8xf32>
    %117 = vector.shape_cast %116 : vector<8x8x8xf32> to vector<64x8xf32>
    %c2_104 = arith.constant 2 : index
    %c1_105 = arith.constant 1 : index
    %c0_106 = arith.constant 0 : index
    %118 = vector.load %arg15[%c2_104, %c1_105, %c0_106] : memref<10x10x8xf32, #tpu.memory_space<vmem>>, vector<8x8x8xf32>
    %119 = vector.shape_cast %118 : vector<8x8x8xf32> to vector<64x8xf32>
    %c2_107 = arith.constant 2 : index
    %c2_108 = arith.constant 2 : index
    %c0_109 = arith.constant 0 : index
    %120 = vector.load %arg15[%c2_107, %c2_108, %c0_109] : memref<10x10x8xf32, #tpu.memory_space<vmem>>, vector<8x8x8xf32>
    %121 = vector.shape_cast %120 : vector<8x8x8xf32> to vector<64x8xf32>
    %122 = tpu.concatenate %105, %107, %109, %111, %113, %115, %117, %119, %121 in 1 : vector<64x8xf32>, vector<64x8xf32>, vector<64x8xf32>, vector<64x8xf32>, vector<64x8xf32>, vector<64x8xf32>, vector<64x8xf32>, vector<64x8xf32>, vector<64x8xf32> -> vector<64x72xf32>
    %123 = arith.truncf %122 : vector<64x72xf32> to vector<64x72xbf16>
    %c0_110 = arith.constant 0 : index
    %c0_111 = arith.constant 0 : index
    %124 = vector.load %arg12[%c0_110, %c0_111] : memref<64x72xbf16, #tpu.memory_space<vmem>>, vector<64x72xbf16>
    %cst_112 = arith.constant dense<0.000000e+00> : vector<64x64xf32>
    %125 = tpu.matmul %123, %124, %cst_112 {dimension_numbers = #tpu.dot_dimension_numbers<[1], [1], [0], [0], [0, 0, 1, 0], [], []>} : vector<64x72xbf16>, vector<64x72xbf16>, vector<64x64xf32> -> vector<64x64xf32>
    %126 = math.tanh %125 : vector<64x64xf32>
    %cst_113 = arith.constant 1.000000e+00 : f32
    %127 = vector.broadcast %cst_113 : f32 to vector<64x64xf32>
    %128 = arith.addf %127, %126 : vector<64x64xf32>
    %129 = arith.mulf %81, %128 : vector<64x64xf32>
    %130 = arith.addf %43, %129 : vector<64x64xf32>
    %131 = tpu.transpose %130, [1, 0] : vector<64x64xf32> -> vector<64x64xf32>
    %c0_114 = arith.constant 0 : index
    %c0_115 = arith.constant 0 : index
    %c0_116 = arith.constant 0 : index
    %132 = vector.load %arg13[%c0_114, %c0_115, %c0_116] : memref<1x64x64xf32, #tpu.memory_space<vmem>>, vector<1x64x64xf32>
    %133 = vector.shape_cast %132 : vector<1x64x64xf32> to vector<64x64xf32>
    %134 = vector.shape_cast %131 : vector<64x64xf32> to vector<1x64x64xf32>
    tpu.vector_store %arg13[%c0_114, %c0_115, %c0_116], %134 {strides = array<i32>} : memref<1x64x64xf32, #tpu.memory_space<vmem>>, vector<1x64x64xf32>,
    return
  }
  func.func @transform_0(%arg0: i32) -> (i32, i32, i32) {
    %c0_i32 = arith.constant 0 : i32
    %c0_i32_0 = arith.constant 0 : i32
    %c0_i32_1 = arith.constant 0 : i32
    return %arg0, %c0_i32, %c0_i32_0 : i32, i32, i32
  }
  func.func @transform_1(%arg0: i32) -> (i32, i32) {
    %c0_i32 = arith.constant 0 : i32
    %c0_i32_0 = arith.constant 0 : i32
    %c0_i32_1 = arith.constant 0 : i32
    return %c0_i32, %c0_i32_0 : i32, i32
  }
  func.func @transform_2(%arg0: i32) -> (i32, i32) {
    %c0_i32 = arith.constant 0 : i32
    %c0_i32_0 = arith.constant 0 : i32
    %c0_i32_1 = arith.constant 0 : i32
    return %c0_i32, %c0_i32_0 : i32, i32
  }
  func.func @transform_3(%arg0: i32) -> (i32, i32) {
    %c0_i32 = arith.constant 0 : i32
    %c0_i32_0 = arith.constant 0 : i32
    %c0_i32_1 = arith.constant 0 : i32
    return %c0_i32, %c0_i32_0 : i32, i32
  }
  func.func @transform_4(%arg0: i32) -> (i32, i32) {
    %c0_i32 = arith.constant 0 : i32
    %c0_i32_0 = arith.constant 0 : i32
    %c0_i32_1 = arith.constant 0 : i32
    return %c0_i32, %c0_i32_0 : i32, i32
  }
  func.func @transform_5(%arg0: i32) -> (i32, i32) {
    %c0_i32 = arith.constant 0 : i32
    %c0_i32_0 = arith.constant 0 : i32
    %c0_i32_1 = arith.constant 0 : i32
    return %c0_i32, %c0_i32_0 : i32, i32
  }
  func.func @transform_6(%arg0: i32) -> (i32, i32) {
    %c0_i32 = arith.constant 0 : i32
    %c0_i32_0 = arith.constant 0 : i32
    %c0_i32_1 = arith.constant 0 : i32
    return %c0_i32, %c0_i32_0 : i32, i32
  }
  func.func @transform_7(%arg0: i32) -> (i32, i32) {
    %c0_i32 = arith.constant 0 : i32
    %c0_i32_0 = arith.constant 0 : i32
    %c0_i32_1 = arith.constant 0 : i32
    return %c0_i32, %c0_i32_0 : i32, i32
  }
  func.func @transform_8(%arg0: i32) -> (i32, i32) {
    %c0_i32 = arith.constant 0 : i32
    %c0_i32_0 = arith.constant 0 : i32
    %c0_i32_1 = arith.constant 0 : i32
    return %c0_i32, %c0_i32_0 : i32, i32
  }
  func.func @transform_9(%arg0: i32) -> (i32, i32) {
    %c0_i32 = arith.constant 0 : i32
    %c0_i32_0 = arith.constant 0 : i32
    %c0_i32_1 = arith.constant 0 : i32
    return %c0_i32, %c0_i32_0 : i32, i32
  }
  func.func @transform_10(%arg0: i32) -> (i32, i32) {
    %c0_i32 = arith.constant 0 : i32
    %c0_i32_0 = arith.constant 0 : i32
    %c0_i32_1 = arith.constant 0 : i32
    return %c0_i32, %c0_i32_0 : i32, i32
  }
  func.func @transform_11(%arg0: i32) -> (i32, i32) {
    %c0_i32 = arith.constant 0 : i32
    %c0_i32_0 = arith.constant 0 : i32
    %c0_i32_1 = arith.constant 0 : i32
    return %c0_i32, %c0_i32_0 : i32, i32
  }
  func.func @transform_12(%arg0: i32) -> (i32, i32, i32) {
    %c0_i32 = arith.constant 0 : i32
    %c0_i32_0 = arith.constant 0 : i32
    %c0_i32_1 = arith.constant 0 : i32
    return %arg0, %c0_i32, %c0_i32_0 : i32, i32, i32
  }
}

module attributes {stable_mosaic.version = 11 : i64} {
  func.func @_sfc_g2_kernel(%arg0: i32, %arg1: memref<1x64x64xf32, #tpu.memory_space<vmem>>, %arg2: memref<1x32x256xf32, #tpu.memory_space<vmem>>, %arg3: memref<256x64xbf16, #tpu.memory_space<vmem>>, %arg4: memref<32x576xbf16, #tpu.memory_space<vmem>>, %arg5: memref<32x288xbf16, #tpu.memory_space<vmem>>, %arg6: memref<64x32xbf16, #tpu.memory_space<vmem>>, %arg7: memref<64x32xbf16, #tpu.memory_space<vmem>>, %arg8: memref<10x576xbf16, #tpu.memory_space<vmem>>, %arg9: memref<1x32x256xf32, #tpu.memory_space<vmem>>, %arg10: memref<1x32x256xf32, #tpu.memory_space<vmem>>, %arg11: memref<1x10x256xf32, #tpu.memory_space<vmem>>, %arg12: memref<10x10x64xf32, #tpu.memory_space<vmem>>, %arg13: memref<18x18x32xf32, #tpu.memory_space<vmem>>, %arg14: memref<18x18x64xf32, #tpu.memory_space<vmem>>) attributes {dimension_semantics = [#tpu.dimension_semantics<parallel>], iteration_bounds = array<i64: 2>, scalar_prefetch = 0 : i64, scratch_operands = 3 : i64, tpu.core_type = #tpu.core_type<tc>, window_params = [{transform_indices = @transform_0, window_bounds = array<i64: 1, 64, 64>}, {transform_indices = @transform_1, window_bounds = array<i64: 1, 32, 256>}, {pipeline_mode = #tpu.pipeline_mode<synchronous>, transform_indices = @transform_2, window_bounds = array<i64: 256, 64>}, {pipeline_mode = #tpu.pipeline_mode<synchronous>, transform_indices = @transform_3, window_bounds = array<i64: 32, 576>}, {pipeline_mode = #tpu.pipeline_mode<synchronous>, transform_indices = @transform_4, window_bounds = array<i64: 32, 288>}, {pipeline_mode = #tpu.pipeline_mode<synchronous>, transform_indices = @transform_5, window_bounds = array<i64: 64, 32>}, {pipeline_mode = #tpu.pipeline_mode<synchronous>, transform_indices = @transform_6, window_bounds = array<i64: 64, 32>}, {pipeline_mode = #tpu.pipeline_mode<synchronous>, transform_indices = @transform_7, window_bounds = array<i64: 10, 576>}, {transform_indices = @transform_8, window_bounds = array<i64: 1, 32, 256>}, {transform_indices = @transform_9, window_bounds = array<i64: 1, 32, 256>}, {transform_indices = @transform_10, window_bounds = array<i64: 1, 10, 256>}]} {
    %c0 = arith.constant 0 : index
    %c0_0 = arith.constant 0 : index
    %c0_1 = arith.constant 0 : index
    %0 = vector.load %arg1[%c0, %c0_0, %c0_1] : memref<1x64x64xf32, #tpu.memory_space<vmem>>, vector<1x64x64xf32>
    %1 = vector.shape_cast %0 : vector<1x64x64xf32> to vector<64x64xf32>
    %2 = tpu.transpose %1, [1, 0] : vector<64x64xf32> -> vector<64x64xf32>
    %3 = vector.shape_cast %2 : vector<64x64xf32> to vector<8x8x64xf32>
    %cst = arith.constant 0.000000e+00 : f32
    %4 = vector.broadcast %cst : f32 to vector<1x10x64xf32>
    %cst_2 = arith.constant 0.000000e+00 : f32
    %5 = vector.broadcast %cst_2 : f32 to vector<8x1x64xf32>
    %c0_3 = arith.constant 0 : index
    %c0_4 = arith.constant 0 : index
    %c0_5 = arith.constant 0 : index
    %6 = vector.load %arg12[%c0_3, %c0_4, %c0_5] : memref<10x10x64xf32, #tpu.memory_space<vmem>>, vector<1x10x64xf32>
    tpu.vector_store %arg12[%c0_3, %c0_4, %c0_5], %4 {strides = array<i32>} : memref<10x10x64xf32, #tpu.memory_space<vmem>>, vector<1x10x64xf32>,
    %c9 = arith.constant 9 : index
    %c0_6 = arith.constant 0 : index
    %c0_7 = arith.constant 0 : index
    %7 = vector.load %arg12[%c9, %c0_6, %c0_7] : memref<10x10x64xf32, #tpu.memory_space<vmem>>, vector<1x10x64xf32>
    tpu.vector_store %arg12[%c9, %c0_6, %c0_7], %4 {strides = array<i32>} : memref<10x10x64xf32, #tpu.memory_space<vmem>>, vector<1x10x64xf32>,
    %8 = tpu.concatenate %5, %3, %5 in 1 : vector<8x1x64xf32>, vector<8x8x64xf32>, vector<8x1x64xf32> -> vector<8x10x64xf32>
    %c1 = arith.constant 1 : index
    %c0_8 = arith.constant 0 : index
    %c0_9 = arith.constant 0 : index
    %9 = vector.load %arg12[%c1, %c0_8, %c0_9] : memref<10x10x64xf32, #tpu.memory_space<vmem>>, vector<8x10x64xf32>
    tpu.vector_store %arg12[%c1, %c0_8, %c0_9], %8 {strides = array<i32>} : memref<10x10x64xf32, #tpu.memory_space<vmem>>, vector<8x10x64xf32>,
    %c0_10 = arith.constant 0 : index
    %c0_11 = arith.constant 0 : index
    %c0_12 = arith.constant 0 : index
    %10 = vector.load %arg2[%c0_10, %c0_11, %c0_12] : memref<1x32x256xf32, #tpu.memory_space<vmem>>, vector<1x32x256xf32>
    %11 = vector.shape_cast %10 : vector<1x32x256xf32> to vector<32x256xf32>
    %12 = tpu.transpose %11, [1, 0] : vector<32x256xf32> -> vector<256x32xf32>
    %13 = vector.shape_cast %12 : vector<256x32xf32> to vector<16x16x32xf32>
    %cst_13 = arith.constant 0.000000e+00 : f32
    %14 = vector.broadcast %cst_13 : f32 to vector<1x18x32xf32>
    %cst_14 = arith.constant 0.000000e+00 : f32
    %15 = vector.broadcast %cst_14 : f32 to vector<16x1x32xf32>
    %c0_15 = arith.constant 0 : index
    %c0_16 = arith.constant 0 : index
    %c0_17 = arith.constant 0 : index
    %16 = vector.load %arg13[%c0_15, %c0_16, %c0_17] : memref<18x18x32xf32, #tpu.memory_space<vmem>>, vector<1x18x32xf32>
    tpu.vector_store %arg13[%c0_15, %c0_16, %c0_17], %14 {strides = array<i32>} : memref<18x18x32xf32, #tpu.memory_space<vmem>>, vector<1x18x32xf32>,
    %c17 = arith.constant 17 : index
    %c0_18 = arith.constant 0 : index
    %c0_19 = arith.constant 0 : index
    %17 = vector.load %arg13[%c17, %c0_18, %c0_19] : memref<18x18x32xf32, #tpu.memory_space<vmem>>, vector<1x18x32xf32>
    tpu.vector_store %arg13[%c17, %c0_18, %c0_19], %14 {strides = array<i32>} : memref<18x18x32xf32, #tpu.memory_space<vmem>>, vector<1x18x32xf32>,
    %18 = tpu.concatenate %15, %13, %15 in 1 : vector<16x1x32xf32>, vector<16x16x32xf32>, vector<16x1x32xf32> -> vector<16x18x32xf32>
    %c1_20 = arith.constant 1 : index
    %c0_21 = arith.constant 0 : index
    %c0_22 = arith.constant 0 : index
    %19 = vector.load %arg13[%c1_20, %c0_21, %c0_22] : memref<18x18x32xf32, #tpu.memory_space<vmem>>, vector<16x18x32xf32>
    tpu.vector_store %arg13[%c1_20, %c0_21, %c0_22], %18 {strides = array<i32>} : memref<18x18x32xf32, #tpu.memory_space<vmem>>, vector<16x18x32xf32>,
    %c0_23 = arith.constant 0 : index
    %c0_24 = arith.constant 0 : index
    %c0_25 = arith.constant 0 : index
    %20 = vector.load %arg12[%c0_23, %c0_24, %c0_25] : memref<10x10x64xf32, #tpu.memory_space<vmem>>, vector<8x8x64xf32>
    %21 = vector.shape_cast %20 : vector<8x8x64xf32> to vector<64x64xf32>
    %c0_26 = arith.constant 0 : index
    %c1_27 = arith.constant 1 : index
    %c0_28 = arith.constant 0 : index
    %22 = vector.load %arg12[%c0_26, %c1_27, %c0_28] : memref<10x10x64xf32, #tpu.memory_space<vmem>>, vector<8x8x64xf32>
    %23 = vector.shape_cast %22 : vector<8x8x64xf32> to vector<64x64xf32>
    %c0_29 = arith.constant 0 : index
    %c2 = arith.constant 2 : index
    %c0_30 = arith.constant 0 : index
    %24 = vector.load %arg12[%c0_29, %c2, %c0_30] : memref<10x10x64xf32, #tpu.memory_space<vmem>>, vector<8x8x64xf32>
    %25 = vector.shape_cast %24 : vector<8x8x64xf32> to vector<64x64xf32>
    %c1_31 = arith.constant 1 : index
    %c0_32 = arith.constant 0 : index
    %c0_33 = arith.constant 0 : index
    %26 = vector.load %arg12[%c1_31, %c0_32, %c0_33] : memref<10x10x64xf32, #tpu.memory_space<vmem>>, vector<8x8x64xf32>
    %27 = vector.shape_cast %26 : vector<8x8x64xf32> to vector<64x64xf32>
    %c1_34 = arith.constant 1 : index
    %c1_35 = arith.constant 1 : index
    %c0_36 = arith.constant 0 : index
    %28 = vector.load %arg12[%c1_34, %c1_35, %c0_36] : memref<10x10x64xf32, #tpu.memory_space<vmem>>, vector<8x8x64xf32>
    %29 = vector.shape_cast %28 : vector<8x8x64xf32> to vector<64x64xf32>
    %c1_37 = arith.constant 1 : index
    %c2_38 = arith.constant 2 : index
    %c0_39 = arith.constant 0 : index
    %30 = vector.load %arg12[%c1_37, %c2_38, %c0_39] : memref<10x10x64xf32, #tpu.memory_space<vmem>>, vector<8x8x64xf32>
    %31 = vector.shape_cast %30 : vector<8x8x64xf32> to vector<64x64xf32>
    %c2_40 = arith.constant 2 : index
    %c0_41 = arith.constant 0 : index
    %c0_42 = arith.constant 0 : index
    %32 = vector.load %arg12[%c2_40, %c0_41, %c0_42] : memref<10x10x64xf32, #tpu.memory_space<vmem>>, vector<8x8x64xf32>
    %33 = vector.shape_cast %32 : vector<8x8x64xf32> to vector<64x64xf32>
    %c2_43 = arith.constant 2 : index
    %c1_44 = arith.constant 1 : index
    %c0_45 = arith.constant 0 : index
    %34 = vector.load %arg12[%c2_43, %c1_44, %c0_45] : memref<10x10x64xf32, #tpu.memory_space<vmem>>, vector<8x8x64xf32>
    %35 = vector.shape_cast %34 : vector<8x8x64xf32> to vector<64x64xf32>
    %c2_46 = arith.constant 2 : index
    %c2_47 = arith.constant 2 : index
    %c0_48 = arith.constant 0 : index
    %36 = vector.load %arg12[%c2_46, %c2_47, %c0_48] : memref<10x10x64xf32, #tpu.memory_space<vmem>>, vector<8x8x64xf32>
    %37 = vector.shape_cast %36 : vector<8x8x64xf32> to vector<64x64xf32>
    %38 = tpu.concatenate %21, %23, %25, %27, %29, %31, %33, %35, %37 in 1 : vector<64x64xf32>, vector<64x64xf32>, vector<64x64xf32>, vector<64x64xf32>, vector<64x64xf32>, vector<64x64xf32>, vector<64x64xf32>, vector<64x64xf32>, vector<64x64xf32> -> vector<64x576xf32>
    %39 = arith.truncf %38 : vector<64x576xf32> to vector<64x576xbf16>
    %c0_49 = arith.constant 0 : index
    %c0_50 = arith.constant 0 : index
    %40 = vector.load %arg4[%c0_49, %c0_50] : memref<32x576xbf16, #tpu.memory_space<vmem>>, vector<32x576xbf16>
    %cst_51 = arith.constant dense<0.000000e+00> : vector<64x32xf32>
    %41 = tpu.matmul %39, %40, %cst_51 {dimension_numbers = #tpu.dot_dimension_numbers<[1], [1], [0], [0], [0, 0, 1, 0], [], []>} : vector<64x576xbf16>, vector<32x576xbf16>, vector<64x32xf32> -> vector<64x32xf32>
    %42 = math.absf %41 : vector<64x32xf32>
    %cst_52 = arith.constant 0.000000e+00 : f32
    %43 = vector.broadcast %cst_52 : f32 to vector<64x32xf32>
    %44 = arith.subf %43, %42 : vector<64x32xf32>
    %45 = math.exp %44 : vector<64x32xf32>
    %cst_53 = arith.constant 1.000000e+00 : f32
    %46 = vector.broadcast %cst_53 : f32 to vector<64x32xf32>
    %47 = arith.addf %46, %45 : vector<64x32xf32>
    %48 = tpu.reciprocal %47 {approx = true} : vector<64x32xf32> -> vector<64x32xf32>
    %cst_54 = arith.constant 0.000000e+00 : f32
    %49 = vector.broadcast %cst_54 : f32 to vector<64x32xf32>
    %50 = arith.cmpf oge, %41, %49 : vector<64x32xf32>
    %51 = arith.mulf %45, %48 : vector<64x32xf32>
    %52 = arith.select %50, %48, %51 : vector<64x32xi1>, vector<64x32xf32>
    %53 = arith.mulf %41, %52 : vector<64x32xf32>
    %c0_55 = arith.constant 0 : index
    %c0_56 = arith.constant 0 : index
    %54 = vector.load %arg3[%c0_55, %c0_56] : memref<256x64xbf16, #tpu.memory_space<vmem>>, vector<256x64xbf16>
    %55 = arith.truncf %53 : vector<64x32xf32> to vector<64x32xbf16>
    %cst_57 = arith.constant dense<0.000000e+00> : vector<256x32xf32>
    %56 = tpu.matmul %54, %55, %cst_57 {dimension_numbers = #tpu.dot_dimension_numbers<[1], [0], [0], [1], [0, 0, 1, 1], [], []>} : vector<256x64xbf16>, vector<64x32xbf16>, vector<256x32xf32> -> vector<256x32xf32>
    %c0_58 = arith.constant 0 : index
    %c0_59 = arith.constant 0 : index
    %c0_60 = arith.constant 0 : index
    %57 = vector.load %arg13[%c0_58, %c0_59, %c0_60] : memref<18x18x32xf32, #tpu.memory_space<vmem>>, vector<16x16x32xf32>
    %58 = vector.shape_cast %57 : vector<16x16x32xf32> to vector<256x32xf32>
    %c0_61 = arith.constant 0 : index
    %c1_62 = arith.constant 1 : index
    %c0_63 = arith.constant 0 : index
    %59 = vector.load %arg13[%c0_61, %c1_62, %c0_63] : memref<18x18x32xf32, #tpu.memory_space<vmem>>, vector<16x16x32xf32>
    %60 = vector.shape_cast %59 : vector<16x16x32xf32> to vector<256x32xf32>
    %c0_64 = arith.constant 0 : index
    %c2_65 = arith.constant 2 : index
    %c0_66 = arith.constant 0 : index
    %61 = vector.load %arg13[%c0_64, %c2_65, %c0_66] : memref<18x18x32xf32, #tpu.memory_space<vmem>>, vector<16x16x32xf32>
    %62 = vector.shape_cast %61 : vector<16x16x32xf32> to vector<256x32xf32>
    %c1_67 = arith.constant 1 : index
    %c0_68 = arith.constant 0 : index
    %c0_69 = arith.constant 0 : index
    %63 = vector.load %arg13[%c1_67, %c0_68, %c0_69] : memref<18x18x32xf32, #tpu.memory_space<vmem>>, vector<16x16x32xf32>
    %64 = vector.shape_cast %63 : vector<16x16x32xf32> to vector<256x32xf32>
    %c1_70 = arith.constant 1 : index
    %c1_71 = arith.constant 1 : index
    %c0_72 = arith.constant 0 : index
    %65 = vector.load %arg13[%c1_70, %c1_71, %c0_72] : memref<18x18x32xf32, #tpu.memory_space<vmem>>, vector<16x16x32xf32>
    %66 = vector.shape_cast %65 : vector<16x16x32xf32> to vector<256x32xf32>
    %c1_73 = arith.constant 1 : index
    %c2_74 = arith.constant 2 : index
    %c0_75 = arith.constant 0 : index
    %67 = vector.load %arg13[%c1_73, %c2_74, %c0_75] : memref<18x18x32xf32, #tpu.memory_space<vmem>>, vector<16x16x32xf32>
    %68 = vector.shape_cast %67 : vector<16x16x32xf32> to vector<256x32xf32>
    %c2_76 = arith.constant 2 : index
    %c0_77 = arith.constant 0 : index
    %c0_78 = arith.constant 0 : index
    %69 = vector.load %arg13[%c2_76, %c0_77, %c0_78] : memref<18x18x32xf32, #tpu.memory_space<vmem>>, vector<16x16x32xf32>
    %70 = vector.shape_cast %69 : vector<16x16x32xf32> to vector<256x32xf32>
    %c2_79 = arith.constant 2 : index
    %c1_80 = arith.constant 1 : index
    %c0_81 = arith.constant 0 : index
    %71 = vector.load %arg13[%c2_79, %c1_80, %c0_81] : memref<18x18x32xf32, #tpu.memory_space<vmem>>, vector<16x16x32xf32>
    %72 = vector.shape_cast %71 : vector<16x16x32xf32> to vector<256x32xf32>
    %c2_82 = arith.constant 2 : index
    %c2_83 = arith.constant 2 : index
    %c0_84 = arith.constant 0 : index
    %73 = vector.load %arg13[%c2_82, %c2_83, %c0_84] : memref<18x18x32xf32, #tpu.memory_space<vmem>>, vector<16x16x32xf32>
    %74 = vector.shape_cast %73 : vector<16x16x32xf32> to vector<256x32xf32>
    %75 = tpu.concatenate %58, %60, %62, %64, %66, %68, %70, %72, %74 in 1 : vector<256x32xf32>, vector<256x32xf32>, vector<256x32xf32>, vector<256x32xf32>, vector<256x32xf32>, vector<256x32xf32>, vector<256x32xf32>, vector<256x32xf32>, vector<256x32xf32> -> vector<256x288xf32>
    %76 = arith.truncf %75 : vector<256x288xf32> to vector<256x288xbf16>
    %c0_85 = arith.constant 0 : index
    %c0_86 = arith.constant 0 : index
    %77 = vector.load %arg5[%c0_85, %c0_86] : memref<32x288xbf16, #tpu.memory_space<vmem>>, vector<32x288xbf16>
    %cst_87 = arith.constant dense<0.000000e+00> : vector<256x32xf32>
    %78 = tpu.matmul %76, %77, %cst_87 {dimension_numbers = #tpu.dot_dimension_numbers<[1], [1], [0], [0], [0, 0, 1, 0], [], []>} : vector<256x288xbf16>, vector<32x288xbf16>, vector<256x32xf32> -> vector<256x32xf32>
    %79 = math.absf %78 : vector<256x32xf32>
    %cst_88 = arith.constant 0.000000e+00 : f32
    %80 = vector.broadcast %cst_88 : f32 to vector<256x32xf32>
    %81 = arith.subf %80, %79 : vector<256x32xf32>
    %82 = math.exp %81 : vector<256x32xf32>
    %cst_89 = arith.constant 1.000000e+00 : f32
    %83 = vector.broadcast %cst_89 : f32 to vector<256x32xf32>
    %84 = arith.addf %83, %82 : vector<256x32xf32>
    %85 = tpu.reciprocal %84 {approx = true} : vector<256x32xf32> -> vector<256x32xf32>
    %cst_90 = arith.constant 0.000000e+00 : f32
    %86 = vector.broadcast %cst_90 : f32 to vector<256x32xf32>
    %87 = arith.cmpf oge, %78, %86 : vector<256x32xf32>
    %88 = arith.mulf %82, %85 : vector<256x32xf32>
    %89 = arith.select %87, %85, %88 : vector<256x32xi1>, vector<256x32xf32>
    %90 = arith.mulf %78, %89 : vector<256x32xf32>
    %91 = tpu.transpose %56, [1, 0] : vector<256x32xf32> -> vector<32x256xf32>
    %c0_91 = arith.constant 0 : index
    %c0_92 = arith.constant 0 : index
    %c0_93 = arith.constant 0 : index
    %92 = vector.load %arg9[%c0_91, %c0_92, %c0_93] : memref<1x32x256xf32, #tpu.memory_space<vmem>>, vector<1x32x256xf32>
    %93 = vector.shape_cast %92 : vector<1x32x256xf32> to vector<32x256xf32>
    %94 = vector.shape_cast %91 : vector<32x256xf32> to vector<1x32x256xf32>
    tpu.vector_store %arg9[%c0_91, %c0_92, %c0_93], %94 {strides = array<i32>} : memref<1x32x256xf32, #tpu.memory_space<vmem>>, vector<1x32x256xf32>,
    %95 = tpu.transpose %90, [1, 0] : vector<256x32xf32> -> vector<32x256xf32>
    %c0_94 = arith.constant 0 : index
    %c0_95 = arith.constant 0 : index
    %c0_96 = arith.constant 0 : index
    %96 = vector.load %arg10[%c0_94, %c0_95, %c0_96] : memref<1x32x256xf32, #tpu.memory_space<vmem>>, vector<1x32x256xf32>
    %97 = vector.shape_cast %96 : vector<1x32x256xf32> to vector<32x256xf32>
    %98 = vector.shape_cast %95 : vector<32x256xf32> to vector<1x32x256xf32>
    tpu.vector_store %arg10[%c0_94, %c0_95, %c0_96], %98 {strides = array<i32>} : memref<1x32x256xf32, #tpu.memory_space<vmem>>, vector<1x32x256xf32>,
    %99 = arith.truncf %90 : vector<256x32xf32> to vector<256x32xbf16>
    %c0_97 = arith.constant 0 : index
    %c0_98 = arith.constant 0 : index
    %100 = vector.load %arg6[%c0_97, %c0_98] : memref<64x32xbf16, #tpu.memory_space<vmem>>, vector<64x32xbf16>
    %cst_99 = arith.constant dense<0.000000e+00> : vector<256x64xf32>
    %101 = tpu.matmul %99, %100, %cst_99 {dimension_numbers = #tpu.dot_dimension_numbers<[1], [1], [0], [0], [0, 0, 1, 0], [], []>} : vector<256x32xbf16>, vector<64x32xbf16>, vector<256x64xf32> -> vector<256x64xf32>
    %102 = arith.truncf %56 : vector<256x32xf32> to vector<256x32xbf16>
    %c0_100 = arith.constant 0 : index
    %c0_101 = arith.constant 0 : index
    %103 = vector.load %arg7[%c0_100, %c0_101] : memref<64x32xbf16, #tpu.memory_space<vmem>>, vector<64x32xbf16>
    %cst_102 = arith.constant dense<0.000000e+00> : vector<256x64xf32>
    %104 = tpu.matmul %102, %103, %cst_102 {dimension_numbers = #tpu.dot_dimension_numbers<[1], [1], [0], [0], [0, 0, 1, 0], [], []>} : vector<256x32xbf16>, vector<64x32xbf16>, vector<256x64xf32> -> vector<256x64xf32>
    %105 = arith.addf %101, %104 : vector<256x64xf32>
    %106 = math.absf %105 : vector<256x64xf32>
    %cst_103 = arith.constant 0.000000e+00 : f32
    %107 = vector.broadcast %cst_103 : f32 to vector<256x64xf32>
    %108 = arith.subf %107, %106 : vector<256x64xf32>
    %109 = math.exp %108 : vector<256x64xf32>
    %cst_104 = arith.constant 1.000000e+00 : f32
    %110 = vector.broadcast %cst_104 : f32 to vector<256x64xf32>
    %111 = arith.addf %110, %109 : vector<256x64xf32>
    %112 = tpu.reciprocal %111 {approx = true} : vector<256x64xf32> -> vector<256x64xf32>
    %cst_105 = arith.constant 0.000000e+00 : f32
    %113 = vector.broadcast %cst_105 : f32 to vector<256x64xf32>
    %114 = arith.cmpf oge, %105, %113 : vector<256x64xf32>
    %115 = arith.mulf %109, %112 : vector<256x64xf32>
    %116 = arith.select %114, %112, %115 : vector<256x64xi1>, vector<256x64xf32>
    %117 = arith.mulf %105, %116 : vector<256x64xf32>
    %118 = vector.shape_cast %117 : vector<256x64xf32> to vector<16x16x64xf32>
    %cst_106 = arith.constant 0.000000e+00 : f32
    %119 = vector.broadcast %cst_106 : f32 to vector<1x18x64xf32>
    %cst_107 = arith.constant 0.000000e+00 : f32
    %120 = vector.broadcast %cst_107 : f32 to vector<16x1x64xf32>
    %c0_108 = arith.constant 0 : index
    %c0_109 = arith.constant 0 : index
    %c0_110 = arith.constant 0 : index
    %121 = vector.load %arg14[%c0_108, %c0_109, %c0_110] : memref<18x18x64xf32, #tpu.memory_space<vmem>>, vector<1x18x64xf32>
    tpu.vector_store %arg14[%c0_108, %c0_109, %c0_110], %119 {strides = array<i32>} : memref<18x18x64xf32, #tpu.memory_space<vmem>>, vector<1x18x64xf32>,
    %c17_111 = arith.constant 17 : index
    %c0_112 = arith.constant 0 : index
    %c0_113 = arith.constant 0 : index
    %122 = vector.load %arg14[%c17_111, %c0_112, %c0_113] : memref<18x18x64xf32, #tpu.memory_space<vmem>>, vector<1x18x64xf32>
    tpu.vector_store %arg14[%c17_111, %c0_112, %c0_113], %119 {strides = array<i32>} : memref<18x18x64xf32, #tpu.memory_space<vmem>>, vector<1x18x64xf32>,
    %123 = tpu.concatenate %120, %118, %120 in 1 : vector<16x1x64xf32>, vector<16x16x64xf32>, vector<16x1x64xf32> -> vector<16x18x64xf32>
    %c1_114 = arith.constant 1 : index
    %c0_115 = arith.constant 0 : index
    %c0_116 = arith.constant 0 : index
    %124 = vector.load %arg14[%c1_114, %c0_115, %c0_116] : memref<18x18x64xf32, #tpu.memory_space<vmem>>, vector<16x18x64xf32>
    tpu.vector_store %arg14[%c1_114, %c0_115, %c0_116], %123 {strides = array<i32>} : memref<18x18x64xf32, #tpu.memory_space<vmem>>, vector<16x18x64xf32>,
    %c0_117 = arith.constant 0 : index
    %c0_118 = arith.constant 0 : index
    %125 = vector.load %arg8[%c0_117, %c0_118] : memref<10x576xbf16, #tpu.memory_space<vmem>>, vector<10x576xbf16>
    %c0_119 = arith.constant 0 : index
    %c0_120 = arith.constant 0 : index
    %c0_121 = arith.constant 0 : index
    %126 = vector.load %arg14[%c0_119, %c0_120, %c0_121] : memref<18x18x64xf32, #tpu.memory_space<vmem>>, vector<16x16x64xf32>
    %127 = vector.shape_cast %126 : vector<16x16x64xf32> to vector<256x64xf32>
    %c0_122 = arith.constant 0 : index
    %c1_123 = arith.constant 1 : index
    %c0_124 = arith.constant 0 : index
    %128 = vector.load %arg14[%c0_122, %c1_123, %c0_124] : memref<18x18x64xf32, #tpu.memory_space<vmem>>, vector<16x16x64xf32>
    %129 = vector.shape_cast %128 : vector<16x16x64xf32> to vector<256x64xf32>
    %c0_125 = arith.constant 0 : index
    %c2_126 = arith.constant 2 : index
    %c0_127 = arith.constant 0 : index
    %130 = vector.load %arg14[%c0_125, %c2_126, %c0_127] : memref<18x18x64xf32, #tpu.memory_space<vmem>>, vector<16x16x64xf32>
    %131 = vector.shape_cast %130 : vector<16x16x64xf32> to vector<256x64xf32>
    %c1_128 = arith.constant 1 : index
    %c0_129 = arith.constant 0 : index
    %c0_130 = arith.constant 0 : index
    %132 = vector.load %arg14[%c1_128, %c0_129, %c0_130] : memref<18x18x64xf32, #tpu.memory_space<vmem>>, vector<16x16x64xf32>
    %133 = vector.shape_cast %132 : vector<16x16x64xf32> to vector<256x64xf32>
    %c1_131 = arith.constant 1 : index
    %c1_132 = arith.constant 1 : index
    %c0_133 = arith.constant 0 : index
    %134 = vector.load %arg14[%c1_131, %c1_132, %c0_133] : memref<18x18x64xf32, #tpu.memory_space<vmem>>, vector<16x16x64xf32>
    %135 = vector.shape_cast %134 : vector<16x16x64xf32> to vector<256x64xf32>
    %c1_134 = arith.constant 1 : index
    %c2_135 = arith.constant 2 : index
    %c0_136 = arith.constant 0 : index
    %136 = vector.load %arg14[%c1_134, %c2_135, %c0_136] : memref<18x18x64xf32, #tpu.memory_space<vmem>>, vector<16x16x64xf32>
    %137 = vector.shape_cast %136 : vector<16x16x64xf32> to vector<256x64xf32>
    %c2_137 = arith.constant 2 : index
    %c0_138 = arith.constant 0 : index
    %c0_139 = arith.constant 0 : index
    %138 = vector.load %arg14[%c2_137, %c0_138, %c0_139] : memref<18x18x64xf32, #tpu.memory_space<vmem>>, vector<16x16x64xf32>
    %139 = vector.shape_cast %138 : vector<16x16x64xf32> to vector<256x64xf32>
    %c2_140 = arith.constant 2 : index
    %c1_141 = arith.constant 1 : index
    %c0_142 = arith.constant 0 : index
    %140 = vector.load %arg14[%c2_140, %c1_141, %c0_142] : memref<18x18x64xf32, #tpu.memory_space<vmem>>, vector<16x16x64xf32>
    %141 = vector.shape_cast %140 : vector<16x16x64xf32> to vector<256x64xf32>
    %c2_143 = arith.constant 2 : index
    %c2_144 = arith.constant 2 : index
    %c0_145 = arith.constant 0 : index
    %142 = vector.load %arg14[%c2_143, %c2_144, %c0_145] : memref<18x18x64xf32, #tpu.memory_space<vmem>>, vector<16x16x64xf32>
    %143 = vector.shape_cast %142 : vector<16x16x64xf32> to vector<256x64xf32>
    %144 = tpu.concatenate %127, %129, %131, %133, %135, %137, %139, %141, %143 in 1 : vector<256x64xf32>, vector<256x64xf32>, vector<256x64xf32>, vector<256x64xf32>, vector<256x64xf32>, vector<256x64xf32>, vector<256x64xf32>, vector<256x64xf32>, vector<256x64xf32> -> vector<256x576xf32>
    %145 = arith.truncf %144 : vector<256x576xf32> to vector<256x576xbf16>
    %cst_146 = arith.constant dense<0.000000e+00> : vector<10x256xf32>
    %146 = tpu.matmul %125, %145, %cst_146 {dimension_numbers = #tpu.dot_dimension_numbers<[1], [1], [0], [0], [0, 0, 1, 0], [], []>} : vector<10x576xbf16>, vector<256x576xbf16>, vector<10x256xf32> -> vector<10x256xf32>
    %c0_147 = arith.constant 0 : index
    %c0_148 = arith.constant 0 : index
    %c0_149 = arith.constant 0 : index
    %147 = vector.load %arg11[%c0_147, %c0_148, %c0_149] : memref<1x10x256xf32, #tpu.memory_space<vmem>>, vector<1x10x256xf32>
    %148 = vector.shape_cast %147 : vector<1x10x256xf32> to vector<10x256xf32>
    %149 = vector.shape_cast %146 : vector<10x256xf32> to vector<1x10x256xf32>
    tpu.vector_store %arg11[%c0_147, %c0_148, %c0_149], %149 {strides = array<i32>} : memref<1x10x256xf32, #tpu.memory_space<vmem>>, vector<1x10x256xf32>,
    return
  }
  func.func @transform_0(%arg0: i32) -> (i32, i32, i32) {
    %c0_i32 = arith.constant 0 : i32
    %c0_i32_0 = arith.constant 0 : i32
    %c0_i32_1 = arith.constant 0 : i32
    return %arg0, %c0_i32, %c0_i32_0 : i32, i32, i32
  }
  func.func @transform_1(%arg0: i32) -> (i32, i32, i32) {
    %c0_i32 = arith.constant 0 : i32
    %c0_i32_0 = arith.constant 0 : i32
    %c0_i32_1 = arith.constant 0 : i32
    return %arg0, %c0_i32, %c0_i32_0 : i32, i32, i32
  }
  func.func @transform_2(%arg0: i32) -> (i32, i32) {
    %c0_i32 = arith.constant 0 : i32
    %c0_i32_0 = arith.constant 0 : i32
    %c0_i32_1 = arith.constant 0 : i32
    return %c0_i32, %c0_i32_0 : i32, i32
  }
  func.func @transform_3(%arg0: i32) -> (i32, i32) {
    %c0_i32 = arith.constant 0 : i32
    %c0_i32_0 = arith.constant 0 : i32
    %c0_i32_1 = arith.constant 0 : i32
    return %c0_i32, %c0_i32_0 : i32, i32
  }
  func.func @transform_4(%arg0: i32) -> (i32, i32) {
    %c0_i32 = arith.constant 0 : i32
    %c0_i32_0 = arith.constant 0 : i32
    %c0_i32_1 = arith.constant 0 : i32
    return %c0_i32, %c0_i32_0 : i32, i32
  }
  func.func @transform_5(%arg0: i32) -> (i32, i32) {
    %c0_i32 = arith.constant 0 : i32
    %c0_i32_0 = arith.constant 0 : i32
    %c0_i32_1 = arith.constant 0 : i32
    return %c0_i32, %c0_i32_0 : i32, i32
  }
  func.func @transform_6(%arg0: i32) -> (i32, i32) {
    %c0_i32 = arith.constant 0 : i32
    %c0_i32_0 = arith.constant 0 : i32
    %c0_i32_1 = arith.constant 0 : i32
    return %c0_i32, %c0_i32_0 : i32, i32
  }
  func.func @transform_7(%arg0: i32) -> (i32, i32) {
    %c0_i32 = arith.constant 0 : i32
    %c0_i32_0 = arith.constant 0 : i32
    %c0_i32_1 = arith.constant 0 : i32
    return %c0_i32, %c0_i32_0 : i32, i32
  }
  func.func @transform_8(%arg0: i32) -> (i32, i32, i32) {
    %c0_i32 = arith.constant 0 : i32
    %c0_i32_0 = arith.constant 0 : i32
    %c0_i32_1 = arith.constant 0 : i32
    return %arg0, %c0_i32, %c0_i32_0 : i32, i32, i32
  }
  func.func @transform_9(%arg0: i32) -> (i32, i32, i32) {
    %c0_i32 = arith.constant 0 : i32
    %c0_i32_0 = arith.constant 0 : i32
    %c0_i32_1 = arith.constant 0 : i32
    return %arg0, %c0_i32, %c0_i32_0 : i32, i32, i32
  }
  func.func @transform_10(%arg0: i32) -> (i32, i32, i32) {
    %c0_i32 = arith.constant 0 : i32
    %c0_i32_0 = arith.constant 0 : i32
    %c0_i32_1 = arith.constant 0 : i32
    return %arg0, %c0_i32, %c0_i32_0 : i32, i32, i32
  }
}

</mosaic_0001>

<llo_original>
// kernel: csfcn_forward.2
$region0: #{csfcn_forward.2}
  #allocation0 [shape = 'u32[]', space=smem, size = 0x4, offset = 0x4, fixed_abs, tag = 'smem constant byte address 0x4 - core index']
  #allocation1 [shape = 'u32[144,128]{1,0:T(1,128)}', space=vmem, size = 0x12000, scoped, tag = 'internal scratch']
  #allocation2 [shape = 'f32[10,10,64]{2,1,0:T(8,128)}', space=vmem, size = 0x14000, scoped, tag = 'scratch operand']
  #allocation3 [shape = 'f32[10,10,8]{2,1,0:T(8,128)}', space=vmem, size = 0x14000, scoped, tag = 'scratch operand']
  %s0 = inlined_call_operand.vmem [shape: f32[2,64,64], index: 0, kind: input, shape index: {}]
  %s1 = inlined_call_operand.vmem [shape: f32[1,128], index: 1, kind: input, shape index: {}]
  %s2 = inlined_call_operand.vmem [shape: bf16[128,64], index: 2, kind: input, shape index: {}]
  %s3 = inlined_call_operand.vmem [shape: bf16[64,576], index: 3, kind: input, shape index: {}]
  %s4 = inlined_call_operand.hbm [shape: bf16[32,64], index: 4, kind: input, shape index: {}]
  %s5 = inlined_call_operand.vmem [shape: f32[1,32], index: 5, kind: input, shape index: {}]
  %s6 = inlined_call_operand.vmem [shape: bf16[32,64], index: 6, kind: input, shape index: {}]
  %s7 = inlined_call_operand.vmem [shape: f32[1,32], index: 7, kind: input, shape index: {}]
  %s8 = inlined_call_operand.vmem [shape: bf16[64,64], index: 8, kind: input, shape index: {}]
  %s9 = inlined_call_operand.hbm [shape: f32[1,64], index: 9, kind: input, shape index: {}]
  %s10 = inlined_call_operand.vmem [shape: bf16[8,64], index: 10, kind: input, shape index: {}]
  %s11 = inlined_call_operand.vmem [shape: bf16[64,72], index: 11, kind: input, shape index: {}]
  %s12 = inlined_call_operand.vmem [shape: f32[2,64,64], index: 12, kind: output, shape index: {}]
  %s13 = sld [smem:[#allocation0]]
  $region89: #{csfcn_forward.2} parent=0
    _
  %s15 = ssub.s32 1, %s13
  %s16 = scalar_select 0, %s15, %s13
  $region1: #{csfcn_forward.2} parent=0
    #allocation4 [shape = 'u8[8192]{0}', space=vmem, size = 0x2000, scoped, tag = 'input window, operand 4, single buffered']
    #allocation5 [shape = 's32[2]{0}', space=sflag, size = 0x8, scoped, tag = 'scoped memory for csfcn_forward.2']
    #allocation6 [shape = 'u8[512]{0}', space=vmem, size = 0x400, scoped, tag = 'input window, operand 9, single buffered']
    #allocation7 [shape = 's32[1]{0}', space=sflag, size = 0x4, scoped, tag = 'scoped memory for csfcn_forward.2']
    %17 = vsyncpa [#allocation5], 0
    %18 = vsyncpa [#allocation7], 0
    loop: start=0, step=1, limit=4
    $region2: #{csfcn_forward.2} parent=1 // loop_pre_header
      _
    $region3: #{csfcn_forward.2} parent=1 // loop_header
      %s20 = sphi 0, %s24
      %p21 = scmp.ge.s32.totalorder %s20, 4
      %s30 = sphi 0, %s32
      %s33 = sphi 0, %s30
      %s34 = sphi 0, %s33
      %s50 = sphi 0, %s34
      %s54 = sphi 0, %s54
      %s56 = sphi 0, %s54
      %s57 = sphi 0, %s56
      %s71 = sphi 0, %s57
      %s75 = sphi 0, %s75
      %s77 = sphi 0, %s75
      %s78 = sphi 0, %s77
      %s92 = sphi 0, %s78
      %s96 = sphi 0, %s96
      %s98 = sphi 0, %s96
      %s99 = sphi 0, %s98
      %s113 = sphi 0, %s99
      %s117 = sphi 0, %s117
      %s119 = sphi 0, %s117
      %s120 = sphi 0, %s119
      %s134 = sphi 0, %s120
      %s138 = sphi 0, %s138
      %s140 = sphi 0, %s138
      %s141 = sphi 0, %s140
      %s155 = sphi 0, %s141
      %s159 = sphi 0, %s159
      %s161 = sphi 0, %s159
      %s162 = sphi 0, %s161
      %s176 = sphi 0, %s162
      %s180 = sphi 0, %s180
      %s182 = sphi 0, %s180
      %s183 = sphi 0, %s182
      %s197 = sphi 0, %s183
      %s201 = sphi 0, %s201
      %s203 = sphi 0, %s201
      %s204 = sphi 0, %s203
      %s218 = sphi 0, %s204
      %s222 = sphi 0, %s222
      %s224 = sphi 0, %s222
      %s225 = sphi 0, %s224
      %s239 = sphi 0, %s225
      %s243 = sphi 0, %s243
      %s245 = sphi 0, %s243
      %s246 = sphi 0, %s245
      %s260 = sphi 0, %s246
      %s264 = sphi 0, %s264
      %s266 = sphi 0, %s264
      %s267 = sphi 0, %s266
      %s281 = sphi 0, %s267
      %s287 = sphi 0, %s289
      %s290 = sphi 0, %s287
      %s291 = sphi 0, %s290
      %s307 = sphi 0, %s291
    $region4: #{csfcn_forward.2} parent=1 // loop_header_branch
      %23 = sbr.rel (%p21) target = $region8
    $region5: #{csfcn_forward.2} parent=1 // loop_body
      %s25 = ssub.s32 %s20, 1
      %s26 = ssub.s32 %s20, 2
      %s27 = sadd.s32 %s20, 1
      %s28 = ssub.s32 %s20, %s27
      %p29 = scmp.eq.s32.totalorder %s28, 0
      %s31 = sadd.s32 %s30, 1
      %s32 = scalar_select %p29, %s30, %s31
      %p35 = pneg %p29
      %p36 = scmp.eq.s32.totalorder %s20, 1
      %p37 = por %p35, %p36
      %p38 = scmp.ne.s32.totalorder %s30, %s33
      %p39 = scmp.eq.s32.totalorder %s20, 0
      %p40 = por %p38, %p39
      %p41 = scmp.ne.s32.totalorder %s30, %s33
      %p42 = scmp.eq.s32.totalorder %s25, 1
      %p43 = por %p41, %p42
      %p44 = scmp.ne.s32.totalorder %s33, %s34
      %p45 = scmp.eq.s32.totalorder %s25, 0
      %p46 = por %p44, %p45
      %p47 = scmp.ne.s32.totalorder %s33, %s34
      %p48 = scmp.eq.s32.totalorder %s26, 1
      %p49 = por %p47, %p48
      %p51 = scmp.ne.s32.totalorder %s34, %s50
      %p52 = scmp.eq.s32.totalorder %s26, 0
      %p53 = por %p51, %p52
      %s55 = sadd.s32 %s54, 1
      %p58 = scmp.eq.s32.totalorder %s20, 1
      %p59 = scmp.ne.s32.totalorder %s54, %s56
      %p60 = scmp.eq.s32.totalorder %s20, 0
      %p61 = por %p59, %p60
      %p62 = scmp.ne.s32.totalorder %s54, %s56
      %p63 = scmp.eq.s32.totalorder %s25, 1
      %p64 = por %p62, %p63
      %p65 = scmp.ne.s32.totalorder %s56, %s57
      %p66 = scmp.eq.s32.totalorder %s25, 0
      %p67 = por %p65, %p66
      %p68 = scmp.ne.s32.totalorder %s56, %s57
      %p69 = scmp.eq.s32.totalorder %s26, 1
      %p70 = por %p68, %p69
      %p72 = scmp.ne.s32.totalorder %s57, %s71
      %p73 = scmp.eq.s32.totalorder %s26, 0
      %p74 = por %p72, %p73
      %s76 = sadd.s32 %s75, 1
      %p79 = scmp.eq.s32.totalorder %s20, 1
      %p80 = scmp.ne.s32.totalorder %s75, %s77
      %p81 = scmp.eq.s32.totalorder %s20, 0
      %p82 = por %p80, %p81
      %p83 = scmp.ne.s32.totalorder %s75, %s77
      %p84 = scmp.eq.s32.totalorder %s25, 1
      %p85 = por %p83, %p84
      %p86 = scmp.ne.s32.totalorder %s77, %s78
      %p87 = scmp.eq.s32.totalorder %s25, 0
      %p88 = por %p86, %p87
      %p89 = scmp.ne.s32.totalorder %s77, %s78
      %p90 = scmp.eq.s32.totalorder %s26, 1
      %p91 = por %p89, %p90
      %p93 = scmp.ne.s32.totalorder %s78, %s92
      %p94 = scmp.eq.s32.totalorder %s26, 0
      %p95 = por %p93, %p94
      %s97 = sadd.s32 %s96, 1
      %p100 = scmp.eq.s32.totalorder %s20, 1
      %p101 = scmp.ne.s32.totalorder %s96, %s98
      %p102 = scmp.eq.s32.totalorder %s20, 0
      %p103 = por %p101, %p102
      %p104 = scmp.ne.s32.totalorder %s96, %s98
      %p105 = scmp.eq.s32.totalorder %s25, 1
      %p106 = por %p104, %p105
      %p107 = scmp.ne.s32.totalorder %s98, %s99
      %p108 = scmp.eq.s32.totalorder %s25, 0
      %p109 = por %p107, %p108
      %p110 = scmp.ne.s32.totalorder %s98, %s99
      %p111 = scmp.eq.s32.totalorder %s26, 1
      %p112 = por %p110, %p111
      %p114 = scmp.ne.s32.totalorder %s99, %s113
      %p115 = scmp.eq.s32.totalorder %s26, 0
      %p116 = por %p114, %p115
      %s118 = sadd.s32 %s117, 1
      %p121 = scmp.eq.s32.totalorder %s20, 1
      %p122 = scmp.ne.s32.totalorder %s117, %s119
      %p123 = scmp.eq.s32.totalorder %s20, 0
      %p124 = por %p122, %p123
      %p125 = scmp.ne.s32.totalorder %s117, %s119
      %p126 = scmp.eq.s32.totalorder %s25, 1
      %p127 = por %p125, %p126
      %p128 = scmp.ne.s32.totalorder %s119, %s120
      %p129 = scmp.eq.s32.totalorder %s25, 0
      %p130 = por %p128, %p129
      %p131 = scmp.ne.s32.totalorder %s119, %s120
      %p132 = scmp.eq.s32.totalorder %s26, 1
      %p133 = por %p131, %p132
      %p135 = scmp.ne.s32.totalorder %s120, %s134
      %p136 = scmp.eq.s32.totalorder %s26, 0
      %p137 = por %p135, %p136
      %s139 = sadd.s32 %s138, 1
      %p142 = scmp.eq.s32.totalorder %s20, 1
      %p143 = scmp.ne.s32.totalorder %s138, %s140
      %p144 = scmp.eq.s32.totalorder %s20, 0
      %p145 = por %p143, %p144
      %p146 = scmp.ne.s32.totalorder %s138, %s140
      %p147 = scmp.eq.s32.totalorder %s25, 1
      %p148 = por %p146, %p147
      %p149 = scmp.ne.s32.totalorder %s140, %s141
      %p150 = scmp.eq.s32.totalorder %s25, 0
      %p151 = por %p149, %p150
      %p152 = scmp.ne.s32.totalorder %s140, %s141
      %p153 = scmp.eq.s32.totalorder %s26, 1
      %p154 = por %p152, %p153
      %p156 = scmp.ne.s32.totalorder %s141, %s155
      %p157 = scmp.eq.s32.totalorder %s26, 0
      %p158 = por %p156, %p157
      %s160 = sadd.s32 %s159, 1
      %p163 = scmp.eq.s32.totalorder %s20, 1
      %p164 = scmp.ne.s32.totalorder %s159, %s161
      %p165 = scmp.eq.s32.totalorder %s20, 0
      %p166 = por %p164, %p165
      %p167 = scmp.ne.s32.totalorder %s159, %s161
      %p168 = scmp.eq.s32.totalorder %s25, 1
      %p169 = por %p167, %p168
      %p170 = scmp.ne.s32.totalorder %s161, %s162
      %p171 = scmp.eq.s32.totalorder %s25, 0
      %p172 = por %p170, %p171
      %p173 = scmp.ne.s32.totalorder %s161, %s162
      %p174 = scmp.eq.s32.totalorder %s26, 1
      %p175 = por %p173, %p174
      %p177 = scmp.ne.s32.totalorder %s162, %s176
      %p178 = scmp.eq.s32.totalorder %s26, 0
      %p179 = por %p177, %p178
      %s181 = sadd.s32 %s180, 1
      %p184 = scmp.eq.s32.totalorder %s20, 1
      %p185 = scmp.ne.s32.totalorder %s180, %s182
      %p186 = scmp.eq.s32.totalorder %s20, 0
      %p187 = por %p185, %p186
      %p188 = scmp.ne.s32.totalorder %s180, %s182
      %p189 = scmp.eq.s32.totalorder %s25, 1
      %p190 = por %p188, %p189
      %p191 = scmp.ne.s32.totalorder %s182, %s183
      %p192 = scmp.eq.s32.totalorder %s25, 0
      %p193 = por %p191, %p192
      %p194 = scmp.ne.s32.totalorder %s182, %s183
      %p195 = scmp.eq.s32.totalorder %s26, 1
      %p196 = por %p194, %p195
      %p198 = scmp.ne.s32.totalorder %s183, %s197
      %p199 = scmp.eq.s32.totalorder %s26, 0
      %p200 = por %p198, %p199
      %s202 = sadd.s32 %s201, 1
      %p205 = scmp.eq.s32.totalorder %s20, 1
      %p206 = scmp.ne.s32.totalorder %s201, %s203
      %p207 = scmp.eq.s32.totalorder %s20, 0
      %p208 = por %p206, %p207
      %p209 = scmp.ne.s32.totalorder %s201, %s203
      %p210 = scmp.eq.s32.totalorder %s25, 1
      %p211 = por %p209, %p210
      %p212 = scmp.ne.s32.totalorder %s203, %s204
      %p213 = scmp.eq.s32.totalorder %s25, 0
      %p214 = por %p212, %p213
      %p215 = scmp.ne.s32.totalorder %s203, %s204
      %p216 = scmp.eq.s32.totalorder %s26, 1
      %p217 = por %p215, %p216
      %p219 = scmp.ne.s32.totalorder %s204, %s218
      %p220 = scmp.eq.s32.totalorder %s26, 0
      %p221 = por %p219, %p220
      %s223 = sadd.s32 %s222, 1
      %p226 = scmp.eq.s32.totalorder %s20, 1
      %p227 = scmp.ne.s32.totalorder %s222, %s224
      %p228 = scmp.eq.s32.totalorder %s20, 0
      %p229 = por %p227, %p228
      %p230 = scmp.ne.s32.totalorder %s222, %s224
      %p231 = scmp.eq.s32.totalorder %s25, 1
      %p232 = por %p230, %p231
      %p233 = scmp.ne.s32.totalorder %s224, %s225
      %p234 = scmp.eq.s32.totalorder %s25, 0
      %p235 = por %p233, %p234
      %p236 = scmp.ne.s32.totalorder %s224, %s225
      %p237 = scmp.eq.s32.totalorder %s26, 1
      %p238 = por %p236, %p237
      %p240 = scmp.ne.s32.totalorder %s225, %s239
      %p241 = scmp.eq.s32.totalorder %s26, 0
      %p242 = por %p240, %p241
      %s244 = sadd.s32 %s243, 1
      %p247 = scmp.eq.s32.totalorder %s20, 1
      %p248 = scmp.ne.s32.totalorder %s243, %s245
      %p249 = scmp.eq.s32.totalorder %s20, 0
      %p250 = por %p248, %p249
      %p251 = scmp.ne.s32.totalorder %s243, %s245
      %p252 = scmp.eq.s32.totalorder %s25, 1
      %p253 = por %p251, %p252
      %p254 = scmp.ne.s32.totalorder %s245, %s246
      %p255 = scmp.eq.s32.totalorder %s25, 0
      %p256 = por %p254, %p255
      %p257 = scmp.ne.s32.totalorder %s245, %s246
      %p258 = scmp.eq.s32.totalorder %s26, 1
      %p259 = por %p257, %p258
      %p261 = scmp.ne.s32.totalorder %s246, %s260
      %p262 = scmp.eq.s32.totalorder %s26, 0
      %p263 = por %p261, %p262
      %s265 = sadd.s32 %s264, 1
      %p268 = scmp.eq.s32.totalorder %s20, 1
      %p269 = scmp.ne.s32.totalorder %s264, %s266
      %p270 = scmp.eq.s32.totalorder %s20, 0
      %p271 = por %p269, %p270
      %p272 = scmp.ne.s32.totalorder %s264, %s266
      %p273 = scmp.eq.s32.totalorder %s25, 1
      %p274 = por %p272, %p273
      %p275 = scmp.ne.s32.totalorder %s266, %s267
      %p276 = scmp.eq.s32.totalorder %s25, 0
      %p277 = por %p275, %p276
      %p278 = scmp.ne.s32.totalorder %s266, %s267
      %p279 = scmp.eq.s32.totalorder %s26, 1
      %p280 = por %p278, %p279
      %p282 = scmp.ne.s32.totalorder %s267, %s281
      %p283 = scmp.eq.s32.totalorder %s26, 0
      %p284 = por %p282, %p283
      %s285 = ssub.s32 %s20, %s27
      %p286 = scmp.eq.s32.totalorder %s285, 0
      %s288 = sadd.s32 %s287, 1
      %s289 = scalar_select %p286, %s287, %s288
      %p292 = pneg %p286
      %p293 = scmp.eq.s32.totalorder %s20, 1
      %p294 = por %p292, %p293
      %p295 = scmp.ne.s32.totalorder %s287, %s290
      %p296 = scmp.eq.s32.totalorder %s20, 0
      %p297 = por %p295, %p296
      %p298 = scmp.ne.s32.totalorder %s287, %s290
      %p299 = scmp.eq.s32.totalorder %s25, 1
      %p300 = por %p298, %p299
      %p301 = scmp.ne.s32.totalorder %s290, %s291
      %p302 = scmp.eq.s32.totalorder %s25, 0
      %p303 = por %p301, %p302
      %p304 = scmp.ne.s32.totalorder %s290, %s291
      %p305 = scmp.eq.s32.totalorder %s26, 1
      %p306 = por %p304, %p305
      %p308 = scmp.ne.s32.totalorder %s291, %s307
      %p309 = scmp.eq.s32.totalorder %s26, 0
      %p310 = por %p308, %p309
      %p311 = scmp.le.s32.totalorder 1, %s20
      %p312 = scmp.lt.s32.totalorder %s20, 3
      %p313 = pnand %p311, %p312
      %p314 = pneg %p313
      // Predicated region
      $region9: #{csfcn_forward.2} parent=5 // pred_check
        _
      $region10: #{csfcn_forward.2} parent=5 // pred_check_branch
        %316 = sbr.rel (%p313) target = $region12
      $region11: #{csfcn_forward.2} parent=5 // pred_region
        %s317 = ssub.s32 %s20, 1
        // Predicated region
        $region13: #{csfcn_forward.2} parent=11 // pred_check
          %p318 = pneg %p67
        $region14: #{csfcn_forward.2} parent=11 // pred_check_branch
          %320 = sbr.rel (%p318) target = $region16
        $region15: #{csfcn_forward.2} parent=11 // pred_region
          _
        $region16: #{csfcn_forward.2} parent=11 // pred_fallthru
          _
        // Predicated region
        $region17: #{csfcn_forward.2} parent=11 // pred_check
          %p321 = pneg %p88
        $region18: #{csfcn_forward.2} parent=11 // pred_check_branch
          %323 = sbr.rel (%p321) target = $region20
        $region19: #{csfcn_forward.2} parent=11 // pred_region
          _
        $region20: #{csfcn_forward.2} parent=11 // pred_fallthru
          _
        // Predicated region
        $region21: #{csfcn_forward.2} parent=11 // pred_check
          %p324 = pneg %p109
        $region22: #{csfcn_forward.2} parent=11 // pred_check_branch
          %326 = sbr.rel (%p324) target = $region24
        $region23: #{csfcn_forward.2} parent=11 // pred_region
          _
        $region24: #{csfcn_forward.2} parent=11 // pred_fallthru
          _
        // Predicated region
        $region25: #{csfcn_forward.2} parent=11 // pred_check
          %p327 = pneg %p130
        $region26: #{csfcn_forward.2} parent=11 // pred_check_branch
          %329 = sbr.rel (%p327) target = $region28
        $region27: #{csfcn_forward.2} parent=11 // pred_region
          %s331 = ssub.s32 256, 256
          %332 = vsyncadd [#allocation5], %s331
          %s333 = sshll.u32 [#allocation4], 4
          %s334 = int_to_ptr.vmem [resolvable:$true] %s333
          %339 = dma.hbm_to_vmem [thread:$0]  %s4, 256, %s334, [#allocation5], 64, 64, 4
        $region28: #{csfcn_forward.2} parent=11 // pred_fallthru
          _
        // Predicated region
        $region29: #{csfcn_forward.2} parent=11 // pred_check
          %p340 = pneg %p151
        $region30: #{csfcn_forward.2} parent=11 // pred_check_branch
          %342 = sbr.rel (%p340) target = $region32
        $region31: #{csfcn_forward.2} parent=11 // pred_region
          _
        $region32: #{csfcn_forward.2} parent=11 // pred_fallthru
          _
        // Predicated region
        $region33: #{csfcn_forward.2} parent=11 // pred_check
          %p343 = pneg %p172
        $region34: #{csfcn_forward.2} parent=11 // pred_check_branch
          %345 = sbr.rel (%p343) target = $region36
        $region35: #{csfcn_forward.2} parent=11 // pred_region
          _
        $region36: #{csfcn_forward.2} parent=11 // pred_fallthru
          _
        // Predicated region
        $region37: #{csfcn_forward.2} parent=11 // pred_check
          %p346 = pneg %p193
        $region38: #{csfcn_forward.2} parent=11 // pred_check_branch
          %348 = sbr.rel (%p346) target = $region40
        $region39: #{csfcn_forward.2} parent=11 // pred_region
          _
        $region40: #{csfcn_forward.2} parent=11 // pred_fallthru
          _
        // Predicated region
        $region41: #{csfcn_forward.2} parent=11 // pred_check
          %p349 = pneg %p214
        $region42: #{csfcn_forward.2} parent=11 // pred_check_branch
          %351 = sbr.rel (%p349) target = $region44
        $region43: #{csfcn_forward.2} parent=11 // pred_region
          _
        $region44: #{csfcn_forward.2} parent=11 // pred_fallthru
          _
        // Predicated region
        $region45: #{csfcn_forward.2} parent=11 // pred_check
          %p352 = pneg %p235
        $region46: #{csfcn_forward.2} parent=11 // pred_check_branch
          %354 = sbr.rel (%p352) target = $region48
        $region47: #{csfcn_forward.2} parent=11 // pred_region
          %s356 = ssub.s32 16, 16
          %357 = vsyncadd [#allocation7], %s356
          %s359 = sshll.u32 [#allocation6], 4
          %s360 = int_to_ptr.vmem [resolvable:$true] %s359
          %362 = dma.hbm_to_vmem [thread:$0]  %s9, 16, %s360, [#allocation7]
        $region48: #{csfcn_forward.2} parent=11 // pred_fallthru
          _
        // Predicated region
        $region49: #{csfcn_forward.2} parent=11 // pred_check
          %p363 = pneg %p256
        $region50: #{csfcn_forward.2} parent=11 // pred_check_branch
          %365 = sbr.rel (%p363) target = $region52
        $region51: #{csfcn_forward.2} parent=11 // pred_region
          _
        $region52: #{csfcn_forward.2} parent=11 // pred_fallthru
          _
        // Predicated region
        $region53: #{csfcn_forward.2} parent=11 // pred_check
          %p366 = pneg %p277
        $region54: #{csfcn_forward.2} parent=11 // pred_check_branch
          %368 = sbr.rel (%p366) target = $region56
        $region55: #{csfcn_forward.2} parent=11 // pred_region
          _
        $region56: #{csfcn_forward.2} parent=11 // pred_fallthru
          _
      $region12: #{csfcn_forward.2} parent=5 // pred_fallthru
        _
      %p369 = scmp.lt.s32.totalorder %s20, 2
      // Predicated region
      $region57: #{csfcn_forward.2} parent=5 // pred_check
        %p370 = pneg %p369
      $region58: #{csfcn_forward.2} parent=5 // pred_check_branch
        %372 = sbr.rel (%p370) target = $region60
      $region59: #{csfcn_forward.2} parent=5 // pred_region
        // Predicated region
        $region61: #{csfcn_forward.2} parent=59 // pred_check
          %p373 = pneg %p40
        $region62: #{csfcn_forward.2} parent=59 // pred_check_branch
          %375 = sbr.rel (%p373) target = $region64
        $region63: #{csfcn_forward.2} parent=59 // pred_region
          %p376 = scmp.lt.s32.totalorder %s20, 1
          %s377 = scalar_select %p376, %s20, 1
          %s378 = smul.addr %s377, 8
          %s379 = smul.addr %s378, 8
          %s380 = scalar_lea.vmem %s0, %s379
        $region64: #{csfcn_forward.2} parent=59 // pred_fallthru
          _
      $region60: #{csfcn_forward.2} parent=5 // pred_fallthru
        _
      %p381 = scmp.le.s32.totalorder 1, %s20
      %p382 = scmp.lt.s32.totalorder %s20, 3
      %p383 = pnand %p381, %p382
      %p384 = pneg %p383
      // Predicated region
      $region65: #{csfcn_forward.2} parent=5 // pred_check
        _
      $region66: #{csfcn_forward.2} parent=5 // pred_check_branch
        %386 = sbr.rel (%p383) target = $region68
      $region67: #{csfcn_forward.2} parent=5 // pred_region
        %s387 = ssub.s32 %s20, 1
        // Predicated region
        $region69: #{csfcn_forward.2} parent=67 // pred_check
          %p388 = pneg %p130
        $region70: #{csfcn_forward.2} parent=67 // pred_check_branch
          %390 = sbr.rel (%p388) target = $region72
        $region71: #{csfcn_forward.2} parent=67 // pred_region
          %391 = dma.done [#allocation5], 256
        $region72: #{csfcn_forward.2} parent=67 // pred_fallthru
          _
        // Predicated region
        $region73: #{csfcn_forward.2} parent=67 // pred_check
          %p392 = pneg %p235
        $region74: #{csfcn_forward.2} parent=67 // pred_check_branch
          %394 = sbr.rel (%p392) target = $region76
        $region75: #{csfcn_forward.2} parent=67 // pred_region
          %395 = dma.done [#allocation7], 16
        $region76: #{csfcn_forward.2} parent=67 // pred_fallthru
          _
        %p396 = scmp.lt.s32.totalorder %s25, 1
        %s397 = scalar_select %p396, %s25, 1
        %s398 = smul.addr %s397, 8
        %s399 = smul.addr %s398, 8
        %s400 = scalar_lea.vmem %s0, %s399
        %p401 = pneg %p46
        %p402 = pneg %p43
        %p403 = pneg %p67
        %p404 = pneg %p64
        %p405 = pneg %p88
        %p406 = pneg %p85
        %p407 = pneg %p109
        %p408 = pneg %p106
        %p409 = pneg %p130
        %p410 = pneg %p127
        %p411 = pneg %p151
        %p412 = pneg %p148
        %p413 = pneg %p172
        %p414 = pneg %p169
        %p415 = pneg %p193
        %p416 = pneg %p190
        %p417 = pneg %p214
        %p418 = pneg %p211
        %p419 = pneg %p235
        %p420 = pneg %p232
        %p421 = pneg %p256
        %p422 = pneg %p253
        %p423 = pneg %p277
        %p424 = pneg %p274
        %p425 = pneg %p303
        %p426 = pneg %p300
        %p427 = scmp.lt.s32.totalorder %s25, 1
        %s428 = scalar_select %p427, %s25, 1
        %s429 = smul.addr %s428, 8
        %s430 = smul.addr %s429, 8
        %s431 = scalar_lea.vmem %s12, %s430
        %p432 = scmp.lt.s32.totalorder %s25, 1
        %s433 = scalar_select %p432, %s25, 1
        %s434 = smul.addr %s433, 8
        %s435 = smul.addr %s434, 8
        %s436 = scalar_lea.vmem %s0, %s435
        %p437 = scmp.lt.s32.totalorder %s25, 1
        %s438 = scalar_select %p437, %s25, 1
        %s439 = smul.addr %s438, 8
        %s440 = smul.addr %s439, 8
        %s441 = scalar_lea.vmem %s12, %s440
        %v443 = vld [vmem:[%s436] sm:$0xff]
        %v444 = vld [vmem:[%s436 + $0x8] sm:$0xff]
        %v445 = vld [vmem:[%s436 + $0x10] sm:$0xff]
        %v446 = vld [vmem:[%s436 + $0x18] sm:$0xff]
        %v447 = vld [vmem:[%s436 + $0x20] sm:$0xff]
        %v448 = vld [vmem:[%s436 + $0x28] sm:$0xff]
        %v449 = vld [vmem:[%s436 + $0x30] sm:$0xff]
        %v450 = vld [vmem:[%s436 + $0x38] sm:$0xff]
        %451 = vxpose.xlu0.b32.start [1/16] %v443, 128
        %452 = vxpose.xlu0.b32.cont [2/16] %v444, 128
        %453 = vxpose.xlu0.b32.cont [3/16] %v445, 128
        %454 = vxpose.xlu0.b32.cont [4/16] %v446, 128
        %455 = vxpose.xlu0.b32.cont [5/16] %v447, 128
        %456 = vxpose.xlu0.b32.cont [6/16] %v448, 128
        %457 = vxpose.xlu0.b32.cont [7/16] %v449, 128
        %458 = vxpose.xlu0.b32.cont [8/16] %v450, 128
        %459 = vxpose.xlu0.b32.cont [9/16] 0.0, 128
        %460 = vxpose.xlu0.b32.cont [10/16] 0.0, 128
        %461 = vxpose.xlu0.b32.cont [11/16] 0.0, 128
        %462 = vxpose.xlu0.b32.cont [12/16] 0.0, 128
        %463 = vxpose.xlu0.b32.cont [13/16] 0.0, 128
        %464 = vxpose.xlu0.b32.cont [14/16] 0.0, 128
        %465 = vxpose.xlu0.b32.cont [15/16] 0.0, 128
        %466 = vxpose.xlu0.b32.end [16/16] 0.0, 128
        %v467 = vpop.trf.xlu0
        %v468 = vpop.trf.xlu0
        %v469 = vpop.trf.xlu0
        %v470 = vpop.trf.xlu0
        %v471 = vpop.trf.xlu0
        %v472 = vpop.trf.xlu0
        %v473 = vpop.trf.xlu0
        %v474 = vpop.trf.xlu0
        %v475 = vpop.trf.xlu0
        %v476 = vpop.trf.xlu0
        %v477 = vpop.trf.xlu0
        %v478 = vpop.trf.xlu0
        %v479 = vpop.trf.xlu0
        %v480 = vpop.trf.xlu0
        %v481 = vpop.trf.xlu0
        %v482 = vpop.trf.xlu0
        %vm483 = vcmask 523264
        %484 = vst.msk [vmem:[#allocation2] sm:$0xff] %vm483, 0.0
        %vm485 = vcmask 517120
        %486 = vst.msk [vmem:[#allocation2 + $0x8] sm:$0x3] %vm485, 0.0
        %s487 = scalar_lea.vmem [#allocation2], 144
        %488 = vst.msk [vmem:[%s487] sm:$0xff] %vm483, 0.0
        %489 = vst.msk [vmem:[%s487 + $0x8] sm:$0x3] %vm485, 0.0
        %v498 = vrot.slane %v467, 7
        %v499 = vrot.slane %v468, 7
        %v500 = vrot.slane %v469, 7
        %v501 = vrot.slane %v470, 7
        %v502 = vrot.slane %v471, 7
        %v503 = vrot.slane %v472, 7
        %v504 = vrot.slane %v473, 7
        %v505 = vrot.slane %v474, 7
        %vm514 = vcmask 1040384
        %v515 = vsel %vm514, 0.0, %v498
        %v516 = vsel %vm514, 0.0, %v499
        %v517 = vsel %vm514, 0.0, %v500
        %v518 = vsel %vm514, 0.0, %v501
        %v519 = vsel %vm514, 0.0, %v502
        %v520 = vsel %vm514, 0.0, %v503
        %v521 = vsel %vm514, 0.0, %v504
        %v522 = vsel %vm514, 0.0, %v505
        %v523 = vsel %vm514, %v498, 0.0
        %v524 = vsel %vm514, %v499, 0.0
        %v525 = vsel %vm514, %v500, 0.0
        %v526 = vsel %vm514, %v501, 0.0
        %v527 = vsel %vm514, %v502, 0.0
        %v528 = vsel %vm514, %v503, 0.0
        %v529 = vsel %vm514, %v504, 0.0
        %v530 = vsel %vm514, %v505, 0.0
        %s531 = scalar_lea.vmem [#allocation2], 16
        %532 = vst.msk [vmem:[%s531] sm:$0xff] %vm483, %v515
        %533 = vst.msk [vmem:[%s531 + $0x8] sm:$0x3] %vm485, %v523
        %534 = vst.msk [vmem:[%s531 + $0x10] sm:$0xff] %vm483, %v516
        %535 = vst.msk [vmem:[%s531 + $0x18] sm:$0x3] %vm485, %v524
        %536 = vst.msk [vmem:[%s531 + $0x20] sm:$0xff] %vm483, %v517
        %537 = vst.msk [vmem:[%s531 + $0x28] sm:$0x3] %vm485, %v525
        %538 = vst.msk [vmem:[%s531 + $0x30] sm:$0xff] %vm483, %v518
        %539 = vst.msk [vmem:[%s531 + $0x38] sm:$0x3] %vm485, %v526
        %540 = vst.msk [vmem:[%s531 + $0x40] sm:$0xff] %vm483, %v519
        %541 = vst.msk [vmem:[%s531 + $0x48] sm:$0x3] %vm485, %v527
        %542 = vst.msk [vmem:[%s531 + $0x50] sm:$0xff] %vm483, %v520
        %543 = vst.msk [vmem:[%s531 + $0x58] sm:$0x3] %vm485, %v528
        %544 = vst.msk [vmem:[%s531 + $0x60] sm:$0xff] %vm483, %v521
        %545 = vst.msk [vmem:[%s531 + $0x68] sm:$0x3] %vm485, %v529
        %546 = vst.msk [vmem:[%s531 + $0x70] sm:$0xff] %vm483, %v522
        %547 = vst.msk [vmem:[%s531 + $0x78] sm:$0x3] %vm485, %v530
        %v548 = vld [vmem:[#allocation2] sm:$0xff]
        %v549 = vld [vmem:[#allocation2 + $0x10] sm:$0xff]
        %v550 = vld [vmem:[#allocation2 + $0x20] sm:$0xff]
        %v551 = vld [vmem:[#allocation2 + $0x30] sm:$0xff]
        %v552 = vld [vmem:[#allocation2 + $0x40] sm:$0xff]
        %v553 = vld [vmem:[#allocation2 + $0x50] sm:$0xff]
        %v554 = vld [vmem:[#allocation2 + $0x60] sm:$0xff]
        %v555 = vld [vmem:[#allocation2 + $0x70] sm:$0xff]
        %v556 = vld [vmem:[#allocation2 + $0x1] sm:$0xff]
        %v557 = vld [vmem:[#allocation2 + $0x11] sm:$0xff]
        %v558 = vld [vmem:[#allocation2 + $0x21] sm:$0xff]
        %v559 = vld [vmem:[#allocation2 + $0x31] sm:$0xff]
        %v560 = vld [vmem:[#allocation2 + $0x41] sm:$0xff]
        %v561 = vld [vmem:[#allocation2 + $0x51] sm:$0xff]
        %v562 = vld [vmem:[#allocation2 + $0x61] sm:$0xff]
        %v563 = vld [vmem:[#allocation2 + $0x71] sm:$0xff]
        %v564 = vld [vmem:[#allocation2 + $0x2] sm:$0xff]
        %v565 = vld [vmem:[#allocation2 + $0x12] sm:$0xff]
        %v566 = vld [vmem:[#allocation2 + $0x22] sm:$0xff]
        %v567 = vld [vmem:[#allocation2 + $0x32] sm:$0xff]
        %v568 = vld [vmem:[#allocation2 + $0x42] sm:$0xff]
        %v569 = vld [vmem:[#allocation2 + $0x52] sm:$0xff]
        %v570 = vld [vmem:[#allocation2 + $0x62] sm:$0xff]
        %v571 = vld [vmem:[#allocation2 + $0x72] sm:$0xff]
        %v572 = vld [vmem:[%s531] sm:$0xff]
        %v573 = vld [vmem:[%s531 + $0x10] sm:$0xff]
        %v574 = vld [vmem:[%s531 + $0x20] sm:$0xff]
        %v575 = vld [vmem:[%s531 + $0x30] sm:$0xff]
        %v576 = vld [vmem:[%s531 + $0x40] sm:$0xff]
        %v577 = vld [vmem:[%s531 + $0x50] sm:$0xff]
        %v578 = vld [vmem:[%s531 + $0x60] sm:$0xff]
        %v579 = vld [vmem:[%s531 + $0x70] sm:$0xff]
        %v580 = vld [vmem:[%s531 + $0x1] sm:$0xff]
        %v581 = vld [vmem:[%s531 + $0x11] sm:$0xff]
        %v582 = vld [vmem:[%s531 + $0x21] sm:$0xff]
        %v583 = vld [vmem:[%s531 + $0x31] sm:$0xff]
        %v584 = vld [vmem:[%s531 + $0x41] sm:$0xff]
        %v585 = vld [vmem:[%s531 + $0x51] sm:$0xff]
        %v586 = vld [vmem:[%s531 + $0x61] sm:$0xff]
        %v587 = vld [vmem:[%s531 + $0x71] sm:$0xff]
        %v588 = vld [vmem:[%s531 + $0x2] sm:$0xff]
        %v589 = vld [vmem:[%s531 + $0x12] sm:$0xff]
        %v590 = vld [vmem:[%s531 + $0x22] sm:$0xff]
        %v591 = vld [vmem:[%s531 + $0x32] sm:$0xff]
        %v592 = vld [vmem:[%s531 + $0x42] sm:$0xff]
        %v593 = vld [vmem:[%s531 + $0x52] sm:$0xff]
        %v594 = vld [vmem:[%s531 + $0x62] sm:$0xff]
        %v595 = vld [vmem:[%s531 + $0x72] sm:$0xff]
        %s596 = scalar_lea.vmem [#allocation2], 32
        %v597 = vld [vmem:[%s596] sm:$0xff]
        %v598 = vld [vmem:[%s596 + $0x10] sm:$0xff]
        %v599 = vld [vmem:[%s596 + $0x20] sm:$0xff]
        %v600 = vld [vmem:[%s596 + $0x30] sm:$0xff]
        %v601 = vld [vmem:[%s596 + $0x40] sm:$0xff]
        %v602 = vld [vmem:[%s596 + $0x50] sm:$0xff]
        %v603 = vld [vmem:[%s596 + $0x60] sm:$0xff]
        %v604 = vld [vmem:[%s596 + $0x70] sm:$0xff]
        %v605 = vld [vmem:[%s596 + $0x1] sm:$0xff]
        %v606 = vld [vmem:[%s596 + $0x11] sm:$0xff]
        %v607 = vld [vmem:[%s596 + $0x21] sm:$0xff]
        %v608 = vld [vmem:[%s596 + $0x31] sm:$0xff]
        %v609 = vld [vmem:[%s596 + $0x41] sm:$0xff]
        %v610 = vld [vmem:[%s596 + $0x51] sm:$0xff]
        %v611 = vld [vmem:[%s596 + $0x61] sm:$0xff]
        %v612 = vld [vmem:[%s596 + $0x71] sm:$0xff]
        %v613 = vld [vmem:[%s596 + $0x2] sm:$0xff]
        %v614 = vld [vmem:[%s596 + $0x12] sm:$0xff]
        %v615 = vld [vmem:[%s596 + $0x22] sm:$0xff]
        %v616 = vld [vmem:[%s596 + $0x32] sm:$0xff]
        %v617 = vld [vmem:[%s596 + $0x42] sm:$0xff]
        %v618 = vld [vmem:[%s596 + $0x52] sm:$0xff]
        %v619 = vld [vmem:[%s596 + $0x62] sm:$0xff]
        %v620 = vld [vmem:[%s596 + $0x72] sm:$0xff]
        %629 = vrot.lane.b32.xlu0 %v556, 64
        %v630 = vpop.permute.xlu0 %629
        %631 = vrot.lane.b32.xlu0 %v557, 64
        %v632 = vpop.permute.xlu0 %631
        %633 = vrot.lane.b32.xlu0 %v558, 64
        %v634 = vpop.permute.xlu0 %633
        %635 = vrot.lane.b32.xlu0 %v559, 64
        %v636 = vpop.permute.xlu0 %635
        %637 = vrot.lane.b32.xlu0 %v560, 64
        %v638 = vpop.permute.xlu0 %637
        %639 = vrot.lane.b32.xlu0 %v561, 64
        %v640 = vpop.permute.xlu0 %639
        %641 = vrot.lane.b32.xlu0 %v562, 64
        %v642 = vpop.permute.xlu0 %641
        %643 = vrot.lane.b32.xlu0 %v563, 64
        %v644 = vpop.permute.xlu0 %643
        %661 = vrot.lane.b32.xlu0 %v572, 64
        %v662 = vpop.permute.xlu0 %661
        %663 = vrot.lane.b32.xlu0 %v573, 64
        %v664 = vpop.permute.xlu0 %663
        %665 = vrot.lane.b32.xlu0 %v574, 64
        %v666 = vpop.permute.xlu0 %665
        %667 = vrot.lane.b32.xlu0 %v575, 64
        %v668 = vpop.permute.xlu0 %667
        %669 = vrot.lane.b32.xlu0 %v576, 64
        %v670 = vpop.permute.xlu0 %669
        %671 = vrot.lane.b32.xlu0 %v577, 64
        %v672 = vpop.permute.xlu0 %671
        %673 = vrot.lane.b32.xlu0 %v578, 64
        %v674 = vpop.permute.xlu0 %673
        %675 = vrot.lane.b32.xlu0 %v579, 64
        %v676 = vpop.permute.xlu0 %675
        %693 = vrot.lane.b32.xlu0 %v588, 64
        %v694 = vpop.permute.xlu0 %693
        %695 = vrot.lane.b32.xlu0 %v589, 64
        %v696 = vpop.permute.xlu0 %695
        %697 = vrot.lane.b32.xlu0 %v590, 64
        %v698 = vpop.permute.xlu0 %697
        %699 = vrot.lane.b32.xlu0 %v591, 64
        %v700 = vpop.permute.xlu0 %699
        %701 = vrot.lane.b32.xlu0 %v592, 64
        %v702 = vpop.permute.xlu0 %701
        %703 = vrot.lane.b32.xlu0 %v593, 64
        %v704 = vpop.permute.xlu0 %703
        %705 = vrot.lane.b32.xlu0 %v594, 64
        %v706 = vpop.permute.xlu0 %705
        %707 = vrot.lane.b32.xlu0 %v595, 64
        %v708 = vpop.permute.xlu0 %707
        %725 = vrot.lane.b32.xlu0 %v605, 64
        %v726 = vpop.permute.xlu0 %725
        %727 = vrot.lane.b32.xlu0 %v606, 64
        %v728 = vpop.permute.xlu0 %727
        %729 = vrot.lane.b32.xlu0 %v607, 64
        %v730 = vpop.permute.xlu0 %729
        %731 = vrot.lane.b32.xlu0 %v608, 64
        %v732 = vpop.permute.xlu0 %731
        %733 = vrot.lane.b32.xlu0 %v609, 64
        %v734 = vpop.permute.xlu0 %733
        %735 = vrot.lane.b32.xlu0 %v610, 64
        %v736 = vpop.permute.xlu0 %735
        %737 = vrot.lane.b32.xlu0 %v611, 64
        %v738 = vpop.permute.xlu0 %737
        %739 = vrot.lane.b32.xlu0 %v612, 64
        %v740 = vpop.permute.xlu0 %739
        %v749 = vsel %vm483, %v548, %v630
        %v750 = vsel %vm483, %v549, %v632
        %v751 = vsel %vm483, %v550, %v634
        %v752 = vsel %vm483, %v551, %v636
        %v753 = vsel %vm483, %v552, %v638
        %v754 = vsel %vm483, %v553, %v640
        %v755 = vsel %vm483, %v554, %v642
        %v756 = vsel %vm483, %v555, %v644
        %v757 = vsel %vm483, %v564, %v662
        %v758 = vsel %vm483, %v565, %v664
        %v759 = vsel %vm483, %v566, %v666
        %v760 = vsel %vm483, %v567, %v668
        %v761 = vsel %vm483, %v568, %v670
        %v762 = vsel %vm483, %v569, %v672
        %v763 = vsel %vm483, %v570, %v674
        %v764 = vsel %vm483, %v571, %v676
        %v765 = vsel %vm483, %v580, %v694
        %v766 = vsel %vm483, %v581, %v696
        %v767 = vsel %vm483, %v582, %v698
        %v768 = vsel %vm483, %v583, %v700
        %v769 = vsel %vm483, %v584, %v702
        %v770 = vsel %vm483, %v585, %v704
        %v771 = vsel %vm483, %v586, %v706
        %v772 = vsel %vm483, %v587, %v708
        %v773 = vsel %vm483, %v597, %v726
        %v774 = vsel %vm483, %v598, %v728
        %v775 = vsel %vm483, %v599, %v730
        %v776 = vsel %vm483, %v600, %v732
        %v777 = vsel %vm483, %v601, %v734
        %v778 = vsel %vm483, %v602, %v736
        %v779 = vsel %vm483, %v603, %v738
        %v780 = vsel %vm483, %v604, %v740
        %v781 = vpack.c.bf16 %v750, %v749
        %v782 = vpack.c.bf16 %v758, %v757
        %v783 = vpack.c.bf16 %v766, %v765
        %v784 = vpack.c.bf16 %v774, %v773
        %v785 = vpack.c.bf16 %v614, %v613
        %v786 = vpack.c.bf16 %v752, %v751
        %v787 = vpack.c.bf16 %v760, %v759
        %v788 = vpack.c.bf16 %v768, %v767
        %v789 = vpack.c.bf16 %v776, %v775
        %v790 = vpack.c.bf16 %v616, %v615
        %v791 = vpack.c.bf16 %v754, %v753
        %v792 = vpack.c.bf16 %v762, %v761
        %v793 = vpack.c.bf16 %v770, %v769
        %v794 = vpack.c.bf16 %v778, %v777
        %v795 = vpack.c.bf16 %v618, %v617
        %v796 = vpack.c.bf16 %v756, %v755
        %v797 = vpack.c.bf16 %v764, %v763
        %v798 = vpack.c.bf16 %v772, %v771
        %v799 = vpack.c.bf16 %v780, %v779
        %v800 = vpack.c.bf16 %v620, %v619
        %v801 = vld [vmem:[%s3] sm:$0xff]
        %v802 = vld [vmem:[%s3 + $0x8] sm:$0xff]
        %v803 = vld [vmem:[%s3 + $0x10] sm:$0xf]
        %v804 = vld [vmem:[%s3 + $0x14] sm:$0xff]
        %v805 = vld [vmem:[%s3 + $0x1c] sm:$0xff]
        %v806 = vld [vmem:[%s3 + $0x24] sm:$0xf]
        %v807 = vld [vmem:[%s3 + $0x28] sm:$0xff]
        %v808 = vld [vmem:[%s3 + $0x30] sm:$0xff]
        %v809 = vld [vmem:[%s3 + $0x38] sm:$0xf]
        %v810 = vld [vmem:[%s3 + $0x3c] sm:$0xff]
        %v811 = vld [vmem:[%s3 + $0x44] sm:$0xff]
        %v812 = vld [vmem:[%s3 + $0x4c] sm:$0xf]
        %v813 = vld [vmem:[%s3 + $0x50] sm:$0xff]
        %v814 = vld [vmem:[%s3 + $0x58] sm:$0xff]
        %v815 = vld [vmem:[%s3 + $0x60] sm:$0xf]
        %v816 = vld [vmem:[%s3 + $0x64] sm:$0xff]
        %v817 = vld [vmem:[%s3 + $0x6c] sm:$0xff]
        %v818 = vld [vmem:[%s3 + $0x74] sm:$0xf]
        %v819 = vld [vmem:[%s3 + $0x78] sm:$0xff]
        %v820 = vld [vmem:[%s3 + $0x80] sm:$0xff]
        %v821 = vld [vmem:[%s3 + $0x88] sm:$0xf]
        %v822 = vld [vmem:[%s3 + $0x8c] sm:$0xff]
        %v823 = vld [vmem:[%s3 + $0x94] sm:$0xff]
        %v824 = vld [vmem:[%s3 + $0x9c] sm:$0xf]
        %v849 = vunpack.c.l.b16 %v801
        %v850 = vunpack.c.h.b16 %v801
        %v851 = vunpack.c.l.b16 %v802
        %v852 = vunpack.c.h.b16 %v802
        %v853 = vunpack.c.l.b16 %v803
        %v854 = vunpack.c.l.b16 %v804
        %v855 = vunpack.c.h.b16 %v804
        %v856 = vunpack.c.l.b16 %v805
        %v857 = vunpack.c.h.b16 %v805
        %v858 = vunpack.c.l.b16 %v806
        %v859 = vunpack.c.l.b16 %v807
        %v860 = vunpack.c.h.b16 %v807
        %v861 = vunpack.c.l.b16 %v808
        %v862 = vunpack.c.h.b16 %v808
        %v863 = vunpack.c.l.b16 %v809
        %v864 = vunpack.c.l.b16 %v810
        %v865 = vunpack.c.h.b16 %v810
        %v866 = vunpack.c.l.b16 %v811
        %v867 = vunpack.c.h.b16 %v811
        %v868 = vunpack.c.l.b16 %v812
        %v869 = vunpack.c.l.b16 %v813
        %v870 = vunpack.c.h.b16 %v813
        %v871 = vunpack.c.l.b16 %v814
        %v872 = vunpack.c.h.b16 %v814
        %v873 = vunpack.c.l.b16 %v815
        %v874 = vunpack.c.l.b16 %v816
        %v875 = vunpack.c.h.b16 %v816
        %v876 = vunpack.c.l.b16 %v817
        %v877 = vunpack.c.h.b16 %v817
        %v878 = vunpack.c.l.b16 %v818
        %v879 = vunpack.c.l.b16 %v819
        %v880 = vunpack.c.h.b16 %v819
        %v881 = vunpack.c.l.b16 %v820
        %v882 = vunpack.c.h.b16 %v820
        %v883 = vunpack.c.l.b16 %v821
        %v884 = vunpack.c.l.b16 %v822
        %v885 = vunpack.c.h.b16 %v822
        %v886 = vunpack.c.l.b16 %v823
        %v887 = vunpack.c.h.b16 %v823
        %v888 = vunpack.c.l.b16 %v824
        %v889 = vpack.c.b16 %v854, %v849
        %v890 = vpack.c.b16 %v855, %v850
        %v891 = vpack.c.b16 %v856, %v851
        %v892 = vpack.c.b16 %v857, %v852
        %v893 = vpack.c.b16 %v858, %v853
        %v894 = vpack.c.b16 %v864, %v859
        %v895 = vpack.c.b16 %v865, %v860
        %v896 = vpack.c.b16 %v866, %v861
        %v897 = vpack.c.b16 %v867, %v862
        %v898 = vpack.c.b16 %v868, %v863
        %v899 = vpack.c.b16 %v874, %v869
        %v900 = vpack.c.b16 %v875, %v870
        %v901 = vpack.c.b16 %v876, %v871
        %v902 = vpack.c.b16 %v877, %v872
        %v903 = vpack.c.b16 %v878, %v873
        %v904 = vpack.c.b16 %v884, %v879
        %v905 = vpack.c.b16 %v885, %v880
        %v906 = vpack.c.b16 %v886, %v881
        %v907 = vpack.c.b16 %v887, %v882
        %v908 = vpack.c.b16 %v888, %v883
        %v926 = vsel %vm483, %v785, 0
        %v929 = vsel %vm483, %v790, 0
        %v932 = vsel %vm483, %v795, 0
        %v935 = vsel %vm483, %v800, 0
        %v938 = vsel %vm483, %v893, 0
        %v941 = vsel %vm483, %v898, 0
        %v944 = vsel %vm483, %v903, 0
        %v947 = vsel %vm483, %v908, 0
        %949 = vmatprep.subr.bf16.mxu0 %v890
        %950 = vmatpush1.bf16.xpose.msra.mxu0 %v889
        %951 = vmatprep.subr.bf16.mxu0 %v895
        %952 = vmatpush1.bf16.xpose.msra.mxu0 %v894
        %953 = vmatprep.subr.bf16.mxu0 %v900
        %954 = vmatpush1.bf16.xpose.msra.mxu0 %v899
        %955 = vmatprep.subr.bf16.mxu0 %v905
        %956 = vmatpush1.bf16.xpose.msra.mxu0 %v904
        %957 = vmatprep.subr.bf16.mxu0 0
        %958 = vmatpush1.bf16.xpose.msra.mxu0 0
        %959 = vmatprep.subr.bf16.mxu0 0
        %960 = vmatpush1.bf16.xpose.msra.mxu0 0
        %961 = vmatprep.subr.bf16.mxu0 0
        %962 = vmatpush1.bf16.xpose.msra.mxu0 0
        %963 = vmatprep.subr.bf16.mxu0 0
        %964 = vmatpush1.bf16.xpose.msra.mxu0 0
        %965 = vmatprep.subr.bf16.mxu0 0
        %966 = vmatpush1.bf16.xpose.msra.mxu0 0
        %967 = vmatprep.subr.bf16.mxu0 0
        %968 = vmatpush1.bf16.xpose.msra.mxu0 0
        %969 = vmatprep.subr.bf16.mxu0 0
        %970 = vmatpush1.bf16.xpose.msra.mxu0 0
        %971 = vmatprep.subr.bf16.mxu0 0
        %972 = vmatpush1.bf16.xpose.msra.mxu0 0
        %973 = vmatprep.subr.bf16.mxu0 0
        %974 = vmatpush1.bf16.xpose.msra.mxu0 0
        %975 = vmatprep.subr.bf16.mxu0 0
        %976 = vmatpush1.bf16.xpose.msra.mxu0 0
        %977 = vmatprep.subr.bf16.mxu0 0
        %978 = vmatpush1.bf16.xpose.msra.mxu0 0
        %979 = vmatprep.subr.bf16.mxu0 0
        %980 = vmatpush1.bf16.xpose.msra.mxu0 0
        %981 = vmatprep.mubr.bf16.mxu0 %v782
        %982 = vmatmul.mubr.bf16.gmra.mrb[0].mxu0 %v781
        %v983 = vpop.f32.mrb[0].mxu0
        %v984 = vadd.f32 0.0, %v983
        %v985 = vpop.f32.mrb[0].mxu0
        %v986 = vpop.f32.mrb[0].mxu0
        %v987 = vadd.f32 0.0, %v986
        %v988 = vpop.f32.mrb[0].mxu0
        %989 = vmatprep.mubr.bf16.mxu0 %v787
        %990 = vmatmul.mubr.bf16.gmra.mrb[0].mxu0 %v786
        %v991 = vpop.f32.mrb[0].mxu0
        %v992 = vadd.f32 0.0, %v991
        %v993 = vpop.f32.mrb[0].mxu0
        %v994 = vpop.f32.mrb[0].mxu0
        %v995 = vadd.f32 0.0, %v994
        %v996 = vpop.f32.mrb[0].mxu0
        %997 = vmatprep.mubr.bf16.mxu0 %v792
        %998 = vmatmul.mubr.bf16.gmra.mrb[0].mxu0 %v791
        %v999 = vpop.f32.mrb[0].mxu0
        %v1000 = vadd.f32 0.0, %v999
        %v1001 = vpop.f32.mrb[0].mxu0
        %v1002 = vpop.f32.mrb[0].mxu0
        %v1003 = vadd.f32 0.0, %v1002
        %v1004 = vpop.f32.mrb[0].mxu0
        %1005 = vmatprep.mubr.bf16.mxu0 %v797
        %1006 = vmatmul.mubr.bf16.gmra.mrb[0].mxu0 %v796
        %v1007 = vpop.f32.mrb[0].mxu0
        %v1008 = vadd.f32 0.0, %v1007
        %v1009 = vpop.f32.mrb[0].mxu0
        %v1010 = vpop.f32.mrb[0].mxu0
        %v1011 = vadd.f32 0.0, %v1010
        %v1012 = vpop.f32.mrb[0].mxu0
        %1013 = vdwg.mxu0
        %1014 = vmatprep.subr.bf16.mxu0 %v892
        %1015 = vmatpush1.bf16.xpose.msra.mxu0 %v891
        %1016 = vmatprep.subr.bf16.mxu0 %v897
        %1017 = vmatpush1.bf16.xpose.msra.mxu0 %v896
        %1018 = vmatprep.subr.bf16.mxu0 %v902
        %1019 = vmatpush1.bf16.xpose.msra.mxu0 %v901
        %1020 = vmatprep.subr.bf16.mxu0 %v907
        %1021 = vmatpush1.bf16.xpose.msra.mxu0 %v906
        %1022 = vmatprep.subr.bf16.mxu0 0
        %1023 = vmatpush1.bf16.xpose.msra.mxu0 0
        %1024 = vmatprep.subr.bf16.mxu0 0
        %1025 = vmatpush1.bf16.xpose.msra.mxu0 0
        %1026 = vmatprep.subr.bf16.mxu0 0
        %1027 = vmatpush1.bf16.xpose.msra.mxu0 0
        %1028 = vmatprep.subr.bf16.mxu0 0
        %1029 = vmatpush1.bf16.xpose.msra.mxu0 0
        %1030 = vmatprep.subr.bf16.mxu0 0
        %1031 = vmatpush1.bf16.xpose.msra.mxu0 0
        %1032 = vmatprep.subr.bf16.mxu0 0
        %1033 = vmatpush1.bf16.xpose.msra.mxu0 0
        %1034 = vmatprep.subr.bf16.mxu0 0
        %1035 = vmatpush1.bf16.xpose.msra.mxu0 0
        %1036 = vmatprep.subr.bf16.mxu0 0
        %1037 = vmatpush1.bf16.xpose.msra.mxu0 0
        %1038 = vmatprep.subr.bf16.mxu0 0
        %1039 = vmatpush1.bf16.xpose.msra.mxu0 0
        %1040 = vmatprep.subr.bf16.mxu0 0
        %1041 = vmatpush1.bf16.xpose.msra.mxu0 0
        %1042 = vmatprep.subr.bf16.mxu0 0
        %1043 = vmatpush1.bf16.xpose.msra.mxu0 0
        %1044 = vmatprep.subr.bf16.mxu0 0
        %1045 = vmatpush1.bf16.xpose.msra.mxu0 0
        %1046 = vmatprep.mubr.bf16.mxu0 %v784
        %1047 = vmatmul.mubr.bf16.gmra.mrb[0].mxu0 %v783
        %v1048 = vpop.f32.mrb[0].mxu0
        %v1049 = vadd.f32 %v984, %v1048
        %v1050 = vpop.f32.mrb[0].mxu0
        %v1051 = vpop.f32.mrb[0].mxu0
        %v1052 = vadd.f32 %v987, %v1051
        %v1053 = vpop.f32.mrb[0].mxu0
        %1054 = vmatprep.mubr.bf16.mxu0 %v789
        %1055 = vmatmul.mubr.bf16.gmra.mrb[0].mxu0 %v788
        %v1056 = vpop.f32.mrb[0].mxu0
        %v1057 = vadd.f32 %v992, %v1056
        %v1058 = vpop.f32.mrb[0].mxu0
        %v1059 = vpop.f32.mrb[0].mxu0
        %v1060 = vadd.f32 %v995, %v1059
        %v1061 = vpop.f32.mrb[0].mxu0
        %1062 = vmatprep.mubr.bf16.mxu0 %v794
        %1063 = vmatmul.mubr.bf16.gmra.mrb[0].mxu0 %v793
        %v1064 = vpop.f32.mrb[0].mxu0
        %v1065 = vadd.f32 %v1000, %v1064
        %v1066 = vpop.f32.mrb[0].mxu0
        %v1067 = vpop.f32.mrb[0].mxu0
        %v1068 = vadd.f32 %v1003, %v1067
        %v1069 = vpop.f32.mrb[0].mxu0
        %1070 = vmatprep.mubr.bf16.mxu0 %v799
        %1071 = vmatmul.mubr.bf16.gmra.mrb[0].mxu0 %v798
        %v1072 = vpop.f32.mrb[0].mxu0
        %v1073 = vadd.f32 %v1008, %v1072
        %v1074 = vpop.f32.mrb[0].mxu0
        %v1075 = vpop.f32.mrb[0].mxu0
        %v1076 = vadd.f32 %v1011, %v1075
        %v1077 = vpop.f32.mrb[0].mxu0
        %1078 = vdwg.mxu0
        %1079 = vmatprep.subr.bf16.mxu0 0
        %1080 = vmatpush1.bf16.xpose.msra.mxu0 %v938
        %1081 = vmatprep.subr.bf16.mxu0 0
        %1082 = vmatpush1.bf16.xpose.msra.mxu0 %v941
        %1083 = vmatprep.subr.bf16.mxu0 0
        %1084 = vmatpush1.bf16.xpose.msra.mxu0 %v944
        %1085 = vmatprep.subr.bf16.mxu0 0
        %1086 = vmatpush1.bf16.xpose.msra.mxu0 %v947
        %1087 = vmatprep.subr.bf16.mxu0 0
        %1088 = vmatpush1.bf16.xpose.msra.mxu0 0
        %1089 = vmatprep.subr.bf16.mxu0 0
        %1090 = vmatpush1.bf16.xpose.msra.mxu0 0
        %1091 = vmatprep.subr.bf16.mxu0 0
        %1092 = vmatpush1.bf16.xpose.msra.mxu0 0
        %1093 = vmatprep.subr.bf16.mxu0 0
        %1094 = vmatpush1.bf16.xpose.msra.mxu0 0
        %1095 = vmatprep.subr.bf16.mxu0 0
        %1096 = vmatpush1.bf16.xpose.msra.mxu0 0
        %1097 = vmatprep.subr.bf16.mxu0 0
        %1098 = vmatpush1.bf16.xpose.msra.mxu0 0
        %1099 = vmatprep.subr.bf16.mxu0 0
        %1100 = vmatpush1.bf16.xpose.msra.mxu0 0
        %1101 = vmatprep.subr.bf16.mxu0 0
        %1102 = vmatpush1.bf16.xpose.msra.mxu0 0
        %1103 = vmatprep.subr.bf16.mxu0 0
        %1104 = vmatpush1.bf16.xpose.msra.mxu0 0
        %1105 = vmatprep.subr.bf16.mxu0 0
        %1106 = vmatpush1.bf16.xpose.msra.mxu0 0
        %1107 = vmatprep.subr.bf16.mxu0 0
        %1108 = vmatpush1.bf16.xpose.msra.mxu0 0
        %1109 = vmatprep.subr.bf16.mxu0 0
        %1110 = vmatpush1.bf16.xpose.msra.mxu0 0
        %1111 = vmatprep.mubr.bf16.mxu0 0
        %1112 = vmatmul.mubr.bf16.gmra.mrb[0].mxu0 %v926
        %v1113 = vpop.f32.mrb[0].mxu0
        %v1114 = vadd.f32 %v1049, %v1113
        %v1115 = vpop.f32.mrb[0].mxu0
        %v1116 = vpop.f32.mrb[0].mxu0
        %v1117 = vadd.f32 %v1052, %v1116
        %v1118 = vpop.f32.mrb[0].mxu0
        %1119 = vmatprep.mubr.bf16.mxu0 0
        %1120 = vmatmul.mubr.bf16.gmra.mrb[0].mxu0 %v929
        %v1121 = vpop.f32.mrb[0].mxu0
        %v1122 = vadd.f32 %v1057, %v1121
        %v1123 = vpop.f32.mrb[0].mxu0
        %v1124 = vpop.f32.mrb[0].mxu0
        %v1125 = vadd.f32 %v1060, %v1124
        %v1126 = vpop.f32.mrb[0].mxu0
        %1127 = vmatprep.mubr.bf16.mxu0 0
        %1128 = vmatmul.mubr.bf16.gmra.mrb[0].mxu0 %v932
        %v1129 = vpop.f32.mrb[0].mxu0
        %v1130 = vadd.f32 %v1065, %v1129
        %v1131 = vpop.f32.mrb[0].mxu0
        %v1132 = vpop.f32.mrb[0].mxu0
        %v1133 = vadd.f32 %v1068, %v1132
        %v1134 = vpop.f32.mrb[0].mxu0
        %1135 = vmatprep.mubr.bf16.mxu0 0
        %1136 = vmatmul.mubr.bf16.gmra.mrb[0].mxu0 %v935
        %v1137 = vpop.f32.mrb[0].mxu0
        %v1138 = vadd.f32 %v1073, %v1137
        %v1139 = vpop.f32.mrb[0].mxu0
        %v1140 = vpop.f32.mrb[0].mxu0
        %v1141 = vadd.f32 %v1076, %v1140
        %v1142 = vpop.f32.mrb[0].mxu0
        %1143 = vdwg.mxu0
        %v1144 = vand.u32 2147483647, %v1114
        %v1145 = vand.u32 2147483647, %v1117
        %v1146 = vand.u32 2147483647, %v1122
        %v1147 = vand.u32 2147483647, %v1125
        %v1148 = vand.u32 2147483647, %v1130
        %v1149 = vand.u32 2147483647, %v1133
        %v1150 = vand.u32 2147483647, %v1138
        %v1151 = vand.u32 2147483647, %v1141
        %v1152 = vsub.f32 0.0, %v1144
        %v1153 = vsub.f32 0.0, %v1145
        %v1154 = vsub.f32 0.0, %v1146
        %v1155 = vsub.f32 0.0, %v1147
        %v1156 = vsub.f32 0.0, %v1148
        %v1157 = vsub.f32 0.0, %v1149
        %v1158 = vsub.f32 0.0, %v1150
        %v1159 = vsub.f32 0.0, %v1151
        %v1160 = vmul.f32 %v1152, 1.442695
        %v1161 = vpow.pop %v1160
        %v1162 = vmul.f32 %v1153, 1.442695
        %v1163 = vpow.pop %v1162
        %v1164 = vmul.f32 %v1154, 1.442695
        %v1165 = vpow.pop %v1164
        %v1166 = vmul.f32 %v1155, 1.442695
        %v1167 = vpow.pop %v1166
        %v1168 = vmul.f32 %v1156, 1.442695
        %v1169 = vpow.pop %v1168
        %v1170 = vmul.f32 %v1157, 1.442695
        %v1171 = vpow.pop %v1170
        %v1172 = vmul.f32 %v1158, 1.442695
        %v1173 = vpow.pop %v1172
        %v1174 = vmul.f32 %v1159, 1.442695
        %v1175 = vpow.pop %v1174
        %v1176 = vadd.f32 %v1161, 1.0
        %v1177 = vadd.f32 %v1163, 1.0
        %v1178 = vadd.f32 %v1165, 1.0
        %v1179 = vadd.f32 %v1167, 1.0
        %v1180 = vadd.f32 %v1169, 1.0
        %v1181 = vadd.f32 %v1171, 1.0
        %v1182 = vadd.f32 %v1173, 1.0
        %v1183 = vadd.f32 %v1175, 1.0
        %v1184 = vrcp.pop %v1176
        %v1185 = vrcp.pop %v1177
        %v1186 = vrcp.pop %v1178
        %v1187 = vrcp.pop %v1179
        %v1188 = vrcp.pop %v1180
        %v1189 = vrcp.pop %v1181
        %v1190 = vrcp.pop %v1182
        %v1191 = vrcp.pop %v1183
        %vm1192 = vcmp.ge.f32.partialorder %v1114, 0.0
        %vm1193 = vcmp.ge.f32.partialorder %v1117, 0.0
        %vm1194 = vcmp.ge.f32.partialorder %v1122, 0.0
        %vm1195 = vcmp.ge.f32.partialorder %v1125, 0.0
        %vm1196 = vcmp.ge.f32.partialorder %v1130, 0.0
        %vm1197 = vcmp.ge.f32.partialorder %v1133, 0.0
        %vm1198 = vcmp.ge.f32.partialorder %v1138, 0.0
        %vm1199 = vcmp.ge.f32.partialorder %v1141, 0.0
        %v1200 = vmul.f32 %v1161, %v1184
        %v1201 = vmul.f32 %v1163, %v1185
        %v1202 = vmul.f32 %v1165, %v1186
        %v1203 = vmul.f32 %v1167, %v1187
        %v1204 = vmul.f32 %v1169, %v1188
        %v1205 = vmul.f32 %v1171, %v1189
        %v1206 = vmul.f32 %v1173, %v1190
        %v1207 = vmul.f32 %v1175, %v1191
        %v1208 = vsel %vm1192, %v1184, %v1200
        %v1209 = vsel %vm1193, %v1185, %v1201
        %v1210 = vsel %vm1194, %v1186, %v1202
        %v1211 = vsel %vm1195, %v1187, %v1203
        %v1212 = vsel %vm1196, %v1188, %v1204
        %v1213 = vsel %vm1197, %v1189, %v1205
        %v1214 = vsel %vm1198, %v1190, %v1206
        %v1215 = vsel %vm1199, %v1191, %v1207
        %v1216 = vmul.f32 %v1114, %v1208
        %v1217 = vmul.f32 %v1117, %v1209
        %v1218 = vmul.f32 %v1122, %v1210
        %v1219 = vmul.f32 %v1125, %v1211
        %v1220 = vmul.f32 %v1130, %v1212
        %v1221 = vmul.f32 %v1133, %v1213
        %v1222 = vmul.f32 %v1138, %v1214
        %v1223 = vmul.f32 %v1141, %v1215
        %v1224 = vpack.c.bf16 %v1217, %v1216
        %v1225 = vpack.c.bf16 %v1219, %v1218
        %v1226 = vpack.c.bf16 %v1221, %v1220
        %v1227 = vpack.c.bf16 %v1223, %v1222
        %v1228 = vld [vmem:[#allocation4] sm:$0xf]
        %v1229 = vld [vmem:[#allocation4 + $0x4] sm:$0xf]
        %v1230 = vld [vmem:[#allocation4 + $0x8] sm:$0xf]
        %v1231 = vld [vmem:[#allocation4 + $0xc] sm:$0xf]
        %v1232 = vld [vmem:[%s5] sm:$0x1]
        %v1234 = vlaneseq
        %v1235 = vshrl.u32 %v1234, 7
        %v1236 = vsub.s32 0, %v1235
        %v1237 = vrot.slane %v1232, %v1236
        %v1243 = vunpack.c.l.b16 %v1228
        %v1244 = vunpack.c.l.b16 %v1229
        %v1245 = vunpack.c.l.b16 %v1230
        %v1246 = vunpack.c.l.b16 %v1231
        %v1247 = vpack.c.b16 %v1244, %v1243
        %v1248 = vpack.c.b16 %v1246, %v1245
        %v1250 = vsel %vm483, %v1224, 0
        %v1253 = vsel %vm483, %v1225, 0
        %v1256 = vsel %vm483, %v1226, 0
        %v1259 = vsel %vm483, %v1227, 0
        %v1262 = vsel %vm483, %v1247, 0
        %v1265 = vsel %vm483, %v1248, 0
        %1267 = vmatprep.subr.bf16.mxu0 0
        %1268 = vmatpush1.bf16.xpose.msra.mxu0 %v1262
        %1269 = vmatprep.subr.bf16.mxu0 0
        %1270 = vmatpush1.bf16.xpose.msra.mxu0 %v1265
        %1271 = vmatprep.subr.bf16.mxu0 0
        %1272 = vmatpush1.bf16.xpose.msra.mxu0 0
        %1273 = vmatprep.subr.bf16.mxu0 0
        %1274 = vmatpush1.bf16.xpose.msra.mxu0 0
        %1275 = vmatprep.subr.bf16.mxu0 0
        %1276 = vmatpush1.bf16.xpose.msra.mxu0 0
        %1277 = vmatprep.subr.bf16.mxu0 0
        %1278 = vmatpush1.bf16.xpose.msra.mxu0 0
        %1279 = vmatprep.subr.bf16.mxu0 0
        %1280 = vmatpush1.bf16.xpose.msra.mxu0 0
        %1281 = vmatprep.subr.bf16.mxu0 0
        %1282 = vmatpush1.bf16.xpose.msra.mxu0 0
        %1283 = vmatprep.subr.bf16.mxu0 0
        %1284 = vmatpush1.bf16.xpose.msra.mxu0 0
        %1285 = vmatprep.subr.bf16.mxu0 0
        %1286 = vmatpush1.bf16.xpose.msra.mxu0 0
        %1287 = vmatprep.subr.bf16.mxu0 0
        %1288 = vmatpush1.bf16.xpose.msra.mxu0 0
        %1289 = vmatprep.subr.bf16.mxu0 0
        %1290 = vmatpush1.bf16.xpose.msra.mxu0 0
        %1291 = vmatprep.subr.bf16.mxu0 0
        %1292 = vmatpush1.bf16.xpose.msra.mxu0 0
        %1293 = vmatprep.subr.bf16.mxu0 0
        %1294 = vmatpush1.bf16.xpose.msra.mxu0 0
        %1295 = vmatprep.subr.bf16.mxu0 0
        %1296 = vmatpush1.bf16.xpose.msra.mxu0 0
        %1297 = vmatprep.subr.bf16.mxu0 0
        %1298 = vmatpush1.bf16.xpose.msra.mxu0 0
        %1299 = vmatprep.mubr.bf16.mxu0 0
        %1300 = vmatmul.mubr.bf16.gmra.mrb[0].mxu0 %v1250
        %v1301 = vpop.f32.mrb[0].mxu0
        %v1302 = vadd.f32 %v1237, %v1301
        %v1303 = vpop.f32.mrb[0].mxu0
        %v1304 = vpop.f32.mrb[0].mxu0
        %v1305 = vadd.f32 %v1237, %v1304
        %v1306 = vpop.f32.mrb[0].mxu0
        %1307 = vmatprep.mubr.bf16.mxu0 0
        %1308 = vmatmul.mubr.bf16.gmra.mrb[0].mxu0 %v1253
        %v1309 = vpop.f32.mrb[0].mxu0
        %v1310 = vadd.f32 %v1237, %v1309
        %v1311 = vpop.f32.mrb[0].mxu0
        %v1312 = vpop.f32.mrb[0].mxu0
        %v1313 = vadd.f32 %v1237, %v1312
        %v1314 = vpop.f32.mrb[0].mxu0
        %1315 = vmatprep.mubr.bf16.mxu0 0
        %1316 = vmatmul.mubr.bf16.gmra.mrb[0].mxu0 %v1256
        %v1317 = vpop.f32.mrb[0].mxu0
        %v1318 = vadd.f32 %v1237, %v1317
        %v1319 = vpop.f32.mrb[0].mxu0
        %v1320 = vpop.f32.mrb[0].mxu0
        %v1321 = vadd.f32 %v1237, %v1320
        %v1322 = vpop.f32.mrb[0].mxu0
        %1323 = vmatprep.mubr.bf16.mxu0 0
        %1324 = vmatmul.mubr.bf16.gmra.mrb[0].mxu0 %v1259
        %v1325 = vpop.f32.mrb[0].mxu0
        %v1326 = vadd.f32 %v1237, %v1325
        %v1327 = vpop.f32.mrb[0].mxu0
        %v1328 = vpop.f32.mrb[0].mxu0
        %v1329 = vadd.f32 %v1237, %v1328
        %v1330 = vpop.f32.mrb[0].mxu0
        %1331 = vdwg.mxu0
        %v1332 = vld [vmem:[%s2] sm:$0xf]
        %v1333 = vld [vmem:[%s2 + $0x4] sm:$0xf]
        %v1334 = vld [vmem:[%s2 + $0x8] sm:$0xf]
        %v1335 = vld [vmem:[%s2 + $0xc] sm:$0xf]
        %v1336 = vld [vmem:[%s2 + $0x10] sm:$0xf]
        %v1337 = vld [vmem:[%s2 + $0x14] sm:$0xf]
        %v1338 = vld [vmem:[%s2 + $0x18] sm:$0xf]
        %v1339 = vld [vmem:[%s2 + $0x1c] sm:$0xf]
        %v1340 = vld [vmem:[%s2 + $0x20] sm:$0xf]
        %v1341 = vld [vmem:[%s2 + $0x24] sm:$0xf]
        %v1342 = vld [vmem:[%s2 + $0x28] sm:$0xf]
        %v1343 = vld [vmem:[%s2 + $0x2c] sm:$0xf]
        %v1344 = vld [vmem:[%s2 + $0x30] sm:$0xf]
        %v1345 = vld [vmem:[%s2 + $0x34] sm:$0xf]
        %v1346 = vld [vmem:[%s2 + $0x38] sm:$0xf]
        %v1347 = vld [vmem:[%s2 + $0x3c] sm:$0xf]
        %v1364 = vunpack.c.l.b16 %v1332
        %v1365 = vunpack.c.l.b16 %v1333
        %v1366 = vunpack.c.l.b16 %v1334
        %v1367 = vunpack.c.l.b16 %v1335
        %v1368 = vunpack.c.l.b16 %v1336
        %v1369 = vunpack.c.l.b16 %v1337
        %v1370 = vunpack.c.l.b16 %v1338
        %v1371 = vunpack.c.l.b16 %v1339
        %v1372 = vunpack.c.l.b16 %v1340
        %v1373 = vunpack.c.l.b16 %v1341
        %v1374 = vunpack.c.l.b16 %v1342
        %v1375 = vunpack.c.l.b16 %v1343
        %v1376 = vunpack.c.l.b16 %v1344
        %v1377 = vunpack.c.l.b16 %v1345
        %v1378 = vunpack.c.l.b16 %v1346
        %v1379 = vunpack.c.l.b16 %v1347
        %v1380 = vpack.c.b16 %v1365, %v1364
        %v1381 = vpack.c.b16 %v1367, %v1366
        %v1382 = vpack.c.b16 %v1369, %v1368
        %v1383 = vpack.c.b16 %v1371, %v1370
        %v1384 = vpack.c.b16 %v1373, %v1372
        %v1385 = vpack.c.b16 %v1375, %v1374
        %v1386 = vpack.c.b16 %v1377, %v1376
        %v1387 = vpack.c.b16 %v1379, %v1378
        %v1389 = vsel %vm483, %v1380, 0
        %v1392 = vsel %vm483, %v1381, 0
        %v1395 = vsel %vm483, %v1382, 0
        %v1398 = vsel %vm483, %v1383, 0
        %v1401 = vsel %vm483, %v1384, 0
        %v1404 = vsel %vm483, %v1385, 0
        %v1407 = vsel %vm483, %v1386, 0
        %v1410 = vsel %vm483, %v1387, 0
        %1412 = vmatprep.subr.bf16.mxu0 0
        %1413 = vmatpush1.bf16.msra.mxu0 %v1224
        %1414 = vmatprep.subr.bf16.mxu0 0
        %1415 = vmatpush1.bf16.msra.mxu0 %v1225
        %1416 = vmatprep.subr.bf16.mxu0 0
        %1417 = vmatpush1.bf16.msra.mxu0 %v1226
        %1418 = vmatprep.subr.bf16.mxu0 0
        %1419 = vmatpush1.bf16.msra.mxu0 %v1227
        %1420 = vmatprep.subr.bf16.mxu0 0
        %1421 = vmatpush1.bf16.msra.mxu0 0
        %1422 = vmatprep.subr.bf16.mxu0 0
        %1423 = vmatpush1.bf16.msra.mxu0 0
        %1424 = vmatprep.subr.bf16.mxu0 0
        %1425 = vmatpush1.bf16.msra.mxu0 0
        %1426 = vmatprep.subr.bf16.mxu0 0
        %1427 = vmatpush1.bf16.msra.mxu0 0
        %1428 = vmatprep.subr.bf16.mxu0 0
        %1429 = vmatpush1.bf16.msra.mxu0 0
        %1430 = vmatprep.subr.bf16.mxu0 0
        %1431 = vmatpush1.bf16.msra.mxu0 0
        %1432 = vmatprep.subr.bf16.mxu0 0
        %1433 = vmatpush1.bf16.msra.mxu0 0
        %1434 = vmatprep.subr.bf16.mxu0 0
        %1435 = vmatpush1.bf16.msra.mxu0 0
        %1436 = vmatprep.subr.bf16.mxu0 0
        %1437 = vmatpush1.bf16.msra.mxu0 0
        %1438 = vmatprep.subr.bf16.mxu0 0
        %1439 = vmatpush1.bf16.msra.mxu0 0
        %1440 = vmatprep.subr.bf16.mxu0 0
        %1441 = vmatpush1.bf16.msra.mxu0 0
        %1442 = vmatprep.subr.bf16.mxu0 0
        %1443 = vmatpush1.bf16.msra.mxu0 0
        %1444 = vmatprep.mubr.bf16.mxu0 0
        %1445 = vmatmul.mubr.bf16.gmra.mrb[0].mxu0 %v1389
        %v1446 = vpop.f32.mrb[0].mxu0
        %v1447 = vadd.f32 0.0, %v1446
        %v1448 = vpop.f32.mrb[0].mxu0
        %v1449 = vpop.f32.mrb[0].mxu0
        %v1450 = vadd.f32 0.0, %v1449
        %v1451 = vpop.f32.mrb[0].mxu0
        %1452 = vmatprep.mubr.bf16.mxu0 0
        %1453 = vmatmul.mubr.bf16.gmra.mrb[0].mxu0 %v1392
        %v1454 = vpop.f32.mrb[0].mxu0
        %v1455 = vadd.f32 0.0, %v1454
        %v1456 = vpop.f32.mrb[0].mxu0
        %v1457 = vpop.f32.mrb[0].mxu0
        %v1458 = vadd.f32 0.0, %v1457
        %v1459 = vpop.f32.mrb[0].mxu0
        %1460 = vmatprep.mubr.bf16.mxu0 0
        %1461 = vmatmul.mubr.bf16.gmra.mrb[0].mxu0 %v1395
        %v1462 = vpop.f32.mrb[0].mxu0
        %v1463 = vadd.f32 0.0, %v1462
        %v1464 = vpop.f32.mrb[0].mxu0
        %v1465 = vpop.f32.mrb[0].mxu0
        %v1466 = vadd.f32 0.0, %v1465
        %v1467 = vpop.f32.mrb[0].mxu0
        %1468 = vmatprep.mubr.bf16.mxu0 0
        %1469 = vmatmul.mubr.bf16.gmra.mrb[0].mxu0 %v1398
        %v1470 = vpop.f32.mrb[0].mxu0
        %v1471 = vadd.f32 0.0, %v1470
        %v1472 = vpop.f32.mrb[0].mxu0
        %v1473 = vpop.f32.mrb[0].mxu0
        %v1474 = vadd.f32 0.0, %v1473
        %v1475 = vpop.f32.mrb[0].mxu0
        %1476 = vmatprep.mubr.bf16.mxu0 0
        %1477 = vmatmul.mubr.bf16.gmra.mrb[0].mxu0 %v1401
        %v1478 = vpop.f32.mrb[0].mxu0
        %v1479 = vadd.f32 0.0, %v1478
        %v1480 = vpop.f32.mrb[0].mxu0
        %v1481 = vpop.f32.mrb[0].mxu0
        %v1482 = vadd.f32 0.0, %v1481
        %v1483 = vpop.f32.mrb[0].mxu0
        %1484 = vmatprep.mubr.bf16.mxu0 0
        %1485 = vmatmul.mubr.bf16.gmra.mrb[0].mxu0 %v1404
        %v1486 = vpop.f32.mrb[0].mxu0
        %v1487 = vadd.f32 0.0, %v1486
        %v1488 = vpop.f32.mrb[0].mxu0
        %v1489 = vpop.f32.mrb[0].mxu0
        %v1490 = vadd.f32 0.0, %v1489
        %v1491 = vpop.f32.mrb[0].mxu0
        %1492 = vmatprep.mubr.bf16.mxu0 0
        %1493 = vmatmul.mubr.bf16.gmra.mrb[0].mxu0 %v1407
        %v1494 = vpop.f32.mrb[0].mxu0
        %v1495 = vadd.f32 0.0, %v1494
        %v1496 = vpop.f32.mrb[0].mxu0
        %v1497 = vpop.f32.mrb[0].mxu0
        %v1498 = vadd.f32 0.0, %v1497
        %v1499 = vpop.f32.mrb[0].mxu0
        %1500 = vmatprep.mubr.bf16.mxu0 0
        %1501 = vmatmul.mubr.bf16.gmra.mrb[0].mxu0 %v1410
        %v1502 = vpop.f32.mrb[0].mxu0
        %v1503 = vadd.f32 0.0, %v1502
        %v1504 = vpop.f32.mrb[0].mxu0
        %v1505 = vpop.f32.mrb[0].mxu0
        %v1506 = vadd.f32 0.0, %v1505
        %v1507 = vpop.f32.mrb[0].mxu0
        %1508 = vdwg.mxu0
        %v1509 = vpack.c.bf16 %v1450, %v1447
        %v1510 = vpack.c.bf16 %v1458, %v1455
        %v1511 = vpack.c.bf16 %v1466, %v1463
        %v1512 = vpack.c.bf16 %v1474, %v1471
        %v1513 = vpack.c.bf16 %v1482, %v1479
        %v1514 = vpack.c.bf16 %v1490, %v1487
        %v1515 = vpack.c.bf16 %v1498, %v1495
        %v1516 = vpack.c.bf16 %v1506, %v1503
        %v1517 = vld [vmem:[%s6] sm:$0xf]
        %v1518 = vld [vmem:[%s6 + $0x4] sm:$0xf]
        %v1519 = vld [vmem:[%s6 + $0x8] sm:$0xf]
        %v1520 = vld [vmem:[%s6 + $0xc] sm:$0xf]
        %v1521 = vld [vmem:[%s7] sm:$0x1]
        %v1523 = vlaneseq
        %v1524 = vshrl.u32 %v1523, 7
        %v1525 = vsub.s32 0, %v1524
        %v1526 = vrot.slane %v1521, %v1525
        %v1532 = vunpack.c.l.b16 %v1517
        %v1533 = vunpack.c.l.b16 %v1518
        %v1534 = vunpack.c.l.b16 %v1519
        %v1535 = vunpack.c.l.b16 %v1520
        %v1536 = vpack.c.b16 %v1533, %v1532
        %v1537 = vpack.c.b16 %v1535, %v1534
        %v1539 = vsel %vm483, %v1509, 0
        %v1542 = vsel %vm483, %v1510, 0
        %v1545 = vsel %vm483, %v1511, 0
        %v1548 = vsel %vm483, %v1512, 0
        %v1551 = vsel %vm483, %v1513, 0
        %v1554 = vsel %vm483, %v1514, 0
        %v1557 = vsel %vm483, %v1515, 0
        %v1560 = vsel %vm483, %v1516, 0
        %v1563 = vsel %vm483, %v1536, 0
        %v1566 = vsel %vm483, %v1537, 0
        %1568 = vmatprep.subr.bf16.mxu0 0
        %1569 = vmatpush1.bf16.xpose.msra.mxu0 %v1563
        %1570 = vmatprep.subr.bf16.mxu0 0
        %1571 = vmatpush1.bf16.xpose.msra.mxu0 %v1566
        %1572 = vmatprep.subr.bf16.mxu0 0
        %1573 = vmatpush1.bf16.xpose.msra.mxu0 0
        %1574 = vmatprep.subr.bf16.mxu0 0
        %1575 = vmatpush1.bf16.xpose.msra.mxu0 0
        %1576 = vmatprep.subr.bf16.mxu0 0
        %1577 = vmatpush1.bf16.xpose.msra.mxu0 0
        %1578 = vmatprep.subr.bf16.mxu0 0
        %1579 = vmatpush1.bf16.xpose.msra.mxu0 0
        %1580 = vmatprep.subr.bf16.mxu0 0
        %1581 = vmatpush1.bf16.xpose.msra.mxu0 0
        %1582 = vmatprep.subr.bf16.mxu0 0
        %1583 = vmatpush1.bf16.xpose.msra.mxu0 0
        %1584 = vmatprep.subr.bf16.mxu0 0
        %1585 = vmatpush1.bf16.xpose.msra.mxu0 0
        %1586 = vmatprep.subr.bf16.mxu0 0
        %1587 = vmatpush1.bf16.xpose.msra.mxu0 0
        %1588 = vmatprep.subr.bf16.mxu0 0
        %1589 = vmatpush1.bf16.xpose.msra.mxu0 0
        %1590 = vmatprep.subr.bf16.mxu0 0
        %1591 = vmatpush1.bf16.xpose.msra.mxu0 0
        %1592 = vmatprep.subr.bf16.mxu0 0
        %1593 = vmatpush1.bf16.xpose.msra.mxu0 0
        %1594 = vmatprep.subr.bf16.mxu0 0
        %1595 = vmatpush1.bf16.xpose.msra.mxu0 0
        %1596 = vmatprep.subr.bf16.mxu0 0
        %1597 = vmatpush1.bf16.xpose.msra.mxu0 0
        %1598 = vmatprep.subr.bf16.mxu0 0
        %1599 = vmatpush1.bf16.xpose.msra.mxu0 0
        %1600 = vmatprep.mubr.bf16.mxu0 0
        %1601 = vmatmul.mubr.bf16.gmra.mrb[0].mxu0 %v1539
        %v1602 = vpop.f32.mrb[0].mxu0
        %v1603 = vadd.f32 %v1526, %v1602
        %v1604 = vpop.f32.mrb[0].mxu0
        %v1605 = vpop.f32.mrb[0].mxu0
        %v1606 = vadd.f32 %v1526, %v1605
        %v1607 = vpop.f32.mrb[0].mxu0
        %1608 = vmatprep.mubr.bf16.mxu0 0
        %1609 = vmatmul.mubr.bf16.gmra.mrb[0].mxu0 %v1542
        %v1610 = vpop.f32.mrb[0].mxu0
        %v1611 = vadd.f32 %v1526, %v1610
        %v1612 = vpop.f32.mrb[0].mxu0
        %v1613 = vpop.f32.mrb[0].mxu0
        %v1614 = vadd.f32 %v1526, %v1613
        %v1615 = vpop.f32.mrb[0].mxu0
        %1616 = vmatprep.mubr.bf16.mxu0 0
        %1617 = vmatmul.mubr.bf16.gmra.mrb[0].mxu0 %v1545
        %v1618 = vpop.f32.mrb[0].mxu0
        %v1619 = vadd.f32 %v1526, %v1618
        %v1620 = vpop.f32.mrb[0].mxu0
        %v1621 = vpop.f32.mrb[0].mxu0
        %v1622 = vadd.f32 %v1526, %v1621
        %v1623 = vpop.f32.mrb[0].mxu0
        %1624 = vmatprep.mubr.bf16.mxu0 0
        %1625 = vmatmul.mubr.bf16.gmra.mrb[0].mxu0 %v1548
        %v1626 = vpop.f32.mrb[0].mxu0
        %v1627 = vadd.f32 %v1526, %v1626
        %v1628 = vpop.f32.mrb[0].mxu0
        %v1629 = vpop.f32.mrb[0].mxu0
        %v1630 = vadd.f32 %v1526, %v1629
        %v1631 = vpop.f32.mrb[0].mxu0
        %1632 = vmatprep.mubr.bf16.mxu0 0
        %1633 = vmatmul.mubr.bf16.gmra.mrb[0].mxu0 %v1551
        %v1634 = vpop.f32.mrb[0].mxu0
        %v1635 = vadd.f32 %v1526, %v1634
        %v1636 = vpop.f32.mrb[0].mxu0
        %v1637 = vpop.f32.mrb[0].mxu0
        %v1638 = vadd.f32 %v1526, %v1637
        %v1639 = vpop.f32.mrb[0].mxu0
        %1640 = vmatprep.mubr.bf16.mxu0 0
        %1641 = vmatmul.mubr.bf16.gmra.mrb[0].mxu0 %v1554
        %v1642 = vpop.f32.mrb[0].mxu0
        %v1643 = vadd.f32 %v1526, %v1642
        %v1644 = vpop.f32.mrb[0].mxu0
        %v1645 = vpop.f32.mrb[0].mxu0
        %v1646 = vadd.f32 %v1526, %v1645
        %v1647 = vpop.f32.mrb[0].mxu0
        %1648 = vmatprep.mubr.bf16.mxu0 0
        %1649 = vmatmul.mubr.bf16.gmra.mrb[0].mxu0 %v1557
        %v1650 = vpop.f32.mrb[0].mxu0
        %v1651 = vadd.f32 %v1526, %v1650
        %v1652 = vpop.f32.mrb[0].mxu0
        %v1653 = vpop.f32.mrb[0].mxu0
        %v1654 = vadd.f32 %v1526, %v1653
        %v1655 = vpop.f32.mrb[0].mxu0
        %1656 = vmatprep.mubr.bf16.mxu0 0
        %1657 = vmatmul.mubr.bf16.gmra.mrb[0].mxu0 %v1560
        %v1658 = vpop.f32.mrb[0].mxu0
        %v1659 = vadd.f32 %v1526, %v1658
        %v1660 = vpop.f32.mrb[0].mxu0
        %v1661 = vpop.f32.mrb[0].mxu0
        %v1662 = vadd.f32 %v1526, %v1661
        %v1663 = vpop.f32.mrb[0].mxu0
        %1664 = vdwg.mxu0
        %v1665 = vld [vmem:[%s8] sm:$0xf]
        %v1666 = vld [vmem:[%s8 + $0x4] sm:$0xf]
        %v1667 = vld [vmem:[%s8 + $0x8] sm:$0xf]
        %v1668 = vld [vmem:[%s8 + $0xc] sm:$0xf]
        %v1669 = vld [vmem:[%s8 + $0x10] sm:$0xf]
        %v1670 = vld [vmem:[%s8 + $0x14] sm:$0xf]
        %v1671 = vld [vmem:[%s8 + $0x18] sm:$0xf]
        %v1672 = vld [vmem:[%s8 + $0x1c] sm:$0xf]
        %v1673 = vld [vmem:[#allocation6] sm:$0x1]
        %v1675 = vlaneseq
        %v1676 = vshrl.u32 %v1675, 7
        %v1677 = vsub.s32 0, %v1676
        %v1678 = vrot.slane %v1673, %v1677
        %v1688 = vunpack.c.l.b16 %v1665
        %v1689 = vunpack.c.l.b16 %v1666
        %v1690 = vunpack.c.l.b16 %v1667
        %v1691 = vunpack.c.l.b16 %v1668
        %v1692 = vunpack.c.l.b16 %v1669
        %v1693 = vunpack.c.l.b16 %v1670
        %v1694 = vunpack.c.l.b16 %v1671
        %v1695 = vunpack.c.l.b16 %v1672
        %v1696 = vpack.c.b16 %v1689, %v1688
        %v1697 = vpack.c.b16 %v1691, %v1690
        %v1698 = vpack.c.b16 %v1693, %v1692
        %v1699 = vpack.c.b16 %v1695, %v1694
        %v1701 = vsel %vm483, %v1696, 0
        %v1704 = vsel %vm483, %v1697, 0
        %v1707 = vsel %vm483, %v1698, 0
        %v1710 = vsel %vm483, %v1699, 0
        %1712 = vmatprep.subr.bf16.mxu0 0
        %1713 = vmatpush1.bf16.xpose.msra.mxu0 %v1701
        %1714 = vmatprep.subr.bf16.mxu0 0
        %1715 = vmatpush1.bf16.xpose.msra.mxu0 %v1704
        %1716 = vmatprep.subr.bf16.mxu0 0
        %1717 = vmatpush1.bf16.xpose.msra.mxu0 %v1707
        %1718 = vmatprep.subr.bf16.mxu0 0
        %1719 = vmatpush1.bf16.xpose.msra.mxu0 %v1710
        %1720 = vmatprep.subr.bf16.mxu0 0
        %1721 = vmatpush1.bf16.xpose.msra.mxu0 0
        %1722 = vmatprep.subr.bf16.mxu0 0
        %1723 = vmatpush1.bf16.xpose.msra.mxu0 0
        %1724 = vmatprep.subr.bf16.mxu0 0
        %1725 = vmatpush1.bf16.xpose.msra.mxu0 0
        %1726 = vmatprep.subr.bf16.mxu0 0
        %1727 = vmatpush1.bf16.xpose.msra.mxu0 0
        %1728 = vmatprep.subr.bf16.mxu0 0
        %1729 = vmatpush1.bf16.xpose.msra.mxu0 0
        %1730 = vmatprep.subr.bf16.mxu0 0
        %1731 = vmatpush1.bf16.xpose.msra.mxu0 0
        %1732 = vmatprep.subr.bf16.mxu0 0
        %1733 = vmatpush1.bf16.xpose.msra.mxu0 0
        %1734 = vmatprep.subr.bf16.mxu0 0
        %1735 = vmatpush1.bf16.xpose.msra.mxu0 0
        %1736 = vmatprep.subr.bf16.mxu0 0
        %1737 = vmatpush1.bf16.xpose.msra.mxu0 0
        %1738 = vmatprep.subr.bf16.mxu0 0
        %1739 = vmatpush1.bf16.xpose.msra.mxu0 0
        %1740 = vmatprep.subr.bf16.mxu0 0
        %1741 = vmatpush1.bf16.xpose.msra.mxu0 0
        %1742 = vmatprep.subr.bf16.mxu0 0
        %1743 = vmatpush1.bf16.xpose.msra.mxu0 0
        %1744 = vmatprep.mubr.bf16.mxu0 0
        %1745 = vmatmul.mubr.bf16.gmra.mrb[0].mxu0 %v1539
        %v1746 = vpop.f32.mrb[0].mxu0
        %v1747 = vadd.f32 %v1678, %v1746
        %v1748 = vpop.f32.mrb[0].mxu0
        %v1749 = vpop.f32.mrb[0].mxu0
        %v1750 = vadd.f32 %v1678, %v1749
        %v1751 = vpop.f32.mrb[0].mxu0
        %1752 = vmatprep.mubr.bf16.mxu0 0
        %1753 = vmatmul.mubr.bf16.gmra.mrb[0].mxu0 %v1542
        %v1754 = vpop.f32.mrb[0].mxu0
        %v1755 = vadd.f32 %v1678, %v1754
        %v1756 = vpop.f32.mrb[0].mxu0
        %v1757 = vpop.f32.mrb[0].mxu0
        %v1758 = vadd.f32 %v1678, %v1757
        %v1759 = vpop.f32.mrb[0].mxu0
        %1760 = vmatprep.mubr.bf16.mxu0 0
        %1761 = vmatmul.mubr.bf16.gmra.mrb[0].mxu0 %v1545
        %v1762 = vpop.f32.mrb[0].mxu0
        %v1763 = vadd.f32 %v1678, %v1762
        %v1764 = vpop.f32.mrb[0].mxu0
        %v1765 = vpop.f32.mrb[0].mxu0
        %v1766 = vadd.f32 %v1678, %v1765
        %v1767 = vpop.f32.mrb[0].mxu0
        %1768 = vmatprep.mubr.bf16.mxu0 0
        %1769 = vmatmul.mubr.bf16.gmra.mrb[0].mxu0 %v1548
        %v1770 = vpop.f32.mrb[0].mxu0
        %v1771 = vadd.f32 %v1678, %v1770
        %v1772 = vpop.f32.mrb[0].mxu0
        %v1773 = vpop.f32.mrb[0].mxu0
        %v1774 = vadd.f32 %v1678, %v1773
        %v1775 = vpop.f32.mrb[0].mxu0
        %1776 = vmatprep.mubr.bf16.mxu0 0
        %1777 = vmatmul.mubr.bf16.gmra.mrb[0].mxu0 %v1551
        %v1778 = vpop.f32.mrb[0].mxu0
        %v1779 = vadd.f32 %v1678, %v1778
        %v1780 = vpop.f32.mrb[0].mxu0
        %v1781 = vpop.f32.mrb[0].mxu0
        %v1782 = vadd.f32 %v1678, %v1781
        %v1783 = vpop.f32.mrb[0].mxu0
        %1784 = vmatprep.mubr.bf16.mxu0 0
        %1785 = vmatmul.mubr.bf16.gmra.mrb[0].mxu0 %v1554
        %v1786 = vpop.f32.mrb[0].mxu0
        %v1787 = vadd.f32 %v1678, %v1786
        %v1788 = vpop.f32.mrb[0].mxu0
        %v1789 = vpop.f32.mrb[0].mxu0
        %v1790 = vadd.f32 %v1678, %v1789
        %v1791 = vpop.f32.mrb[0].mxu0
        %1792 = vmatprep.mubr.bf16.mxu0 0
        %1793 = vmatmul.mubr.bf16.gmra.mrb[0].mxu0 %v1557
        %v1794 = vpop.f32.mrb[0].mxu0
        %v1795 = vadd.f32 %v1678, %v1794
        %v1796 = vpop.f32.mrb[0].mxu0
        %v1797 = vpop.f32.mrb[0].mxu0
        %v1798 = vadd.f32 %v1678, %v1797
        %v1799 = vpop.f32.mrb[0].mxu0
        %1800 = vmatprep.mubr.bf16.mxu0 0
        %1801 = vmatmul.mubr.bf16.gmra.mrb[0].mxu0 %v1560
        %v1802 = vpop.f32.mrb[0].mxu0
        %v1803 = vadd.f32 %v1678, %v1802
        %v1804 = vpop.f32.mrb[0].mxu0
        %v1805 = vpop.f32.mrb[0].mxu0
        %v1806 = vadd.f32 %v1678, %v1805
        %v1807 = vpop.f32.mrb[0].mxu0
        %1808 = vdwg.mxu0
        %v1809 = vpack.c.bf16 %v1305, %v1302
        %v1810 = vpack.c.bf16 %v1313, %v1310
        %v1811 = vpack.c.bf16 %v1321, %v1318
        %v1812 = vpack.c.bf16 %v1329, %v1326
        %v1813 = vpack.c.bf16 %v1606, %v1603
        %v1814 = vpack.c.bf16 %v1614, %v1611
        %v1815 = vpack.c.bf16 %v1622, %v1619
        %v1816 = vpack.c.bf16 %v1630, %v1627
        %v1817 = vpack.c.bf16 %v1638, %v1635
        %v1818 = vpack.c.bf16 %v1646, %v1643
        %v1819 = vpack.c.bf16 %v1654, %v1651
        %v1820 = vpack.c.bf16 %v1662, %v1659
        %v1821 = vld [vmem:[%s1] sm:$0x1]
        %v1823 = vlaneseq
        %v1824 = vshrl.u32 %v1823, 7
        %v1825 = vsub.s32 0, %v1824
        %v1826 = vrot.slane %v1821, %v1825
        %vm1828 = vcmask 261120
        %v1830 = vsel %vm1828, %v1809, 0
        %v1833 = vsel %vm1828, %v1810, 0
        %v1836 = vsel %vm1828, %v1811, 0
        %v1839 = vsel %vm1828, %v1812, 0
        %v1842 = vsel %vm1828, %v1813, 0
        %v1845 = vsel %vm1828, %v1814, 0
        %v1848 = vsel %vm1828, %v1815, 0
        %v1851 = vsel %vm1828, %v1816, 0
        %v1854 = vsel %vm1828, %v1817, 0
        %v1857 = vsel %vm1828, %v1818, 0
        %v1860 = vsel %vm1828, %v1819, 0
        %v1863 = vsel %vm1828, %v1820, 0
        %1865 = vmatprep.subr.bf16.mxu0 0
        %1866 = vmatpush1.bf16.xpose.msra.mxu0 %v1842
        %1867 = vmatprep.subr.bf16.mxu0 0
        %1868 = vmatpush1.bf16.xpose.msra.mxu0 %v1845
        %1869 = vmatprep.subr.bf16.mxu0 0
        %1870 = vmatpush1.bf16.xpose.msra.mxu0 %v1848
        %1871 = vmatprep.subr.bf16.mxu0 0
        %1872 = vmatpush1.bf16.xpose.msra.mxu0 %v1851
        %1873 = vmatprep.subr.bf16.mxu0 0
        %1874 = vmatpush1.bf16.xpose.msra.mxu0 %v1854
        %1875 = vmatprep.subr.bf16.mxu0 0
        %1876 = vmatpush1.bf16.xpose.msra.mxu0 %v1857
        %1877 = vmatprep.subr.bf16.mxu0 0
        %1878 = vmatpush1.bf16.xpose.msra.mxu0 %v1860
        %1879 = vmatprep.subr.bf16.mxu0 0
        %1880 = vmatpush1.bf16.xpose.msra.mxu0 %v1863
        %1881 = vmatprep.subr.bf16.mxu0 0
        %1882 = vmatpush1.bf16.xpose.msra.mxu0 0
        %1883 = vmatprep.subr.bf16.mxu0 0
        %1884 = vmatpush1.bf16.xpose.msra.mxu0 0
        %1885 = vmatprep.subr.bf16.mxu0 0
        %1886 = vmatpush1.bf16.xpose.msra.mxu0 0
        %1887 = vmatprep.subr.bf16.mxu0 0
        %1888 = vmatpush1.bf16.xpose.msra.mxu0 0
        %1889 = vmatprep.subr.bf16.mxu0 0
        %1890 = vmatpush1.bf16.xpose.msra.mxu0 0
        %1891 = vmatprep.subr.bf16.mxu0 0
        %1892 = vmatpush1.bf16.xpose.msra.mxu0 0
        %1893 = vmatprep.subr.bf16.mxu0 0
        %1894 = vmatpush1.bf16.xpose.msra.mxu0 0
        %1895 = vmatprep.subr.bf16.mxu0 0
        %1896 = vmatpush1.bf16.xpose.msra.mxu0 0
        %1897 = vmatprep.mubr.bf16.mxu0 0
        %1898 = vmatmul.mubr.bf16.gmra.mrb[0].mxu0 %v1830
        %v1899 = vpop.f32.mrb[0].mxu0
        %v1900 = vadd.f32 %v1826, %v1899
        %v1901 = vpop.f32.mrb[0].mxu0
        %v1902 = vpop.f32.mrb[0].mxu0
        %v1903 = vadd.f32 %v1826, %v1902
        %v1904 = vpop.f32.mrb[0].mxu0
        %1905 = vmatprep.mubr.bf16.mxu0 0
        %1906 = vmatmul.mubr.bf16.gmra.mrb[0].mxu0 %v1833
        %v1907 = vpop.f32.mrb[0].mxu0
        %v1908 = vadd.f32 %v1826, %v1907
        %v1909 = vpop.f32.mrb[0].mxu0
        %v1910 = vpop.f32.mrb[0].mxu0
        %v1911 = vadd.f32 %v1826, %v1910
        %v1912 = vpop.f32.mrb[0].mxu0
        %1913 = vmatprep.mubr.bf16.mxu0 0
        %1914 = vmatmul.mubr.bf16.gmra.mrb[0].mxu0 %v1836
        %v1915 = vpop.f32.mrb[0].mxu0
        %v1916 = vadd.f32 %v1826, %v1915
        %v1917 = vpop.f32.mrb[0].mxu0
        %v1918 = vpop.f32.mrb[0].mxu0
        %v1919 = vadd.f32 %v1826, %v1918
        %v1920 = vpop.f32.mrb[0].mxu0
        %1921 = vmatprep.mubr.bf16.mxu0 0
        %1922 = vmatmul.mubr.bf16.gmra.mrb[0].mxu0 %v1839
        %v1923 = vpop.f32.mrb[0].mxu0
        %v1924 = vadd.f32 %v1826, %v1923
        %v1925 = vpop.f32.mrb[0].mxu0
        %v1926 = vpop.f32.mrb[0].mxu0
        %v1927 = vadd.f32 %v1826, %v1926
        %v1928 = vpop.f32.mrb[0].mxu0
        %1929 = vdwg.mxu0
        %1930 = vmax.xlane.f32.xlu0 %v1900
        %v1931 = vpop.xlane.xlu0 %1930
        %1932 = vmax.xlane.f32.xlu0 %v1903
        %v1933 = vpop.xlane.xlu0 %1932
        %1934 = vmax.xlane.f32.xlu0 %v1908
        %v1935 = vpop.xlane.xlu0 %1934
        %1936 = vmax.xlane.f32.xlu0 %v1911
        %v1937 = vpop.xlane.xlu0 %1936
        %1938 = vmax.xlane.f32.xlu0 %v1916
        %v1939 = vpop.xlane.xlu0 %1938
        %1940 = vmax.xlane.f32.xlu0 %v1919
        %v1941 = vpop.xlane.xlu0 %1940
        %1942 = vmax.xlane.f32.xlu0 %v1924
        %v1943 = vpop.xlane.xlu0 %1942
        %1944 = vmax.xlane.f32.xlu0 %v1927
        %v1945 = vpop.xlane.xlu0 %1944
        %v1946 = vsub.f32 %v1900, %v1931
        %v1947 = vsub.f32 %v1903, %v1933
        %v1948 = vsub.f32 %v1908, %v1935
        %v1949 = vsub.f32 %v1911, %v1937
        %v1950 = vsub.f32 %v1916, %v1939
        %v1951 = vsub.f32 %v1919, %v1941
        %v1952 = vsub.f32 %v1924, %v1943
        %v1953 = vsub.f32 %v1927, %v1945
        %v1954 = vmul.f32 %v1946, 1.442695
        %v1955 = vpow.pop %v1954
        %v1956 = vmul.f32 %v1947, 1.442695
        %v1957 = vpow.pop %v1956
        %v1958 = vmul.f32 %v1948, 1.442695
        %v1959 = vpow.pop %v1958
        %v1960 = vmul.f32 %v1949, 1.442695
        %v1961 = vpow.pop %v1960
        %v1962 = vmul.f32 %v1950, 1.442695
        %v1963 = vpow.pop %v1962
        %v1964 = vmul.f32 %v1951, 1.442695
        %v1965 = vpow.pop %v1964
        %v1966 = vmul.f32 %v1952, 1.442695
        %v1967 = vpow.pop %v1966
        %v1968 = vmul.f32 %v1953, 1.442695
        %v1969 = vpow.pop %v1968
        %1970 = vadd.xlane.f32.xlu0 %v1955
        %v1971 = vpop.xlane.xlu0 %1970
        %1972 = vadd.xlane.f32.xlu0 %v1957
        %v1973 = vpop.xlane.xlu0 %1972
        %1974 = vadd.xlane.f32.xlu0 %v1959
        %v1975 = vpop.xlane.xlu0 %1974
        %1976 = vadd.xlane.f32.xlu0 %v1961
        %v1977 = vpop.xlane.xlu0 %1976
        %1978 = vadd.xlane.f32.xlu0 %v1963
        %v1979 = vpop.xlane.xlu0 %1978
        %1980 = vadd.xlane.f32.xlu0 %v1965
        %v1981 = vpop.xlane.xlu0 %1980
        %1982 = vadd.xlane.f32.xlu0 %v1967
        %v1983 = vpop.xlane.xlu0 %1982
        %1984 = vadd.xlane.f32.xlu0 %v1969
        %v1985 = vpop.xlane.xlu0 %1984
        %v1986 = vrcp.pop %v1971
        %v1987 = vrcp.pop %v1973
        %v1988 = vrcp.pop %v1975
        %v1989 = vrcp.pop %v1977
        %v1990 = vrcp.pop %v1979
        %v1991 = vrcp.pop %v1981
        %v1992 = vrcp.pop %v1983
        %v1993 = vrcp.pop %v1985
        %v1994 = vmul.f32 %v1955, %v1986
        %v1995 = vmul.f32 %v1957, %v1987
        %v1996 = vmul.f32 %v1959, %v1988
        %v1997 = vmul.f32 %v1961, %v1989
        %v1998 = vmul.f32 %v1963, %v1990
        %v1999 = vmul.f32 %v1965, %v1991
        %v2000 = vmul.f32 %v1967, %v1992
        %v2001 = vmul.f32 %v1969, %v1993
        %v2002 = vpack.c.bf16 %v1995, %v1994
        %v2003 = vpack.c.bf16 %v1997, %v1996
        %v2004 = vpack.c.bf16 %v1999, %v1998
        %v2005 = vpack.c.bf16 %v2001, %v2000
        %v2006 = vpack.c.bf16 %v1750, %v1747
        %v2007 = vpack.c.bf16 %v1758, %v1755
        %v2008 = vpack.c.bf16 %v1766, %v1763
        %v2009 = vpack.c.bf16 %v1774, %v1771
        %v2010 = vpack.c.bf16 %v1782, %v1779
        %v2011 = vpack.c.bf16 %v1790, %v1787
        %v2012 = vpack.c.bf16 %v1798, %v1795
        %v2013 = vpack.c.bf16 %v1806, %v1803
        %2014 = vmatprep.subr.bf16.mxu0 0
        %2015 = vmatpush1.bf16.msra.mxu0 %v2006
        %2016 = vmatprep.subr.bf16.mxu0 0
        %2017 = vmatpush1.bf16.msra.mxu0 %v2007
        %2018 = vmatprep.subr.bf16.mxu0 0
        %2019 = vmatpush1.bf16.msra.mxu0 %v2008
        %2020 = vmatprep.subr.bf16.mxu0 0
        %2021 = vmatpush1.bf16.msra.mxu0 %v2009
        %2022 = vmatprep.subr.bf16.mxu0 0
        %2023 = vmatpush1.bf16.msra.mxu0 %v2010
        %2024 = vmatprep.subr.bf16.mxu0 0
        %2025 = vmatpush1.bf16.msra.mxu0 %v2011
        %2026 = vmatprep.subr.bf16.mxu0 0
        %2027 = vmatpush1.bf16.msra.mxu0 %v2012
        %2028 = vmatprep.subr.bf16.mxu0 0
        %2029 = vmatpush1.bf16.msra.mxu0 %v2013
        %2030 = vmatprep.subr.bf16.mxu0 0
        %2031 = vmatpush1.bf16.msra.mxu0 0
        %2032 = vmatprep.subr.bf16.mxu0 0
        %2033 = vmatpush1.bf16.msra.mxu0 0
        %2034 = vmatprep.subr.bf16.mxu0 0
        %2035 = vmatpush1.bf16.msra.mxu0 0
        %2036 = vmatprep.subr.bf16.mxu0 0
        %2037 = vmatpush1.bf16.msra.mxu0 0
        %2038 = vmatprep.subr.bf16.mxu0 0
        %2039 = vmatpush1.bf16.msra.mxu0 0
        %2040 = vmatprep.subr.bf16.mxu0 0
        %2041 = vmatpush1.bf16.msra.mxu0 0
        %2042 = vmatprep.subr.bf16.mxu0 0
        %2043 = vmatpush1.bf16.msra.mxu0 0
        %2044 = vmatprep.subr.bf16.mxu0 0
        %2045 = vmatpush1.bf16.msra.mxu0 0
        %2046 = vmatprep.mubr.bf16.mxu0 0
        %2047 = vmatmul.mubr.bf16.gmra.mrb[0].mxu0 %v2002
        %v2048 = vpop.f32.mrb[0].mxu0
        %v2049 = vadd.f32 0.0, %v2048
        %v2050 = vpop.f32.mrb[0].mxu0
        %v2051 = vpop.f32.mrb[0].mxu0
        %v2052 = vadd.f32 0.0, %v2051
        %v2053 = vpop.f32.mrb[0].mxu0
        %2054 = vmatprep.mubr.bf16.mxu0 0
        %2055 = vmatmul.mubr.bf16.gmra.mrb[0].mxu0 %v2003
        %v2056 = vpop.f32.mrb[0].mxu0
        %v2057 = vadd.f32 0.0, %v2056
        %v2058 = vpop.f32.mrb[0].mxu0
        %v2059 = vpop.f32.mrb[0].mxu0
        %v2060 = vadd.f32 0.0, %v2059
        %v2061 = vpop.f32.mrb[0].mxu0
        %2062 = vmatprep.mubr.bf16.mxu0 0
        %2063 = vmatmul.mubr.bf16.gmra.mrb[0].mxu0 %v2004
        %v2064 = vpop.f32.mrb[0].mxu0
        %v2065 = vadd.f32 0.0, %v2064
        %v2066 = vpop.f32.mrb[0].mxu0
        %v2067 = vpop.f32.mrb[0].mxu0
        %v2068 = vadd.f32 0.0, %v2067
        %v2069 = vpop.f32.mrb[0].mxu0
        %2070 = vmatprep.mubr.bf16.mxu0 0
        %2071 = vmatmul.mubr.bf16.gmra.mrb[0].mxu0 %v2005
        %v2072 = vpop.f32.mrb[0].mxu0
        %v2073 = vadd.f32 0.0, %v2072
        %v2074 = vpop.f32.mrb[0].mxu0
        %v2075 = vpop.f32.mrb[0].mxu0
        %v2076 = vadd.f32 0.0, %v2075
        %v2077 = vpop.f32.mrb[0].mxu0
        %2078 = vdwg.mxu0
        %v2079 = vpack.c.bf16 %v2052, %v2049
        %v2080 = vpack.c.bf16 %v2060, %v2057
        %v2081 = vpack.c.bf16 %v2068, %v2065
        %v2082 = vpack.c.bf16 %v2076, %v2073
        %v2083 = vld [vmem:[%s10] sm:$0xf]
        %v2085 = vsel %vm483, %v2079, 0
        %v2088 = vsel %vm483, %v2080, 0
        %v2091 = vsel %vm483, %v2081, 0
        %v2094 = vsel %vm483, %v2082, 0
        %v2097 = vsel %vm483, %v2083, 0
        %2099 = vmatprep.subr.bf16.mxu0 0
        %2100 = vmatpush1.bf16.xpose.msra.mxu0 %v2097
        %2101 = vmatprep.subr.bf16.mxu0 0
        %2102 = vmatpush1.bf16.xpose.msra.mxu0 0
        %2103 = vmatprep.subr.bf16.mxu0 0
        %2104 = vmatpush1.bf16.xpose.msra.mxu0 0
        %2105 = vmatprep.subr.bf16.mxu0 0
        %2106 = vmatpush1.bf16.xpose.msra.mxu0 0
        %2107 = vmatprep.subr.bf16.mxu0 0
        %2108 = vmatpush1.bf16.xpose.msra.mxu0 0
        %2109 = vmatprep.subr.bf16.mxu0 0
        %2110 = vmatpush1.bf16.xpose.msra.mxu0 0
        %2111 = vmatprep.subr.bf16.mxu0 0
        %2112 = vmatpush1.bf16.xpose.msra.mxu0 0
        %2113 = vmatprep.subr.bf16.mxu0 0
        %2114 = vmatpush1.bf16.xpose.msra.mxu0 0
        %2115 = vmatprep.subr.bf16.mxu0 0
        %2116 = vmatpush1.bf16.xpose.msra.mxu0 0
        %2117 = vmatprep.subr.bf16.mxu0 0
        %2118 = vmatpush1.bf16.xpose.msra.mxu0 0
        %2119 = vmatprep.subr.bf16.mxu0 0
        %2120 = vmatpush1.bf16.xpose.msra.mxu0 0
        %2121 = vmatprep.subr.bf16.mxu0 0
        %2122 = vmatpush1.bf16.xpose.msra.mxu0 0
        %2123 = vmatprep.subr.bf16.mxu0 0
        %2124 = vmatpush1.bf16.xpose.msra.mxu0 0
        %2125 = vmatprep.subr.bf16.mxu0 0
        %2126 = vmatpush1.bf16.xpose.msra.mxu0 0
        %2127 = vmatprep.subr.bf16.mxu0 0
        %2128 = vmatpush1.bf16.xpose.msra.mxu0 0
        %2129 = vmatprep.subr.bf16.mxu0 0
        %2130 = vmatpush1.bf16.xpose.msra.mxu0 0
        %2131 = vmatprep.mubr.bf16.mxu0 0
        %2132 = vmatmul.mubr.bf16.gmra.mrb[0].mxu0 %v2085
        %v2133 = vpop.f32.mrb[0].mxu0
        %v2134 = vadd.f32 0.0, %v2133
        %v2135 = vpop.f32.mrb[0].mxu0
        %v2136 = vpop.f32.mrb[0].mxu0
        %v2137 = vadd.f32 0.0, %v2136
        %v2138 = vpop.f32.mrb[0].mxu0
        %2139 = vmatprep.mubr.bf16.mxu0 0
        %2140 = vmatmul.mubr.bf16.gmra.mrb[0].mxu0 %v2088
        %v2141 = vpop.f32.mrb[0].mxu0
        %v2142 = vadd.f32 0.0, %v2141
        %v2143 = vpop.f32.mrb[0].mxu0
        %v2144 = vpop.f32.mrb[0].mxu0
        %v2145 = vadd.f32 0.0, %v2144
        %v2146 = vpop.f32.mrb[0].mxu0
        %2147 = vmatprep.mubr.bf16.mxu0 0
        %2148 = vmatmul.mubr.bf16.gmra.mrb[0].mxu0 %v2091
        %v2149 = vpop.f32.mrb[0].mxu0
        %v2150 = vadd.f32 0.0, %v2149
        %v2151 = vpop.f32.mrb[0].mxu0
        %v2152 = vpop.f32.mrb[0].mxu0
        %v2153 = vadd.f32 0.0, %v2152
        %v2154 = vpop.f32.mrb[0].mxu0
        %2155 = vmatprep.mubr.bf16.mxu0 0
        %2156 = vmatmul.mubr.bf16.gmra.mrb[0].mxu0 %v2094
        %v2157 = vpop.f32.mrb[0].mxu0
        %v2158 = vadd.f32 0.0, %v2157
        %v2159 = vpop.f32.mrb[0].mxu0
        %v2160 = vpop.f32.mrb[0].mxu0
        %v2161 = vadd.f32 0.0, %v2160
        %v2162 = vpop.f32.mrb[0].mxu0
        %2163 = vdwg.mxu0
        %v2164 = vand.u32 2147483647, %v2134
        %v2165 = vand.u32 2147483647, %v2137
        %v2166 = vand.u32 2147483647, %v2142
        %v2167 = vand.u32 2147483647, %v2145
        %v2168 = vand.u32 2147483647, %v2150
        %v2169 = vand.u32 2147483647, %v2153
        %v2170 = vand.u32 2147483647, %v2158
        %v2171 = vand.u32 2147483647, %v2161
        %v2172 = vsub.f32 0.0, %v2164
        %v2173 = vsub.f32 0.0, %v2165
        %v2174 = vsub.f32 0.0, %v2166
        %v2175 = vsub.f32 0.0, %v2167
        %v2176 = vsub.f32 0.0, %v2168
        %v2177 = vsub.f32 0.0, %v2169
        %v2178 = vsub.f32 0.0, %v2170
        %v2179 = vsub.f32 0.0, %v2171
        %v2180 = vmul.f32 %v2172, 1.442695
        %v2181 = vpow.pop %v2180
        %v2182 = vmul.f32 %v2173, 1.442695
        %v2183 = vpow.pop %v2182
        %v2184 = vmul.f32 %v2174, 1.442695
        %v2185 = vpow.pop %v2184
        %v2186 = vmul.f32 %v2175, 1.442695
        %v2187 = vpow.pop %v2186
        %v2188 = vmul.f32 %v2176, 1.442695
        %v2189 = vpow.pop %v2188
        %v2190 = vmul.f32 %v2177, 1.442695
        %v2191 = vpow.pop %v2190
        %v2192 = vmul.f32 %v2178, 1.442695
        %v2193 = vpow.pop %v2192
        %v2194 = vmul.f32 %v2179, 1.442695
        %v2195 = vpow.pop %v2194
        %v2196 = vadd.f32 %v2181, 1.0
        %v2197 = vadd.f32 %v2183, 1.0
        %v2198 = vadd.f32 %v2185, 1.0
        %v2199 = vadd.f32 %v2187, 1.0
        %v2200 = vadd.f32 %v2189, 1.0
        %v2201 = vadd.f32 %v2191, 1.0
        %v2202 = vadd.f32 %v2193, 1.0
        %v2203 = vadd.f32 %v2195, 1.0
        %v2204 = vrcp.pop %v2196
        %v2205 = vrcp.pop %v2197
        %v2206 = vrcp.pop %v2198
        %v2207 = vrcp.pop %v2199
        %v2208 = vrcp.pop %v2200
        %v2209 = vrcp.pop %v2201
        %v2210 = vrcp.pop %v2202
        %v2211 = vrcp.pop %v2203
        %vm2212 = vcmp.ge.f32.partialorder %v2134, 0.0
        %vm2213 = vcmp.ge.f32.partialorder %v2137, 0.0
        %vm2214 = vcmp.ge.f32.partialorder %v2142, 0.0
        %vm2215 = vcmp.ge.f32.partialorder %v2145, 0.0
        %vm2216 = vcmp.ge.f32.partialorder %v2150, 0.0
        %vm2217 = vcmp.ge.f32.partialorder %v2153, 0.0
        %vm2218 = vcmp.ge.f32.partialorder %v2158, 0.0
        %vm2219 = vcmp.ge.f32.partialorder %v2161, 0.0
        %v2220 = vmul.f32 %v2181, %v2204
        %v2221 = vmul.f32 %v2183, %v2205
        %v2222 = vmul.f32 %v2185, %v2206
        %v2223 = vmul.f32 %v2187, %v2207
        %v2224 = vmul.f32 %v2189, %v2208
        %v2225 = vmul.f32 %v2191, %v2209
        %v2226 = vmul.f32 %v2193, %v2210
        %v2227 = vmul.f32 %v2195, %v2211
        %v2228 = vsel %vm2212, %v2204, %v2220
        %v2229 = vsel %vm2213, %v2205, %v2221
        %v2230 = vsel %vm2214, %v2206, %v2222
        %v2231 = vsel %vm2215, %v2207, %v2223
        %v2232 = vsel %vm2216, %v2208, %v2224
        %v2233 = vsel %vm2217, %v2209, %v2225
        %v2234 = vsel %vm2218, %v2210, %v2226
        %v2235 = vsel %vm2219, %v2211, %v2227
        %v2236 = vmul.f32 %v2134, %v2228
        %v2237 = vmul.f32 %v2137, %v2229
        %v2238 = vmul.f32 %v2142, %v2230
        %v2239 = vmul.f32 %v2145, %v2231
        %v2240 = vmul.f32 %v2150, %v2232
        %v2241 = vmul.f32 %v2153, %v2233
        %v2242 = vmul.f32 %v2158, %v2234
        %v2243 = vmul.f32 %v2161, %v2235
        %vm2244 = vcmask 64512
        %2245 = vst.msk [vmem:[#allocation3] sm:$0xff] %vm2244, 0.0
        %vm2246 = vcmask 58368
        %2247 = vst.msk [vmem:[#allocation3 + $0x8] sm:$0x3] %vm2246, 0.0
        %s2248 = scalar_lea.vmem [#allocation3], 144
        %2249 = vst.msk [vmem:[%s2248] sm:$0xff] %vm2244, 0.0
        %2250 = vst.msk [vmem:[%s2248 + $0x8] sm:$0x3] %vm2246, 0.0
        %v2259 = vrot.slane %v2236, 7
        %v2260 = vrot.slane %v2237, 7
        %v2261 = vrot.slane %v2238, 7
        %v2262 = vrot.slane %v2239, 7
        %v2263 = vrot.slane %v2240, 7
        %v2264 = vrot.slane %v2241, 7
        %v2265 = vrot.slane %v2242, 7
        %v2266 = vrot.slane %v2243, 7
        %v2275 = vsel %vm514, 0.0, %v2259
        %v2276 = vsel %vm514, 0.0, %v2260
        %v2277 = vsel %vm514, 0.0, %v2261
        %v2278 = vsel %vm514, 0.0, %v2262
        %v2279 = vsel %vm514, 0.0, %v2263
        %v2280 = vsel %vm514, 0.0, %v2264
        %v2281 = vsel %vm514, 0.0, %v2265
        %v2282 = vsel %vm514, 0.0, %v2266
        %v2283 = vsel %vm514, %v2259, 0.0
        %v2284 = vsel %vm514, %v2260, 0.0
        %v2285 = vsel %vm514, %v2261, 0.0
        %v2286 = vsel %vm514, %v2262, 0.0
        %v2287 = vsel %vm514, %v2263, 0.0
        %v2288 = vsel %vm514, %v2264, 0.0
        %v2289 = vsel %vm514, %v2265, 0.0
        %v2290 = vsel %vm514, %v2266, 0.0
        %s2291 = scalar_lea.vmem [#allocation3], 16
        %2292 = vst.msk [vmem:[%s2291] sm:$0xff] %vm2244, %v2275
        %2293 = vst.msk [vmem:[%s2291 + $0x8] sm:$0x3] %vm2246, %v2283
        %2294 = vst.msk [vmem:[%s2291 + $0x10] sm:$0xff] %vm2244, %v2276
        %2295 = vst.msk [vmem:[%s2291 + $0x18] sm:$0x3] %vm2246, %v2284
        %2296 = vst.msk [vmem:[%s2291 + $0x20] sm:$0xff] %vm2244, %v2277
        %2297 = vst.msk [vmem:[%s2291 + $0x28] sm:$0x3] %vm2246, %v2285
        %2298 = vst.msk [vmem:[%s2291 + $0x30] sm:$0xff] %vm2244, %v2278
        %2299 = vst.msk [vmem:[%s2291 + $0x38] sm:$0x3] %vm2246, %v2286
        %2300 = vst.msk [vmem:[%s2291 + $0x40] sm:$0xff] %vm2244, %v2279
        %2301 = vst.msk [vmem:[%s2291 + $0x48] sm:$0x3] %vm2246, %v2287
        %2302 = vst.msk [vmem:[%s2291 + $0x50] sm:$0xff] %vm2244, %v2280
        %2303 = vst.msk [vmem:[%s2291 + $0x58] sm:$0x3] %vm2246, %v2288
        %2304 = vst.msk [vmem:[%s2291 + $0x60] sm:$0xff] %vm2244, %v2281
        %2305 = vst.msk [vmem:[%s2291 + $0x68] sm:$0x3] %vm2246, %v2289
        %2306 = vst.msk [vmem:[%s2291 + $0x70] sm:$0xff] %vm2244, %v2282
        %2307 = vst.msk [vmem:[%s2291 + $0x78] sm:$0x3] %vm2246, %v2290
        %v2308 = vld [vmem:[#allocation3] sm:$0xff]
        %v2309 = vld [vmem:[#allocation3 + $0x10] sm:$0xff]
        %v2310 = vld [vmem:[#allocation3 + $0x20] sm:$0xff]
        %v2311 = vld [vmem:[#allocation3 + $0x30] sm:$0xff]
        %v2312 = vld [vmem:[#allocation3 + $0x40] sm:$0xff]
        %v2313 = vld [vmem:[#allocation3 + $0x50] sm:$0xff]
        %v2314 = vld [vmem:[#allocation3 + $0x60] sm:$0xff]
        %v2315 = vld [vmem:[#allocation3 + $0x70] sm:$0xff]
        %v2316 = vld [vmem:[#allocation3 + $0x1] sm:$0xff]
        %v2317 = vld [vmem:[#allocation3 + $0x11] sm:$0xff]
        %v2318 = vld [vmem:[#allocation3 + $0x21] sm:$0xff]
        %v2319 = vld [vmem:[#allocation3 + $0x31] sm:$0xff]
        %v2320 = vld [vmem:[#allocation3 + $0x41] sm:$0xff]
        %v2321 = vld [vmem:[#allocation3 + $0x51] sm:$0xff]
        %v2322 = vld [vmem:[#allocation3 + $0x61] sm:$0xff]
        %v2323 = vld [vmem:[#allocation3 + $0x71] sm:$0xff]
        %v2324 = vld [vmem:[#allocation3 + $0x2] sm:$0xff]
        %v2325 = vld [vmem:[#allocation3 + $0x12] sm:$0xff]
        %v2326 = vld [vmem:[#allocation3 + $0x22] sm:$0xff]
        %v2327 = vld [vmem:[#allocation3 + $0x32] sm:$0xff]
        %v2328 = vld [vmem:[#allocation3 + $0x42] sm:$0xff]
        %v2329 = vld [vmem:[#allocation3 + $0x52] sm:$0xff]
        %v2330 = vld [vmem:[#allocation3 + $0x62] sm:$0xff]
        %v2331 = vld [vmem:[#allocation3 + $0x72] sm:$0xff]
        %v2332 = vld [vmem:[%s2291] sm:$0xff]
        %v2333 = vld [vmem:[%s2291 + $0x10] sm:$0xff]
        %v2334 = vld [vmem:[%s2291 + $0x20] sm:$0xff]
        %v2335 = vld [vmem:[%s2291 + $0x30] sm:$0xff]
        %v2336 = vld [vmem:[%s2291 + $0x40] sm:$0xff]
        %v2337 = vld [vmem:[%s2291 + $0x50] sm:$0xff]
        %v2338 = vld [vmem:[%s2291 + $0x60] sm:$0xff]
        %v2339 = vld [vmem:[%s2291 + $0x70] sm:$0xff]
        %v2340 = vld [vmem:[%s2291 + $0x1] sm:$0xff]
        %v2341 = vld [vmem:[%s2291 + $0x11] sm:$0xff]
        %v2342 = vld [vmem:[%s2291 + $0x21] sm:$0xff]
        %v2343 = vld [vmem:[%s2291 + $0x31] sm:$0xff]
        %v2344 = vld [vmem:[%s2291 + $0x41] sm:$0xff]
        %v2345 = vld [vmem:[%s2291 + $0x51] sm:$0xff]
        %v2346 = vld [vmem:[%s2291 + $0x61] sm:$0xff]
        %v2347 = vld [vmem:[%s2291 + $0x71] sm:$0xff]
        %v2348 = vld [vmem:[%s2291 + $0x2] sm:$0xff]
        %v2349 = vld [vmem:[%s2291 + $0x12] sm:$0xff]
        %v2350 = vld [vmem:[%s2291 + $0x22] sm:$0xff]
        %v2351 = vld [vmem:[%s2291 + $0x32] sm:$0xff]
        %v2352 = vld [vmem:[%s2291 + $0x42] sm:$0xff]
        %v2353 = vld [vmem:[%s2291 + $0x52] sm:$0xff]
        %v2354 = vld [vmem:[%s2291 + $0x62] sm:$0xff]
        %v2355 = vld [vmem:[%s2291 + $0x72] sm:$0xff]
        %s2356 = scalar_lea.vmem [#allocation3], 32
        %v2357 = vld [vmem:[%s2356] sm:$0xff]
        %v2358 = vld [vmem:[%s2356 + $0x10] sm:$0xff]
        %v2359 = vld [vmem:[%s2356 + $0x20] sm:$0xff]
        %v2360 = vld [vmem:[%s2356 + $0x30] sm:$0xff]
        %v2361 = vld [vmem:[%s2356 + $0x40] sm:$0xff]
        %v2362 = vld [vmem:[%s2356 + $0x50] sm:$0xff]
        %v2363 = vld [vmem:[%s2356 + $0x60] sm:$0xff]
        %v2364 = vld [vmem:[%s2356 + $0x70] sm:$0xff]
        %v2365 = vld [vmem:[%s2356 + $0x1] sm:$0xff]
        %v2366 = vld [vmem:[%s2356 + $0x11] sm:$0xff]
        %v2367 = vld [vmem:[%s2356 + $0x21] sm:$0xff]
        %v2368 = vld [vmem:[%s2356 + $0x31] sm:$0xff]
        %v2369 = vld [vmem:[%s2356 + $0x41] sm:$0xff]
        %v2370 = vld [vmem:[%s2356 + $0x51] sm:$0xff]
        %v2371 = vld [vmem:[%s2356 + $0x61] sm:$0xff]
        %v2372 = vld [vmem:[%s2356 + $0x71] sm:$0xff]
        %v2373 = vld [vmem:[%s2356 + $0x2] sm:$0xff]
        %v2374 = vld [vmem:[%s2356 + $0x12] sm:$0xff]
        %v2375 = vld [vmem:[%s2356 + $0x22] sm:$0xff]
        %v2376 = vld [vmem:[%s2356 + $0x32] sm:$0xff]
        %v2377 = vld [vmem:[%s2356 + $0x42] sm:$0xff]
        %v2378 = vld [vmem:[%s2356 + $0x52] sm:$0xff]
        %v2379 = vld [vmem:[%s2356 + $0x62] sm:$0xff]
        %v2380 = vld [vmem:[%s2356 + $0x72] sm:$0xff]
        %2389 = vrot.lane.b32.xlu0 %v2316, 8
        %v2390 = vpop.permute.xlu0 %2389
        %2391 = vrot.lane.b32.xlu0 %v2317, 8
        %v2392 = vpop.permute.xlu0 %2391
        %2393 = vrot.lane.b32.xlu0 %v2318, 8
        %v2394 = vpop.permute.xlu0 %2393
        %2395 = vrot.lane.b32.xlu0 %v2319, 8
        %v2396 = vpop.permute.xlu0 %2395
        %2397 = vrot.lane.b32.xlu0 %v2320, 8
        %v2398 = vpop.permute.xlu0 %2397
        %2399 = vrot.lane.b32.xlu0 %v2321, 8
        %v2400 = vpop.permute.xlu0 %2399
        %2401 = vrot.lane.b32.xlu0 %v2322, 8
        %v2402 = vpop.permute.xlu0 %2401
        %2403 = vrot.lane.b32.xlu0 %v2323, 8
        %v2404 = vpop.permute.xlu0 %2403
        %2421 = vrot.lane.b32.xlu0 %v2324, 16
        %v2422 = vpop.permute.xlu0 %2421
        %2423 = vrot.lane.b32.xlu0 %v2325, 16
        %v2424 = vpop.permute.xlu0 %2423
        %2425 = vrot.lane.b32.xlu0 %v2326, 16
        %v2426 = vpop.permute.xlu0 %2425
        %2427 = vrot.lane.b32.xlu0 %v2327, 16
        %v2428 = vpop.permute.xlu0 %2427
        %2429 = vrot.lane.b32.xlu0 %v2328, 16
        %v2430 = vpop.permute.xlu0 %2429
        %2431 = vrot.lane.b32.xlu0 %v2329, 16
        %v2432 = vpop.permute.xlu0 %2431
        %2433 = vrot.lane.b32.xlu0 %v2330, 16
        %v2434 = vpop.permute.xlu0 %2433
        %2435 = vrot.lane.b32.xlu0 %v2331, 16
        %v2436 = vpop.permute.xlu0 %2435
        %2453 = vrot.lane.b32.xlu0 %v2332, 24
        %v2454 = vpop.permute.xlu0 %2453
        %2455 = vrot.lane.b32.xlu0 %v2333, 24
        %v2456 = vpop.permute.xlu0 %2455
        %2457 = vrot.lane.b32.xlu0 %v2334, 24
        %v2458 = vpop.permute.xlu0 %2457
        %2459 = vrot.lane.b32.xlu0 %v2335, 24
        %v2460 = vpop.permute.xlu0 %2459
        %2461 = vrot.lane.b32.xlu0 %v2336, 24
        %v2462 = vpop.permute.xlu0 %2461
        %2463 = vrot.lane.b32.xlu0 %v2337, 24
        %v2464 = vpop.permute.xlu0 %2463
        %2465 = vrot.lane.b32.xlu0 %v2338, 24
        %v2466 = vpop.permute.xlu0 %2465
        %2467 = vrot.lane.b32.xlu0 %v2339, 24
        %v2468 = vpop.permute.xlu0 %2467
        %2485 = vrot.lane.b32.xlu0 %v2340, 32
        %v2486 = vpop.permute.xlu0 %2485
        %2487 = vrot.lane.b32.xlu0 %v2341, 32
        %v2488 = vpop.permute.xlu0 %2487
        %2489 = vrot.lane.b32.xlu0 %v2342, 32
        %v2490 = vpop.permute.xlu0 %2489
        %2491 = vrot.lane.b32.xlu0 %v2343, 32
        %v2492 = vpop.permute.xlu0 %2491
        %2493 = vrot.lane.b32.xlu0 %v2344, 32
        %v2494 = vpop.permute.xlu0 %2493
        %2495 = vrot.lane.b32.xlu0 %v2345, 32
        %v2496 = vpop.permute.xlu0 %2495
        %2497 = vrot.lane.b32.xlu0 %v2346, 32
        %v2498 = vpop.permute.xlu0 %2497
        %2499 = vrot.lane.b32.xlu0 %v2347, 32
        %v2500 = vpop.permute.xlu0 %2499
        %2517 = vrot.lane.b32.xlu0 %v2348, 40
        %v2518 = vpop.permute.xlu0 %2517
        %2519 = vrot.lane.b32.xlu0 %v2349, 40
        %v2520 = vpop.permute.xlu0 %2519
        %2521 = vrot.lane.b32.xlu0 %v2350, 40
        %v2522 = vpop.permute.xlu0 %2521
        %2523 = vrot.lane.b32.xlu0 %v2351, 40
        %v2524 = vpop.permute.xlu0 %2523
        %2525 = vrot.lane.b32.xlu0 %v2352, 40
        %v2526 = vpop.permute.xlu0 %2525
        %2527 = vrot.lane.b32.xlu0 %v2353, 40
        %v2528 = vpop.permute.xlu0 %2527
        %2529 = vrot.lane.b32.xlu0 %v2354, 40
        %v2530 = vpop.permute.xlu0 %2529
        %2531 = vrot.lane.b32.xlu0 %v2355, 40
        %v2532 = vpop.permute.xlu0 %2531
        %2549 = vrot.lane.b32.xlu0 %v2357, 48
        %v2550 = vpop.permute.xlu0 %2549
        %2551 = vrot.lane.b32.xlu0 %v2358, 48
        %v2552 = vpop.permute.xlu0 %2551
        %2553 = vrot.lane.b32.xlu0 %v2359, 48
        %v2554 = vpop.permute.xlu0 %2553
        %2555 = vrot.lane.b32.xlu0 %v2360, 48
        %v2556 = vpop.permute.xlu0 %2555
        %2557 = vrot.lane.b32.xlu0 %v2361, 48
        %v2558 = vpop.permute.xlu0 %2557
        %2559 = vrot.lane.b32.xlu0 %v2362, 48
        %v2560 = vpop.permute.xlu0 %2559
        %2561 = vrot.lane.b32.xlu0 %v2363, 48
        %v2562 = vpop.permute.xlu0 %2561
        %2563 = vrot.lane.b32.xlu0 %v2364, 48
        %v2564 = vpop.permute.xlu0 %2563
        %2581 = vrot.lane.b32.xlu0 %v2365, 56
        %v2582 = vpop.permute.xlu0 %2581
        %2583 = vrot.lane.b32.xlu0 %v2366, 56
        %v2584 = vpop.permute.xlu0 %2583
        %2585 = vrot.lane.b32.xlu0 %v2367, 56
        %v2586 = vpop.permute.xlu0 %2585
        %2587 = vrot.lane.b32.xlu0 %v2368, 56
        %v2588 = vpop.permute.xlu0 %2587
        %2589 = vrot.lane.b32.xlu0 %v2369, 56
        %v2590 = vpop.permute.xlu0 %2589
        %2591 = vrot.lane.b32.xlu0 %v2370, 56
        %v2592 = vpop.permute.xlu0 %2591
        %2593 = vrot.lane.b32.xlu0 %v2371, 56
        %v2594 = vpop.permute.xlu0 %2593
        %2595 = vrot.lane.b32.xlu0 %v2372, 56
        %v2596 = vpop.permute.xlu0 %2595
        %2613 = vrot.lane.b32.xlu0 %v2373, 64
        %v2614 = vpop.permute.xlu0 %2613
        %2615 = vrot.lane.b32.xlu0 %v2374, 64
        %v2616 = vpop.permute.xlu0 %2615
        %2617 = vrot.lane.b32.xlu0 %v2375, 64
        %v2618 = vpop.permute.xlu0 %2617
        %2619 = vrot.lane.b32.xlu0 %v2376, 64
        %v2620 = vpop.permute.xlu0 %2619
        %2621 = vrot.lane.b32.xlu0 %v2377, 64
        %v2622 = vpop.permute.xlu0 %2621
        %2623 = vrot.lane.b32.xlu0 %v2378, 64
        %v2624 = vpop.permute.xlu0 %2623
        %2625 = vrot.lane.b32.xlu0 %v2379, 64
        %v2626 = vpop.permute.xlu0 %2625
        %2627 = vrot.lane.b32.xlu0 %v2380, 64
        %v2628 = vpop.permute.xlu0 %2627
        %v2637 = vsel %vm2244, %v2308, %v2390
        %v2638 = vsel %vm2244, %v2309, %v2392
        %v2639 = vsel %vm2244, %v2310, %v2394
        %v2640 = vsel %vm2244, %v2311, %v2396
        %v2641 = vsel %vm2244, %v2312, %v2398
        %v2642 = vsel %vm2244, %v2313, %v2400
        %v2643 = vsel %vm2244, %v2314, %v2402
        %v2644 = vsel %vm2244, %v2315, %v2404
        %vm2645 = vcmask 130048
        %v2646 = vsel %vm2645, %v2637, %v2422
        %v2647 = vsel %vm2645, %v2638, %v2424
        %v2648 = vsel %vm2645, %v2639, %v2426
        %v2649 = vsel %vm2645, %v2640, %v2428
        %v2650 = vsel %vm2645, %v2641, %v2430
        %v2651 = vsel %vm2645, %v2642, %v2432
        %v2652 = vsel %vm2645, %v2643, %v2434
        %v2653 = vsel %vm2645, %v2644, %v2436
        %vm2654 = vcmask 195584
        %v2655 = vsel %vm2654, %v2646, %v2454
        %v2656 = vsel %vm2654, %v2647, %v2456
        %v2657 = vsel %vm2654, %v2648, %v2458
        %v2658 = vsel %vm2654, %v2649, %v2460
        %v2659 = vsel %vm2654, %v2650, %v2462
        %v2660 = vsel %vm2654, %v2651, %v2464
        %v2661 = vsel %vm2654, %v2652, %v2466
        %v2662 = vsel %vm2654, %v2653, %v2468
        %v2663 = vsel %vm1828, %v2655, %v2486
        %v2664 = vsel %vm1828, %v2656, %v2488
        %v2665 = vsel %vm1828, %v2657, %v2490
        %v2666 = vsel %vm1828, %v2658, %v2492
        %v2667 = vsel %vm1828, %v2659, %v2494
        %v2668 = vsel %vm1828, %v2660, %v2496
        %v2669 = vsel %vm1828, %v2661, %v2498
        %v2670 = vsel %vm1828, %v2662, %v2500
        %vm2671 = vcmask 326656
        %v2672 = vsel %vm2671, %v2663, %v2518
        %v2673 = vsel %vm2671, %v2664, %v2520
        %v2674 = vsel %vm2671, %v2665, %v2522
        %v2675 = vsel %vm2671, %v2666, %v2524
        %v2676 = vsel %vm2671, %v2667, %v2526
        %v2677 = vsel %vm2671, %v2668, %v2528
        %v2678 = vsel %vm2671, %v2669, %v2530
        %v2679 = vsel %vm2671, %v2670, %v2532
        %vm2680 = vcmask 392192
        %v2681 = vsel %vm2680, %v2672, %v2550
        %v2682 = vsel %vm2680, %v2673, %v2552
        %v2683 = vsel %vm2680, %v2674, %v2554
        %v2684 = vsel %vm2680, %v2675, %v2556
        %v2685 = vsel %vm2680, %v2676, %v2558
        %v2686 = vsel %vm2680, %v2677, %v2560
        %v2687 = vsel %vm2680, %v2678, %v2562
        %v2688 = vsel %vm2680, %v2679, %v2564
        %vm2689 = vcmask 457728
        %v2690 = vsel %vm2689, %v2681, %v2582
        %v2691 = vsel %vm2689, %v2682, %v2584
        %v2692 = vsel %vm2689, %v2683, %v2586
        %v2693 = vsel %vm2689, %v2684, %v2588
        %v2694 = vsel %vm2689, %v2685, %v2590
        %v2695 = vsel %vm2689, %v2686, %v2592
        %v2696 = vsel %vm2689, %v2687, %v2594
        %v2697 = vsel %vm2689, %v2688, %v2596
        %v2698 = vsel %vm483, %v2690, %v2614
        %v2699 = vsel %vm483, %v2691, %v2616
        %v2700 = vsel %vm483, %v2692, %v2618
        %v2701 = vsel %vm483, %v2693, %v2620
        %v2702 = vsel %vm483, %v2694, %v2622
        %v2703 = vsel %vm483, %v2695, %v2624
        %v2704 = vsel %vm483, %v2696, %v2626
        %v2705 = vsel %vm483, %v2697, %v2628
        %v2706 = vpack.c.bf16 %v2699, %v2698
        %v2707 = vpack.c.bf16 %v2701, %v2700
        %v2708 = vpack.c.bf16 %v2703, %v2702
        %v2709 = vpack.c.bf16 %v2705, %v2704
        %v2710 = vld [vmem:[%s11] sm:$0xf]
        %v2711 = vld [vmem:[%s11 + $0x4] sm:$0xf]
        %v2712 = vld [vmem:[%s11 + $0x8] sm:$0xf]
        %v2713 = vld [vmem:[%s11 + $0xc] sm:$0xf]
        %v2714 = vld [vmem:[%s11 + $0x10] sm:$0xf]
        %v2715 = vld [vmem:[%s11 + $0x14] sm:$0xf]
        %v2716 = vld [vmem:[%s11 + $0x18] sm:$0xf]
        %v2717 = vld [vmem:[%s11 + $0x1c] sm:$0xf]
        %v2726 = vunpack.c.l.b16 %v2710
        %v2727 = vunpack.c.l.b16 %v2711
        %v2728 = vunpack.c.l.b16 %v2712
        %v2729 = vunpack.c.l.b16 %v2713
        %v2730 = vunpack.c.l.b16 %v2714
        %v2731 = vunpack.c.l.b16 %v2715
        %v2732 = vunpack.c.l.b16 %v2716
        %v2733 = vunpack.c.l.b16 %v2717
        %v2734 = vpack.c.b16 %v2727, %v2726
        %v2735 = vpack.c.b16 %v2729, %v2728
        %v2736 = vpack.c.b16 %v2731, %v2730
        %v2737 = vpack.c.b16 %v2733, %v2732
        %vm2738 = vcmask 588800
        %v2740 = vsel %vm2738, %v2706, 0
        %v2743 = vsel %vm2738, %v2707, 0
        %v2746 = vsel %vm2738, %v2708, 0
        %v2749 = vsel %vm2738, %v2709, 0
        %v2752 = vsel %vm2738, %v2734, 0
        %v2755 = vsel %vm2738, %v2735, 0
        %v2758 = vsel %vm2738, %v2736, 0
        %v2761 = vsel %vm2738, %v2737, 0
        %2763 = vmatprep.subr.bf16.mxu0 0
        %2764 = vmatpush1.bf16.xpose.msra.mxu0 %v2752
        %2765 = vmatprep.subr.bf16.mxu0 0
        %2766 = vmatpush1.bf16.xpose.msra.mxu0 %v2755
        %2767 = vmatprep.subr.bf16.mxu0 0
        %2768 = vmatpush1.bf16.xpose.msra.mxu0 %v2758
        %2769 = vmatprep.subr.bf16.mxu0 0
        %2770 = vmatpush1.bf16.xpose.msra.mxu0 %v2761
        %2771 = vmatprep.subr.bf16.mxu0 0
        %2772 = vmatpush1.bf16.xpose.msra.mxu0 0
        %2773 = vmatprep.subr.bf16.mxu0 0
        %2774 = vmatpush1.bf16.xpose.msra.mxu0 0
        %2775 = vmatprep.subr.bf16.mxu0 0
        %2776 = vmatpush1.bf16.xpose.msra.mxu0 0
        %2777 = vmatprep.subr.bf16.mxu0 0
        %2778 = vmatpush1.bf16.xpose.msra.mxu0 0
        %2779 = vmatprep.subr.bf16.mxu0 0
        %2780 = vmatpush1.bf16.xpose.msra.mxu0 0
        %2781 = vmatprep.subr.bf16.mxu0 0
        %2782 = vmatpush1.bf16.xpose.msra.mxu0 0
        %2783 = vmatprep.subr.bf16.mxu0 0
        %2784 = vmatpush1.bf16.xpose.msra.mxu0 0
        %2785 = vmatprep.subr.bf16.mxu0 0
        %2786 = vmatpush1.bf16.xpose.msra.mxu0 0
        %2787 = vmatprep.subr.bf16.mxu0 0
        %2788 = vmatpush1.bf16.xpose.msra.mxu0 0
        %2789 = vmatprep.subr.bf16.mxu0 0
        %2790 = vmatpush1.bf16.xpose.msra.mxu0 0
        %2791 = vmatprep.subr.bf16.mxu0 0
        %2792 = vmatpush1.bf16.xpose.msra.mxu0 0
        %2793 = vmatprep.subr.bf16.mxu0 0
        %2794 = vmatpush1.bf16.xpose.msra.mxu0 0
        %2795 = vmatprep.mubr.bf16.mxu0 0
        %2796 = vmatmul.mubr.bf16.gmra.mrb[0].mxu0 %v2740
        %v2797 = vpop.f32.mrb[0].mxu0
        %v2798 = vadd.f32 0.0, %v2797
        %v2799 = vpop.f32.mrb[0].mxu0
        %v2800 = vpop.f32.mrb[0].mxu0
        %v2801 = vadd.f32 0.0, %v2800
        %v2802 = vpop.f32.mrb[0].mxu0
        %2803 = vmatprep.mubr.bf16.mxu0 0
        %2804 = vmatmul.mubr.bf16.gmra.mrb[0].mxu0 %v2743
        %v2805 = vpop.f32.mrb[0].mxu0
        %v2806 = vadd.f32 0.0, %v2805
        %v2807 = vpop.f32.mrb[0].mxu0
        %v2808 = vpop.f32.mrb[0].mxu0
        %v2809 = vadd.f32 0.0, %v2808
        %v2810 = vpop.f32.mrb[0].mxu0
        %2811 = vmatprep.mubr.bf16.mxu0 0
        %2812 = vmatmul.mubr.bf16.gmra.mrb[0].mxu0 %v2746
        %v2813 = vpop.f32.mrb[0].mxu0
        %v2814 = vadd.f32 0.0, %v2813
        %v2815 = vpop.f32.mrb[0].mxu0
        %v2816 = vpop.f32.mrb[0].mxu0
        %v2817 = vadd.f32 0.0, %v2816
        %v2818 = vpop.f32.mrb[0].mxu0
        %2819 = vmatprep.mubr.bf16.mxu0 0
        %2820 = vmatmul.mubr.bf16.gmra.mrb[0].mxu0 %v2749
        %v2821 = vpop.f32.mrb[0].mxu0
        %v2822 = vadd.f32 0.0, %v2821
        %v2823 = vpop.f32.mrb[0].mxu0
        %v2824 = vpop.f32.mrb[0].mxu0
        %v2825 = vadd.f32 0.0, %v2824
        %v2826 = vpop.f32.mrb[0].mxu0
        %2827 = vdwg.mxu0
        %v2828 = vtanh.pop %v2798
        %v2829 = vtanh.pop %v2801
        %v2830 = vtanh.pop %v2806
        %v2831 = vtanh.pop %v2809
        %v2832 = vtanh.pop %v2814
        %v2833 = vtanh.pop %v2817
        %v2834 = vtanh.pop %v2822
        %v2835 = vtanh.pop %v2825
        %v2836 = vadd.f32 %v2828, 1.0
        %v2837 = vadd.f32 %v2829, 1.0
        %v2838 = vadd.f32 %v2830, 1.0
        %v2839 = vadd.f32 %v2831, 1.0
        %v2840 = vadd.f32 %v2832, 1.0
        %v2841 = vadd.f32 %v2833, 1.0
        %v2842 = vadd.f32 %v2834, 1.0
        %v2843 = vadd.f32 %v2835, 1.0
        %v2844 = vmul.f32 %v2049, %v2836
        %v2845 = vmul.f32 %v2052, %v2837
        %v2846 = vmul.f32 %v2057, %v2838
        %v2847 = vmul.f32 %v2060, %v2839
        %v2848 = vmul.f32 %v2065, %v2840
        %v2849 = vmul.f32 %v2068, %v2841
        %v2850 = vmul.f32 %v2073, %v2842
        %v2851 = vmul.f32 %v2076, %v2843
        %v2852 = vadd.f32 %v1216, %v2844
        %v2853 = vadd.f32 %v1217, %v2845
        %v2854 = vadd.f32 %v1218, %v2846
        %v2855 = vadd.f32 %v1219, %v2847
        %v2856 = vadd.f32 %v1220, %v2848
        %v2857 = vadd.f32 %v1221, %v2849
        %v2858 = vadd.f32 %v1222, %v2850
        %v2859 = vadd.f32 %v1223, %v2851
        %2860 = vxpose.xlu0.b32.start [1/16] %v2852, 128
        %2861 = vxpose.xlu0.b32.cont [2/16] %v2853, 128
        %2862 = vxpose.xlu0.b32.cont [3/16] %v2854, 128
        %2863 = vxpose.xlu0.b32.cont [4/16] %v2855, 128
        %2864 = vxpose.xlu0.b32.cont [5/16] %v2856, 128
        %2865 = vxpose.xlu0.b32.cont [6/16] %v2857, 128
        %2866 = vxpose.xlu0.b32.cont [7/16] %v2858, 128
        %2867 = vxpose.xlu0.b32.cont [8/16] %v2859, 128
        %2868 = vxpose.xlu0.b32.cont [9/16] 0.0, 128
        %2869 = vxpose.xlu0.b32.cont [10/16] 0.0, 128
        %2870 = vxpose.xlu0.b32.cont [11/16] 0.0, 128
        %2871 = vxpose.xlu0.b32.cont [12/16] 0.0, 128
        %2872 = vxpose.xlu0.b32.cont [13/16] 0.0, 128
        %2873 = vxpose.xlu0.b32.cont [14/16] 0.0, 128
        %2874 = vxpose.xlu0.b32.cont [15/16] 0.0, 128
        %2875 = vxpose.xlu0.b32.end [16/16] 0.0, 128
        %v2876 = vpop.trf.xlu0
        %v2877 = vpop.trf.xlu0
        %v2878 = vpop.trf.xlu0
        %v2879 = vpop.trf.xlu0
        %v2880 = vpop.trf.xlu0
        %v2881 = vpop.trf.xlu0
        %v2882 = vpop.trf.xlu0
        %v2883 = vpop.trf.xlu0
        %v2884 = vpop.trf.xlu0
        %v2885 = vpop.trf.xlu0
        %v2886 = vpop.trf.xlu0
        %v2887 = vpop.trf.xlu0
        %v2888 = vpop.trf.xlu0
        %v2889 = vpop.trf.xlu0
        %v2890 = vpop.trf.xlu0
        %v2891 = vpop.trf.xlu0
        %2892 = vst.msk [vmem:[%s441] sm:$0xff] %vm483, %v2876
        %2893 = vst.msk [vmem:[%s441 + $0x8] sm:$0xff] %vm483, %v2877
        %2894 = vst.msk [vmem:[%s441 + $0x10] sm:$0xff] %vm483, %v2878
        %2895 = vst.msk [vmem:[%s441 + $0x18] sm:$0xff] %vm483, %v2879
        %2896 = vst.msk [vmem:[%s441 + $0x20] sm:$0xff] %vm483, %v2880
        %2897 = vst.msk [vmem:[%s441 + $0x28] sm:$0xff] %vm483, %v2881
        %2898 = vst.msk [vmem:[%s441 + $0x30] sm:$0xff] %vm483, %v2882
        %2899 = vst.msk [vmem:[%s441 + $0x38] sm:$0xff] %vm483, %v2883
        %p2900 = scmp.lt.s32.totalorder %s25, 1
        %s2901 = scalar_select %p2900, %s25, 1
        %s2902 = smul.addr %s2901, 8
        %s2903 = smul.addr %s2902, 8
        %s2904 = scalar_lea.vmem %s12, %s2903
        // Predicated region
        $region77: #{csfcn_forward.2} parent=67 // pred_check
          %p2905 = pneg %p300
        $region78: #{csfcn_forward.2} parent=67 // pred_check_branch
          %2907 = sbr.rel (%p2905) target = $region80
        $region79: #{csfcn_forward.2} parent=67 // pred_region
          _
        $region80: #{csfcn_forward.2} parent=67 // pred_fallthru
          _
      $region68: #{csfcn_forward.2} parent=5 // pred_fallthru
        _
      %p2908 = scmp.le.s32.totalorder 2, %s20
      // Predicated region
      $region81: #{csfcn_forward.2} parent=5 // pred_check
        %p2909 = pneg %p2908
      $region82: #{csfcn_forward.2} parent=5 // pred_check_branch
        %2911 = sbr.rel (%p2909) target = $region84
      $region83: #{csfcn_forward.2} parent=5 // pred_region
        %s2912 = ssub.s32 %s20, 2
        // Predicated region
        $region85: #{csfcn_forward.2} parent=83 // pred_check
          %p2913 = pneg %p306
        $region86: #{csfcn_forward.2} parent=83 // pred_check_branch
          %2915 = sbr.rel (%p2913) target = $region88
        $region87: #{csfcn_forward.2} parent=83 // pred_region
          %p2916 = scmp.lt.s32.totalorder %s26, 1
          %s2917 = scalar_select %p2916, %s26, 1
          %s2918 = smul.addr %s2917, 8
          %s2919 = smul.addr %s2918, 8
          %s2920 = scalar_lea.vmem %s12, %s2919
        $region88: #{csfcn_forward.2} parent=83 // pred_fallthru
          _
      $region84: #{csfcn_forward.2} parent=5 // pred_fallthru
        _
    $region6: #{csfcn_forward.2} parent=1 // loop_footer
      %s24 = sadd.s32 1, %s20
    $region7: #{csfcn_forward.2} parent=1 // loop_footer_branch
      %19 = sbr.rel target = $region3
    $region8: #{csfcn_forward.2} parent=1 // loop_exit
      _
    %2921 = vsyncpa [#allocation5], 1
    %s2922 = scalar_lea.sflag [#allocation5], 1
    %2923 = vsyncpa %s2922, 1
    %2924 = vsyncpa [#allocation7], 1

// kernel: csfcn_forward.3
$region0: #{csfcn_forward.3}
  #allocation0 [shape = 'u32[]', space=smem, size = 0x4, offset = 0x4, fixed_abs, tag = 'smem constant byte address 0x4 - core index']
  #allocation1 [shape = 'u32[144,128]{1,0:T(1,128)}', space=vmem, size = 0x12000, scoped, tag = 'internal scratch']
  #allocation2 [shape = 'f32[10,10,64]{2,1,0:T(8,128)}', space=vmem, size = 0x14000, scoped, tag = 'scratch operand']
  #allocation3 [shape = 'f32[18,18,32]{2,1,0:T(8,128)}', space=vmem, size = 0x36000, scoped, tag = 'scratch operand']
  #allocation4 [shape = 'f32[18,18,64]{2,1,0:T(8,128)}', space=vmem, size = 0x36000, scoped, tag = 'scratch operand']
  %s0 = inlined_call_operand.vmem [shape: f32[2,64,64], index: 0, kind: input, shape index: {}]
  %s1 = inlined_call_operand.vmem [shape: f32[2,32,256], index: 1, kind: input, shape index: {}]
  %s2 = inlined_call_operand.vmem [shape: bf16[256,64], index: 2, kind: input, shape index: {}]
  %s3 = inlined_call_operand.vmem [shape: bf16[32,576], index: 3, kind: input, shape index: {}]
  %s4 = inlined_call_operand.vmem [shape: bf16[32,288], index: 4, kind: input, shape index: {}]
  %s5 = inlined_call_operand.vmem [shape: bf16[64,32], index: 5, kind: input, shape index: {}]
  %s6 = inlined_call_operand.vmem [shape: bf16[64,32], index: 6, kind: input, shape index: {}]
  %s7 = inlined_call_operand.vmem [shape: bf16[10,576], index: 7, kind: input, shape index: {}]
  %s8 = inlined_call_operand.vmem [shape: f32[2,32,256], index: 8, kind: output, shape index: {0}]
  %s9 = inlined_call_operand.vmem [shape: f32[2,32,256], index: 9, kind: output, shape index: {1}]
  %s10 = inlined_call_operand.vmem [shape: f32[2,10,256], index: 10, kind: output, shape index: {2}]
  %11 = xla_tuple %s8, %s9, %s10
  %s12 = sld [smem:[#allocation0]]
  $region81: #{csfcn_forward.3} parent=0
    _
  %s14 = ssub.s32 1, %s12
  %s15 = scalar_select 0, %s14, %s12
  loop: start=0, step=1, limit=4
  $region2: #{csfcn_forward.3} parent=0 // loop_pre_header
    _
  $region3: #{csfcn_forward.3} parent=0 // loop_header
    %s17 = sphi 0, %s21
    %p18 = scmp.ge.s32.totalorder %s17, 4
    %s27 = sphi 0, %s29
    %s30 = sphi 0, %s27
    %s31 = sphi 0, %s30
    %s47 = sphi 0, %s31
    %s53 = sphi 0, %s55
    %s56 = sphi 0, %s53
    %s57 = sphi 0, %s56
    %s73 = sphi 0, %s57
    %s77 = sphi 0, %s77
    %s79 = sphi 0, %s77
    %s80 = sphi 0, %s79
    %s94 = sphi 0, %s80
    %s98 = sphi 0, %s98
    %s100 = sphi 0, %s98
    %s101 = sphi 0, %s100
    %s115 = sphi 0, %s101
    %s119 = sphi 0, %s119
    %s121 = sphi 0, %s119
    %s122 = sphi 0, %s121
    %s136 = sphi 0, %s122
    %s140 = sphi 0, %s140
    %s142 = sphi 0, %s140
    %s143 = sphi 0, %s142
    %s157 = sphi 0, %s143
    %s161 = sphi 0, %s161
    %s163 = sphi 0, %s161
    %s164 = sphi 0, %s163
    %s178 = sphi 0, %s164
    %s182 = sphi 0, %s182
    %s184 = sphi 0, %s182
    %s185 = sphi 0, %s184
    %s199 = sphi 0, %s185
    %s205 = sphi 0, %s207
    %s208 = sphi 0, %s205
    %s209 = sphi 0, %s208
    %s225 = sphi 0, %s209
    %s231 = sphi 0, %s233
    %s234 = sphi 0, %s231
    %s235 = sphi 0, %s234
    %s251 = sphi 0, %s235
    %s257 = sphi 0, %s259
    %s260 = sphi 0, %s257
    %s261 = sphi 0, %s260
    %s277 = sphi 0, %s261
  $region4: #{csfcn_forward.3} parent=0 // loop_header_branch
    %20 = sbr.rel (%p18) target = $region8
  $region5: #{csfcn_forward.3} parent=0 // loop_body
    %s22 = ssub.s32 %s17, 1
    %s23 = ssub.s32 %s17, 2
    %s24 = sadd.s32 %s17, 1
    %s25 = ssub.s32 %s17, %s24
    %p26 = scmp.eq.s32.totalorder %s25, 0
    %s28 = sadd.s32 %s27, 1
    %s29 = scalar_select %p26, %s27, %s28
    %p32 = pneg %p26
    %p33 = scmp.eq.s32.totalorder %s17, 1
    %p34 = por %p32, %p33
    %p35 = scmp.ne.s32.totalorder %s27, %s30
    %p36 = scmp.eq.s32.totalorder %s17, 0
    %p37 = por %p35, %p36
    %p38 = scmp.ne.s32.totalorder %s27, %s30
    %p39 = scmp.eq.s32.totalorder %s22, 1
    %p40 = por %p38, %p39
    %p41 = scmp.ne.s32.totalorder %s30, %s31
    %p42 = scmp.eq.s32.totalorder %s22, 0
    %p43 = por %p41, %p42
    %p44 = scmp.ne.s32.totalorder %s30, %s31
    %p45 = scmp.eq.s32.totalorder %s23, 1
    %p46 = por %p44, %p45
    %p48 = scmp.ne.s32.totalorder %s31, %s47
    %p49 = scmp.eq.s32.totalorder %s23, 0
    %p50 = por %p48, %p49
    %s51 = ssub.s32 %s17, %s24
    %p52 = scmp.eq.s32.totalorder %s51, 0
    %s54 = sadd.s32 %s53, 1
    %s55 = scalar_select %p52, %s53, %s54
    %p58 = pneg %p52
    %p59 = scmp.eq.s32.totalorder %s17, 1
    %p60 = por %p58, %p59
    %p61 = scmp.ne.s32.totalorder %s53, %s56
    %p62 = scmp.eq.s32.totalorder %s17, 0
    %p63 = por %p61, %p62
    %p64 = scmp.ne.s32.totalorder %s53, %s56
    %p65 = scmp.eq.s32.totalorder %s22, 1
    %p66 = por %p64, %p65
    %p67 = scmp.ne.s32.totalorder %s56, %s57
    %p68 = scmp.eq.s32.totalorder %s22, 0
    %p69 = por %p67, %p68
    %p70 = scmp.ne.s32.totalorder %s56, %s57
    %p71 = scmp.eq.s32.totalorder %s23, 1
    %p72 = por %p70, %p71
    %p74 = scmp.ne.s32.totalorder %s57, %s73
    %p75 = scmp.eq.s32.totalorder %s23, 0
    %p76 = por %p74, %p75
    %s78 = sadd.s32 %s77, 1
    %p81 = scmp.eq.s32.totalorder %s17, 1
    %p82 = scmp.ne.s32.totalorder %s77, %s79
    %p83 = scmp.eq.s32.totalorder %s17, 0
    %p84 = por %p82, %p83
    %p85 = scmp.ne.s32.totalorder %s77, %s79
    %p86 = scmp.eq.s32.totalorder %s22, 1
    %p87 = por %p85, %p86
    %p88 = scmp.ne.s32.totalorder %s79, %s80
    %p89 = scmp.eq.s32.totalorder %s22, 0
    %p90 = por %p88, %p89
    %p91 = scmp.ne.s32.totalorder %s79, %s80
    %p92 = scmp.eq.s32.totalorder %s23, 1
    %p93 = por %p91, %p92
    %p95 = scmp.ne.s32.totalorder %s80, %s94
    %p96 = scmp.eq.s32.totalorder %s23, 0
    %p97 = por %p95, %p96
    %s99 = sadd.s32 %s98, 1
    %p102 = scmp.eq.s32.totalorder %s17, 1
    %p103 = scmp.ne.s32.totalorder %s98, %s100
    %p104 = scmp.eq.s32.totalorder %s17, 0
    %p105 = por %p103, %p104
    %p106 = scmp.ne.s32.totalorder %s98, %s100
    %p107 = scmp.eq.s32.totalorder %s22, 1
    %p108 = por %p106, %p107
    %p109 = scmp.ne.s32.totalorder %s100, %s101
    %p110 = scmp.eq.s32.totalorder %s22, 0
    %p111 = por %p109, %p110
    %p112 = scmp.ne.s32.totalorder %s100, %s101
    %p113 = scmp.eq.s32.totalorder %s23, 1
    %p114 = por %p112, %p113
    %p116 = scmp.ne.s32.totalorder %s101, %s115
    %p117 = scmp.eq.s32.totalorder %s23, 0
    %p118 = por %p116, %p117
    %s120 = sadd.s32 %s119, 1
    %p123 = scmp.eq.s32.totalorder %s17, 1
    %p124 = scmp.ne.s32.totalorder %s119, %s121
    %p125 = scmp.eq.s32.totalorder %s17, 0
    %p126 = por %p124, %p125
    %p127 = scmp.ne.s32.totalorder %s119, %s121
    %p128 = scmp.eq.s32.totalorder %s22, 1
    %p129 = por %p127, %p128
    %p130 = scmp.ne.s32.totalorder %s121, %s122
    %p131 = scmp.eq.s32.totalorder %s22, 0
    %p132 = por %p130, %p131
    %p133 = scmp.ne.s32.totalorder %s121, %s122
    %p134 = scmp.eq.s32.totalorder %s23, 1
    %p135 = por %p133, %p134
    %p137 = scmp.ne.s32.totalorder %s122, %s136
    %p138 = scmp.eq.s32.totalorder %s23, 0
    %p139 = por %p137, %p138
    %s141 = sadd.s32 %s140, 1
    %p144 = scmp.eq.s32.totalorder %s17, 1
    %p145 = scmp.ne.s32.totalorder %s140, %s142
    %p146 = scmp.eq.s32.totalorder %s17, 0
    %p147 = por %p145, %p146
    %p148 = scmp.ne.s32.totalorder %s140, %s142
    %p149 = scmp.eq.s32.totalorder %s22, 1
    %p150 = por %p148, %p149
    %p151 = scmp.ne.s32.totalorder %s142, %s143
    %p152 = scmp.eq.s32.totalorder %s22, 0
    %p153 = por %p151, %p152
    %p154 = scmp.ne.s32.totalorder %s142, %s143
    %p155 = scmp.eq.s32.totalorder %s23, 1
    %p156 = por %p154, %p155
    %p158 = scmp.ne.s32.totalorder %s143, %s157
    %p159 = scmp.eq.s32.totalorder %s23, 0
    %p160 = por %p158, %p159
    %s162 = sadd.s32 %s161, 1
    %p165 = scmp.eq.s32.totalorder %s17, 1
    %p166 = scmp.ne.s32.totalorder %s161, %s163
    %p167 = scmp.eq.s32.totalorder %s17, 0
    %p168 = por %p166, %p167
    %p169 = scmp.ne.s32.totalorder %s161, %s163
    %p170 = scmp.eq.s32.totalorder %s22, 1
    %p171 = por %p169, %p170
    %p172 = scmp.ne.s32.totalorder %s163, %s164
    %p173 = scmp.eq.s32.totalorder %s22, 0
    %p174 = por %p172, %p173
    %p175 = scmp.ne.s32.totalorder %s163, %s164
    %p176 = scmp.eq.s32.totalorder %s23, 1
    %p177 = por %p175, %p176
    %p179 = scmp.ne.s32.totalorder %s164, %s178
    %p180 = scmp.eq.s32.totalorder %s23, 0
    %p181 = por %p179, %p180
    %s183 = sadd.s32 %s182, 1
    %p186 = scmp.eq.s32.totalorder %s17, 1
    %p187 = scmp.ne.s32.totalorder %s182, %s184
    %p188 = scmp.eq.s32.totalorder %s17, 0
    %p189 = por %p187, %p188
    %p190 = scmp.ne.s32.totalorder %s182, %s184
    %p191 = scmp.eq.s32.totalorder %s22, 1
    %p192 = por %p190, %p191
    %p193 = scmp.ne.s32.totalorder %s184, %s185
    %p194 = scmp.eq.s32.totalorder %s22, 0
    %p195 = por %p193, %p194
    %p196 = scmp.ne.s32.totalorder %s184, %s185
    %p197 = scmp.eq.s32.totalorder %s23, 1
    %p198 = por %p196, %p197
    %p200 = scmp.ne.s32.totalorder %s185, %s199
    %p201 = scmp.eq.s32.totalorder %s23, 0
    %p202 = por %p200, %p201
    %s203 = ssub.s32 %s17, %s24
    %p204 = scmp.eq.s32.totalorder %s203, 0
    %s206 = sadd.s32 %s205, 1
    %s207 = scalar_select %p204, %s205, %s206
    %p210 = pneg %p204
    %p211 = scmp.eq.s32.totalorder %s17, 1
    %p212 = por %p210, %p211
    %p213 = scmp.ne.s32.totalorder %s205, %s208
    %p214 = scmp.eq.s32.totalorder %s17, 0
    %p215 = por %p213, %p214
    %p216 = scmp.ne.s32.totalorder %s205, %s208
    %p217 = scmp.eq.s32.totalorder %s22, 1
    %p218 = por %p216, %p217
    %p219 = scmp.ne.s32.totalorder %s208, %s209
    %p220 = scmp.eq.s32.totalorder %s22, 0
    %p221 = por %p219, %p220
    %p222 = scmp.ne.s32.totalorder %s208, %s209
    %p223 = scmp.eq.s32.totalorder %s23, 1
    %p224 = por %p222, %p223
    %p226 = scmp.ne.s32.totalorder %s209, %s225
    %p227 = scmp.eq.s32.totalorder %s23, 0
    %p228 = por %p226, %p227
    %s229 = ssub.s32 %s17, %s24
    %p230 = scmp.eq.s32.totalorder %s229, 0
    %s232 = sadd.s32 %s231, 1
    %s233 = scalar_select %p230, %s231, %s232
    %p236 = pneg %p230
    %p237 = scmp.eq.s32.totalorder %s17, 1
    %p238 = por %p236, %p237
    %p239 = scmp.ne.s32.totalorder %s231, %s234
    %p240 = scmp.eq.s32.totalorder %s17, 0
    %p241 = por %p239, %p240
    %p242 = scmp.ne.s32.totalorder %s231, %s234
    %p243 = scmp.eq.s32.totalorder %s22, 1
    %p244 = por %p242, %p243
    %p245 = scmp.ne.s32.totalorder %s234, %s235
    %p246 = scmp.eq.s32.totalorder %s22, 0
    %p247 = por %p245, %p246
    %p248 = scmp.ne.s32.totalorder %s234, %s235
    %p249 = scmp.eq.s32.totalorder %s23, 1
    %p250 = por %p248, %p249
    %p252 = scmp.ne.s32.totalorder %s235, %s251
    %p253 = scmp.eq.s32.totalorder %s23, 0
    %p254 = por %p252, %p253
    %s255 = ssub.s32 %s17, %s24
    %p256 = scmp.eq.s32.totalorder %s255, 0
    %s258 = sadd.s32 %s257, 1
    %s259 = scalar_select %p256, %s257, %s258
    %p262 = pneg %p256
    %p263 = scmp.eq.s32.totalorder %s17, 1
    %p264 = por %p262, %p263
    %p265 = scmp.ne.s32.totalorder %s257, %s260
    %p266 = scmp.eq.s32.totalorder %s17, 0
    %p267 = por %p265, %p266
    %p268 = scmp.ne.s32.totalorder %s257, %s260
    %p269 = scmp.eq.s32.totalorder %s22, 1
    %p270 = por %p268, %p269
    %p271 = scmp.ne.s32.totalorder %s260, %s261
    %p272 = scmp.eq.s32.totalorder %s22, 0
    %p273 = por %p271, %p272
    %p274 = scmp.ne.s32.totalorder %s260, %s261
    %p275 = scmp.eq.s32.totalorder %s23, 1
    %p276 = por %p274, %p275
    %p278 = scmp.ne.s32.totalorder %s261, %s277
    %p279 = scmp.eq.s32.totalorder %s23, 0
    %p280 = por %p278, %p279
    %p281 = scmp.le.s32.totalorder 1, %s17
    %p282 = scmp.lt.s32.totalorder %s17, 3
    %p283 = pnand %p281, %p282
    %p284 = pneg %p283
    // Predicated region
    $region9: #{csfcn_forward.3} parent=5 // pred_check
      _
    $region10: #{csfcn_forward.3} parent=5 // pred_check_branch
      %286 = sbr.rel (%p283) target = $region12
    $region11: #{csfcn_forward.3} parent=5 // pred_region
      %s287 = ssub.s32 %s17, 1
      // Predicated region
      $region13: #{csfcn_forward.3} parent=11 // pred_check
        %p288 = pneg %p90
      $region14: #{csfcn_forward.3} parent=11 // pred_check_branch
        %290 = sbr.rel (%p288) target = $region16
      $region15: #{csfcn_forward.3} parent=11 // pred_region
        _
      $region16: #{csfcn_forward.3} parent=11 // pred_fallthru
        _
      // Predicated region
      $region17: #{csfcn_forward.3} parent=11 // pred_check
        %p291 = pneg %p111
      $region18: #{csfcn_forward.3} parent=11 // pred_check_branch
        %293 = sbr.rel (%p291) target = $region20
      $region19: #{csfcn_forward.3} parent=11 // pred_region
        _
      $region20: #{csfcn_forward.3} parent=11 // pred_fallthru
        _
      // Predicated region
      $region21: #{csfcn_forward.3} parent=11 // pred_check
        %p294 = pneg %p132
      $region22: #{csfcn_forward.3} parent=11 // pred_check_branch
        %296 = sbr.rel (%p294) target = $region24
      $region23: #{csfcn_forward.3} parent=11 // pred_region
        _
      $region24: #{csfcn_forward.3} parent=11 // pred_fallthru
        _
      // Predicated region
      $region25: #{csfcn_forward.3} parent=11 // pred_check
        %p297 = pneg %p153
      $region26: #{csfcn_forward.3} parent=11 // pred_check_branch
        %299 = sbr.rel (%p297) target = $region28
      $region27: #{csfcn_forward.3} parent=11 // pred_region
        _
      $region28: #{csfcn_forward.3} parent=11 // pred_fallthru
        _
      // Predicated region
      $region29: #{csfcn_forward.3} parent=11 // pred_check
        %p300 = pneg %p174
      $region30: #{csfcn_forward.3} parent=11 // pred_check_branch
        %302 = sbr.rel (%p300) target = $region32
      $region31: #{csfcn_forward.3} parent=11 // pred_region
        _
      $region32: #{csfcn_forward.3} parent=11 // pred_fallthru
        _
      // Predicated region
      $region33: #{csfcn_forward.3} parent=11 // pred_check
        %p303 = pneg %p195
      $region34: #{csfcn_forward.3} parent=11 // pred_check_branch
        %305 = sbr.rel (%p303) target = $region36
      $region35: #{csfcn_forward.3} parent=11 // pred_region
        _
      $region36: #{csfcn_forward.3} parent=11 // pred_fallthru
        _
    $region12: #{csfcn_forward.3} parent=5 // pred_fallthru
      _
    %p306 = scmp.lt.s32.totalorder %s17, 2
    // Predicated region
    $region37: #{csfcn_forward.3} parent=5 // pred_check
      %p307 = pneg %p306
    $region38: #{csfcn_forward.3} parent=5 // pred_check_branch
      %309 = sbr.rel (%p307) target = $region40
    $region39: #{csfcn_forward.3} parent=5 // pred_region
      // Predicated region
      $region41: #{csfcn_forward.3} parent=39 // pred_check
        %p310 = pneg %p37
      $region42: #{csfcn_forward.3} parent=39 // pred_check_branch
        %312 = sbr.rel (%p310) target = $region44
      $region43: #{csfcn_forward.3} parent=39 // pred_region
        %p313 = scmp.lt.s32.totalorder %s17, 1
        %s314 = scalar_select %p313, %s17, 1
        %s315 = smul.addr %s314, 8
        %s316 = smul.addr %s315, 8
        %s317 = scalar_lea.vmem %s0, %s316
      $region44: #{csfcn_forward.3} parent=39 // pred_fallthru
        _
      // Predicated region
      $region45: #{csfcn_forward.3} parent=39 // pred_check
        %p318 = pneg %p63
      $region46: #{csfcn_forward.3} parent=39 // pred_check_branch
        %320 = sbr.rel (%p318) target = $region48
      $region47: #{csfcn_forward.3} parent=39 // pred_region
        %p321 = scmp.lt.s32.totalorder %s17, 1
        %s322 = scalar_select %p321, %s17, 1
        %s323 = smul.addr %s322, 8
        %s324 = smul.addr %s323, 8
        %s325 = scalar_lea.vmem %s1, %s324
      $region48: #{csfcn_forward.3} parent=39 // pred_fallthru
        _
    $region40: #{csfcn_forward.3} parent=5 // pred_fallthru
      _
    %p326 = scmp.le.s32.totalorder 1, %s17
    %p327 = scmp.lt.s32.totalorder %s17, 3
    %p328 = pnand %p326, %p327
    %p329 = pneg %p328
    // Predicated region
    $region49: #{csfcn_forward.3} parent=5 // pred_check
      _
    $region50: #{csfcn_forward.3} parent=5 // pred_check_branch
      %331 = sbr.rel (%p328) target = $region52
    $region51: #{csfcn_forward.3} parent=5 // pred_region
      %s332 = ssub.s32 %s17, 1
      %p333 = scmp.lt.s32.totalorder %s22, 1
      %s334 = scalar_select %p333, %s22, 1
      %s335 = smul.addr %s334, 8
      %s336 = smul.addr %s335, 8
      %s337 = scalar_lea.vmem %s0, %s336
      %p338 = pneg %p43
      %p339 = pneg %p40
      %p340 = scmp.lt.s32.totalorder %s22, 1
      %s341 = scalar_select %p340, %s22, 1
      %s342 = smul.addr %s341, 8
      %s343 = smul.addr %s342, 8
      %s344 = scalar_lea.vmem %s1, %s343
      %p345 = pneg %p69
      %p346 = pneg %p66
      %p347 = pneg %p90
      %p348 = pneg %p87
      %p349 = pneg %p111
      %p350 = pneg %p108
      %p351 = pneg %p132
      %p352 = pneg %p129
      %p353 = pneg %p153
      %p354 = pneg %p150
      %p355 = pneg %p174
      %p356 = pneg %p171
      %p357 = pneg %p195
      %p358 = pneg %p192
      %p359 = pneg %p221
      %p360 = pneg %p218
      %p361 = scmp.lt.s32.totalorder %s22, 1
      %s362 = scalar_select %p361, %s22, 1
      %s363 = smul.addr %s362, 8
      %s364 = smul.addr %s363, 8
      %s365 = scalar_lea.vmem %s8, %s364
      %p366 = pneg %p247
      %p367 = pneg %p244
      %p368 = scmp.lt.s32.totalorder %s22, 1
      %s369 = scalar_select %p368, %s22, 1
      %s370 = smul.addr %s369, 8
      %s371 = smul.addr %s370, 8
      %s372 = scalar_lea.vmem %s9, %s371
      %p373 = pneg %p273
      %p374 = pneg %p270
      %p375 = scmp.lt.s32.totalorder %s22, 1
      %s376 = scalar_select %p375, %s22, 1
      %s377 = smul.addr %s376, 4
      %s378 = smul.addr %s377, 8
      %s379 = scalar_lea.vmem %s10, %s378
      %p380 = scmp.lt.s32.totalorder %s22, 1
      %s381 = scalar_select %p380, %s22, 1
      %s382 = smul.addr %s381, 8
      %s383 = smul.addr %s382, 8
      %s384 = scalar_lea.vmem %s0, %s383
      %p385 = scmp.lt.s32.totalorder %s22, 1
      %s386 = scalar_select %p385, %s22, 1
      %s387 = smul.addr %s386, 8
      %s388 = smul.addr %s387, 8
      %s389 = scalar_lea.vmem %s1, %s388
      %p390 = scmp.lt.s32.totalorder %s22, 1
      %s391 = scalar_select %p390, %s22, 1
      %s392 = smul.addr %s391, 8
      %s393 = smul.addr %s392, 8
      %s394 = scalar_lea.vmem %s8, %s393
      %p395 = scmp.lt.s32.totalorder %s22, 1
      %s396 = scalar_select %p395, %s22, 1
      %s397 = smul.addr %s396, 8
      %s398 = smul.addr %s397, 8
      %s399 = scalar_lea.vmem %s9, %s398
      %p400 = scmp.lt.s32.totalorder %s22, 1
      %s401 = scalar_select %p400, %s22, 1
      %s402 = smul.addr %s401, 4
      %s403 = smul.addr %s402, 8
      %s404 = scalar_lea.vmem %s10, %s403
      %v406 = vld [vmem:[%s384] sm:$0xff]
      %v407 = vld [vmem:[%s384 + $0x8] sm:$0xff]
      %v408 = vld [vmem:[%s384 + $0x10] sm:$0xff]
      %v409 = vld [vmem:[%s384 + $0x18] sm:$0xff]
      %v410 = vld [vmem:[%s384 + $0x20] sm:$0xff]
      %v411 = vld [vmem:[%s384 + $0x28] sm:$0xff]
      %v412 = vld [vmem:[%s384 + $0x30] sm:$0xff]
      %v413 = vld [vmem:[%s384 + $0x38] sm:$0xff]
      %414 = vxpose.xlu0.b32.start [1/16] %v406, 128
      %415 = vxpose.xlu0.b32.cont [2/16] %v407, 128
      %416 = vxpose.xlu0.b32.cont [3/16] %v408, 128
      %417 = vxpose.xlu0.b32.cont [4/16] %v409, 128
      %418 = vxpose.xlu0.b32.cont [5/16] %v410, 128
      %419 = vxpose.xlu0.b32.cont [6/16] %v411, 128
      %420 = vxpose.xlu0.b32.cont [7/16] %v412, 128
      %421 = vxpose.xlu0.b32.cont [8/16] %v413, 128
      %422 = vxpose.xlu0.b32.cont [9/16] 0.0, 128
      %423 = vxpose.xlu0.b32.cont [10/16] 0.0, 128
      %424 = vxpose.xlu0.b32.cont [11/16] 0.0, 128
      %425 = vxpose.xlu0.b32.cont [12/16] 0.0, 128
      %426 = vxpose.xlu0.b32.cont [13/16] 0.0, 128
      %427 = vxpose.xlu0.b32.cont [14/16] 0.0, 128
      %428 = vxpose.xlu0.b32.cont [15/16] 0.0, 128
      %429 = vxpose.xlu0.b32.end [16/16] 0.0, 128
      %v430 = vpop.trf.xlu0
      %v431 = vpop.trf.xlu0
      %v432 = vpop.trf.xlu0
      %v433 = vpop.trf.xlu0
      %v434 = vpop.trf.xlu0
      %v435 = vpop.trf.xlu0
      %v436 = vpop.trf.xlu0
      %v437 = vpop.trf.xlu0
      %v438 = vpop.trf.xlu0
      %v439 = vpop.trf.xlu0
      %v440 = vpop.trf.xlu0
      %v441 = vpop.trf.xlu0
      %v442 = vpop.trf.xlu0
      %v443 = vpop.trf.xlu0
      %v444 = vpop.trf.xlu0
      %v445 = vpop.trf.xlu0
      %vm446 = vcmask 523264
      %447 = vst.msk [vmem:[#allocation2] sm:$0xff] %vm446, 0.0
      %vm448 = vcmask 517120
      %449 = vst.msk [vmem:[#allocation2 + $0x8] sm:$0x3] %vm448, 0.0
      %s450 = scalar_lea.vmem [#allocation2], 144
      %451 = vst.msk [vmem:[%s450] sm:$0xff] %vm446, 0.0
      %452 = vst.msk [vmem:[%s450 + $0x8] sm:$0x3] %vm448, 0.0
      %v461 = vrot.slane %v430, 7
      %v462 = vrot.slane %v431, 7
      %v463 = vrot.slane %v432, 7
      %v464 = vrot.slane %v433, 7
      %v465 = vrot.slane %v434, 7
      %v466 = vrot.slane %v435, 7
      %v467 = vrot.slane %v436, 7
      %v468 = vrot.slane %v437, 7
      %vm477 = vcmask 1040384
      %v478 = vsel %vm477, 0.0, %v461
      %v479 = vsel %vm477, 0.0, %v462
      %v480 = vsel %vm477, 0.0, %v463
      %v481 = vsel %vm477, 0.0, %v464
      %v482 = vsel %vm477, 0.0, %v465
      %v483 = vsel %vm477, 0.0, %v466
      %v484 = vsel %vm477, 0.0, %v467
      %v485 = vsel %vm477, 0.0, %v468
      %v486 = vsel %vm477, %v461, 0.0
      %v487 = vsel %vm477, %v462, 0.0
      %v488 = vsel %vm477, %v463, 0.0
      %v489 = vsel %vm477, %v464, 0.0
      %v490 = vsel %vm477, %v465, 0.0
      %v491 = vsel %vm477, %v466, 0.0
      %v492 = vsel %vm477, %v467, 0.0
      %v493 = vsel %vm477, %v468, 0.0
      %s494 = scalar_lea.vmem [#allocation2], 16
      %495 = vst.msk [vmem:[%s494] sm:$0xff] %vm446, %v478
      %496 = vst.msk [vmem:[%s494 + $0x8] sm:$0x3] %vm448, %v486
      %497 = vst.msk [vmem:[%s494 + $0x10] sm:$0xff] %vm446, %v479
      %498 = vst.msk [vmem:[%s494 + $0x18] sm:$0x3] %vm448, %v487
      %499 = vst.msk [vmem:[%s494 + $0x20] sm:$0xff] %vm446, %v480
      %500 = vst.msk [vmem:[%s494 + $0x28] sm:$0x3] %vm448, %v488
      %501 = vst.msk [vmem:[%s494 + $0x30] sm:$0xff] %vm446, %v481
      %502 = vst.msk [vmem:[%s494 + $0x38] sm:$0x3] %vm448, %v489
      %503 = vst.msk [vmem:[%s494 + $0x40] sm:$0xff] %vm446, %v482
      %504 = vst.msk [vmem:[%s494 + $0x48] sm:$0x3] %vm448, %v490
      %505 = vst.msk [vmem:[%s494 + $0x50] sm:$0xff] %vm446, %v483
      %506 = vst.msk [vmem:[%s494 + $0x58] sm:$0x3] %vm448, %v491
      %507 = vst.msk [vmem:[%s494 + $0x60] sm:$0xff] %vm446, %v484
      %508 = vst.msk [vmem:[%s494 + $0x68] sm:$0x3] %vm448, %v492
      %509 = vst.msk [vmem:[%s494 + $0x70] sm:$0xff] %vm446, %v485
      %510 = vst.msk [vmem:[%s494 + $0x78] sm:$0x3] %vm448, %v493
      %v511 = vld [vmem:[%s389] sm:$0xff]
      %v512 = vld [vmem:[%s389 + $0x8] sm:$0xff]
      %v513 = vld [vmem:[%s389 + $0x10] sm:$0xff]
      %v514 = vld [vmem:[%s389 + $0x18] sm:$0xff]
      %v515 = vld [vmem:[%s389 + $0x20] sm:$0xff]
      %v516 = vld [vmem:[%s389 + $0x28] sm:$0xff]
      %v517 = vld [vmem:[%s389 + $0x30] sm:$0xff]
      %v518 = vld [vmem:[%s389 + $0x38] sm:$0xff]
      %519 = vxpose.xlu0.b32.start [1/16] %v511, 128
      %520 = vxpose.xlu0.b32.cont [2/16] %v513, 128
      %521 = vxpose.xlu0.b32.cont [3/16] %v515, 128
      %522 = vxpose.xlu0.b32.cont [4/16] %v517, 128
      %523 = vxpose.xlu0.b32.cont [5/16] 0.0, 128
      %524 = vxpose.xlu0.b32.cont [6/16] 0.0, 128
      %525 = vxpose.xlu0.b32.cont [7/16] 0.0, 128
      %526 = vxpose.xlu0.b32.cont [8/16] 0.0, 128
      %527 = vxpose.xlu0.b32.cont [9/16] 0.0, 128
      %528 = vxpose.xlu0.b32.cont [10/16] 0.0, 128
      %529 = vxpose.xlu0.b32.cont [11/16] 0.0, 128
      %530 = vxpose.xlu0.b32.cont [12/16] 0.0, 128
      %531 = vxpose.xlu0.b32.cont [13/16] 0.0, 128
      %532 = vxpose.xlu0.b32.cont [14/16] 0.0, 128
      %533 = vxpose.xlu0.b32.cont [15/16] 0.0, 128
      %534 = vxpose.xlu0.b32.end [16/16] 0.0, 128
      %v535 = vpop.trf.xlu0
      %v536 = vpop.trf.xlu0
      %v537 = vpop.trf.xlu0
      %v538 = vpop.trf.xlu0
      %v539 = vpop.trf.xlu0
      %v540 = vpop.trf.xlu0
      %v541 = vpop.trf.xlu0
      %v542 = vpop.trf.xlu0
      %v543 = vpop.trf.xlu0
      %v544 = vpop.trf.xlu0
      %v545 = vpop.trf.xlu0
      %v546 = vpop.trf.xlu0
      %v547 = vpop.trf.xlu0
      %v548 = vpop.trf.xlu0
      %v549 = vpop.trf.xlu0
      %v550 = vpop.trf.xlu0
      %551 = vxpose.xlu0.b32.start [1/16] %v512, 128
      %552 = vxpose.xlu0.b32.cont [2/16] %v514, 128
      %553 = vxpose.xlu0.b32.cont [3/16] %v516, 128
      %554 = vxpose.xlu0.b32.cont [4/16] %v518, 128
      %555 = vxpose.xlu0.b32.cont [5/16] 0.0, 128
      %556 = vxpose.xlu0.b32.cont [6/16] 0.0, 128
      %557 = vxpose.xlu0.b32.cont [7/16] 0.0, 128
      %558 = vxpose.xlu0.b32.cont [8/16] 0.0, 128
      %559 = vxpose.xlu0.b32.cont [9/16] 0.0, 128
      %560 = vxpose.xlu0.b32.cont [10/16] 0.0, 128
      %561 = vxpose.xlu0.b32.cont [11/16] 0.0, 128
      %562 = vxpose.xlu0.b32.cont [12/16] 0.0, 128
      %563 = vxpose.xlu0.b32.cont [13/16] 0.0, 128
      %564 = vxpose.xlu0.b32.cont [14/16] 0.0, 128
      %565 = vxpose.xlu0.b32.cont [15/16] 0.0, 128
      %566 = vxpose.xlu0.b32.end [16/16] 0.0, 128
      %v567 = vpop.trf.xlu0
      %v568 = vpop.trf.xlu0
      %v569 = vpop.trf.xlu0
      %v570 = vpop.trf.xlu0
      %v571 = vpop.trf.xlu0
      %v572 = vpop.trf.xlu0
      %v573 = vpop.trf.xlu0
      %v574 = vpop.trf.xlu0
      %v575 = vpop.trf.xlu0
      %v576 = vpop.trf.xlu0
      %v577 = vpop.trf.xlu0
      %v578 = vpop.trf.xlu0
      %v579 = vpop.trf.xlu0
      %v580 = vpop.trf.xlu0
      %v581 = vpop.trf.xlu0
      %v582 = vpop.trf.xlu0
      %vm583 = vcmask 261120
      %584 = vst.msk [vmem:[#allocation3] sm:$0xff] %vm583, 0.0
      %585 = vst.msk [vmem:[#allocation3 + $0x8] sm:$0xff] %vm583, 0.0
      %vm586 = vcmask 254976
      %587 = vst.msk [vmem:[#allocation3 + $0x10] sm:$0x3] %vm586, 0.0
      %s588 = scalar_lea.vmem [#allocation3], 408
      %589 = vst.msk [vmem:[%s588] sm:$0xff] %vm583, 0.0
      %590 = vst.msk [vmem:[%s588 + $0x8] sm:$0xff] %vm583, 0.0
      %591 = vst.msk [vmem:[%s588 + $0x10] sm:$0x3] %vm586, 0.0
      %v624 = vrot.slane %v535, 7
      %v625 = vrot.slane %v536, 7
      %v626 = vsel %vm477, %v624, %v625
      %v627 = vrot.slane %v537, 7
      %v628 = vrot.slane %v538, 7
      %v629 = vsel %vm477, %v627, %v628
      %v630 = vrot.slane %v539, 7
      %v631 = vrot.slane %v540, 7
      %v632 = vsel %vm477, %v630, %v631
      %v633 = vrot.slane %v541, 7
      %v634 = vrot.slane %v542, 7
      %v635 = vsel %vm477, %v633, %v634
      %v636 = vrot.slane %v543, 7
      %v637 = vrot.slane %v544, 7
      %v638 = vsel %vm477, %v636, %v637
      %v639 = vrot.slane %v545, 7
      %v640 = vrot.slane %v546, 7
      %v641 = vsel %vm477, %v639, %v640
      %v642 = vrot.slane %v547, 7
      %v643 = vrot.slane %v548, 7
      %v644 = vsel %vm477, %v642, %v643
      %v645 = vrot.slane %v549, 7
      %v646 = vrot.slane %v550, 7
      %v647 = vsel %vm477, %v645, %v646
      %v648 = vrot.slane %v567, 7
      %v649 = vrot.slane %v568, 7
      %v650 = vsel %vm477, %v648, %v649
      %v651 = vrot.slane %v569, 7
      %v652 = vrot.slane %v570, 7
      %v653 = vsel %vm477, %v651, %v652
      %v654 = vrot.slane %v571, 7
      %v655 = vrot.slane %v572, 7
      %v656 = vsel %vm477, %v654, %v655
      %v657 = vrot.slane %v573, 7
      %v658 = vrot.slane %v574, 7
      %v659 = vsel %vm477, %v657, %v658
      %v660 = vrot.slane %v575, 7
      %v661 = vrot.slane %v576, 7
      %v662 = vsel %vm477, %v660, %v661
      %v663 = vrot.slane %v577, 7
      %v664 = vrot.slane %v578, 7
      %v665 = vsel %vm477, %v663, %v664
      %v666 = vrot.slane %v579, 7
      %v667 = vrot.slane %v580, 7
      %v668 = vsel %vm477, %v666, %v667
      %v669 = vrot.slane %v581, 7
      %v670 = vrot.slane %v582, 7
      %v671 = vsel %vm477, %v669, %v670
      %v720 = vsel %vm477, 0.0, %v624
      %v721 = vsel %vm477, 0.0, %v627
      %v722 = vsel %vm477, 0.0, %v630
      %v723 = vsel %vm477, 0.0, %v633
      %v724 = vsel %vm477, 0.0, %v636
      %v725 = vsel %vm477, 0.0, %v639
      %v726 = vsel %vm477, 0.0, %v642
      %v727 = vsel %vm477, 0.0, %v645
      %v728 = vsel %vm477, 0.0, %v648
      %v729 = vsel %vm477, 0.0, %v651
      %v730 = vsel %vm477, 0.0, %v654
      %v731 = vsel %vm477, 0.0, %v657
      %v732 = vsel %vm477, 0.0, %v660
      %v733 = vsel %vm477, 0.0, %v663
      %v734 = vsel %vm477, 0.0, %v666
      %v735 = vsel %vm477, 0.0, %v669
      %v736 = vsel %vm477, %v625, 0.0
      %v737 = vsel %vm477, %v628, 0.0
      %v738 = vsel %vm477, %v631, 0.0
      %v739 = vsel %vm477, %v634, 0.0
      %v740 = vsel %vm477, %v637, 0.0
      %v741 = vsel %vm477, %v640, 0.0
      %v742 = vsel %vm477, %v643, 0.0
      %v743 = vsel %vm477, %v646, 0.0
      %v744 = vsel %vm477, %v649, 0.0
      %v745 = vsel %vm477, %v652, 0.0
      %v746 = vsel %vm477, %v655, 0.0
      %v747 = vsel %vm477, %v658, 0.0
      %v748 = vsel %vm477, %v661, 0.0
      %v749 = vsel %vm477, %v664, 0.0
      %v750 = vsel %vm477, %v667, 0.0
      %v751 = vsel %vm477, %v670, 0.0
      %s752 = scalar_lea.vmem [#allocation3], 24
      %753 = vst.msk [vmem:[%s752] sm:$0xff] %vm583, %v720
      %754 = vst.msk [vmem:[%s752 + $0x8] sm:$0xff] %vm583, %v626
      %755 = vst.msk [vmem:[%s752 + $0x10] sm:$0x3] %vm586, %v736
      %756 = vst.msk [vmem:[%s752 + $0x18] sm:$0xff] %vm583, %v721
      %757 = vst.msk [vmem:[%s752 + $0x20] sm:$0xff] %vm583, %v629
      %758 = vst.msk [vmem:[%s752 + $0x28] sm:$0x3] %vm586, %v737
      %759 = vst.msk [vmem:[%s752 + $0x30] sm:$0xff] %vm583, %v722
      %760 = vst.msk [vmem:[%s752 + $0x38] sm:$0xff] %vm583, %v632
      %761 = vst.msk [vmem:[%s752 + $0x40] sm:$0x3] %vm586, %v738
      %762 = vst.msk [vmem:[%s752 + $0x48] sm:$0xff] %vm583, %v723
      %763 = vst.msk [vmem:[%s752 + $0x50] sm:$0xff] %vm583, %v635
      %764 = vst.msk [vmem:[%s752 + $0x58] sm:$0x3] %vm586, %v739
      %765 = vst.msk [vmem:[%s752 + $0x60] sm:$0xff] %vm583, %v724
      %766 = vst.msk [vmem:[%s752 + $0x68] sm:$0xff] %vm583, %v638
      %767 = vst.msk [vmem:[%s752 + $0x70] sm:$0x3] %vm586, %v740
      %768 = vst.msk [vmem:[%s752 + $0x78] sm:$0xff] %vm583, %v725
      %769 = vst.msk [vmem:[%s752 + $0x80] sm:$0xff] %vm583, %v641
      %770 = vst.msk [vmem:[%s752 + $0x88] sm:$0x3] %vm586, %v741
      %771 = vst.msk [vmem:[%s752 + $0x90] sm:$0xff] %vm583, %v726
      %772 = vst.msk [vmem:[%s752 + $0x98] sm:$0xff] %vm583, %v644
      %773 = vst.msk [vmem:[%s752 + $0xa0] sm:$0x3] %vm586, %v742
      %774 = vst.msk [vmem:[%s752 + $0xa8] sm:$0xff] %vm583, %v727
      %775 = vst.msk [vmem:[%s752 + $0xb0] sm:$0xff] %vm583, %v647
      %776 = vst.msk [vmem:[%s752 + $0xb8] sm:$0x3] %vm586, %v743
      %777 = vst.msk [vmem:[%s752 + $0xc0] sm:$0xff] %vm583, %v728
      %778 = vst.msk [vmem:[%s752 + $0xc8] sm:$0xff] %vm583, %v650
      %779 = vst.msk [vmem:[%s752 + $0xd0] sm:$0x3] %vm586, %v744
      %780 = vst.msk [vmem:[%s752 + $0xd8] sm:$0xff] %vm583, %v729
      %781 = vst.msk [vmem:[%s752 + $0xe0] sm:$0xff] %vm583, %v653
      %782 = vst.msk [vmem:[%s752 + $0xe8] sm:$0x3] %vm586, %v745
      %783 = vst.msk [vmem:[%s752 + $0xf0] sm:$0xff] %vm583, %v730
      %784 = vst.msk [vmem:[%s752 + $0xf8] sm:$0xff] %vm583, %v656
      %785 = vst.msk [vmem:[%s752 + $0x100] sm:$0x3] %vm586, %v746
      %786 = vst.msk [vmem:[%s752 + $0x108] sm:$0xff] %vm583, %v731
      %787 = vst.msk [vmem:[%s752 + $0x110] sm:$0xff] %vm583, %v659
      %788 = vst.msk [vmem:[%s752 + $0x118] sm:$0x3] %vm586, %v747
      %789 = vst.msk [vmem:[%s752 + $0x120] sm:$0xff] %vm583, %v732
      %790 = vst.msk [vmem:[%s752 + $0x128] sm:$0xff] %vm583, %v662
      %791 = vst.msk [vmem:[%s752 + $0x130] sm:$0x3] %vm586, %v748
      %792 = vst.msk [vmem:[%s752 + $0x138] sm:$0xff] %vm583, %v733
      %793 = vst.msk [vmem:[%s752 + $0x140] sm:$0xff] %vm583, %v665
      %794 = vst.msk [vmem:[%s752 + $0x148] sm:$0x3] %vm586, %v749
      %795 = vst.msk [vmem:[%s752 + $0x150] sm:$0xff] %vm583, %v734
      %796 = vst.msk [vmem:[%s752 + $0x158] sm:$0xff] %vm583, %v668
      %797 = vst.msk [vmem:[%s752 + $0x160] sm:$0x3] %vm586, %v750
      %798 = vst.msk [vmem:[%s752 + $0x168] sm:$0xff] %vm583, %v735
      %799 = vst.msk [vmem:[%s752 + $0x170] sm:$0xff] %vm583, %v671
      %800 = vst.msk [vmem:[%s752 + $0x178] sm:$0x3] %vm586, %v751
      %v801 = vld [vmem:[#allocation2] sm:$0xff]
      %v802 = vld [vmem:[#allocation2 + $0x10] sm:$0xff]
      %v803 = vld [vmem:[#allocation2 + $0x20] sm:$0xff]
      %v804 = vld [vmem:[#allocation2 + $0x30] sm:$0xff]
      %v805 = vld [vmem:[#allocation2 + $0x40] sm:$0xff]
      %v806 = vld [vmem:[#allocation2 + $0x50] sm:$0xff]
      %v807 = vld [vmem:[#allocation2 + $0x60] sm:$0xff]
      %v808 = vld [vmem:[#allocation2 + $0x70] sm:$0xff]
      %v809 = vld [vmem:[#allocation2 + $0x1] sm:$0xff]
      %v810 = vld [vmem:[#allocation2 + $0x11] sm:$0xff]
      %v811 = vld [vmem:[#allocation2 + $0x21] sm:$0xff]
      %v812 = vld [vmem:[#allocation2 + $0x31] sm:$0xff]
      %v813 = vld [vmem:[#allocation2 + $0x41] sm:$0xff]
      %v814 = vld [vmem:[#allocation2 + $0x51] sm:$0xff]
      %v815 = vld [vmem:[#allocation2 + $0x61] sm:$0xff]
      %v816 = vld [vmem:[#allocation2 + $0x71] sm:$0xff]
      %v817 = vld [vmem:[#allocation2 + $0x2] sm:$0xff]
      %v818 = vld [vmem:[#allocation2 + $0x12] sm:$0xff]
      %v819 = vld [vmem:[#allocation2 + $0x22] sm:$0xff]
      %v820 = vld [vmem:[#allocation2 + $0x32] sm:$0xff]
      %v821 = vld [vmem:[#allocation2 + $0x42] sm:$0xff]
      %v822 = vld [vmem:[#allocation2 + $0x52] sm:$0xff]
      %v823 = vld [vmem:[#allocation2 + $0x62] sm:$0xff]
      %v824 = vld [vmem:[#allocation2 + $0x72] sm:$0xff]
      %v825 = vld [vmem:[%s494] sm:$0xff]
      %v826 = vld [vmem:[%s494 + $0x10] sm:$0xff]
      %v827 = vld [vmem:[%s494 + $0x20] sm:$0xff]
      %v828 = vld [vmem:[%s494 + $0x30] sm:$0xff]
      %v829 = vld [vmem:[%s494 + $0x40] sm:$0xff]
      %v830 = vld [vmem:[%s494 + $0x50] sm:$0xff]
      %v831 = vld [vmem:[%s494 + $0x60] sm:$0xff]
      %v832 = vld [vmem:[%s494 + $0x70] sm:$0xff]
      %v833 = vld [vmem:[%s494 + $0x1] sm:$0xff]
      %v834 = vld [vmem:[%s494 + $0x11] sm:$0xff]
      %v835 = vld [vmem:[%s494 + $0x21] sm:$0xff]
      %v836 = vld [vmem:[%s494 + $0x31] sm:$0xff]
      %v837 = vld [vmem:[%s494 + $0x41] sm:$0xff]
      %v838 = vld [vmem:[%s494 + $0x51] sm:$0xff]
      %v839 = vld [vmem:[%s494 + $0x61] sm:$0xff]
      %v840 = vld [vmem:[%s494 + $0x71] sm:$0xff]
      %v841 = vld [vmem:[%s494 + $0x2] sm:$0xff]
      %v842 = vld [vmem:[%s494 + $0x12] sm:$0xff]
      %v843 = vld [vmem:[%s494 + $0x22] sm:$0xff]
      %v844 = vld [vmem:[%s494 + $0x32] sm:$0xff]
      %v845 = vld [vmem:[%s494 + $0x42] sm:$0xff]
      %v846 = vld [vmem:[%s494 + $0x52] sm:$0xff]
      %v847 = vld [vmem:[%s494 + $0x62] sm:$0xff]
      %v848 = vld [vmem:[%s494 + $0x72] sm:$0xff]
      %s849 = scalar_lea.vmem [#allocation2], 32
      %v850 = vld [vmem:[%s849] sm:$0xff]
      %v851 = vld [vmem:[%s849 + $0x10] sm:$0xff]
      %v852 = vld [vmem:[%s849 + $0x20] sm:$0xff]
      %v853 = vld [vmem:[%s849 + $0x30] sm:$0xff]
      %v854 = vld [vmem:[%s849 + $0x40] sm:$0xff]
      %v855 = vld [vmem:[%s849 + $0x50] sm:$0xff]
      %v856 = vld [vmem:[%s849 + $0x60] sm:$0xff]
      %v857 = vld [vmem:[%s849 + $0x70] sm:$0xff]
      %v858 = vld [vmem:[%s849 + $0x1] sm:$0xff]
      %v859 = vld [vmem:[%s849 + $0x11] sm:$0xff]
      %v860 = vld [vmem:[%s849 + $0x21] sm:$0xff]
      %v861 = vld [vmem:[%s849 + $0x31] sm:$0xff]
      %v862 = vld [vmem:[%s849 + $0x41] sm:$0xff]
      %v863 = vld [vmem:[%s849 + $0x51] sm:$0xff]
      %v864 = vld [vmem:[%s849 + $0x61] sm:$0xff]
      %v865 = vld [vmem:[%s849 + $0x71] sm:$0xff]
      %v866 = vld [vmem:[%s849 + $0x2] sm:$0xff]
      %v867 = vld [vmem:[%s849 + $0x12] sm:$0xff]
      %v868 = vld [vmem:[%s849 + $0x22] sm:$0xff]
      %v869 = vld [vmem:[%s849 + $0x32] sm:$0xff]
      %v870 = vld [vmem:[%s849 + $0x42] sm:$0xff]
      %v871 = vld [vmem:[%s849 + $0x52] sm:$0xff]
      %v872 = vld [vmem:[%s849 + $0x62] sm:$0xff]
      %v873 = vld [vmem:[%s849 + $0x72] sm:$0xff]
      %882 = vrot.lane.b32.xlu0 %v809, 64
      %v883 = vpop.permute.xlu0 %882
      %884 = vrot.lane.b32.xlu0 %v810, 64
      %v885 = vpop.permute.xlu0 %884
      %886 = vrot.lane.b32.xlu0 %v811, 64
      %v887 = vpop.permute.xlu0 %886
      %888 = vrot.lane.b32.xlu0 %v812, 64
      %v889 = vpop.permute.xlu0 %888
      %890 = vrot.lane.b32.xlu0 %v813, 64
      %v891 = vpop.permute.xlu0 %890
      %892 = vrot.lane.b32.xlu0 %v814, 64
      %v893 = vpop.permute.xlu0 %892
      %894 = vrot.lane.b32.xlu0 %v815, 64
      %v895 = vpop.permute.xlu0 %894
      %896 = vrot.lane.b32.xlu0 %v816, 64
      %v897 = vpop.permute.xlu0 %896
      %914 = vrot.lane.b32.xlu0 %v825, 64
      %v915 = vpop.permute.xlu0 %914
      %916 = vrot.lane.b32.xlu0 %v826, 64
      %v917 = vpop.permute.xlu0 %916
      %918 = vrot.lane.b32.xlu0 %v827, 64
      %v919 = vpop.permute.xlu0 %918
      %920 = vrot.lane.b32.xlu0 %v828, 64
      %v921 = vpop.permute.xlu0 %920
      %922 = vrot.lane.b32.xlu0 %v829, 64
      %v923 = vpop.permute.xlu0 %922
      %924 = vrot.lane.b32.xlu0 %v830, 64
      %v925 = vpop.permute.xlu0 %924
      %926 = vrot.lane.b32.xlu0 %v831, 64
      %v927 = vpop.permute.xlu0 %926
      %928 = vrot.lane.b32.xlu0 %v832, 64
      %v929 = vpop.permute.xlu0 %928
      %946 = vrot.lane.b32.xlu0 %v841, 64
      %v947 = vpop.permute.xlu0 %946
      %948 = vrot.lane.b32.xlu0 %v842, 64
      %v949 = vpop.permute.xlu0 %948
      %950 = vrot.lane.b32.xlu0 %v843, 64
      %v951 = vpop.permute.xlu0 %950
      %952 = vrot.lane.b32.xlu0 %v844, 64
      %v953 = vpop.permute.xlu0 %952
      %954 = vrot.lane.b32.xlu0 %v845, 64
      %v955 = vpop.permute.xlu0 %954
      %956 = vrot.lane.b32.xlu0 %v846, 64
      %v957 = vpop.permute.xlu0 %956
      %958 = vrot.lane.b32.xlu0 %v847, 64
      %v959 = vpop.permute.xlu0 %958
      %960 = vrot.lane.b32.xlu0 %v848, 64
      %v961 = vpop.permute.xlu0 %960
      %978 = vrot.lane.b32.xlu0 %v858, 64
      %v979 = vpop.permute.xlu0 %978
      %980 = vrot.lane.b32.xlu0 %v859, 64
      %v981 = vpop.permute.xlu0 %980
      %982 = vrot.lane.b32.xlu0 %v860, 64
      %v983 = vpop.permute.xlu0 %982
      %984 = vrot.lane.b32.xlu0 %v861, 64
      %v985 = vpop.permute.xlu0 %984
      %986 = vrot.lane.b32.xlu0 %v862, 64
      %v987 = vpop.permute.xlu0 %986
      %988 = vrot.lane.b32.xlu0 %v863, 64
      %v989 = vpop.permute.xlu0 %988
      %990 = vrot.lane.b32.xlu0 %v864, 64
      %v991 = vpop.permute.xlu0 %990
      %992 = vrot.lane.b32.xlu0 %v865, 64
      %v993 = vpop.permute.xlu0 %992
      %v1002 = vsel %vm446, %v801, %v883
      %v1003 = vsel %vm446, %v802, %v885
      %v1004 = vsel %vm446, %v803, %v887
      %v1005 = vsel %vm446, %v804, %v889
      %v1006 = vsel %vm446, %v805, %v891
      %v1007 = vsel %vm446, %v806, %v893
      %v1008 = vsel %vm446, %v807, %v895
      %v1009 = vsel %vm446, %v808, %v897
      %v1010 = vsel %vm446, %v817, %v915
      %v1011 = vsel %vm446, %v818, %v917
      %v1012 = vsel %vm446, %v819, %v919
      %v1013 = vsel %vm446, %v820, %v921
      %v1014 = vsel %vm446, %v821, %v923
      %v1015 = vsel %vm446, %v822, %v925
      %v1016 = vsel %vm446, %v823, %v927
      %v1017 = vsel %vm446, %v824, %v929
      %v1018 = vsel %vm446, %v833, %v947
      %v1019 = vsel %vm446, %v834, %v949
      %v1020 = vsel %vm446, %v835, %v951
      %v1021 = vsel %vm446, %v836, %v953
      %v1022 = vsel %vm446, %v837, %v955
      %v1023 = vsel %vm446, %v838, %v957
      %v1024 = vsel %vm446, %v839, %v959
      %v1025 = vsel %vm446, %v840, %v961
      %v1026 = vsel %vm446, %v850, %v979
      %v1027 = vsel %vm446, %v851, %v981
      %v1028 = vsel %vm446, %v852, %v983
      %v1029 = vsel %vm446, %v853, %v985
      %v1030 = vsel %vm446, %v854, %v987
      %v1031 = vsel %vm446, %v855, %v989
      %v1032 = vsel %vm446, %v856, %v991
      %v1033 = vsel %vm446, %v857, %v993
      %v1034 = vpack.c.bf16 %v1003, %v1002
      %v1035 = vpack.c.bf16 %v1011, %v1010
      %v1036 = vpack.c.bf16 %v1019, %v1018
      %v1037 = vpack.c.bf16 %v1027, %v1026
      %v1038 = vpack.c.bf16 %v867, %v866
      %v1039 = vpack.c.bf16 %v1005, %v1004
      %v1040 = vpack.c.bf16 %v1013, %v1012
      %v1041 = vpack.c.bf16 %v1021, %v1020
      %v1042 = vpack.c.bf16 %v1029, %v1028
      %v1043 = vpack.c.bf16 %v869, %v868
      %v1044 = vpack.c.bf16 %v1007, %v1006
      %v1045 = vpack.c.bf16 %v1015, %v1014
      %v1046 = vpack.c.bf16 %v1023, %v1022
      %v1047 = vpack.c.bf16 %v1031, %v1030
      %v1048 = vpack.c.bf16 %v871, %v870
      %v1049 = vpack.c.bf16 %v1009, %v1008
      %v1050 = vpack.c.bf16 %v1017, %v1016
      %v1051 = vpack.c.bf16 %v1025, %v1024
      %v1052 = vpack.c.bf16 %v1033, %v1032
      %v1053 = vpack.c.bf16 %v873, %v872
      %v1054 = vld [vmem:[%s3] sm:$0xff]
      %v1055 = vld [vmem:[%s3 + $0x8] sm:$0xff]
      %v1056 = vld [vmem:[%s3 + $0x10] sm:$0xf]
      %v1057 = vld [vmem:[%s3 + $0x14] sm:$0xff]
      %v1058 = vld [vmem:[%s3 + $0x1c] sm:$0xff]
      %v1059 = vld [vmem:[%s3 + $0x24] sm:$0xf]
      %v1060 = vld [vmem:[%s3 + $0x28] sm:$0xff]
      %v1061 = vld [vmem:[%s3 + $0x30] sm:$0xff]
      %v1062 = vld [vmem:[%s3 + $0x38] sm:$0xf]
      %v1063 = vld [vmem:[%s3 + $0x3c] sm:$0xff]
      %v1064 = vld [vmem:[%s3 + $0x44] sm:$0xff]
      %v1065 = vld [vmem:[%s3 + $0x4c] sm:$0xf]
      %v1078 = vunpack.c.l.b16 %v1054
      %v1079 = vunpack.c.h.b16 %v1054
      %v1080 = vunpack.c.l.b16 %v1055
      %v1081 = vunpack.c.h.b16 %v1055
      %v1082 = vunpack.c.l.b16 %v1056
      %v1083 = vunpack.c.l.b16 %v1057
      %v1084 = vunpack.c.h.b16 %v1057
      %v1085 = vunpack.c.l.b16 %v1058
      %v1086 = vunpack.c.h.b16 %v1058
      %v1087 = vunpack.c.l.b16 %v1059
      %v1088 = vunpack.c.l.b16 %v1060
      %v1089 = vunpack.c.h.b16 %v1060
      %v1090 = vunpack.c.l.b16 %v1061
      %v1091 = vunpack.c.h.b16 %v1061
      %v1092 = vunpack.c.l.b16 %v1062
      %v1093 = vunpack.c.l.b16 %v1063
      %v1094 = vunpack.c.h.b16 %v1063
      %v1095 = vunpack.c.l.b16 %v1064
      %v1096 = vunpack.c.h.b16 %v1064
      %v1097 = vunpack.c.l.b16 %v1065
      %v1098 = vpack.c.b16 %v1083, %v1078
      %v1099 = vpack.c.b16 %v1084, %v1079
      %v1100 = vpack.c.b16 %v1085, %v1080
      %v1101 = vpack.c.b16 %v1086, %v1081
      %v1102 = vpack.c.b16 %v1087, %v1082
      %v1103 = vpack.c.b16 %v1093, %v1088
      %v1104 = vpack.c.b16 %v1094, %v1089
      %v1105 = vpack.c.b16 %v1095, %v1090
      %v1106 = vpack.c.b16 %v1096, %v1091
      %v1107 = vpack.c.b16 %v1097, %v1092
      %v1117 = vsel %vm446, %v1038, 0
      %v1120 = vsel %vm446, %v1043, 0
      %v1123 = vsel %vm446, %v1048, 0
      %v1126 = vsel %vm446, %v1053, 0
      %v1129 = vsel %vm446, %v1102, 0
      %v1132 = vsel %vm446, %v1107, 0
      %1134 = vmatprep.subr.bf16.mxu0 %v1099
      %1135 = vmatpush1.bf16.xpose.msra.mxu0 %v1098
      %1136 = vmatprep.subr.bf16.mxu0 %v1104
      %1137 = vmatpush1.bf16.xpose.msra.mxu0 %v1103
      %1138 = vmatprep.subr.bf16.mxu0 0
      %1139 = vmatpush1.bf16.xpose.msra.mxu0 0
      %1140 = vmatprep.subr.bf16.mxu0 0
      %1141 = vmatpush1.bf16.xpose.msra.mxu0 0
      %1142 = vmatprep.subr.bf16.mxu0 0
      %1143 = vmatpush1.bf16.xpose.msra.mxu0 0
      %1144 = vmatprep.subr.bf16.mxu0 0
      %1145 = vmatpush1.bf16.xpose.msra.mxu0 0
      %1146 = vmatprep.subr.bf16.mxu0 0
      %1147 = vmatpush1.bf16.xpose.msra.mxu0 0
      %1148 = vmatprep.subr.bf16.mxu0 0
      %1149 = vmatpush1.bf16.xpose.msra.mxu0 0
      %1150 = vmatprep.subr.bf16.mxu0 0
      %1151 = vmatpush1.bf16.xpose.msra.mxu0 0
      %1152 = vmatprep.subr.bf16.mxu0 0
      %1153 = vmatpush1.bf16.xpose.msra.mxu0 0
      %1154 = vmatprep.subr.bf16.mxu0 0
      %1155 = vmatpush1.bf16.xpose.msra.mxu0 0
      %1156 = vmatprep.subr.bf16.mxu0 0
      %1157 = vmatpush1.bf16.xpose.msra.mxu0 0
      %1158 = vmatprep.subr.bf16.mxu0 0
      %1159 = vmatpush1.bf16.xpose.msra.mxu0 0
      %1160 = vmatprep.subr.bf16.mxu0 0
      %1161 = vmatpush1.bf16.xpose.msra.mxu0 0
      %1162 = vmatprep.subr.bf16.mxu0 0
      %1163 = vmatpush1.bf16.xpose.msra.mxu0 0
      %1164 = vmatprep.subr.bf16.mxu0 0
      %1165 = vmatpush1.bf16.xpose.msra.mxu0 0
      %1166 = vmatprep.mubr.bf16.mxu0 %v1035
      %1167 = vmatmul.mubr.bf16.gmra.mrb[0].mxu0 %v1034
      %v1168 = vpop.f32.mrb[0].mxu0
      %v1169 = vadd.f32 0.0, %v1168
      %v1170 = vpop.f32.mrb[0].mxu0
      %v1171 = vpop.f32.mrb[0].mxu0
      %v1172 = vadd.f32 0.0, %v1171
      %v1173 = vpop.f32.mrb[0].mxu0
      %1174 = vmatprep.mubr.bf16.mxu0 %v1040
      %1175 = vmatmul.mubr.bf16.gmra.mrb[0].mxu0 %v1039
      %v1176 = vpop.f32.mrb[0].mxu0
      %v1177 = vadd.f32 0.0, %v1176
      %v1178 = vpop.f32.mrb[0].mxu0
      %v1179 = vpop.f32.mrb[0].mxu0
      %v1180 = vadd.f32 0.0, %v1179
      %v1181 = vpop.f32.mrb[0].mxu0
      %1182 = vmatprep.mubr.bf16.mxu0 %v1045
      %1183 = vmatmul.mubr.bf16.gmra.mrb[0].mxu0 %v1044
      %v1184 = vpop.f32.mrb[0].mxu0
      %v1185 = vadd.f32 0.0, %v1184
      %v1186 = vpop.f32.mrb[0].mxu0
      %v1187 = vpop.f32.mrb[0].mxu0
      %v1188 = vadd.f32 0.0, %v1187
      %v1189 = vpop.f32.mrb[0].mxu0
      %1190 = vmatprep.mubr.bf16.mxu0 %v1050
      %1191 = vmatmul.mubr.bf16.gmra.mrb[0].mxu0 %v1049
      %v1192 = vpop.f32.mrb[0].mxu0
      %v1193 = vadd.f32 0.0, %v1192
      %v1194 = vpop.f32.mrb[0].mxu0
      %v1195 = vpop.f32.mrb[0].mxu0
      %v1196 = vadd.f32 0.0, %v1195
      %v1197 = vpop.f32.mrb[0].mxu0
      %1198 = vdwg.mxu0
      %1199 = vmatprep.subr.bf16.mxu0 %v1101
      %1200 = vmatpush1.bf16.xpose.msra.mxu0 %v1100
      %1201 = vmatprep.subr.bf16.mxu0 %v1106
      %1202 = vmatpush1.bf16.xpose.msra.mxu0 %v1105
      %1203 = vmatprep.subr.bf16.mxu0 0
      %1204 = vmatpush1.bf16.xpose.msra.mxu0 0
      %1205 = vmatprep.subr.bf16.mxu0 0
      %1206 = vmatpush1.bf16.xpose.msra.mxu0 0
      %1207 = vmatprep.subr.bf16.mxu0 0
      %1208 = vmatpush1.bf16.xpose.msra.mxu0 0
      %1209 = vmatprep.subr.bf16.mxu0 0
      %1210 = vmatpush1.bf16.xpose.msra.mxu0 0
      %1211 = vmatprep.subr.bf16.mxu0 0
      %1212 = vmatpush1.bf16.xpose.msra.mxu0 0
      %1213 = vmatprep.subr.bf16.mxu0 0
      %1214 = vmatpush1.bf16.xpose.msra.mxu0 0
      %1215 = vmatprep.subr.bf16.mxu0 0
      %1216 = vmatpush1.bf16.xpose.msra.mxu0 0
      %1217 = vmatprep.subr.bf16.mxu0 0
      %1218 = vmatpush1.bf16.xpose.msra.mxu0 0
      %1219 = vmatprep.subr.bf16.mxu0 0
      %1220 = vmatpush1.bf16.xpose.msra.mxu0 0
      %1221 = vmatprep.subr.bf16.mxu0 0
      %1222 = vmatpush1.bf16.xpose.msra.mxu0 0
      %1223 = vmatprep.subr.bf16.mxu0 0
      %1224 = vmatpush1.bf16.xpose.msra.mxu0 0
      %1225 = vmatprep.subr.bf16.mxu0 0
      %1226 = vmatpush1.bf16.xpose.msra.mxu0 0
      %1227 = vmatprep.subr.bf16.mxu0 0
      %1228 = vmatpush1.bf16.xpose.msra.mxu0 0
      %1229 = vmatprep.subr.bf16.mxu0 0
      %1230 = vmatpush1.bf16.xpose.msra.mxu0 0
      %1231 = vmatprep.mubr.bf16.mxu0 %v1037
      %1232 = vmatmul.mubr.bf16.gmra.mrb[0].mxu0 %v1036
      %v1233 = vpop.f32.mrb[0].mxu0
      %v1234 = vadd.f32 %v1169, %v1233
      %v1235 = vpop.f32.mrb[0].mxu0
      %v1236 = vpop.f32.mrb[0].mxu0
      %v1237 = vadd.f32 %v1172, %v1236
      %v1238 = vpop.f32.mrb[0].mxu0
      %1239 = vmatprep.mubr.bf16.mxu0 %v1042
      %1240 = vmatmul.mubr.bf16.gmra.mrb[0].mxu0 %v1041
      %v1241 = vpop.f32.mrb[0].mxu0
      %v1242 = vadd.f32 %v1177, %v1241
      %v1243 = vpop.f32.mrb[0].mxu0
      %v1244 = vpop.f32.mrb[0].mxu0
      %v1245 = vadd.f32 %v1180, %v1244
      %v1246 = vpop.f32.mrb[0].mxu0
      %1247 = vmatprep.mubr.bf16.mxu0 %v1047
      %1248 = vmatmul.mubr.bf16.gmra.mrb[0].mxu0 %v1046
      %v1249 = vpop.f32.mrb[0].mxu0
      %v1250 = vadd.f32 %v1185, %v1249
      %v1251 = vpop.f32.mrb[0].mxu0
      %v1252 = vpop.f32.mrb[0].mxu0
      %v1253 = vadd.f32 %v1188, %v1252
      %v1254 = vpop.f32.mrb[0].mxu0
      %1255 = vmatprep.mubr.bf16.mxu0 %v1052
      %1256 = vmatmul.mubr.bf16.gmra.mrb[0].mxu0 %v1051
      %v1257 = vpop.f32.mrb[0].mxu0
      %v1258 = vadd.f32 %v1193, %v1257
      %v1259 = vpop.f32.mrb[0].mxu0
      %v1260 = vpop.f32.mrb[0].mxu0
      %v1261 = vadd.f32 %v1196, %v1260
      %v1262 = vpop.f32.mrb[0].mxu0
      %1263 = vdwg.mxu0
      %1264 = vmatprep.subr.bf16.mxu0 0
      %1265 = vmatpush1.bf16.xpose.msra.mxu0 %v1129
      %1266 = vmatprep.subr.bf16.mxu0 0
      %1267 = vmatpush1.bf16.xpose.msra.mxu0 %v1132
      %1268 = vmatprep.subr.bf16.mxu0 0
      %1269 = vmatpush1.bf16.xpose.msra.mxu0 0
      %1270 = vmatprep.subr.bf16.mxu0 0
      %1271 = vmatpush1.bf16.xpose.msra.mxu0 0
      %1272 = vmatprep.subr.bf16.mxu0 0
      %1273 = vmatpush1.bf16.xpose.msra.mxu0 0
      %1274 = vmatprep.subr.bf16.mxu0 0
      %1275 = vmatpush1.bf16.xpose.msra.mxu0 0
      %1276 = vmatprep.subr.bf16.mxu0 0
      %1277 = vmatpush1.bf16.xpose.msra.mxu0 0
      %1278 = vmatprep.subr.bf16.mxu0 0
      %1279 = vmatpush1.bf16.xpose.msra.mxu0 0
      %1280 = vmatprep.subr.bf16.mxu0 0
      %1281 = vmatpush1.bf16.xpose.msra.mxu0 0
      %1282 = vmatprep.subr.bf16.mxu0 0
      %1283 = vmatpush1.bf16.xpose.msra.mxu0 0
      %1284 = vmatprep.subr.bf16.mxu0 0
      %1285 = vmatpush1.bf16.xpose.msra.mxu0 0
      %1286 = vmatprep.subr.bf16.mxu0 0
      %1287 = vmatpush1.bf16.xpose.msra.mxu0 0
      %1288 = vmatprep.subr.bf16.mxu0 0
      %1289 = vmatpush1.bf16.xpose.msra.mxu0 0
      %1290 = vmatprep.subr.bf16.mxu0 0
      %1291 = vmatpush1.bf16.xpose.msra.mxu0 0
      %1292 = vmatprep.subr.bf16.mxu0 0
      %1293 = vmatpush1.bf16.xpose.msra.mxu0 0
      %1294 = vmatprep.subr.bf16.mxu0 0
      %1295 = vmatpush1.bf16.xpose.msra.mxu0 0
      %1296 = vmatprep.mubr.bf16.mxu0 0
      %1297 = vmatmul.mubr.bf16.gmra.mrb[0].mxu0 %v1117
      %v1298 = vpop.f32.mrb[0].mxu0
      %v1299 = vadd.f32 %v1234, %v1298
      %v1300 = vpop.f32.mrb[0].mxu0
      %v1301 = vpop.f32.mrb[0].mxu0
      %v1302 = vadd.f32 %v1237, %v1301
      %v1303 = vpop.f32.mrb[0].mxu0
      %1304 = vmatprep.mubr.bf16.mxu0 0
      %1305 = vmatmul.mubr.bf16.gmra.mrb[0].mxu0 %v1120
      %v1306 = vpop.f32.mrb[0].mxu0
      %v1307 = vadd.f32 %v1242, %v1306
      %v1308 = vpop.f32.mrb[0].mxu0
      %v1309 = vpop.f32.mrb[0].mxu0
      %v1310 = vadd.f32 %v1245, %v1309
      %v1311 = vpop.f32.mrb[0].mxu0
      %1312 = vmatprep.mubr.bf16.mxu0 0
      %1313 = vmatmul.mubr.bf16.gmra.mrb[0].mxu0 %v1123
      %v1314 = vpop.f32.mrb[0].mxu0
      %v1315 = vadd.f32 %v1250, %v1314
      %v1316 = vpop.f32.mrb[0].mxu0
      %v1317 = vpop.f32.mrb[0].mxu0
      %v1318 = vadd.f32 %v1253, %v1317
      %v1319 = vpop.f32.mrb[0].mxu0
      %1320 = vmatprep.mubr.bf16.mxu0 0
      %1321 = vmatmul.mubr.bf16.gmra.mrb[0].mxu0 %v1126
      %v1322 = vpop.f32.mrb[0].mxu0
      %v1323 = vadd.f32 %v1258, %v1322
      %v1324 = vpop.f32.mrb[0].mxu0
      %v1325 = vpop.f32.mrb[0].mxu0
      %v1326 = vadd.f32 %v1261, %v1325
      %v1327 = vpop.f32.mrb[0].mxu0
      %1328 = vdwg.mxu0
      %v1329 = vand.u32 2147483647, %v1299
      %v1330 = vand.u32 2147483647, %v1302
      %v1331 = vand.u32 2147483647, %v1307
      %v1332 = vand.u32 2147483647, %v1310
      %v1333 = vand.u32 2147483647, %v1315
      %v1334 = vand.u32 2147483647, %v1318
      %v1335 = vand.u32 2147483647, %v1323
      %v1336 = vand.u32 2147483647, %v1326
      %v1337 = vsub.f32 0.0, %v1329
      %v1338 = vsub.f32 0.0, %v1330
      %v1339 = vsub.f32 0.0, %v1331
      %v1340 = vsub.f32 0.0, %v1332
      %v1341 = vsub.f32 0.0, %v1333
      %v1342 = vsub.f32 0.0, %v1334
      %v1343 = vsub.f32 0.0, %v1335
      %v1344 = vsub.f32 0.0, %v1336
      %v1345 = vmul.f32 %v1337, 1.442695
      %v1346 = vpow.pop %v1345
      %v1347 = vmul.f32 %v1338, 1.442695
      %v1348 = vpow.pop %v1347
      %v1349 = vmul.f32 %v1339, 1.442695
      %v1350 = vpow.pop %v1349
      %v1351 = vmul.f32 %v1340, 1.442695
      %v1352 = vpow.pop %v1351
      %v1353 = vmul.f32 %v1341, 1.442695
      %v1354 = vpow.pop %v1353
      %v1355 = vmul.f32 %v1342, 1.442695
      %v1356 = vpow.pop %v1355
      %v1357 = vmul.f32 %v1343, 1.442695
      %v1358 = vpow.pop %v1357
      %v1359 = vmul.f32 %v1344, 1.442695
      %v1360 = vpow.pop %v1359
      %v1361 = vadd.f32 %v1346, 1.0
      %v1362 = vadd.f32 %v1348, 1.0
      %v1363 = vadd.f32 %v1350, 1.0
      %v1364 = vadd.f32 %v1352, 1.0
      %v1365 = vadd.f32 %v1354, 1.0
      %v1366 = vadd.f32 %v1356, 1.0
      %v1367 = vadd.f32 %v1358, 1.0
      %v1368 = vadd.f32 %v1360, 1.0
      %v1369 = vrcp.pop %v1361
      %v1370 = vrcp.pop %v1362
      %v1371 = vrcp.pop %v1363
      %v1372 = vrcp.pop %v1364
      %v1373 = vrcp.pop %v1365
      %v1374 = vrcp.pop %v1366
      %v1375 = vrcp.pop %v1367
      %v1376 = vrcp.pop %v1368
      %vm1377 = vcmp.ge.f32.partialorder %v1299, 0.0
      %vm1378 = vcmp.ge.f32.partialorder %v1302, 0.0
      %vm1379 = vcmp.ge.f32.partialorder %v1307, 0.0
      %vm1380 = vcmp.ge.f32.partialorder %v1310, 0.0
      %vm1381 = vcmp.ge.f32.partialorder %v1315, 0.0
      %vm1382 = vcmp.ge.f32.partialorder %v1318, 0.0
      %vm1383 = vcmp.ge.f32.partialorder %v1323, 0.0
      %vm1384 = vcmp.ge.f32.partialorder %v1326, 0.0
      %v1385 = vmul.f32 %v1346, %v1369
      %v1386 = vmul.f32 %v1348, %v1370
      %v1387 = vmul.f32 %v1350, %v1371
      %v1388 = vmul.f32 %v1352, %v1372
      %v1389 = vmul.f32 %v1354, %v1373
      %v1390 = vmul.f32 %v1356, %v1374
      %v1391 = vmul.f32 %v1358, %v1375
      %v1392 = vmul.f32 %v1360, %v1376
      %v1393 = vsel %vm1377, %v1369, %v1385
      %v1394 = vsel %vm1378, %v1370, %v1386
      %v1395 = vsel %vm1379, %v1371, %v1387
      %v1396 = vsel %vm1380, %v1372, %v1388
      %v1397 = vsel %vm1381, %v1373, %v1389
      %v1398 = vsel %vm1382, %v1374, %v1390
      %v1399 = vsel %vm1383, %v1375, %v1391
      %v1400 = vsel %vm1384, %v1376, %v1392
      %v1401 = vmul.f32 %v1299, %v1393
      %v1402 = vmul.f32 %v1302, %v1394
      %v1403 = vmul.f32 %v1307, %v1395
      %v1404 = vmul.f32 %v1310, %v1396
      %v1405 = vmul.f32 %v1315, %v1397
      %v1406 = vmul.f32 %v1318, %v1398
      %v1407 = vmul.f32 %v1323, %v1399
      %v1408 = vmul.f32 %v1326, %v1400
      %v1409 = vld [vmem:[%s2] sm:$0xf]
      %v1410 = vld [vmem:[%s2 + $0x4] sm:$0xf]
      %v1411 = vld [vmem:[%s2 + $0x8] sm:$0xf]
      %v1412 = vld [vmem:[%s2 + $0xc] sm:$0xf]
      %v1413 = vld [vmem:[%s2 + $0x10] sm:$0xf]
      %v1414 = vld [vmem:[%s2 + $0x14] sm:$0xf]
      %v1415 = vld [vmem:[%s2 + $0x18] sm:$0xf]
      %v1416 = vld [vmem:[%s2 + $0x1c] sm:$0xf]
      %v1417 = vld [vmem:[%s2 + $0x20] sm:$0xf]
      %v1418 = vld [vmem:[%s2 + $0x24] sm:$0xf]
      %v1419 = vld [vmem:[%s2 + $0x28] sm:$0xf]
      %v1420 = vld [vmem:[%s2 + $0x2c] sm:$0xf]
      %v1421 = vld [vmem:[%s2 + $0x30] sm:$0xf]
      %v1422 = vld [vmem:[%s2 + $0x34] sm:$0xf]
      %v1423 = vld [vmem:[%s2 + $0x38] sm:$0xf]
      %v1424 = vld [vmem:[%s2 + $0x3c] sm:$0xf]
      %v1425 = vld [vmem:[%s2 + $0x40] sm:$0xf]
      %v1426 = vld [vmem:[%s2 + $0x44] sm:$0xf]
      %v1427 = vld [vmem:[%s2 + $0x48] sm:$0xf]
      %v1428 = vld [vmem:[%s2 + $0x4c] sm:$0xf]
      %v1429 = vld [vmem:[%s2 + $0x50] sm:$0xf]
      %v1430 = vld [vmem:[%s2 + $0x54] sm:$0xf]
      %v1431 = vld [vmem:[%s2 + $0x58] sm:$0xf]
      %v1432 = vld [vmem:[%s2 + $0x5c] sm:$0xf]
      %v1433 = vld [vmem:[%s2 + $0x60] sm:$0xf]
      %v1434 = vld [vmem:[%s2 + $0x64] sm:$0xf]
      %v1435 = vld [vmem:[%s2 + $0x68] sm:$0xf]
      %v1436 = vld [vmem:[%s2 + $0x6c] sm:$0xf]
      %v1437 = vld [vmem:[%s2 + $0x70] sm:$0xf]
      %v1438 = vld [vmem:[%s2 + $0x74] sm:$0xf]
      %v1439 = vld [vmem:[%s2 + $0x78] sm:$0xf]
      %v1440 = vld [vmem:[%s2 + $0x7c] sm:$0xf]
      %v1441 = vpack.c.bf16 %v1402, %v1401
      %v1442 = vpack.c.bf16 %v1404, %v1403
      %v1443 = vpack.c.bf16 %v1406, %v1405
      %v1444 = vpack.c.bf16 %v1408, %v1407
      %v1477 = vunpack.c.l.b16 %v1409
      %v1478 = vunpack.c.l.b16 %v1410
      %v1479 = vunpack.c.l.b16 %v1411
      %v1480 = vunpack.c.l.b16 %v1412
      %v1481 = vunpack.c.l.b16 %v1413
      %v1482 = vunpack.c.l.b16 %v1414
      %v1483 = vunpack.c.l.b16 %v1415
      %v1484 = vunpack.c.l.b16 %v1416
      %v1485 = vunpack.c.l.b16 %v1417
      %v1486 = vunpack.c.l.b16 %v1418
      %v1487 = vunpack.c.l.b16 %v1419
      %v1488 = vunpack.c.l.b16 %v1420
      %v1489 = vunpack.c.l.b16 %v1421
      %v1490 = vunpack.c.l.b16 %v1422
      %v1491 = vunpack.c.l.b16 %v1423
      %v1492 = vunpack.c.l.b16 %v1424
      %v1493 = vunpack.c.l.b16 %v1425
      %v1494 = vunpack.c.l.b16 %v1426
      %v1495 = vunpack.c.l.b16 %v1427
      %v1496 = vunpack.c.l.b16 %v1428
      %v1497 = vunpack.c.l.b16 %v1429
      %v1498 = vunpack.c.l.b16 %v1430
      %v1499 = vunpack.c.l.b16 %v1431
      %v1500 = vunpack.c.l.b16 %v1432
      %v1501 = vunpack.c.l.b16 %v1433
      %v1502 = vunpack.c.l.b16 %v1434
      %v1503 = vunpack.c.l.b16 %v1435
      %v1504 = vunpack.c.l.b16 %v1436
      %v1505 = vunpack.c.l.b16 %v1437
      %v1506 = vunpack.c.l.b16 %v1438
      %v1507 = vunpack.c.l.b16 %v1439
      %v1508 = vunpack.c.l.b16 %v1440
      %v1509 = vpack.c.b16 %v1478, %v1477
      %v1510 = vpack.c.b16 %v1480, %v1479
      %v1511 = vpack.c.b16 %v1482, %v1481
      %v1512 = vpack.c.b16 %v1484, %v1483
      %v1513 = vpack.c.b16 %v1486, %v1485
      %v1514 = vpack.c.b16 %v1488, %v1487
      %v1515 = vpack.c.b16 %v1490, %v1489
      %v1516 = vpack.c.b16 %v1492, %v1491
      %v1517 = vpack.c.b16 %v1494, %v1493
      %v1518 = vpack.c.b16 %v1496, %v1495
      %v1519 = vpack.c.b16 %v1498, %v1497
      %v1520 = vpack.c.b16 %v1500, %v1499
      %v1521 = vpack.c.b16 %v1502, %v1501
      %v1522 = vpack.c.b16 %v1504, %v1503
      %v1523 = vpack.c.b16 %v1506, %v1505
      %v1524 = vpack.c.b16 %v1508, %v1507
      %v1526 = vsel %vm446, %v1509, 0
      %v1529 = vsel %vm446, %v1510, 0
      %v1532 = vsel %vm446, %v1511, 0
      %v1535 = vsel %vm446, %v1512, 0
      %v1538 = vsel %vm446, %v1513, 0
      %v1541 = vsel %vm446, %v1514, 0
      %v1544 = vsel %vm446, %v1515, 0
      %v1547 = vsel %vm446, %v1516, 0
      %v1550 = vsel %vm446, %v1517, 0
      %v1553 = vsel %vm446, %v1518, 0
      %v1556 = vsel %vm446, %v1519, 0
      %v1559 = vsel %vm446, %v1520, 0
      %v1562 = vsel %vm446, %v1521, 0
      %v1565 = vsel %vm446, %v1522, 0
      %v1568 = vsel %vm446, %v1523, 0
      %v1571 = vsel %vm446, %v1524, 0
      %1573 = vmatprep.subr.bf16.mxu0 0
      %1574 = vmatpush1.bf16.msra.mxu0 %v1441
      %1575 = vmatprep.subr.bf16.mxu0 0
      %1576 = vmatpush1.bf16.msra.mxu0 %v1442
      %1577 = vmatprep.subr.bf16.mxu0 0
      %1578 = vmatpush1.bf16.msra.mxu0 %v1443
      %1579 = vmatprep.subr.bf16.mxu0 0
      %1580 = vmatpush1.bf16.msra.mxu0 %v1444
      %1581 = vmatprep.subr.bf16.mxu0 0
      %1582 = vmatpush1.bf16.msra.mxu0 0
      %1583 = vmatprep.subr.bf16.mxu0 0
      %1584 = vmatpush1.bf16.msra.mxu0 0
      %1585 = vmatprep.subr.bf16.mxu0 0
      %1586 = vmatpush1.bf16.msra.mxu0 0
      %1587 = vmatprep.subr.bf16.mxu0 0
      %1588 = vmatpush1.bf16.msra.mxu0 0
      %1589 = vmatprep.subr.bf16.mxu0 0
      %1590 = vmatpush1.bf16.msra.mxu0 0
      %1591 = vmatprep.subr.bf16.mxu0 0
      %1592 = vmatpush1.bf16.msra.mxu0 0
      %1593 = vmatprep.subr.bf16.mxu0 0
      %1594 = vmatpush1.bf16.msra.mxu0 0
      %1595 = vmatprep.subr.bf16.mxu0 0
      %1596 = vmatpush1.bf16.msra.mxu0 0
      %1597 = vmatprep.subr.bf16.mxu0 0
      %1598 = vmatpush1.bf16.msra.mxu0 0
      %1599 = vmatprep.subr.bf16.mxu0 0
      %1600 = vmatpush1.bf16.msra.mxu0 0
      %1601 = vmatprep.subr.bf16.mxu0 0
      %1602 = vmatpush1.bf16.msra.mxu0 0
      %1603 = vmatprep.subr.bf16.mxu0 0
      %1604 = vmatpush1.bf16.msra.mxu0 0
      %1605 = vmatprep.mubr.bf16.mxu0 0
      %1606 = vmatmul.mubr.bf16.gmra.mrb[0].mxu0 %v1526
      %v1607 = vpop.f32.mrb[0].mxu0
      %v1608 = vadd.f32 0.0, %v1607
      %v1609 = vpop.f32.mrb[0].mxu0
      %v1610 = vpop.f32.mrb[0].mxu0
      %v1611 = vadd.f32 0.0, %v1610
      %v1612 = vpop.f32.mrb[0].mxu0
      %1613 = vmatprep.mubr.bf16.mxu0 0
      %1614 = vmatmul.mubr.bf16.gmra.mrb[0].mxu0 %v1529
      %v1615 = vpop.f32.mrb[0].mxu0
      %v1616 = vadd.f32 0.0, %v1615
      %v1617 = vpop.f32.mrb[0].mxu0
      %v1618 = vpop.f32.mrb[0].mxu0
      %v1619 = vadd.f32 0.0, %v1618
      %v1620 = vpop.f32.mrb[0].mxu0
      %1621 = vmatprep.mubr.bf16.mxu0 0
      %1622 = vmatmul.mubr.bf16.gmra.mrb[0].mxu0 %v1532
      %v1623 = vpop.f32.mrb[0].mxu0
      %v1624 = vadd.f32 0.0, %v1623
      %v1625 = vpop.f32.mrb[0].mxu0
      %v1626 = vpop.f32.mrb[0].mxu0
      %v1627 = vadd.f32 0.0, %v1626
      %v1628 = vpop.f32.mrb[0].mxu0
      %1629 = vmatprep.mubr.bf16.mxu0 0
      %1630 = vmatmul.mubr.bf16.gmra.mrb[0].mxu0 %v1535
      %v1631 = vpop.f32.mrb[0].mxu0
      %v1632 = vadd.f32 0.0, %v1631
      %v1633 = vpop.f32.mrb[0].mxu0
      %v1634 = vpop.f32.mrb[0].mxu0
      %v1635 = vadd.f32 0.0, %v1634
      %v1636 = vpop.f32.mrb[0].mxu0
      %1637 = vmatprep.mubr.bf16.mxu0 0
      %1638 = vmatmul.mubr.bf16.gmra.mrb[0].mxu0 %v1538
      %v1639 = vpop.f32.mrb[0].mxu0
      %v1640 = vadd.f32 0.0, %v1639
      %v1641 = vpop.f32.mrb[0].mxu0
      %v1642 = vpop.f32.mrb[0].mxu0
      %v1643 = vadd.f32 0.0, %v1642
      %v1644 = vpop.f32.mrb[0].mxu0
      %1645 = vmatprep.mubr.bf16.mxu0 0
      %1646 = vmatmul.mubr.bf16.gmra.mrb[0].mxu0 %v1541
      %v1647 = vpop.f32.mrb[0].mxu0
      %v1648 = vadd.f32 0.0, %v1647
      %v1649 = vpop.f32.mrb[0].mxu0
      %v1650 = vpop.f32.mrb[0].mxu0
      %v1651 = vadd.f32 0.0, %v1650
      %v1652 = vpop.f32.mrb[0].mxu0
      %1653 = vmatprep.mubr.bf16.mxu0 0
      %1654 = vmatmul.mubr.bf16.gmra.mrb[0].mxu0 %v1544
      %v1655 = vpop.f32.mrb[0].mxu0
      %v1656 = vadd.f32 0.0, %v1655
      %v1657 = vpop.f32.mrb[0].mxu0
      %v1658 = vpop.f32.mrb[0].mxu0
      %v1659 = vadd.f32 0.0, %v1658
      %v1660 = vpop.f32.mrb[0].mxu0
      %1661 = vmatprep.mubr.bf16.mxu0 0
      %1662 = vmatmul.mubr.bf16.gmra.mrb[0].mxu0 %v1547
      %v1663 = vpop.f32.mrb[0].mxu0
      %v1664 = vadd.f32 0.0, %v1663
      %v1665 = vpop.f32.mrb[0].mxu0
      %v1666 = vpop.f32.mrb[0].mxu0
      %v1667 = vadd.f32 0.0, %v1666
      %v1668 = vpop.f32.mrb[0].mxu0
      %1669 = vmatprep.mubr.bf16.mxu0 0
      %1670 = vmatmul.mubr.bf16.gmra.mrb[0].mxu0 %v1550
      %v1671 = vpop.f32.mrb[0].mxu0
      %v1672 = vadd.f32 0.0, %v1671
      %v1673 = vpop.f32.mrb[0].mxu0
      %v1674 = vpop.f32.mrb[0].mxu0
      %v1675 = vadd.f32 0.0, %v1674
      %v1676 = vpop.f32.mrb[0].mxu0
      %1677 = vmatprep.mubr.bf16.mxu0 0
      %1678 = vmatmul.mubr.bf16.gmra.mrb[0].mxu0 %v1553
      %v1679 = vpop.f32.mrb[0].mxu0
      %v1680 = vadd.f32 0.0, %v1679
      %v1681 = vpop.f32.mrb[0].mxu0
      %v1682 = vpop.f32.mrb[0].mxu0
      %v1683 = vadd.f32 0.0, %v1682
      %v1684 = vpop.f32.mrb[0].mxu0
      %1685 = vmatprep.mubr.bf16.mxu0 0
      %1686 = vmatmul.mubr.bf16.gmra.mrb[0].mxu0 %v1556
      %v1687 = vpop.f32.mrb[0].mxu0
      %v1688 = vadd.f32 0.0, %v1687
      %v1689 = vpop.f32.mrb[0].mxu0
      %v1690 = vpop.f32.mrb[0].mxu0
      %v1691 = vadd.f32 0.0, %v1690
      %v1692 = vpop.f32.mrb[0].mxu0
      %1693 = vmatprep.mubr.bf16.mxu0 0
      %1694 = vmatmul.mubr.bf16.gmra.mrb[0].mxu0 %v1559
      %v1695 = vpop.f32.mrb[0].mxu0
      %v1696 = vadd.f32 0.0, %v1695
      %v1697 = vpop.f32.mrb[0].mxu0
      %v1698 = vpop.f32.mrb[0].mxu0
      %v1699 = vadd.f32 0.0, %v1698
      %v1700 = vpop.f32.mrb[0].mxu0
      %1701 = vmatprep.mubr.bf16.mxu0 0
      %1702 = vmatmul.mubr.bf16.gmra.mrb[0].mxu0 %v1562
      %v1703 = vpop.f32.mrb[0].mxu0
      %v1704 = vadd.f32 0.0, %v1703
      %v1705 = vpop.f32.mrb[0].mxu0
      %v1706 = vpop.f32.mrb[0].mxu0
      %v1707 = vadd.f32 0.0, %v1706
      %v1708 = vpop.f32.mrb[0].mxu0
      %1709 = vmatprep.mubr.bf16.mxu0 0
      %1710 = vmatmul.mubr.bf16.gmra.mrb[0].mxu0 %v1565
      %v1711 = vpop.f32.mrb[0].mxu0
      %v1712 = vadd.f32 0.0, %v1711
      %v1713 = vpop.f32.mrb[0].mxu0
      %v1714 = vpop.f32.mrb[0].mxu0
      %v1715 = vadd.f32 0.0, %v1714
      %v1716 = vpop.f32.mrb[0].mxu0
      %1717 = vmatprep.mubr.bf16.mxu0 0
      %1718 = vmatmul.mubr.bf16.gmra.mrb[0].mxu0 %v1568
      %v1719 = vpop.f32.mrb[0].mxu0
      %v1720 = vadd.f32 0.0, %v1719
      %v1721 = vpop.f32.mrb[0].mxu0
      %v1722 = vpop.f32.mrb[0].mxu0
      %v1723 = vadd.f32 0.0, %v1722
      %v1724 = vpop.f32.mrb[0].mxu0
      %1725 = vmatprep.mubr.bf16.mxu0 0
      %1726 = vmatmul.mubr.bf16.gmra.mrb[0].mxu0 %v1571
      %v1727 = vpop.f32.mrb[0].mxu0
      %v1728 = vadd.f32 0.0, %v1727
      %v1729 = vpop.f32.mrb[0].mxu0
      %v1730 = vpop.f32.mrb[0].mxu0
      %v1731 = vadd.f32 0.0, %v1730
      %v1732 = vpop.f32.mrb[0].mxu0
      %1733 = vdwg.mxu0
      %v1734 = vld [vmem:[#allocation3] sm:$0xff]
      %v1735 = vld [vmem:[#allocation3 + $0x8] sm:$0xff]
      %v1736 = vld [vmem:[#allocation3 + $0x18] sm:$0xff]
      %v1737 = vld [vmem:[#allocation3 + $0x20] sm:$0xff]
      %v1738 = vld [vmem:[#allocation3 + $0x30] sm:$0xff]
      %v1739 = vld [vmem:[#allocation3 + $0x38] sm:$0xff]
      %v1740 = vld [vmem:[#allocation3 + $0x48] sm:$0xff]
      %v1741 = vld [vmem:[#allocation3 + $0x50] sm:$0xff]
      %v1742 = vld [vmem:[#allocation3 + $0x60] sm:$0xff]
      %v1743 = vld [vmem:[#allocation3 + $0x68] sm:$0xff]
      %v1744 = vld [vmem:[#allocation3 + $0x78] sm:$0xff]
      %v1745 = vld [vmem:[#allocation3 + $0x80] sm:$0xff]
      %v1746 = vld [vmem:[#allocation3 + $0x90] sm:$0xff]
      %v1747 = vld [vmem:[#allocation3 + $0x98] sm:$0xff]
      %v1748 = vld [vmem:[#allocation3 + $0xa8] sm:$0xff]
      %v1749 = vld [vmem:[#allocation3 + $0xb0] sm:$0xff]
      %v1750 = vld [vmem:[#allocation3 + $0xc0] sm:$0xff]
      %v1751 = vld [vmem:[#allocation3 + $0xc8] sm:$0xff]
      %v1752 = vld [vmem:[#allocation3 + $0xd8] sm:$0xff]
      %v1753 = vld [vmem:[#allocation3 + $0xe0] sm:$0xff]
      %v1754 = vld [vmem:[#allocation3 + $0xf0] sm:$0xff]
      %v1755 = vld [vmem:[#allocation3 + $0xf8] sm:$0xff]
      %v1756 = vld [vmem:[#allocation3 + $0x108] sm:$0xff]
      %v1757 = vld [vmem:[#allocation3 + $0x110] sm:$0xff]
      %v1758 = vld [vmem:[#allocation3 + $0x120] sm:$0xff]
      %v1759 = vld [vmem:[#allocation3 + $0x128] sm:$0xff]
      %v1760 = vld [vmem:[#allocation3 + $0x138] sm:$0xff]
      %v1761 = vld [vmem:[#allocation3 + $0x140] sm:$0xff]
      %v1762 = vld [vmem:[#allocation3 + $0x150] sm:$0xff]
      %v1763 = vld [vmem:[#allocation3 + $0x158] sm:$0xff]
      %v1764 = vld [vmem:[#allocation3 + $0x168] sm:$0xff]
      %v1765 = vld [vmem:[#allocation3 + $0x170] sm:$0xff]
      %v1766 = vld [vmem:[#allocation3 + $0x1] sm:$0xff]
      %v1767 = vld [vmem:[#allocation3 + $0x9] sm:$0xff]
      %v1768 = vld [vmem:[#allocation3 + $0x19] sm:$0xff]
      %v1769 = vld [vmem:[#allocation3 + $0x21] sm:$0xff]
      %v1770 = vld [vmem:[#allocation3 + $0x31] sm:$0xff]
      %v1771 = vld [vmem:[#allocation3 + $0x39] sm:$0xff]
      %v1772 = vld [vmem:[#allocation3 + $0x49] sm:$0xff]
      %v1773 = vld [vmem:[#allocation3 + $0x51] sm:$0xff]
      %v1774 = vld [vmem:[#allocation3 + $0x61] sm:$0xff]
      %v1775 = vld [vmem:[#allocation3 + $0x69] sm:$0xff]
      %v1776 = vld [vmem:[#allocation3 + $0x79] sm:$0xff]
      %v1777 = vld [vmem:[#allocation3 + $0x81] sm:$0xff]
      %v1778 = vld [vmem:[#allocation3 + $0x91] sm:$0xff]
      %v1779 = vld [vmem:[#allocation3 + $0x99] sm:$0xff]
      %v1780 = vld [vmem:[#allocation3 + $0xa9] sm:$0xff]
      %v1781 = vld [vmem:[#allocation3 + $0xb1] sm:$0xff]
      %v1782 = vld [vmem:[#allocation3 + $0xc1] sm:$0xff]
      %v1783 = vld [vmem:[#allocation3 + $0xc9] sm:$0xff]
      %v1784 = vld [vmem:[#allocation3 + $0xd9] sm:$0xff]
      %v1785 = vld [vmem:[#allocation3 + $0xe1] sm:$0xff]
      %v1786 = vld [vmem:[#allocation3 + $0xf1] sm:$0xff]
      %v1787 = vld [vmem:[#allocation3 + $0xf9] sm:$0xff]
      %v1788 = vld [vmem:[#allocation3 + $0x109] sm:$0xff]
      %v1789 = vld [vmem:[#allocation3 + $0x111] sm:$0xff]
      %v1790 = vld [vmem:[#allocation3 + $0x121] sm:$0xff]
      %v1791 = vld [vmem:[#allocation3 + $0x129] sm:$0xff]
      %v1792 = vld [vmem:[#allocation3 + $0x139] sm:$0xff]
      %v1793 = vld [vmem:[#allocation3 + $0x141] sm:$0xff]
      %v1794 = vld [vmem:[#allocation3 + $0x151] sm:$0xff]
      %v1795 = vld [vmem:[#allocation3 + $0x159] sm:$0xff]
      %v1796 = vld [vmem:[#allocation3 + $0x169] sm:$0xff]
      %v1797 = vld [vmem:[#allocation3 + $0x171] sm:$0xff]
      %v1798 = vld [vmem:[#allocation3 + $0x2] sm:$0xff]
      %v1799 = vld [vmem:[#allocation3 + $0xa] sm:$0xff]
      %v1800 = vld [vmem:[#allocation3 + $0x1a] sm:$0xff]
      %v1801 = vld [vmem:[#allocation3 + $0x22] sm:$0xff]
      %v1802 = vld [vmem:[#allocation3 + $0x32] sm:$0xff]
      %v1803 = vld [vmem:[#allocation3 + $0x3a] sm:$0xff]
      %v1804 = vld [vmem:[#allocation3 + $0x4a] sm:$0xff]
      %v1805 = vld [vmem:[#allocation3 + $0x52] sm:$0xff]
      %v1806 = vld [vmem:[#allocation3 + $0x62] sm:$0xff]
      %v1807 = vld [vmem:[#allocation3 + $0x6a] sm:$0xff]
      %v1808 = vld [vmem:[#allocation3 + $0x7a] sm:$0xff]
      %v1809 = vld [vmem:[#allocation3 + $0x82] sm:$0xff]
      %v1810 = vld [vmem:[#allocation3 + $0x92] sm:$0xff]
      %v1811 = vld [vmem:[#allocation3 + $0x9a] sm:$0xff]
      %v1812 = vld [vmem:[#allocation3 + $0xaa] sm:$0xff]
      %v1813 = vld [vmem:[#allocation3 + $0xb2] sm:$0xff]
      %v1814 = vld [vmem:[#allocation3 + $0xc2] sm:$0xff]
      %v1815 = vld [vmem:[#allocation3 + $0xca] sm:$0xff]
      %v1816 = vld [vmem:[#allocation3 + $0xda] sm:$0xff]
      %v1817 = vld [vmem:[#allocation3 + $0xe2] sm:$0xff]
      %v1818 = vld [vmem:[#allocation3 + $0xf2] sm:$0xff]
      %v1819 = vld [vmem:[#allocation3 + $0xfa] sm:$0xff]
      %v1820 = vld [vmem:[#allocation3 + $0x10a] sm:$0xff]
      %v1821 = vld [vmem:[#allocation3 + $0x112] sm:$0xff]
      %v1822 = vld [vmem:[#allocation3 + $0x122] sm:$0xff]
      %v1823 = vld [vmem:[#allocation3 + $0x12a] sm:$0xff]
      %v1824 = vld [vmem:[#allocation3 + $0x13a] sm:$0xff]
      %v1825 = vld [vmem:[#allocation3 + $0x142] sm:$0xff]
      %v1826 = vld [vmem:[#allocation3 + $0x152] sm:$0xff]
      %v1827 = vld [vmem:[#allocation3 + $0x15a] sm:$0xff]
      %v1828 = vld [vmem:[#allocation3 + $0x16a] sm:$0xff]
      %v1829 = vld [vmem:[#allocation3 + $0x172] sm:$0xff]
      %v1830 = vld [vmem:[%s752] sm:$0xff]
      %v1831 = vld [vmem:[%s752 + $0x8] sm:$0xff]
      %v1832 = vld [vmem:[%s752 + $0x18] sm:$0xff]
      %v1833 = vld [vmem:[%s752 + $0x20] sm:$0xff]
      %v1834 = vld [vmem:[%s752 + $0x30] sm:$0xff]
      %v1835 = vld [vmem:[%s752 + $0x38] sm:$0xff]
      %v1836 = vld [vmem:[%s752 + $0x48] sm:$0xff]
      %v1837 = vld [vmem:[%s752 + $0x50] sm:$0xff]
      %v1838 = vld [vmem:[%s752 + $0x60] sm:$0xff]
      %v1839 = vld [vmem:[%s752 + $0x68] sm:$0xff]
      %v1840 = vld [vmem:[%s752 + $0x78] sm:$0xff]
      %v1841 = vld [vmem:[%s752 + $0x80] sm:$0xff]
      %v1842 = vld [vmem:[%s752 + $0x90] sm:$0xff]
      %v1843 = vld [vmem:[%s752 + $0x98] sm:$0xff]
      %v1844 = vld [vmem:[%s752 + $0xa8] sm:$0xff]
      %v1845 = vld [vmem:[%s752 + $0xb0] sm:$0xff]
      %v1846 = vld [vmem:[%s752 + $0xc0] sm:$0xff]
      %v1847 = vld [vmem:[%s752 + $0xc8] sm:$0xff]
      %v1848 = vld [vmem:[%s752 + $0xd8] sm:$0xff]
      %v1849 = vld [vmem:[%s752 + $0xe0] sm:$0xff]
      %v1850 = vld [vmem:[%s752 + $0xf0] sm:$0xff]
      %v1851 = vld [vmem:[%s752 + $0xf8] sm:$0xff]
      %v1852 = vld [vmem:[%s752 + $0x108] sm:$0xff]
      %v1853 = vld [vmem:[%s752 + $0x110] sm:$0xff]
      %v1854 = vld [vmem:[%s752 + $0x120] sm:$0xff]
      %v1855 = vld [vmem:[%s752 + $0x128] sm:$0xff]
      %v1856 = vld [vmem:[%s752 + $0x138] sm:$0xff]
      %v1857 = vld [vmem:[%s752 + $0x140] sm:$0xff]
      %v1858 = vld [vmem:[%s752 + $0x150] sm:$0xff]
      %v1859 = vld [vmem:[%s752 + $0x158] sm:$0xff]
      %v1860 = vld [vmem:[%s752 + $0x168] sm:$0xff]
      %v1861 = vld [vmem:[%s752 + $0x170] sm:$0xff]
      %v1862 = vld [vmem:[%s752 + $0x1] sm:$0xff]
      %v1863 = vld [vmem:[%s752 + $0x9] sm:$0xff]
      %v1864 = vld [vmem:[%s752 + $0x19] sm:$0xff]
      %v1865 = vld [vmem:[%s752 + $0x21] sm:$0xff]
      %v1866 = vld [vmem:[%s752 + $0x31] sm:$0xff]
      %v1867 = vld [vmem:[%s752 + $0x39] sm:$0xff]
      %v1868 = vld [vmem:[%s752 + $0x49] sm:$0xff]
      %v1869 = vld [vmem:[%s752 + $0x51] sm:$0xff]
      %v1870 = vld [vmem:[%s752 + $0x61] sm:$0xff]
      %v1871 = vld [vmem:[%s752 + $0x69] sm:$0xff]
      %v1872 = vld [vmem:[%s752 + $0x79] sm:$0xff]
      %v1873 = vld [vmem:[%s752 + $0x81] sm:$0xff]
      %v1874 = vld [vmem:[%s752 + $0x91] sm:$0xff]
      %v1875 = vld [vmem:[%s752 + $0x99] sm:$0xff]
      %v1876 = vld [vmem:[%s752 + $0xa9] sm:$0xff]
      %v1877 = vld [vmem:[%s752 + $0xb1] sm:$0xff]
      %v1878 = vld [vmem:[%s752 + $0xc1] sm:$0xff]
      %v1879 = vld [vmem:[%s752 + $0xc9] sm:$0xff]
      %v1880 = vld [vmem:[%s752 + $0xd9] sm:$0xff]
      %v1881 = vld [vmem:[%s752 + $0xe1] sm:$0xff]
      %v1882 = vld [vmem:[%s752 + $0xf1] sm:$0xff]
      %v1883 = vld [vmem:[%s752 + $0xf9] sm:$0xff]
      %v1884 = vld [vmem:[%s752 + $0x109] sm:$0xff]
      %v1885 = vld [vmem:[%s752 + $0x111] sm:$0xff]
      %v1886 = vld [vmem:[%s752 + $0x121] sm:$0xff]
      %v1887 = vld [vmem:[%s752 + $0x129] sm:$0xff]
      %v1888 = vld [vmem:[%s752 + $0x139] sm:$0xff]
      %v1889 = vld [vmem:[%s752 + $0x141] sm:$0xff]
      %v1890 = vld [vmem:[%s752 + $0x151] sm:$0xff]
      %v1891 = vld [vmem:[%s752 + $0x159] sm:$0xff]
      %v1892 = vld [vmem:[%s752 + $0x169] sm:$0xff]
      %v1893 = vld [vmem:[%s752 + $0x171] sm:$0xff]
      %v1894 = vld [vmem:[%s752 + $0x2] sm:$0xff]
      %v1895 = vld [vmem:[%s752 + $0xa] sm:$0xff]
      %v1896 = vld [vmem:[%s752 + $0x1a] sm:$0xff]
      %v1897 = vld [vmem:[%s752 + $0x22] sm:$0xff]
      %v1898 = vld [vmem:[%s752 + $0x32] sm:$0xff]
      %v1899 = vld [vmem:[%s752 + $0x3a] sm:$0xff]
      %v1900 = vld [vmem:[%s752 + $0x4a] sm:$0xff]
      %v1901 = vld [vmem:[%s752 + $0x52] sm:$0xff]
      %v1902 = vld [vmem:[%s752 + $0x62] sm:$0xff]
      %v1903 = vld [vmem:[%s752 + $0x6a] sm:$0xff]
      %v1904 = vld [vmem:[%s752 + $0x7a] sm:$0xff]
      %v1905 = vld [vmem:[%s752 + $0x82] sm:$0xff]
      %v1906 = vld [vmem:[%s752 + $0x92] sm:$0xff]
      %v1907 = vld [vmem:[%s752 + $0x9a] sm:$0xff]
      %v1908 = vld [vmem:[%s752 + $0xaa] sm:$0xff]
      %v1909 = vld [vmem:[%s752 + $0xb2] sm:$0xff]
      %v1910 = vld [vmem:[%s752 + $0xc2] sm:$0xff]
      %v1911 = vld [vmem:[%s752 + $0xca] sm:$0xff]
      %v1912 = vld [vmem:[%s752 + $0xda] sm:$0xff]
      %v1913 = vld [vmem:[%s752 + $0xe2] sm:$0xff]
      %v1914 = vld [vmem:[%s752 + $0xf2] sm:$0xff]
      %v1915 = vld [vmem:[%s752 + $0xfa] sm:$0xff]
      %v1916 = vld [vmem:[%s752 + $0x10a] sm:$0xff]
      %v1917 = vld [vmem:[%s752 + $0x112] sm:$0xff]
      %v1918 = vld [vmem:[%s752 + $0x122] sm:$0xff]
      %v1919 = vld [vmem:[%s752 + $0x12a] sm:$0xff]
      %v1920 = vld [vmem:[%s752 + $0x13a] sm:$0xff]
      %v1921 = vld [vmem:[%s752 + $0x142] sm:$0xff]
      %v1922 = vld [vmem:[%s752 + $0x152] sm:$0xff]
      %v1923 = vld [vmem:[%s752 + $0x15a] sm:$0xff]
      %v1924 = vld [vmem:[%s752 + $0x16a] sm:$0xff]
      %v1925 = vld [vmem:[%s752 + $0x172] sm:$0xff]
      %s1926 = scalar_lea.vmem [#allocation3], 48
      %v1927 = vld [vmem:[%s1926] sm:$0xff]
      %v1928 = vld [vmem:[%s1926 + $0x8] sm:$0xff]
      %v1929 = vld [vmem:[%s1926 + $0x18] sm:$0xff]
      %v1930 = vld [vmem:[%s1926 + $0x20] sm:$0xff]
      %v1931 = vld [vmem:[%s1926 + $0x30] sm:$0xff]
      %v1932 = vld [vmem:[%s1926 + $0x38] sm:$0xff]
      %v1933 = vld [vmem:[%s1926 + $0x48] sm:$0xff]
      %v1934 = vld [vmem:[%s1926 + $0x50] sm:$0xff]
      %v1935 = vld [vmem:[%s1926 + $0x60] sm:$0xff]
      %v1936 = vld [vmem:[%s1926 + $0x68] sm:$0xff]
      %v1937 = vld [vmem:[%s1926 + $0x78] sm:$0xff]
      %v1938 = vld [vmem:[%s1926 + $0x80] sm:$0xff]
      %v1939 = vld [vmem:[%s1926 + $0x90] sm:$0xff]
      %v1940 = vld [vmem:[%s1926 + $0x98] sm:$0xff]
      %v1941 = vld [vmem:[%s1926 + $0xa8] sm:$0xff]
      %v1942 = vld [vmem:[%s1926 + $0xb0] sm:$0xff]
      %v1943 = vld [vmem:[%s1926 + $0xc0] sm:$0xff]
      %v1944 = vld [vmem:[%s1926 + $0xc8] sm:$0xff]
      %v1945 = vld [vmem:[%s1926 + $0xd8] sm:$0xff]
      %v1946 = vld [vmem:[%s1926 + $0xe0] sm:$0xff]
      %v1947 = vld [vmem:[%s1926 + $0xf0] sm:$0xff]
      %v1948 = vld [vmem:[%s1926 + $0xf8] sm:$0xff]
      %v1949 = vld [vmem:[%s1926 + $0x108] sm:$0xff]
      %v1950 = vld [vmem:[%s1926 + $0x110] sm:$0xff]
      %v1951 = vld [vmem:[%s1926 + $0x120] sm:$0xff]
      %v1952 = vld [vmem:[%s1926 + $0x128] sm:$0xff]
      %v1953 = vld [vmem:[%s1926 + $0x138] sm:$0xff]
      %v1954 = vld [vmem:[%s1926 + $0x140] sm:$0xff]
      %v1955 = vld [vmem:[%s1926 + $0x150] sm:$0xff]
      %v1956 = vld [vmem:[%s1926 + $0x158] sm:$0xff]
      %v1957 = vld [vmem:[%s1926 + $0x168] sm:$0xff]
      %v1958 = vld [vmem:[%s1926 + $0x170] sm:$0xff]
      %v1959 = vld [vmem:[%s1926 + $0x1] sm:$0xff]
      %v1960 = vld [vmem:[%s1926 + $0x9] sm:$0xff]
      %v1961 = vld [vmem:[%s1926 + $0x19] sm:$0xff]
      %v1962 = vld [vmem:[%s1926 + $0x21] sm:$0xff]
      %v1963 = vld [vmem:[%s1926 + $0x31] sm:$0xff]
      %v1964 = vld [vmem:[%s1926 + $0x39] sm:$0xff]
      %v1965 = vld [vmem:[%s1926 + $0x49] sm:$0xff]
      %v1966 = vld [vmem:[%s1926 + $0x51] sm:$0xff]
      %v1967 = vld [vmem:[%s1926 + $0x61] sm:$0xff]
      %v1968 = vld [vmem:[%s1926 + $0x69] sm:$0xff]
      %v1969 = vld [vmem:[%s1926 + $0x79] sm:$0xff]
      %v1970 = vld [vmem:[%s1926 + $0x81] sm:$0xff]
      %v1971 = vld [vmem:[%s1926 + $0x91] sm:$0xff]
      %v1972 = vld [vmem:[%s1926 + $0x99] sm:$0xff]
      %v1973 = vld [vmem:[%s1926 + $0xa9] sm:$0xff]
      %v1974 = vld [vmem:[%s1926 + $0xb1] sm:$0xff]
      %v1975 = vld [vmem:[%s1926 + $0xc1] sm:$0xff]
      %v1976 = vld [vmem:[%s1926 + $0xc9] sm:$0xff]
      %v1977 = vld [vmem:[%s1926 + $0xd9] sm:$0xff]
      %v1978 = vld [vmem:[%s1926 + $0xe1] sm:$0xff]
      %v1979 = vld [vmem:[%s1926 + $0xf1] sm:$0xff]
      %v1980 = vld [vmem:[%s1926 + $0xf9] sm:$0xff]
      %v1981 = vld [vmem:[%s1926 + $0x109] sm:$0xff]
      %v1982 = vld [vmem:[%s1926 + $0x111] sm:$0xff]
      %v1983 = vld [vmem:[%s1926 + $0x121] sm:$0xff]
      %v1984 = vld [vmem:[%s1926 + $0x129] sm:$0xff]
      %v1985 = vld [vmem:[%s1926 + $0x139] sm:$0xff]
      %v1986 = vld [vmem:[%s1926 + $0x141] sm:$0xff]
      %v1987 = vld [vmem:[%s1926 + $0x151] sm:$0xff]
      %v1988 = vld [vmem:[%s1926 + $0x159] sm:$0xff]
      %v1989 = vld [vmem:[%s1926 + $0x169] sm:$0xff]
      %v1990 = vld [vmem:[%s1926 + $0x171] sm:$0xff]
      %v1991 = vld [vmem:[%s1926 + $0x2] sm:$0xff]
      %v1992 = vld [vmem:[%s1926 + $0xa] sm:$0xff]
      %v1993 = vld [vmem:[%s1926 + $0x1a] sm:$0xff]
      %v1994 = vld [vmem:[%s1926 + $0x22] sm:$0xff]
      %v1995 = vld [vmem:[%s1926 + $0x32] sm:$0xff]
      %v1996 = vld [vmem:[%s1926 + $0x3a] sm:$0xff]
      %v1997 = vld [vmem:[%s1926 + $0x4a] sm:$0xff]
      %v1998 = vld [vmem:[%s1926 + $0x52] sm:$0xff]
      %v1999 = vld [vmem:[%s1926 + $0x62] sm:$0xff]
      %v2000 = vld [vmem:[%s1926 + $0x6a] sm:$0xff]
      %v2001 = vld [vmem:[%s1926 + $0x7a] sm:$0xff]
      %v2002 = vld [vmem:[%s1926 + $0x82] sm:$0xff]
      %v2003 = vld [vmem:[%s1926 + $0x92] sm:$0xff]
      %v2004 = vld [vmem:[%s1926 + $0x9a] sm:$0xff]
      %v2005 = vld [vmem:[%s1926 + $0xaa] sm:$0xff]
      %v2006 = vld [vmem:[%s1926 + $0xb2] sm:$0xff]
      %v2007 = vld [vmem:[%s1926 + $0xc2] sm:$0xff]
      %v2008 = vld [vmem:[%s1926 + $0xca] sm:$0xff]
      %v2009 = vld [vmem:[%s1926 + $0xda] sm:$0xff]
      %v2010 = vld [vmem:[%s1926 + $0xe2] sm:$0xff]
      %v2011 = vld [vmem:[%s1926 + $0xf2] sm:$0xff]
      %v2012 = vld [vmem:[%s1926 + $0xfa] sm:$0xff]
      %v2013 = vld [vmem:[%s1926 + $0x10a] sm:$0xff]
      %v2014 = vld [vmem:[%s1926 + $0x112] sm:$0xff]
      %v2015 = vld [vmem:[%s1926 + $0x122] sm:$0xff]
      %v2016 = vld [vmem:[%s1926 + $0x12a] sm:$0xff]
      %v2017 = vld [vmem:[%s1926 + $0x13a] sm:$0xff]
      %v2018 = vld [vmem:[%s1926 + $0x142] sm:$0xff]
      %v2019 = vld [vmem:[%s1926 + $0x152] sm:$0xff]
      %v2020 = vld [vmem:[%s1926 + $0x15a] sm:$0xff]
      %v2021 = vld [vmem:[%s1926 + $0x16a] sm:$0xff]
      %v2022 = vld [vmem:[%s1926 + $0x172] sm:$0xff]
      %2055 = vrot.lane.b32.xlu0 %v1766, 32
      %v2056 = vpop.permute.xlu0 %2055
      %2057 = vrot.lane.b32.xlu0 %v1767, 32
      %v2058 = vpop.permute.xlu0 %2057
      %2059 = vrot.lane.b32.xlu0 %v1768, 32
      %v2060 = vpop.permute.xlu0 %2059
      %2061 = vrot.lane.b32.xlu0 %v1769, 32
      %v2062 = vpop.permute.xlu0 %2061
      %2063 = vrot.lane.b32.xlu0 %v1770, 32
      %v2064 = vpop.permute.xlu0 %2063
      %2065 = vrot.lane.b32.xlu0 %v1771, 32
      %v2066 = vpop.permute.xlu0 %2065
      %2067 = vrot.lane.b32.xlu0 %v1772, 32
      %v2068 = vpop.permute.xlu0 %2067
      %2069 = vrot.lane.b32.xlu0 %v1773, 32
      %v2070 = vpop.permute.xlu0 %2069
      %2071 = vrot.lane.b32.xlu0 %v1774, 32
      %v2072 = vpop.permute.xlu0 %2071
      %2073 = vrot.lane.b32.xlu0 %v1775, 32
      %v2074 = vpop.permute.xlu0 %2073
      %2075 = vrot.lane.b32.xlu0 %v1776, 32
      %v2076 = vpop.permute.xlu0 %2075
      %2077 = vrot.lane.b32.xlu0 %v1777, 32
      %v2078 = vpop.permute.xlu0 %2077
      %2079 = vrot.lane.b32.xlu0 %v1778, 32
      %v2080 = vpop.permute.xlu0 %2079
      %2081 = vrot.lane.b32.xlu0 %v1779, 32
      %v2082 = vpop.permute.xlu0 %2081
      %2083 = vrot.lane.b32.xlu0 %v1780, 32
      %v2084 = vpop.permute.xlu0 %2083
      %2085 = vrot.lane.b32.xlu0 %v1781, 32
      %v2086 = vpop.permute.xlu0 %2085
      %2087 = vrot.lane.b32.xlu0 %v1782, 32
      %v2088 = vpop.permute.xlu0 %2087
      %2089 = vrot.lane.b32.xlu0 %v1783, 32
      %v2090 = vpop.permute.xlu0 %2089
      %2091 = vrot.lane.b32.xlu0 %v1784, 32
      %v2092 = vpop.permute.xlu0 %2091
      %2093 = vrot.lane.b32.xlu0 %v1785, 32
      %v2094 = vpop.permute.xlu0 %2093
      %2095 = vrot.lane.b32.xlu0 %v1786, 32
      %v2096 = vpop.permute.xlu0 %2095
      %2097 = vrot.lane.b32.xlu0 %v1787, 32
      %v2098 = vpop.permute.xlu0 %2097
      %2099 = vrot.lane.b32.xlu0 %v1788, 32
      %v2100 = vpop.permute.xlu0 %2099
      %2101 = vrot.lane.b32.xlu0 %v1789, 32
      %v2102 = vpop.permute.xlu0 %2101
      %2103 = vrot.lane.b32.xlu0 %v1790, 32
      %v2104 = vpop.permute.xlu0 %2103
      %2105 = vrot.lane.b32.xlu0 %v1791, 32
      %v2106 = vpop.permute.xlu0 %2105
      %2107 = vrot.lane.b32.xlu0 %v1792, 32
      %v2108 = vpop.permute.xlu0 %2107
      %2109 = vrot.lane.b32.xlu0 %v1793, 32
      %v2110 = vpop.permute.xlu0 %2109
      %2111 = vrot.lane.b32.xlu0 %v1794, 32
      %v2112 = vpop.permute.xlu0 %2111
      %2113 = vrot.lane.b32.xlu0 %v1795, 32
      %v2114 = vpop.permute.xlu0 %2113
      %2115 = vrot.lane.b32.xlu0 %v1796, 32
      %v2116 = vpop.permute.xlu0 %2115
      %2117 = vrot.lane.b32.xlu0 %v1797, 32
      %v2118 = vpop.permute.xlu0 %2117
      %2183 = vrot.lane.b32.xlu0 %v1798, 64
      %v2184 = vpop.permute.xlu0 %2183
      %2185 = vrot.lane.b32.xlu0 %v1799, 64
      %v2186 = vpop.permute.xlu0 %2185
      %2187 = vrot.lane.b32.xlu0 %v1800, 64
      %v2188 = vpop.permute.xlu0 %2187
      %2189 = vrot.lane.b32.xlu0 %v1801, 64
      %v2190 = vpop.permute.xlu0 %2189
      %2191 = vrot.lane.b32.xlu0 %v1802, 64
      %v2192 = vpop.permute.xlu0 %2191
      %2193 = vrot.lane.b32.xlu0 %v1803, 64
      %v2194 = vpop.permute.xlu0 %2193
      %2195 = vrot.lane.b32.xlu0 %v1804, 64
      %v2196 = vpop.permute.xlu0 %2195
      %2197 = vrot.lane.b32.xlu0 %v1805, 64
      %v2198 = vpop.permute.xlu0 %2197
      %2199 = vrot.lane.b32.xlu0 %v1806, 64
      %v2200 = vpop.permute.xlu0 %2199
      %2201 = vrot.lane.b32.xlu0 %v1807, 64
      %v2202 = vpop.permute.xlu0 %2201
      %2203 = vrot.lane.b32.xlu0 %v1808, 64
      %v2204 = vpop.permute.xlu0 %2203
      %2205 = vrot.lane.b32.xlu0 %v1809, 64
      %v2206 = vpop.permute.xlu0 %2205
      %2207 = vrot.lane.b32.xlu0 %v1810, 64
      %v2208 = vpop.permute.xlu0 %2207
      %2209 = vrot.lane.b32.xlu0 %v1811, 64
      %v2210 = vpop.permute.xlu0 %2209
      %2211 = vrot.lane.b32.xlu0 %v1812, 64
      %v2212 = vpop.permute.xlu0 %2211
      %2213 = vrot.lane.b32.xlu0 %v1813, 64
      %v2214 = vpop.permute.xlu0 %2213
      %2215 = vrot.lane.b32.xlu0 %v1814, 64
      %v2216 = vpop.permute.xlu0 %2215
      %2217 = vrot.lane.b32.xlu0 %v1815, 64
      %v2218 = vpop.permute.xlu0 %2217
      %2219 = vrot.lane.b32.xlu0 %v1816, 64
      %v2220 = vpop.permute.xlu0 %2219
      %2221 = vrot.lane.b32.xlu0 %v1817, 64
      %v2222 = vpop.permute.xlu0 %2221
      %2223 = vrot.lane.b32.xlu0 %v1818, 64
      %v2224 = vpop.permute.xlu0 %2223
      %2225 = vrot.lane.b32.xlu0 %v1819, 64
      %v2226 = vpop.permute.xlu0 %2225
      %2227 = vrot.lane.b32.xlu0 %v1820, 64
      %v2228 = vpop.permute.xlu0 %2227
      %2229 = vrot.lane.b32.xlu0 %v1821, 64
      %v2230 = vpop.permute.xlu0 %2229
      %2231 = vrot.lane.b32.xlu0 %v1822, 64
      %v2232 = vpop.permute.xlu0 %2231
      %2233 = vrot.lane.b32.xlu0 %v1823, 64
      %v2234 = vpop.permute.xlu0 %2233
      %2235 = vrot.lane.b32.xlu0 %v1824, 64
      %v2236 = vpop.permute.xlu0 %2235
      %2237 = vrot.lane.b32.xlu0 %v1825, 64
      %v2238 = vpop.permute.xlu0 %2237
      %2239 = vrot.lane.b32.xlu0 %v1826, 64
      %v2240 = vpop.permute.xlu0 %2239
      %2241 = vrot.lane.b32.xlu0 %v1827, 64
      %v2242 = vpop.permute.xlu0 %2241
      %2243 = vrot.lane.b32.xlu0 %v1828, 64
      %v2244 = vpop.permute.xlu0 %2243
      %2245 = vrot.lane.b32.xlu0 %v1829, 64
      %v2246 = vpop.permute.xlu0 %2245
      %2311 = vrot.lane.b32.xlu0 %v1830, 96
      %v2312 = vpop.permute.xlu0 %2311
      %2313 = vrot.lane.b32.xlu0 %v1831, 96
      %v2314 = vpop.permute.xlu0 %2313
      %2315 = vrot.lane.b32.xlu0 %v1832, 96
      %v2316 = vpop.permute.xlu0 %2315
      %2317 = vrot.lane.b32.xlu0 %v1833, 96
      %v2318 = vpop.permute.xlu0 %2317
      %2319 = vrot.lane.b32.xlu0 %v1834, 96
      %v2320 = vpop.permute.xlu0 %2319
      %2321 = vrot.lane.b32.xlu0 %v1835, 96
      %v2322 = vpop.permute.xlu0 %2321
      %2323 = vrot.lane.b32.xlu0 %v1836, 96
      %v2324 = vpop.permute.xlu0 %2323
      %2325 = vrot.lane.b32.xlu0 %v1837, 96
      %v2326 = vpop.permute.xlu0 %2325
      %2327 = vrot.lane.b32.xlu0 %v1838, 96
      %v2328 = vpop.permute.xlu0 %2327
      %2329 = vrot.lane.b32.xlu0 %v1839, 96
      %v2330 = vpop.permute.xlu0 %2329
      %2331 = vrot.lane.b32.xlu0 %v1840, 96
      %v2332 = vpop.permute.xlu0 %2331
      %2333 = vrot.lane.b32.xlu0 %v1841, 96
      %v2334 = vpop.permute.xlu0 %2333
      %2335 = vrot.lane.b32.xlu0 %v1842, 96
      %v2336 = vpop.permute.xlu0 %2335
      %2337 = vrot.lane.b32.xlu0 %v1843, 96
      %v2338 = vpop.permute.xlu0 %2337
      %2339 = vrot.lane.b32.xlu0 %v1844, 96
      %v2340 = vpop.permute.xlu0 %2339
      %2341 = vrot.lane.b32.xlu0 %v1845, 96
      %v2342 = vpop.permute.xlu0 %2341
      %2343 = vrot.lane.b32.xlu0 %v1846, 96
      %v2344 = vpop.permute.xlu0 %2343
      %2345 = vrot.lane.b32.xlu0 %v1847, 96
      %v2346 = vpop.permute.xlu0 %2345
      %2347 = vrot.lane.b32.xlu0 %v1848, 96
      %v2348 = vpop.permute.xlu0 %2347
      %2349 = vrot.lane.b32.xlu0 %v1849, 96
      %v2350 = vpop.permute.xlu0 %2349
      %2351 = vrot.lane.b32.xlu0 %v1850, 96
      %v2352 = vpop.permute.xlu0 %2351
      %2353 = vrot.lane.b32.xlu0 %v1851, 96
      %v2354 = vpop.permute.xlu0 %2353
      %2355 = vrot.lane.b32.xlu0 %v1852, 96
      %v2356 = vpop.permute.xlu0 %2355
      %2357 = vrot.lane.b32.xlu0 %v1853, 96
      %v2358 = vpop.permute.xlu0 %2357
      %2359 = vrot.lane.b32.xlu0 %v1854, 96
      %v2360 = vpop.permute.xlu0 %2359
      %2361 = vrot.lane.b32.xlu0 %v1855, 96
      %v2362 = vpop.permute.xlu0 %2361
      %2363 = vrot.lane.b32.xlu0 %v1856, 96
      %v2364 = vpop.permute.xlu0 %2363
      %2365 = vrot.lane.b32.xlu0 %v1857, 96
      %v2366 = vpop.permute.xlu0 %2365
      %2367 = vrot.lane.b32.xlu0 %v1858, 96
      %v2368 = vpop.permute.xlu0 %2367
      %2369 = vrot.lane.b32.xlu0 %v1859, 96
      %v2370 = vpop.permute.xlu0 %2369
      %2371 = vrot.lane.b32.xlu0 %v1860, 96
      %v2372 = vpop.permute.xlu0 %2371
      %2373 = vrot.lane.b32.xlu0 %v1861, 96
      %v2374 = vpop.permute.xlu0 %2373
      %2439 = vrot.lane.b32.xlu0 %v1894, 32
      %v2440 = vpop.permute.xlu0 %2439
      %2441 = vrot.lane.b32.xlu0 %v1895, 32
      %v2442 = vpop.permute.xlu0 %2441
      %2443 = vrot.lane.b32.xlu0 %v1896, 32
      %v2444 = vpop.permute.xlu0 %2443
      %2445 = vrot.lane.b32.xlu0 %v1897, 32
      %v2446 = vpop.permute.xlu0 %2445
      %2447 = vrot.lane.b32.xlu0 %v1898, 32
      %v2448 = vpop.permute.xlu0 %2447
      %2449 = vrot.lane.b32.xlu0 %v1899, 32
      %v2450 = vpop.permute.xlu0 %2449
      %2451 = vrot.lane.b32.xlu0 %v1900, 32
      %v2452 = vpop.permute.xlu0 %2451
      %2453 = vrot.lane.b32.xlu0 %v1901, 32
      %v2454 = vpop.permute.xlu0 %2453
      %2455 = vrot.lane.b32.xlu0 %v1902, 32
      %v2456 = vpop.permute.xlu0 %2455
      %2457 = vrot.lane.b32.xlu0 %v1903, 32
      %v2458 = vpop.permute.xlu0 %2457
      %2459 = vrot.lane.b32.xlu0 %v1904, 32
      %v2460 = vpop.permute.xlu0 %2459
      %2461 = vrot.lane.b32.xlu0 %v1905, 32
      %v2462 = vpop.permute.xlu0 %2461
      %2463 = vrot.lane.b32.xlu0 %v1906, 32
      %v2464 = vpop.permute.xlu0 %2463
      %2465 = vrot.lane.b32.xlu0 %v1907, 32
      %v2466 = vpop.permute.xlu0 %2465
      %2467 = vrot.lane.b32.xlu0 %v1908, 32
      %v2468 = vpop.permute.xlu0 %2467
      %2469 = vrot.lane.b32.xlu0 %v1909, 32
      %v2470 = vpop.permute.xlu0 %2469
      %2471 = vrot.lane.b32.xlu0 %v1910, 32
      %v2472 = vpop.permute.xlu0 %2471
      %2473 = vrot.lane.b32.xlu0 %v1911, 32
      %v2474 = vpop.permute.xlu0 %2473
      %2475 = vrot.lane.b32.xlu0 %v1912, 32
      %v2476 = vpop.permute.xlu0 %2475
      %2477 = vrot.lane.b32.xlu0 %v1913, 32
      %v2478 = vpop.permute.xlu0 %2477
      %2479 = vrot.lane.b32.xlu0 %v1914, 32
      %v2480 = vpop.permute.xlu0 %2479
      %2481 = vrot.lane.b32.xlu0 %v1915, 32
      %v2482 = vpop.permute.xlu0 %2481
      %2483 = vrot.lane.b32.xlu0 %v1916, 32
      %v2484 = vpop.permute.xlu0 %2483
      %2485 = vrot.lane.b32.xlu0 %v1917, 32
      %v2486 = vpop.permute.xlu0 %2485
      %2487 = vrot.lane.b32.xlu0 %v1918, 32
      %v2488 = vpop.permute.xlu0 %2487
      %2489 = vrot.lane.b32.xlu0 %v1919, 32
      %v2490 = vpop.permute.xlu0 %2489
      %2491 = vrot.lane.b32.xlu0 %v1920, 32
      %v2492 = vpop.permute.xlu0 %2491
      %2493 = vrot.lane.b32.xlu0 %v1921, 32
      %v2494 = vpop.permute.xlu0 %2493
      %2495 = vrot.lane.b32.xlu0 %v1922, 32
      %v2496 = vpop.permute.xlu0 %2495
      %2497 = vrot.lane.b32.xlu0 %v1923, 32
      %v2498 = vpop.permute.xlu0 %2497
      %2499 = vrot.lane.b32.xlu0 %v1924, 32
      %v2500 = vpop.permute.xlu0 %2499
      %2501 = vrot.lane.b32.xlu0 %v1925, 32
      %v2502 = vpop.permute.xlu0 %2501
      %2567 = vrot.lane.b32.xlu0 %v1927, 64
      %v2568 = vpop.permute.xlu0 %2567
      %2569 = vrot.lane.b32.xlu0 %v1928, 64
      %v2570 = vpop.permute.xlu0 %2569
      %2571 = vrot.lane.b32.xlu0 %v1929, 64
      %v2572 = vpop.permute.xlu0 %2571
      %2573 = vrot.lane.b32.xlu0 %v1930, 64
      %v2574 = vpop.permute.xlu0 %2573
      %2575 = vrot.lane.b32.xlu0 %v1931, 64
      %v2576 = vpop.permute.xlu0 %2575
      %2577 = vrot.lane.b32.xlu0 %v1932, 64
      %v2578 = vpop.permute.xlu0 %2577
      %2579 = vrot.lane.b32.xlu0 %v1933, 64
      %v2580 = vpop.permute.xlu0 %2579
      %2581 = vrot.lane.b32.xlu0 %v1934, 64
      %v2582 = vpop.permute.xlu0 %2581
      %2583 = vrot.lane.b32.xlu0 %v1935, 64
      %v2584 = vpop.permute.xlu0 %2583
      %2585 = vrot.lane.b32.xlu0 %v1936, 64
      %v2586 = vpop.permute.xlu0 %2585
      %2587 = vrot.lane.b32.xlu0 %v1937, 64
      %v2588 = vpop.permute.xlu0 %2587
      %2589 = vrot.lane.b32.xlu0 %v1938, 64
      %v2590 = vpop.permute.xlu0 %2589
      %2591 = vrot.lane.b32.xlu0 %v1939, 64
      %v2592 = vpop.permute.xlu0 %2591
      %2593 = vrot.lane.b32.xlu0 %v1940, 64
      %v2594 = vpop.permute.xlu0 %2593
      %2595 = vrot.lane.b32.xlu0 %v1941, 64
      %v2596 = vpop.permute.xlu0 %2595
      %2597 = vrot.lane.b32.xlu0 %v1942, 64
      %v2598 = vpop.permute.xlu0 %2597
      %2599 = vrot.lane.b32.xlu0 %v1943, 64
      %v2600 = vpop.permute.xlu0 %2599
      %2601 = vrot.lane.b32.xlu0 %v1944, 64
      %v2602 = vpop.permute.xlu0 %2601
      %2603 = vrot.lane.b32.xlu0 %v1945, 64
      %v2604 = vpop.permute.xlu0 %2603
      %2605 = vrot.lane.b32.xlu0 %v1946, 64
      %v2606 = vpop.permute.xlu0 %2605
      %2607 = vrot.lane.b32.xlu0 %v1947, 64
      %v2608 = vpop.permute.xlu0 %2607
      %2609 = vrot.lane.b32.xlu0 %v1948, 64
      %v2610 = vpop.permute.xlu0 %2609
      %2611 = vrot.lane.b32.xlu0 %v1949, 64
      %v2612 = vpop.permute.xlu0 %2611
      %2613 = vrot.lane.b32.xlu0 %v1950, 64
      %v2614 = vpop.permute.xlu0 %2613
      %2615 = vrot.lane.b32.xlu0 %v1951, 64
      %v2616 = vpop.permute.xlu0 %2615
      %2617 = vrot.lane.b32.xlu0 %v1952, 64
      %v2618 = vpop.permute.xlu0 %2617
      %2619 = vrot.lane.b32.xlu0 %v1953, 64
      %v2620 = vpop.permute.xlu0 %2619
      %2621 = vrot.lane.b32.xlu0 %v1954, 64
      %v2622 = vpop.permute.xlu0 %2621
      %2623 = vrot.lane.b32.xlu0 %v1955, 64
      %v2624 = vpop.permute.xlu0 %2623
      %2625 = vrot.lane.b32.xlu0 %v1956, 64
      %v2626 = vpop.permute.xlu0 %2625
      %2627 = vrot.lane.b32.xlu0 %v1957, 64
      %v2628 = vpop.permute.xlu0 %2627
      %2629 = vrot.lane.b32.xlu0 %v1958, 64
      %v2630 = vpop.permute.xlu0 %2629
      %2695 = vrot.lane.b32.xlu0 %v1959, 96
      %v2696 = vpop.permute.xlu0 %2695
      %2697 = vrot.lane.b32.xlu0 %v1960, 96
      %v2698 = vpop.permute.xlu0 %2697
      %2699 = vrot.lane.b32.xlu0 %v1961, 96
      %v2700 = vpop.permute.xlu0 %2699
      %2701 = vrot.lane.b32.xlu0 %v1962, 96
      %v2702 = vpop.permute.xlu0 %2701
      %2703 = vrot.lane.b32.xlu0 %v1963, 96
      %v2704 = vpop.permute.xlu0 %2703
      %2705 = vrot.lane.b32.xlu0 %v1964, 96
      %v2706 = vpop.permute.xlu0 %2705
      %2707 = vrot.lane.b32.xlu0 %v1965, 96
      %v2708 = vpop.permute.xlu0 %2707
      %2709 = vrot.lane.b32.xlu0 %v1966, 96
      %v2710 = vpop.permute.xlu0 %2709
      %2711 = vrot.lane.b32.xlu0 %v1967, 96
      %v2712 = vpop.permute.xlu0 %2711
      %2713 = vrot.lane.b32.xlu0 %v1968, 96
      %v2714 = vpop.permute.xlu0 %2713
      %2715 = vrot.lane.b32.xlu0 %v1969, 96
      %v2716 = vpop.permute.xlu0 %2715
      %2717 = vrot.lane.b32.xlu0 %v1970, 96
      %v2718 = vpop.permute.xlu0 %2717
      %2719 = vrot.lane.b32.xlu0 %v1971, 96
      %v2720 = vpop.permute.xlu0 %2719
      %2721 = vrot.lane.b32.xlu0 %v1972, 96
      %v2722 = vpop.permute.xlu0 %2721
      %2723 = vrot.lane.b32.xlu0 %v1973, 96
      %v2724 = vpop.permute.xlu0 %2723
      %2725 = vrot.lane.b32.xlu0 %v1974, 96
      %v2726 = vpop.permute.xlu0 %2725
      %2727 = vrot.lane.b32.xlu0 %v1975, 96
      %v2728 = vpop.permute.xlu0 %2727
      %2729 = vrot.lane.b32.xlu0 %v1976, 96
      %v2730 = vpop.permute.xlu0 %2729
      %2731 = vrot.lane.b32.xlu0 %v1977, 96
      %v2732 = vpop.permute.xlu0 %2731
      %2733 = vrot.lane.b32.xlu0 %v1978, 96
      %v2734 = vpop.permute.xlu0 %2733
      %2735 = vrot.lane.b32.xlu0 %v1979, 96
      %v2736 = vpop.permute.xlu0 %2735
      %2737 = vrot.lane.b32.xlu0 %v1980, 96
      %v2738 = vpop.permute.xlu0 %2737
      %2739 = vrot.lane.b32.xlu0 %v1981, 96
      %v2740 = vpop.permute.xlu0 %2739
      %2741 = vrot.lane.b32.xlu0 %v1982, 96
      %v2742 = vpop.permute.xlu0 %2741
      %2743 = vrot.lane.b32.xlu0 %v1983, 96
      %v2744 = vpop.permute.xlu0 %2743
      %2745 = vrot.lane.b32.xlu0 %v1984, 96
      %v2746 = vpop.permute.xlu0 %2745
      %2747 = vrot.lane.b32.xlu0 %v1985, 96
      %v2748 = vpop.permute.xlu0 %2747
      %2749 = vrot.lane.b32.xlu0 %v1986, 96
      %v2750 = vpop.permute.xlu0 %2749
      %2751 = vrot.lane.b32.xlu0 %v1987, 96
      %v2752 = vpop.permute.xlu0 %2751
      %2753 = vrot.lane.b32.xlu0 %v1988, 96
      %v2754 = vpop.permute.xlu0 %2753
      %2755 = vrot.lane.b32.xlu0 %v1989, 96
      %v2756 = vpop.permute.xlu0 %2755
      %2757 = vrot.lane.b32.xlu0 %v1990, 96
      %v2758 = vpop.permute.xlu0 %2757
      %v2791 = vsel %vm583, %v1734, %v2056
      %v2792 = vsel %vm583, %v1735, %v2058
      %v2793 = vsel %vm583, %v1736, %v2060
      %v2794 = vsel %vm583, %v1737, %v2062
      %v2795 = vsel %vm583, %v1738, %v2064
      %v2796 = vsel %vm583, %v1739, %v2066
      %v2797 = vsel %vm583, %v1740, %v2068
      %v2798 = vsel %vm583, %v1741, %v2070
      %v2799 = vsel %vm583, %v1742, %v2072
      %v2800 = vsel %vm583, %v1743, %v2074
      %v2801 = vsel %vm583, %v1744, %v2076
      %v2802 = vsel %vm583, %v1745, %v2078
      %v2803 = vsel %vm583, %v1746, %v2080
      %v2804 = vsel %vm583, %v1747, %v2082
      %v2805 = vsel %vm583, %v1748, %v2084
      %v2806 = vsel %vm583, %v1749, %v2086
      %v2807 = vsel %vm583, %v1750, %v2088
      %v2808 = vsel %vm583, %v1751, %v2090
      %v2809 = vsel %vm583, %v1752, %v2092
      %v2810 = vsel %vm583, %v1753, %v2094
      %v2811 = vsel %vm583, %v1754, %v2096
      %v2812 = vsel %vm583, %v1755, %v2098
      %v2813 = vsel %vm583, %v1756, %v2100
      %v2814 = vsel %vm583, %v1757, %v2102
      %v2815 = vsel %vm583, %v1758, %v2104
      %v2816 = vsel %vm583, %v1759, %v2106
      %v2817 = vsel %vm583, %v1760, %v2108
      %v2818 = vsel %vm583, %v1761, %v2110
      %v2819 = vsel %vm583, %v1762, %v2112
      %v2820 = vsel %vm583, %v1763, %v2114
      %v2821 = vsel %vm583, %v1764, %v2116
      %v2822 = vsel %vm583, %v1765, %v2118
      %v2823 = vsel %vm446, %v2791, %v2184
      %v2824 = vsel %vm446, %v2792, %v2186
      %v2825 = vsel %vm446, %v2793, %v2188
      %v2826 = vsel %vm446, %v2794, %v2190
      %v2827 = vsel %vm446, %v2795, %v2192
      %v2828 = vsel %vm446, %v2796, %v2194
      %v2829 = vsel %vm446, %v2797, %v2196
      %v2830 = vsel %vm446, %v2798, %v2198
      %v2831 = vsel %vm446, %v2799, %v2200
      %v2832 = vsel %vm446, %v2800, %v2202
      %v2833 = vsel %vm446, %v2801, %v2204
      %v2834 = vsel %vm446, %v2802, %v2206
      %v2835 = vsel %vm446, %v2803, %v2208
      %v2836 = vsel %vm446, %v2804, %v2210
      %v2837 = vsel %vm446, %v2805, %v2212
      %v2838 = vsel %vm446, %v2806, %v2214
      %v2839 = vsel %vm446, %v2807, %v2216
      %v2840 = vsel %vm446, %v2808, %v2218
      %v2841 = vsel %vm446, %v2809, %v2220
      %v2842 = vsel %vm446, %v2810, %v2222
      %v2843 = vsel %vm446, %v2811, %v2224
      %v2844 = vsel %vm446, %v2812, %v2226
      %v2845 = vsel %vm446, %v2813, %v2228
      %v2846 = vsel %vm446, %v2814, %v2230
      %v2847 = vsel %vm446, %v2815, %v2232
      %v2848 = vsel %vm446, %v2816, %v2234
      %v2849 = vsel %vm446, %v2817, %v2236
      %v2850 = vsel %vm446, %v2818, %v2238
      %v2851 = vsel %vm446, %v2819, %v2240
      %v2852 = vsel %vm446, %v2820, %v2242
      %v2853 = vsel %vm446, %v2821, %v2244
      %v2854 = vsel %vm446, %v2822, %v2246
      %vm2855 = vcmask 785408
      %v2856 = vsel %vm2855, %v2823, %v2312
      %v2857 = vsel %vm2855, %v2824, %v2314
      %v2858 = vsel %vm2855, %v2825, %v2316
      %v2859 = vsel %vm2855, %v2826, %v2318
      %v2860 = vsel %vm2855, %v2827, %v2320
      %v2861 = vsel %vm2855, %v2828, %v2322
      %v2862 = vsel %vm2855, %v2829, %v2324
      %v2863 = vsel %vm2855, %v2830, %v2326
      %v2864 = vsel %vm2855, %v2831, %v2328
      %v2865 = vsel %vm2855, %v2832, %v2330
      %v2866 = vsel %vm2855, %v2833, %v2332
      %v2867 = vsel %vm2855, %v2834, %v2334
      %v2868 = vsel %vm2855, %v2835, %v2336
      %v2869 = vsel %vm2855, %v2836, %v2338
      %v2870 = vsel %vm2855, %v2837, %v2340
      %v2871 = vsel %vm2855, %v2838, %v2342
      %v2872 = vsel %vm2855, %v2839, %v2344
      %v2873 = vsel %vm2855, %v2840, %v2346
      %v2874 = vsel %vm2855, %v2841, %v2348
      %v2875 = vsel %vm2855, %v2842, %v2350
      %v2876 = vsel %vm2855, %v2843, %v2352
      %v2877 = vsel %vm2855, %v2844, %v2354
      %v2878 = vsel %vm2855, %v2845, %v2356
      %v2879 = vsel %vm2855, %v2846, %v2358
      %v2880 = vsel %vm2855, %v2847, %v2360
      %v2881 = vsel %vm2855, %v2848, %v2362
      %v2882 = vsel %vm2855, %v2849, %v2364
      %v2883 = vsel %vm2855, %v2850, %v2366
      %v2884 = vsel %vm2855, %v2851, %v2368
      %v2885 = vsel %vm2855, %v2852, %v2370
      %v2886 = vsel %vm2855, %v2853, %v2372
      %v2887 = vsel %vm2855, %v2854, %v2374
      %v2888 = vsel %vm583, %v1862, %v2440
      %v2889 = vsel %vm583, %v1863, %v2442
      %v2890 = vsel %vm583, %v1864, %v2444
      %v2891 = vsel %vm583, %v1865, %v2446
      %v2892 = vsel %vm583, %v1866, %v2448
      %v2893 = vsel %vm583, %v1867, %v2450
      %v2894 = vsel %vm583, %v1868, %v2452
      %v2895 = vsel %vm583, %v1869, %v2454
      %v2896 = vsel %vm583, %v1870, %v2456
      %v2897 = vsel %vm583, %v1871, %v2458
      %v2898 = vsel %vm583, %v1872, %v2460
      %v2899 = vsel %vm583, %v1873, %v2462
      %v2900 = vsel %vm583, %v1874, %v2464
      %v2901 = vsel %vm583, %v1875, %v2466
      %v2902 = vsel %vm583, %v1876, %v2468
      %v2903 = vsel %vm583, %v1877, %v2470
      %v2904 = vsel %vm583, %v1878, %v2472
      %v2905 = vsel %vm583, %v1879, %v2474
      %v2906 = vsel %vm583, %v1880, %v2476
      %v2907 = vsel %vm583, %v1881, %v2478
      %v2908 = vsel %vm583, %v1882, %v2480
      %v2909 = vsel %vm583, %v1883, %v2482
      %v2910 = vsel %vm583, %v1884, %v2484
      %v2911 = vsel %vm583, %v1885, %v2486
      %v2912 = vsel %vm583, %v1886, %v2488
      %v2913 = vsel %vm583, %v1887, %v2490
      %v2914 = vsel %vm583, %v1888, %v2492
      %v2915 = vsel %vm583, %v1889, %v2494
      %v2916 = vsel %vm583, %v1890, %v2496
      %v2917 = vsel %vm583, %v1891, %v2498
      %v2918 = vsel %vm583, %v1892, %v2500
      %v2919 = vsel %vm583, %v1893, %v2502
      %v2920 = vsel %vm446, %v2888, %v2568
      %v2921 = vsel %vm446, %v2889, %v2570
      %v2922 = vsel %vm446, %v2890, %v2572
      %v2923 = vsel %vm446, %v2891, %v2574
      %v2924 = vsel %vm446, %v2892, %v2576
      %v2925 = vsel %vm446, %v2893, %v2578
      %v2926 = vsel %vm446, %v2894, %v2580
      %v2927 = vsel %vm446, %v2895, %v2582
      %v2928 = vsel %vm446, %v2896, %v2584
      %v2929 = vsel %vm446, %v2897, %v2586
      %v2930 = vsel %vm446, %v2898, %v2588
      %v2931 = vsel %vm446, %v2899, %v2590
      %v2932 = vsel %vm446, %v2900, %v2592
      %v2933 = vsel %vm446, %v2901, %v2594
      %v2934 = vsel %vm446, %v2902, %v2596
      %v2935 = vsel %vm446, %v2903, %v2598
      %v2936 = vsel %vm446, %v2904, %v2600
      %v2937 = vsel %vm446, %v2905, %v2602
      %v2938 = vsel %vm446, %v2906, %v2604
      %v2939 = vsel %vm446, %v2907, %v2606
      %v2940 = vsel %vm446, %v2908, %v2608
      %v2941 = vsel %vm446, %v2909, %v2610
      %v2942 = vsel %vm446, %v2910, %v2612
      %v2943 = vsel %vm446, %v2911, %v2614
      %v2944 = vsel %vm446, %v2912, %v2616
      %v2945 = vsel %vm446, %v2913, %v2618
      %v2946 = vsel %vm446, %v2914, %v2620
      %v2947 = vsel %vm446, %v2915, %v2622
      %v2948 = vsel %vm446, %v2916, %v2624
      %v2949 = vsel %vm446, %v2917, %v2626
      %v2950 = vsel %vm446, %v2918, %v2628
      %v2951 = vsel %vm446, %v2919, %v2630
      %v2952 = vsel %vm2855, %v2920, %v2696
      %v2953 = vsel %vm2855, %v2921, %v2698
      %v2954 = vsel %vm2855, %v2922, %v2700
      %v2955 = vsel %vm2855, %v2923, %v2702
      %v2956 = vsel %vm2855, %v2924, %v2704
      %v2957 = vsel %vm2855, %v2925, %v2706
      %v2958 = vsel %vm2855, %v2926, %v2708
      %v2959 = vsel %vm2855, %v2927, %v2710
      %v2960 = vsel %vm2855, %v2928, %v2712
      %v2961 = vsel %vm2855, %v2929, %v2714
      %v2962 = vsel %vm2855, %v2930, %v2716
      %v2963 = vsel %vm2855, %v2931, %v2718
      %v2964 = vsel %vm2855, %v2932, %v2720
      %v2965 = vsel %vm2855, %v2933, %v2722
      %v2966 = vsel %vm2855, %v2934, %v2724
      %v2967 = vsel %vm2855, %v2935, %v2726
      %v2968 = vsel %vm2855, %v2936, %v2728
      %v2969 = vsel %vm2855, %v2937, %v2730
      %v2970 = vsel %vm2855, %v2938, %v2732
      %v2971 = vsel %vm2855, %v2939, %v2734
      %v2972 = vsel %vm2855, %v2940, %v2736
      %v2973 = vsel %vm2855, %v2941, %v2738
      %v2974 = vsel %vm2855, %v2942, %v2740
      %v2975 = vsel %vm2855, %v2943, %v2742
      %v2976 = vsel %vm2855, %v2944, %v2744
      %v2977 = vsel %vm2855, %v2945, %v2746
      %v2978 = vsel %vm2855, %v2946, %v2748
      %v2979 = vsel %vm2855, %v2947, %v2750
      %v2980 = vsel %vm2855, %v2948, %v2752
      %v2981 = vsel %vm2855, %v2949, %v2754
      %v2982 = vsel %vm2855, %v2950, %v2756
      %v2983 = vsel %vm2855, %v2951, %v2758
      %v2984 = vpack.c.bf16 %v2857, %v2856
      %v2985 = vpack.c.bf16 %v2953, %v2952
      %v2986 = vpack.c.bf16 %v1992, %v1991
      %v2987 = vpack.c.bf16 %v2859, %v2858
      %v2988 = vpack.c.bf16 %v2955, %v2954
      %v2989 = vpack.c.bf16 %v1994, %v1993
      %v2990 = vpack.c.bf16 %v2861, %v2860
      %v2991 = vpack.c.bf16 %v2957, %v2956
      %v2992 = vpack.c.bf16 %v1996, %v1995
      %v2993 = vpack.c.bf16 %v2863, %v2862
      %v2994 = vpack.c.bf16 %v2959, %v2958
      %v2995 = vpack.c.bf16 %v1998, %v1997
      %v2996 = vpack.c.bf16 %v2865, %v2864
      %v2997 = vpack.c.bf16 %v2961, %v2960
      %v2998 = vpack.c.bf16 %v2000, %v1999
      %v2999 = vpack.c.bf16 %v2867, %v2866
      %v3000 = vpack.c.bf16 %v2963, %v2962
      %v3001 = vpack.c.bf16 %v2002, %v2001
      %v3002 = vpack.c.bf16 %v2869, %v2868
      %v3003 = vpack.c.bf16 %v2965, %v2964
      %v3004 = vpack.c.bf16 %v2004, %v2003
      %v3005 = vpack.c.bf16 %v2871, %v2870
      %v3006 = vpack.c.bf16 %v2967, %v2966
      %v3007 = vpack.c.bf16 %v2006, %v2005
      %v3008 = vpack.c.bf16 %v2873, %v2872
      %v3009 = vpack.c.bf16 %v2969, %v2968
      %v3010 = vpack.c.bf16 %v2008, %v2007
      %v3011 = vpack.c.bf16 %v2875, %v2874
      %v3012 = vpack.c.bf16 %v2971, %v2970
      %v3013 = vpack.c.bf16 %v2010, %v2009
      %v3014 = vpack.c.bf16 %v2877, %v2876
      %v3015 = vpack.c.bf16 %v2973, %v2972
      %v3016 = vpack.c.bf16 %v2012, %v2011
      %v3017 = vpack.c.bf16 %v2879, %v2878
      %v3018 = vpack.c.bf16 %v2975, %v2974
      %v3019 = vpack.c.bf16 %v2014, %v2013
      %v3020 = vpack.c.bf16 %v2881, %v2880
      %v3021 = vpack.c.bf16 %v2977, %v2976
      %v3022 = vpack.c.bf16 %v2016, %v2015
      %v3023 = vpack.c.bf16 %v2883, %v2882
      %v3024 = vpack.c.bf16 %v2979, %v2978
      %v3025 = vpack.c.bf16 %v2018, %v2017
      %v3026 = vpack.c.bf16 %v2885, %v2884
      %v3027 = vpack.c.bf16 %v2981, %v2980
      %v3028 = vpack.c.bf16 %v2020, %v2019
      %v3029 = vpack.c.bf16 %v2887, %v2886
      %v3030 = vpack.c.bf16 %v2983, %v2982
      %v3031 = vpack.c.bf16 %v2022, %v2021
      %v3032 = vld [vmem:[%s4] sm:$0xff]
      %v3033 = vld [vmem:[%s4 + $0x8] sm:$0xf]
      %v3034 = vld [vmem:[%s4 + $0xc] sm:$0xff]
      %v3035 = vld [vmem:[%s4 + $0x14] sm:$0xf]
      %v3036 = vld [vmem:[%s4 + $0x18] sm:$0xff]
      %v3037 = vld [vmem:[%s4 + $0x20] sm:$0xf]
      %v3038 = vld [vmem:[%s4 + $0x24] sm:$0xff]
      %v3039 = vld [vmem:[%s4 + $0x2c] sm:$0xf]
      %v3048 = vunpack.c.l.b16 %v3032
      %v3049 = vunpack.c.h.b16 %v3032
      %v3050 = vunpack.c.l.b16 %v3033
      %v3051 = vunpack.c.l.b16 %v3034
      %v3052 = vunpack.c.h.b16 %v3034
      %v3053 = vunpack.c.l.b16 %v3035
      %v3054 = vunpack.c.l.b16 %v3036
      %v3055 = vunpack.c.h.b16 %v3036
      %v3056 = vunpack.c.l.b16 %v3037
      %v3057 = vunpack.c.l.b16 %v3038
      %v3058 = vunpack.c.h.b16 %v3038
      %v3059 = vunpack.c.l.b16 %v3039
      %v3060 = vpack.c.b16 %v3051, %v3048
      %v3061 = vpack.c.b16 %v3052, %v3049
      %v3062 = vpack.c.b16 %v3053, %v3050
      %v3063 = vpack.c.b16 %v3057, %v3054
      %v3064 = vpack.c.b16 %v3058, %v3055
      %v3065 = vpack.c.b16 %v3059, %v3056
      %v3071 = vsel %vm583, %v2986, 0
      %v3074 = vsel %vm583, %v2989, 0
      %v3077 = vsel %vm583, %v2992, 0
      %v3080 = vsel %vm583, %v2995, 0
      %v3083 = vsel %vm583, %v2998, 0
      %v3086 = vsel %vm583, %v3001, 0
      %v3089 = vsel %vm583, %v3004, 0
      %v3092 = vsel %vm583, %v3007, 0
      %v3095 = vsel %vm583, %v3010, 0
      %v3098 = vsel %vm583, %v3013, 0
      %v3101 = vsel %vm583, %v3016, 0
      %v3104 = vsel %vm583, %v3019, 0
      %v3107 = vsel %vm583, %v3022, 0
      %v3110 = vsel %vm583, %v3025, 0
      %v3113 = vsel %vm583, %v3028, 0
      %v3116 = vsel %vm583, %v3031, 0
      %v3119 = vsel %vm583, %v3062, 0
      %v3122 = vsel %vm583, %v3065, 0
      %3124 = vmatprep.subr.bf16.mxu0 %v3061
      %3125 = vmatpush1.bf16.xpose.msra.mxu0 %v3060
      %3126 = vmatprep.subr.bf16.mxu0 %v3064
      %3127 = vmatpush1.bf16.xpose.msra.mxu0 %v3063
      %3128 = vmatprep.subr.bf16.mxu0 0
      %3129 = vmatpush1.bf16.xpose.msra.mxu0 0
      %3130 = vmatprep.subr.bf16.mxu0 0
      %3131 = vmatpush1.bf16.xpose.msra.mxu0 0
      %3132 = vmatprep.subr.bf16.mxu0 0
      %3133 = vmatpush1.bf16.xpose.msra.mxu0 0
      %3134 = vmatprep.subr.bf16.mxu0 0
      %3135 = vmatpush1.bf16.xpose.msra.mxu0 0
      %3136 = vmatprep.subr.bf16.mxu0 0
      %3137 = vmatpush1.bf16.xpose.msra.mxu0 0
      %3138 = vmatprep.subr.bf16.mxu0 0
      %3139 = vmatpush1.bf16.xpose.msra.mxu0 0
      %3140 = vmatprep.subr.bf16.mxu0 0
      %3141 = vmatpush1.bf16.xpose.msra.mxu0 0
      %3142 = vmatprep.subr.bf16.mxu0 0
      %3143 = vmatpush1.bf16.xpose.msra.mxu0 0
      %3144 = vmatprep.subr.bf16.mxu0 0
      %3145 = vmatpush1.bf16.xpose.msra.mxu0 0
      %3146 = vmatprep.subr.bf16.mxu0 0
      %3147 = vmatpush1.bf16.xpose.msra.mxu0 0
      %3148 = vmatprep.subr.bf16.mxu0 0
      %3149 = vmatpush1.bf16.xpose.msra.mxu0 0
      %3150 = vmatprep.subr.bf16.mxu0 0
      %3151 = vmatpush1.bf16.xpose.msra.mxu0 0
      %3152 = vmatprep.subr.bf16.mxu0 0
      %3153 = vmatpush1.bf16.xpose.msra.mxu0 0
      %3154 = vmatprep.subr.bf16.mxu0 0
      %3155 = vmatpush1.bf16.xpose.msra.mxu0 0
      %3156 = vmatprep.mubr.bf16.mxu0 %v2985
      %3157 = vmatmul.mubr.bf16.gmra.mrb[0].mxu0 %v2984
      %v3158 = vpop.f32.mrb[0].mxu0
      %v3159 = vadd.f32 0.0, %v3158
      %v3160 = vpop.f32.mrb[0].mxu0
      %v3161 = vpop.f32.mrb[0].mxu0
      %v3162 = vadd.f32 0.0, %v3161
      %v3163 = vpop.f32.mrb[0].mxu0
      %3164 = vmatprep.mubr.bf16.mxu0 %v2988
      %3165 = vmatmul.mubr.bf16.gmra.mrb[0].mxu0 %v2987
      %v3166 = vpop.f32.mrb[0].mxu0
      %v3167 = vadd.f32 0.0, %v3166
      %v3168 = vpop.f32.mrb[0].mxu0
      %v3169 = vpop.f32.mrb[0].mxu0
      %v3170 = vadd.f32 0.0, %v3169
      %v3171 = vpop.f32.mrb[0].mxu0
      %3172 = vmatprep.mubr.bf16.mxu0 %v2991
      %3173 = vmatmul.mubr.bf16.gmra.mrb[0].mxu0 %v2990
      %v3174 = vpop.f32.mrb[0].mxu0
      %v3175 = vadd.f32 0.0, %v3174
      %v3176 = vpop.f32.mrb[0].mxu0
      %v3177 = vpop.f32.mrb[0].mxu0
      %v3178 = vadd.f32 0.0, %v3177
      %v3179 = vpop.f32.mrb[0].mxu0
      %3180 = vmatprep.mubr.bf16.mxu0 %v2994
      %3181 = vmatmul.mubr.bf16.gmra.mrb[0].mxu0 %v2993
      %v3182 = vpop.f32.mrb[0].mxu0
      %v3183 = vadd.f32 0.0, %v3182
      %v3184 = vpop.f32.mrb[0].mxu0
      %v3185 = vpop.f32.mrb[0].mxu0
      %v3186 = vadd.f32 0.0, %v3185
      %v3187 = vpop.f32.mrb[0].mxu0
      %3188 = vmatprep.mubr.bf16.mxu0 %v2997
      %3189 = vmatmul.mubr.bf16.gmra.mrb[0].mxu0 %v2996
      %v3190 = vpop.f32.mrb[0].mxu0
      %v3191 = vadd.f32 0.0, %v3190
      %v3192 = vpop.f32.mrb[0].mxu0
      %v3193 = vpop.f32.mrb[0].mxu0
      %v3194 = vadd.f32 0.0, %v3193
      %v3195 = vpop.f32.mrb[0].mxu0
      %3196 = vmatprep.mubr.bf16.mxu0 %v3000
      %3197 = vmatmul.mubr.bf16.gmra.mrb[0].mxu0 %v2999
      %v3198 = vpop.f32.mrb[0].mxu0
      %v3199 = vadd.f32 0.0, %v3198
      %v3200 = vpop.f32.mrb[0].mxu0
      %v3201 = vpop.f32.mrb[0].mxu0
      %v3202 = vadd.f32 0.0, %v3201
      %v3203 = vpop.f32.mrb[0].mxu0
      %3204 = vmatprep.mubr.bf16.mxu0 %v3003
      %3205 = vmatmul.mubr.bf16.gmra.mrb[0].mxu0 %v3002
      %v3206 = vpop.f32.mrb[0].mxu0
      %v3207 = vadd.f32 0.0, %v3206
      %v3208 = vpop.f32.mrb[0].mxu0
      %v3209 = vpop.f32.mrb[0].mxu0
      %v3210 = vadd.f32 0.0, %v3209
      %v3211 = vpop.f32.mrb[0].mxu0
      %3212 = vmatprep.mubr.bf16.mxu0 %v3006
      %3213 = vmatmul.mubr.bf16.gmra.mrb[0].mxu0 %v3005
      %v3214 = vpop.f32.mrb[0].mxu0
      %v3215 = vadd.f32 0.0, %v3214
      %v3216 = vpop.f32.mrb[0].mxu0
      %v3217 = vpop.f32.mrb[0].mxu0
      %v3218 = vadd.f32 0.0, %v3217
      %v3219 = vpop.f32.mrb[0].mxu0
      %3220 = vmatprep.mubr.bf16.mxu0 %v3009
      %3221 = vmatmul.mubr.bf16.gmra.mrb[0].mxu0 %v3008
      %v3222 = vpop.f32.mrb[0].mxu0
      %v3223 = vadd.f32 0.0, %v3222
      %v3224 = vpop.f32.mrb[0].mxu0
      %v3225 = vpop.f32.mrb[0].mxu0
      %v3226 = vadd.f32 0.0, %v3225
      %v3227 = vpop.f32.mrb[0].mxu0
      %3228 = vmatprep.mubr.bf16.mxu0 %v3012
      %3229 = vmatmul.mubr.bf16.gmra.mrb[0].mxu0 %v3011
      %v3230 = vpop.f32.mrb[0].mxu0
      %v3231 = vadd.f32 0.0, %v3230
      %v3232 = vpop.f32.mrb[0].mxu0
      %v3233 = vpop.f32.mrb[0].mxu0
      %v3234 = vadd.f32 0.0, %v3233
      %v3235 = vpop.f32.mrb[0].mxu0
      %3236 = vmatprep.mubr.bf16.mxu0 %v3015
      %3237 = vmatmul.mubr.bf16.gmra.mrb[0].mxu0 %v3014
      %v3238 = vpop.f32.mrb[0].mxu0
      %v3239 = vadd.f32 0.0, %v3238
      %v3240 = vpop.f32.mrb[0].mxu0
      %v3241 = vpop.f32.mrb[0].mxu0
      %v3242 = vadd.f32 0.0, %v3241
      %v3243 = vpop.f32.mrb[0].mxu0
      %3244 = vmatprep.mubr.bf16.mxu0 %v3018
      %3245 = vmatmul.mubr.bf16.gmra.mrb[0].mxu0 %v3017
      %v3246 = vpop.f32.mrb[0].mxu0
      %v3247 = vadd.f32 0.0, %v3246
      %v3248 = vpop.f32.mrb[0].mxu0
      %v3249 = vpop.f32.mrb[0].mxu0
      %v3250 = vadd.f32 0.0, %v3249
      %v3251 = vpop.f32.mrb[0].mxu0
      %3252 = vmatprep.mubr.bf16.mxu0 %v3021
      %3253 = vmatmul.mubr.bf16.gmra.mrb[0].mxu0 %v3020
      %v3254 = vpop.f32.mrb[0].mxu0
      %v3255 = vadd.f32 0.0, %v3254
      %v3256 = vpop.f32.mrb[0].mxu0
      %v3257 = vpop.f32.mrb[0].mxu0
      %v3258 = vadd.f32 0.0, %v3257
      %v3259 = vpop.f32.mrb[0].mxu0
      %3260 = vmatprep.mubr.bf16.mxu0 %v3024
      %3261 = vmatmul.mubr.bf16.gmra.mrb[0].mxu0 %v3023
      %v3262 = vpop.f32.mrb[0].mxu0
      %v3263 = vadd.f32 0.0, %v3262
      %v3264 = vpop.f32.mrb[0].mxu0
      %v3265 = vpop.f32.mrb[0].mxu0
      %v3266 = vadd.f32 0.0, %v3265
      %v3267 = vpop.f32.mrb[0].mxu0
      %3268 = vmatprep.mubr.bf16.mxu0 %v3027
      %3269 = vmatmul.mubr.bf16.gmra.mrb[0].mxu0 %v3026
      %v3270 = vpop.f32.mrb[0].mxu0
      %v3271 = vadd.f32 0.0, %v3270
      %v3272 = vpop.f32.mrb[0].mxu0
      %v3273 = vpop.f32.mrb[0].mxu0
      %v3274 = vadd.f32 0.0, %v3273
      %v3275 = vpop.f32.mrb[0].mxu0
      %3276 = vmatprep.mubr.bf16.mxu0 %v3030
      %3277 = vmatmul.mubr.bf16.gmra.mrb[0].mxu0 %v3029
      %v3278 = vpop.f32.mrb[0].mxu0
      %v3279 = vadd.f32 0.0, %v3278
      %v3280 = vpop.f32.mrb[0].mxu0
      %v3281 = vpop.f32.mrb[0].mxu0
      %v3282 = vadd.f32 0.0, %v3281
      %v3283 = vpop.f32.mrb[0].mxu0
      %3284 = vdwg.mxu0
      %3285 = vmatprep.subr.bf16.mxu0 0
      %3286 = vmatpush1.bf16.xpose.msra.mxu0 %v3119
      %3287 = vmatprep.subr.bf16.mxu0 0
      %3288 = vmatpush1.bf16.xpose.msra.mxu0 %v3122
      %3289 = vmatprep.subr.bf16.mxu0 0
      %3290 = vmatpush1.bf16.xpose.msra.mxu0 0
      %3291 = vmatprep.subr.bf16.mxu0 0
      %3292 = vmatpush1.bf16.xpose.msra.mxu0 0
      %3293 = vmatprep.subr.bf16.mxu0 0
      %3294 = vmatpush1.bf16.xpose.msra.mxu0 0
      %3295 = vmatprep.subr.bf16.mxu0 0
      %3296 = vmatpush1.bf16.xpose.msra.mxu0 0
      %3297 = vmatprep.subr.bf16.mxu0 0
      %3298 = vmatpush1.bf16.xpose.msra.mxu0 0
      %3299 = vmatprep.subr.bf16.mxu0 0
      %3300 = vmatpush1.bf16.xpose.msra.mxu0 0
      %3301 = vmatprep.subr.bf16.mxu0 0
      %3302 = vmatpush1.bf16.xpose.msra.mxu0 0
      %3303 = vmatprep.subr.bf16.mxu0 0
      %3304 = vmatpush1.bf16.xpose.msra.mxu0 0
      %3305 = vmatprep.subr.bf16.mxu0 0
      %3306 = vmatpush1.bf16.xpose.msra.mxu0 0
      %3307 = vmatprep.subr.bf16.mxu0 0
      %3308 = vmatpush1.bf16.xpose.msra.mxu0 0
      %3309 = vmatprep.subr.bf16.mxu0 0
      %3310 = vmatpush1.bf16.xpose.msra.mxu0 0
      %3311 = vmatprep.subr.bf16.mxu0 0
      %3312 = vmatpush1.bf16.xpose.msra.mxu0 0
      %3313 = vmatprep.subr.bf16.mxu0 0
      %3314 = vmatpush1.bf16.xpose.msra.mxu0 0
      %3315 = vmatprep.subr.bf16.mxu0 0
      %3316 = vmatpush1.bf16.xpose.msra.mxu0 0
      %3317 = vmatprep.mubr.bf16.mxu0 0
      %3318 = vmatmul.mubr.bf16.gmra.mrb[0].mxu0 %v3071
      %v3319 = vpop.f32.mrb[0].mxu0
      %v3320 = vadd.f32 %v3159, %v3319
      %v3321 = vpop.f32.mrb[0].mxu0
      %v3322 = vpop.f32.mrb[0].mxu0
      %v3323 = vadd.f32 %v3162, %v3322
      %v3324 = vpop.f32.mrb[0].mxu0
      %3325 = vmatprep.mubr.bf16.mxu0 0
      %3326 = vmatmul.mubr.bf16.gmra.mrb[0].mxu0 %v3074
      %v3327 = vpop.f32.mrb[0].mxu0
      %v3328 = vadd.f32 %v3167, %v3327
      %v3329 = vpop.f32.mrb[0].mxu0
      %v3330 = vpop.f32.mrb[0].mxu0
      %v3331 = vadd.f32 %v3170, %v3330
      %v3332 = vpop.f32.mrb[0].mxu0
      %3333 = vmatprep.mubr.bf16.mxu0 0
      %3334 = vmatmul.mubr.bf16.gmra.mrb[0].mxu0 %v3077
      %v3335 = vpop.f32.mrb[0].mxu0
      %v3336 = vadd.f32 %v3175, %v3335
      %v3337 = vpop.f32.mrb[0].mxu0
      %v3338 = vpop.f32.mrb[0].mxu0
      %v3339 = vadd.f32 %v3178, %v3338
      %v3340 = vpop.f32.mrb[0].mxu0
      %3341 = vmatprep.mubr.bf16.mxu0 0
      %3342 = vmatmul.mubr.bf16.gmra.mrb[0].mxu0 %v3080
      %v3343 = vpop.f32.mrb[0].mxu0
      %v3344 = vadd.f32 %v3183, %v3343
      %v3345 = vpop.f32.mrb[0].mxu0
      %v3346 = vpop.f32.mrb[0].mxu0
      %v3347 = vadd.f32 %v3186, %v3346
      %v3348 = vpop.f32.mrb[0].mxu0
      %3349 = vmatprep.mubr.bf16.mxu0 0
      %3350 = vmatmul.mubr.bf16.gmra.mrb[0].mxu0 %v3083
      %v3351 = vpop.f32.mrb[0].mxu0
      %v3352 = vadd.f32 %v3191, %v3351
      %v3353 = vpop.f32.mrb[0].mxu0
      %v3354 = vpop.f32.mrb[0].mxu0
      %v3355 = vadd.f32 %v3194, %v3354
      %v3356 = vpop.f32.mrb[0].mxu0
      %3357 = vmatprep.mubr.bf16.mxu0 0
      %3358 = vmatmul.mubr.bf16.gmra.mrb[0].mxu0 %v3086
      %v3359 = vpop.f32.mrb[0].mxu0
      %v3360 = vadd.f32 %v3199, %v3359
      %v3361 = vpop.f32.mrb[0].mxu0
      %v3362 = vpop.f32.mrb[0].mxu0
      %v3363 = vadd.f32 %v3202, %v3362
      %v3364 = vpop.f32.mrb[0].mxu0
      %3365 = vmatprep.mubr.bf16.mxu0 0
      %3366 = vmatmul.mubr.bf16.gmra.mrb[0].mxu0 %v3089
      %v3367 = vpop.f32.mrb[0].mxu0
      %v3368 = vadd.f32 %v3207, %v3367
      %v3369 = vpop.f32.mrb[0].mxu0
      %v3370 = vpop.f32.mrb[0].mxu0
      %v3371 = vadd.f32 %v3210, %v3370
      %v3372 = vpop.f32.mrb[0].mxu0
      %3373 = vmatprep.mubr.bf16.mxu0 0
      %3374 = vmatmul.mubr.bf16.gmra.mrb[0].mxu0 %v3092
      %v3375 = vpop.f32.mrb[0].mxu0
      %v3376 = vadd.f32 %v3215, %v3375
      %v3377 = vpop.f32.mrb[0].mxu0
      %v3378 = vpop.f32.mrb[0].mxu0
      %v3379 = vadd.f32 %v3218, %v3378
      %v3380 = vpop.f32.mrb[0].mxu0
      %3381 = vmatprep.mubr.bf16.mxu0 0
      %3382 = vmatmul.mubr.bf16.gmra.mrb[0].mxu0 %v3095
      %v3383 = vpop.f32.mrb[0].mxu0
      %v3384 = vadd.f32 %v3223, %v3383
      %v3385 = vpop.f32.mrb[0].mxu0
      %v3386 = vpop.f32.mrb[0].mxu0
      %v3387 = vadd.f32 %v3226, %v3386
      %v3388 = vpop.f32.mrb[0].mxu0
      %3389 = vmatprep.mubr.bf16.mxu0 0
      %3390 = vmatmul.mubr.bf16.gmra.mrb[0].mxu0 %v3098
      %v3391 = vpop.f32.mrb[0].mxu0
      %v3392 = vadd.f32 %v3231, %v3391
      %v3393 = vpop.f32.mrb[0].mxu0
      %v3394 = vpop.f32.mrb[0].mxu0
      %v3395 = vadd.f32 %v3234, %v3394
      %v3396 = vpop.f32.mrb[0].mxu0
      %3397 = vmatprep.mubr.bf16.mxu0 0
      %3398 = vmatmul.mubr.bf16.gmra.mrb[0].mxu0 %v3101
      %v3399 = vpop.f32.mrb[0].mxu0
      %v3400 = vadd.f32 %v3239, %v3399
      %v3401 = vpop.f32.mrb[0].mxu0
      %v3402 = vpop.f32.mrb[0].mxu0
      %v3403 = vadd.f32 %v3242, %v3402
      %v3404 = vpop.f32.mrb[0].mxu0
      %3405 = vmatprep.mubr.bf16.mxu0 0
      %3406 = vmatmul.mubr.bf16.gmra.mrb[0].mxu0 %v3104
      %v3407 = vpop.f32.mrb[0].mxu0
      %v3408 = vadd.f32 %v3247, %v3407
      %v3409 = vpop.f32.mrb[0].mxu0
      %v3410 = vpop.f32.mrb[0].mxu0
      %v3411 = vadd.f32 %v3250, %v3410
      %v3412 = vpop.f32.mrb[0].mxu0
      %3413 = vmatprep.mubr.bf16.mxu0 0
      %3414 = vmatmul.mubr.bf16.gmra.mrb[0].mxu0 %v3107
      %v3415 = vpop.f32.mrb[0].mxu0
      %v3416 = vadd.f32 %v3255, %v3415
      %v3417 = vpop.f32.mrb[0].mxu0
      %v3418 = vpop.f32.mrb[0].mxu0
      %v3419 = vadd.f32 %v3258, %v3418
      %v3420 = vpop.f32.mrb[0].mxu0
      %3421 = vmatprep.mubr.bf16.mxu0 0
      %3422 = vmatmul.mubr.bf16.gmra.mrb[0].mxu0 %v3110
      %v3423 = vpop.f32.mrb[0].mxu0
      %v3424 = vadd.f32 %v3263, %v3423
      %v3425 = vpop.f32.mrb[0].mxu0
      %v3426 = vpop.f32.mrb[0].mxu0
      %v3427 = vadd.f32 %v3266, %v3426
      %v3428 = vpop.f32.mrb[0].mxu0
      %3429 = vmatprep.mubr.bf16.mxu0 0
      %3430 = vmatmul.mubr.bf16.gmra.mrb[0].mxu0 %v3113
      %v3431 = vpop.f32.mrb[0].mxu0
      %v3432 = vadd.f32 %v3271, %v3431
      %v3433 = vpop.f32.mrb[0].mxu0
      %v3434 = vpop.f32.mrb[0].mxu0
      %v3435 = vadd.f32 %v3274, %v3434
      %v3436 = vpop.f32.mrb[0].mxu0
      %3437 = vmatprep.mubr.bf16.mxu0 0
      %3438 = vmatmul.mubr.bf16.gmra.mrb[0].mxu0 %v3116
      %v3439 = vpop.f32.mrb[0].mxu0
      %v3440 = vadd.f32 %v3279, %v3439
      %v3441 = vpop.f32.mrb[0].mxu0
      %v3442 = vpop.f32.mrb[0].mxu0
      %v3443 = vadd.f32 %v3282, %v3442
      %v3444 = vpop.f32.mrb[0].mxu0
      %3445 = vdwg.mxu0
      %v3446 = vand.u32 2147483647, %v3320
      %v3447 = vand.u32 2147483647, %v3323
      %v3448 = vand.u32 2147483647, %v3328
      %v3449 = vand.u32 2147483647, %v3331
      %v3450 = vand.u32 2147483647, %v3336
      %v3451 = vand.u32 2147483647, %v3339
      %v3452 = vand.u32 2147483647, %v3344
      %v3453 = vand.u32 2147483647, %v3347
      %v3454 = vand.u32 2147483647, %v3352
      %v3455 = vand.u32 2147483647, %v3355
      %v3456 = vand.u32 2147483647, %v3360
      %v3457 = vand.u32 2147483647, %v3363
      %v3458 = vand.u32 2147483647, %v3368
      %v3459 = vand.u32 2147483647, %v3371
      %v3460 = vand.u32 2147483647, %v3376
      %v3461 = vand.u32 2147483647, %v3379
      %v3462 = vand.u32 2147483647, %v3384
      %v3463 = vand.u32 2147483647, %v3387
      %v3464 = vand.u32 2147483647, %v3392
      %v3465 = vand.u32 2147483647, %v3395
      %v3466 = vand.u32 2147483647, %v3400
      %v3467 = vand.u32 2147483647, %v3403
      %v3468 = vand.u32 2147483647, %v3408
      %v3469 = vand.u32 2147483647, %v3411
      %v3470 = vand.u32 2147483647, %v3416
      %v3471 = vand.u32 2147483647, %v3419
      %v3472 = vand.u32 2147483647, %v3424
      %v3473 = vand.u32 2147483647, %v3427
      %v3474 = vand.u32 2147483647, %v3432
      %v3475 = vand.u32 2147483647, %v3435
      %v3476 = vand.u32 2147483647, %v3440
      %v3477 = vand.u32 2147483647, %v3443
      %v3478 = vsub.f32 0.0, %v3446
      %v3479 = vsub.f32 0.0, %v3447
      %v3480 = vsub.f32 0.0, %v3448
      %v3481 = vsub.f32 0.0, %v3449
      %v3482 = vsub.f32 0.0, %v3450
      %v3483 = vsub.f32 0.0, %v3451
      %v3484 = vsub.f32 0.0, %v3452
      %v3485 = vsub.f32 0.0, %v3453
      %v3486 = vsub.f32 0.0, %v3454
      %v3487 = vsub.f32 0.0, %v3455
      %v3488 = vsub.f32 0.0, %v3456
      %v3489 = vsub.f32 0.0, %v3457
      %v3490 = vsub.f32 0.0, %v3458
      %v3491 = vsub.f32 0.0, %v3459
      %v3492 = vsub.f32 0.0, %v3460
      %v3493 = vsub.f32 0.0, %v3461
      %v3494 = vsub.f32 0.0, %v3462
      %v3495 = vsub.f32 0.0, %v3463
      %v3496 = vsub.f32 0.0, %v3464
      %v3497 = vsub.f32 0.0, %v3465
      %v3498 = vsub.f32 0.0, %v3466
      %v3499 = vsub.f32 0.0, %v3467
      %v3500 = vsub.f32 0.0, %v3468
      %v3501 = vsub.f32 0.0, %v3469
      %v3502 = vsub.f32 0.0, %v3470
      %v3503 = vsub.f32 0.0, %v3471
      %v3504 = vsub.f32 0.0, %v3472
      %v3505 = vsub.f32 0.0, %v3473
      %v3506 = vsub.f32 0.0, %v3474
      %v3507 = vsub.f32 0.0, %v3475
      %v3508 = vsub.f32 0.0, %v3476
      %v3509 = vsub.f32 0.0, %v3477
      %v3510 = vmul.f32 %v3478, 1.442695
      %v3511 = vpow.pop %v3510
      %v3512 = vmul.f32 %v3479, 1.442695
      %v3513 = vpow.pop %v3512
      %v3514 = vmul.f32 %v3480, 1.442695
      %v3515 = vpow.pop %v3514
      %v3516 = vmul.f32 %v3481, 1.442695
      %v3517 = vpow.pop %v3516
      %v3518 = vmul.f32 %v3482, 1.442695
      %v3519 = vpow.pop %v3518
      %v3520 = vmul.f32 %v3483, 1.442695
      %v3521 = vpow.pop %v3520
      %v3522 = vmul.f32 %v3484, 1.442695
      %v3523 = vpow.pop %v3522
      %v3524 = vmul.f32 %v3485, 1.442695
      %v3525 = vpow.pop %v3524
      %v3526 = vmul.f32 %v3486, 1.442695
      %v3527 = vpow.pop %v3526
      %v3528 = vmul.f32 %v3487, 1.442695
      %v3529 = vpow.pop %v3528
      %v3530 = vmul.f32 %v3488, 1.442695
      %v3531 = vpow.pop %v3530
      %v3532 = vmul.f32 %v3489, 1.442695
      %v3533 = vpow.pop %v3532
      %v3534 = vmul.f32 %v3490, 1.442695
      %v3535 = vpow.pop %v3534
      %v3536 = vmul.f32 %v3491, 1.442695
      %v3537 = vpow.pop %v3536
      %v3538 = vmul.f32 %v3492, 1.442695
      %v3539 = vpow.pop %v3538
      %v3540 = vmul.f32 %v3493, 1.442695
      %v3541 = vpow.pop %v3540
      %v3542 = vmul.f32 %v3494, 1.442695
      %v3543 = vpow.pop %v3542
      %v3544 = vmul.f32 %v3495, 1.442695
      %v3545 = vpow.pop %v3544
      %v3546 = vmul.f32 %v3496, 1.442695
      %v3547 = vpow.pop %v3546
      %v3548 = vmul.f32 %v3497, 1.442695
      %v3549 = vpow.pop %v3548
      %v3550 = vmul.f32 %v3498, 1.442695
      %v3551 = vpow.pop %v3550
      %v3552 = vmul.f32 %v3499, 1.442695
      %v3553 = vpow.pop %v3552
      %v3554 = vmul.f32 %v3500, 1.442695
      %v3555 = vpow.pop %v3554
      %v3556 = vmul.f32 %v3501, 1.442695
      %v3557 = vpow.pop %v3556
      %v3558 = vmul.f32 %v3502, 1.442695
      %v3559 = vpow.pop %v3558
      %v3560 = vmul.f32 %v3503, 1.442695
      %v3561 = vpow.pop %v3560
      %v3562 = vmul.f32 %v3504, 1.442695
      %v3563 = vpow.pop %v3562
      %v3564 = vmul.f32 %v3505, 1.442695
      %v3565 = vpow.pop %v3564
      %v3566 = vmul.f32 %v3506, 1.442695
      %v3567 = vpow.pop %v3566
      %v3568 = vmul.f32 %v3507, 1.442695
      %v3569 = vpow.pop %v3568
      %v3570 = vmul.f32 %v3508, 1.442695
      %v3571 = vpow.pop %v3570
      %v3572 = vmul.f32 %v3509, 1.442695
      %v3573 = vpow.pop %v3572
      %v3574 = vadd.f32 %v3511, 1.0
      %v3575 = vadd.f32 %v3513, 1.0
      %v3576 = vadd.f32 %v3515, 1.0
      %v3577 = vadd.f32 %v3517, 1.0
      %v3578 = vadd.f32 %v3519, 1.0
      %v3579 = vadd.f32 %v3521, 1.0
      %v3580 = vadd.f32 %v3523, 1.0
      %v3581 = vadd.f32 %v3525, 1.0
      %v3582 = vadd.f32 %v3527, 1.0
      %v3583 = vadd.f32 %v3529, 1.0
      %v3584 = vadd.f32 %v3531, 1.0
      %v3585 = vadd.f32 %v3533, 1.0
      %v3586 = vadd.f32 %v3535, 1.0
      %v3587 = vadd.f32 %v3537, 1.0
      %v3588 = vadd.f32 %v3539, 1.0
      %v3589 = vadd.f32 %v3541, 1.0
      %v3590 = vadd.f32 %v3543, 1.0
      %v3591 = vadd.f32 %v3545, 1.0
      %v3592 = vadd.f32 %v3547, 1.0
      %v3593 = vadd.f32 %v3549, 1.0
      %v3594 = vadd.f32 %v3551, 1.0
      %v3595 = vadd.f32 %v3553, 1.0
      %v3596 = vadd.f32 %v3555, 1.0
      %v3597 = vadd.f32 %v3557, 1.0
      %v3598 = vadd.f32 %v3559, 1.0
      %v3599 = vadd.f32 %v3561, 1.0
      %v3600 = vadd.f32 %v3563, 1.0
      %v3601 = vadd.f32 %v3565, 1.0
      %v3602 = vadd.f32 %v3567, 1.0
      %v3603 = vadd.f32 %v3569, 1.0
      %v3604 = vadd.f32 %v3571, 1.0
      %v3605 = vadd.f32 %v3573, 1.0
      %v3606 = vrcp.pop %v3574
      %v3607 = vrcp.pop %v3575
      %v3608 = vrcp.pop %v3576
      %v3609 = vrcp.pop %v3577
      %v3610 = vrcp.pop %v3578
      %v3611 = vrcp.pop %v3579
      %v3612 = vrcp.pop %v3580
      %v3613 = vrcp.pop %v3581
      %v3614 = vrcp.pop %v3582
      %v3615 = vrcp.pop %v3583
      %v3616 = vrcp.pop %v3584
      %v3617 = vrcp.pop %v3585
      %v3618 = vrcp.pop %v3586
      %v3619 = vrcp.pop %v3587
      %v3620 = vrcp.pop %v3588
      %v3621 = vrcp.pop %v3589
      %v3622 = vrcp.pop %v3590
      %v3623 = vrcp.pop %v3591
      %v3624 = vrcp.pop %v3592
      %v3625 = vrcp.pop %v3593
      %v3626 = vrcp.pop %v3594
      %v3627 = vrcp.pop %v3595
      %v3628 = vrcp.pop %v3596
      %v3629 = vrcp.pop %v3597
      %v3630 = vrcp.pop %v3598
      %v3631 = vrcp.pop %v3599
      %v3632 = vrcp.pop %v3600
      %v3633 = vrcp.pop %v3601
      %v3634 = vrcp.pop %v3602
      %v3635 = vrcp.pop %v3603
      %v3636 = vrcp.pop %v3604
      %v3637 = vrcp.pop %v3605
      %vm3638 = vcmp.ge.f32.partialorder %v3320, 0.0
      %vm3639 = vcmp.ge.f32.partialorder %v3323, 0.0
      %vm3640 = vcmp.ge.f32.partialorder %v3328, 0.0
      %vm3641 = vcmp.ge.f32.partialorder %v3331, 0.0
      %vm3642 = vcmp.ge.f32.partialorder %v3336, 0.0
      %vm3643 = vcmp.ge.f32.partialorder %v3339, 0.0
      %vm3644 = vcmp.ge.f32.partialorder %v3344, 0.0
      %vm3645 = vcmp.ge.f32.partialorder %v3347, 0.0
      %vm3646 = vcmp.ge.f32.partialorder %v3352, 0.0
      %vm3647 = vcmp.ge.f32.partialorder %v3355, 0.0
      %vm3648 = vcmp.ge.f32.partialorder %v3360, 0.0
      %vm3649 = vcmp.ge.f32.partialorder %v3363, 0.0
      %vm3650 = vcmp.ge.f32.partialorder %v3368, 0.0
      %vm3651 = vcmp.ge.f32.partialorder %v3371, 0.0
      %vm3652 = vcmp.ge.f32.partialorder %v3376, 0.0
      %vm3653 = vcmp.ge.f32.partialorder %v3379, 0.0
      %vm3654 = vcmp.ge.f32.partialorder %v3384, 0.0
      %vm3655 = vcmp.ge.f32.partialorder %v3387, 0.0
      %vm3656 = vcmp.ge.f32.partialorder %v3392, 0.0
      %vm3657 = vcmp.ge.f32.partialorder %v3395, 0.0
      %vm3658 = vcmp.ge.f32.partialorder %v3400, 0.0
      %vm3659 = vcmp.ge.f32.partialorder %v3403, 0.0
      %vm3660 = vcmp.ge.f32.partialorder %v3408, 0.0
      %vm3661 = vcmp.ge.f32.partialorder %v3411, 0.0
      %vm3662 = vcmp.ge.f32.partialorder %v3416, 0.0
      %vm3663 = vcmp.ge.f32.partialorder %v3419, 0.0
      %vm3664 = vcmp.ge.f32.partialorder %v3424, 0.0
      %vm3665 = vcmp.ge.f32.partialorder %v3427, 0.0
      %vm3666 = vcmp.ge.f32.partialorder %v3432, 0.0
      %vm3667 = vcmp.ge.f32.partialorder %v3435, 0.0
      %vm3668 = vcmp.ge.f32.partialorder %v3440, 0.0
      %vm3669 = vcmp.ge.f32.partialorder %v3443, 0.0
      %v3670 = vmul.f32 %v3511, %v3606
      %v3671 = vmul.f32 %v3513, %v3607
      %v3672 = vmul.f32 %v3515, %v3608
      %v3673 = vmul.f32 %v3517, %v3609
      %v3674 = vmul.f32 %v3519, %v3610
      %v3675 = vmul.f32 %v3521, %v3611
      %v3676 = vmul.f32 %v3523, %v3612
      %v3677 = vmul.f32 %v3525, %v3613
      %v3678 = vmul.f32 %v3527, %v3614
      %v3679 = vmul.f32 %v3529, %v3615
      %v3680 = vmul.f32 %v3531, %v3616
      %v3681 = vmul.f32 %v3533, %v3617
      %v3682 = vmul.f32 %v3535, %v3618
      %v3683 = vmul.f32 %v3537, %v3619
      %v3684 = vmul.f32 %v3539, %v3620
      %v3685 = vmul.f32 %v3541, %v3621
      %v3686 = vmul.f32 %v3543, %v3622
      %v3687 = vmul.f32 %v3545, %v3623
      %v3688 = vmul.f32 %v3547, %v3624
      %v3689 = vmul.f32 %v3549, %v3625
      %v3690 = vmul.f32 %v3551, %v3626
      %v3691 = vmul.f32 %v3553, %v3627
      %v3692 = vmul.f32 %v3555, %v3628
      %v3693 = vmul.f32 %v3557, %v3629
      %v3694 = vmul.f32 %v3559, %v3630
      %v3695 = vmul.f32 %v3561, %v3631
      %v3696 = vmul.f32 %v3563, %v3632
      %v3697 = vmul.f32 %v3565, %v3633
      %v3698 = vmul.f32 %v3567, %v3634
      %v3699 = vmul.f32 %v3569, %v3635
      %v3700 = vmul.f32 %v3571, %v3636
      %v3701 = vmul.f32 %v3573, %v3637
      %v3702 = vsel %vm3638, %v3606, %v3670
      %v3703 = vsel %vm3639, %v3607, %v3671
      %v3704 = vsel %vm3640, %v3608, %v3672
      %v3705 = vsel %vm3641, %v3609, %v3673
      %v3706 = vsel %vm3642, %v3610, %v3674
      %v3707 = vsel %vm3643, %v3611, %v3675
      %v3708 = vsel %vm3644, %v3612, %v3676
      %v3709 = vsel %vm3645, %v3613, %v3677
      %v3710 = vsel %vm3646, %v3614, %v3678
      %v3711 = vsel %vm3647, %v3615, %v3679
      %v3712 = vsel %vm3648, %v3616, %v3680
      %v3713 = vsel %vm3649, %v3617, %v3681
      %v3714 = vsel %vm3650, %v3618, %v3682
      %v3715 = vsel %vm3651, %v3619, %v3683
      %v3716 = vsel %vm3652, %v3620, %v3684
      %v3717 = vsel %vm3653, %v3621, %v3685
      %v3718 = vsel %vm3654, %v3622, %v3686
      %v3719 = vsel %vm3655, %v3623, %v3687
      %v3720 = vsel %vm3656, %v3624, %v3688
      %v3721 = vsel %vm3657, %v3625, %v3689
      %v3722 = vsel %vm3658, %v3626, %v3690
      %v3723 = vsel %vm3659, %v3627, %v3691
      %v3724 = vsel %vm3660, %v3628, %v3692
      %v3725 = vsel %vm3661, %v3629, %v3693
      %v3726 = vsel %vm3662, %v3630, %v3694
      %v3727 = vsel %vm3663, %v3631, %v3695
      %v3728 = vsel %vm3664, %v3632, %v3696
      %v3729 = vsel %vm3665, %v3633, %v3697
      %v3730 = vsel %vm3666, %v3634, %v3698
      %v3731 = vsel %vm3667, %v3635, %v3699
      %v3732 = vsel %vm3668, %v3636, %v3700
      %v3733 = vsel %vm3669, %v3637, %v3701
      %v3734 = vmul.f32 %v3320, %v3702
      %v3735 = vmul.f32 %v3323, %v3703
      %v3736 = vmul.f32 %v3328, %v3704
      %v3737 = vmul.f32 %v3331, %v3705
      %v3738 = vmul.f32 %v3336, %v3706
      %v3739 = vmul.f32 %v3339, %v3707
      %v3740 = vmul.f32 %v3344, %v3708
      %v3741 = vmul.f32 %v3347, %v3709
      %v3742 = vmul.f32 %v3352, %v3710
      %v3743 = vmul.f32 %v3355, %v3711
      %v3744 = vmul.f32 %v3360, %v3712
      %v3745 = vmul.f32 %v3363, %v3713
      %v3746 = vmul.f32 %v3368, %v3714
      %v3747 = vmul.f32 %v3371, %v3715
      %v3748 = vmul.f32 %v3376, %v3716
      %v3749 = vmul.f32 %v3379, %v3717
      %v3750 = vmul.f32 %v3384, %v3718
      %v3751 = vmul.f32 %v3387, %v3719
      %v3752 = vmul.f32 %v3392, %v3720
      %v3753 = vmul.f32 %v3395, %v3721
      %v3754 = vmul.f32 %v3400, %v3722
      %v3755 = vmul.f32 %v3403, %v3723
      %v3756 = vmul.f32 %v3408, %v3724
      %v3757 = vmul.f32 %v3411, %v3725
      %v3758 = vmul.f32 %v3416, %v3726
      %v3759 = vmul.f32 %v3419, %v3727
      %v3760 = vmul.f32 %v3424, %v3728
      %v3761 = vmul.f32 %v3427, %v3729
      %v3762 = vmul.f32 %v3432, %v3730
      %v3763 = vmul.f32 %v3435, %v3731
      %v3764 = vmul.f32 %v3440, %v3732
      %v3765 = vmul.f32 %v3443, %v3733
      %3766 = vxpose.xlu0.b32.start [1/16] %v1608, 128
      %3767 = vxpose.xlu0.b32.cont [2/16] %v1611, 128
      %3768 = vxpose.xlu0.b32.cont [3/16] %v1616, 128
      %3769 = vxpose.xlu0.b32.cont [4/16] %v1619, 128
      %3770 = vxpose.xlu0.b32.cont [5/16] %v1624, 128
      %3771 = vxpose.xlu0.b32.cont [6/16] %v1627, 128
      %3772 = vxpose.xlu0.b32.cont [7/16] %v1632, 128
      %3773 = vxpose.xlu0.b32.cont [8/16] %v1635, 128
      %3774 = vxpose.xlu0.b32.cont [9/16] %v1640, 128
      %3775 = vxpose.xlu0.b32.cont [10/16] %v1643, 128
      %3776 = vxpose.xlu0.b32.cont [11/16] %v1648, 128
      %3777 = vxpose.xlu0.b32.cont [12/16] %v1651, 128
      %3778 = vxpose.xlu0.b32.cont [13/16] %v1656, 128
      %3779 = vxpose.xlu0.b32.cont [14/16] %v1659, 128
      %3780 = vxpose.xlu0.b32.cont [15/16] %v1664, 128
      %3781 = vxpose.xlu0.b32.end [16/16] %v1667, 128
      %v3782 = vpop.trf.xlu0
      %v3783 = vpop.trf.xlu0
      %v3784 = vpop.trf.xlu0
      %v3785 = vpop.trf.xlu0
      %v3786 = vpop.trf.xlu0
      %v3787 = vpop.trf.xlu0
      %v3788 = vpop.trf.xlu0
      %v3789 = vpop.trf.xlu0
      %v3790 = vpop.trf.xlu0
      %v3791 = vpop.trf.xlu0
      %v3792 = vpop.trf.xlu0
      %v3793 = vpop.trf.xlu0
      %v3794 = vpop.trf.xlu0
      %v3795 = vpop.trf.xlu0
      %v3796 = vpop.trf.xlu0
      %v3797 = vpop.trf.xlu0
      %3798 = vxpose.xlu0.b32.start [1/16] %v1672, 128
      %3799 = vxpose.xlu0.b32.cont [2/16] %v1675, 128
      %3800 = vxpose.xlu0.b32.cont [3/16] %v1680, 128
      %3801 = vxpose.xlu0.b32.cont [4/16] %v1683, 128
      %3802 = vxpose.xlu0.b32.cont [5/16] %v1688, 128
      %3803 = vxpose.xlu0.b32.cont [6/16] %v1691, 128
      %3804 = vxpose.xlu0.b32.cont [7/16] %v1696, 128
      %3805 = vxpose.xlu0.b32.cont [8/16] %v1699, 128
      %3806 = vxpose.xlu0.b32.cont [9/16] %v1704, 128
      %3807 = vxpose.xlu0.b32.cont [10/16] %v1707, 128
      %3808 = vxpose.xlu0.b32.cont [11/16] %v1712, 128
      %3809 = vxpose.xlu0.b32.cont [12/16] %v1715, 128
      %3810 = vxpose.xlu0.b32.cont [13/16] %v1720, 128
      %3811 = vxpose.xlu0.b32.cont [14/16] %v1723, 128
      %3812 = vxpose.xlu0.b32.cont [15/16] %v1728, 128
      %3813 = vxpose.xlu0.b32.end [16/16] %v1731, 128
      %v3814 = vpop.trf.xlu0
      %v3815 = vpop.trf.xlu0
      %v3816 = vpop.trf.xlu0
      %v3817 = vpop.trf.xlu0
      %v3818 = vpop.trf.xlu0
      %v3819 = vpop.trf.xlu0
      %v3820 = vpop.trf.xlu0
      %v3821 = vpop.trf.xlu0
      %v3822 = vpop.trf.xlu0
      %v3823 = vpop.trf.xlu0
      %v3824 = vpop.trf.xlu0
      %v3825 = vpop.trf.xlu0
      %v3826 = vpop.trf.xlu0
      %v3827 = vpop.trf.xlu0
      %v3828 = vpop.trf.xlu0
      %v3829 = vpop.trf.xlu0
      %3830 = vst [vmem:[%s394] sm:$0xff] %v3782
      %3831 = vst [vmem:[%s394 + $0x8] sm:$0xff] %v3814
      %3832 = vst [vmem:[%s394 + $0x10] sm:$0xff] %v3783
      %3833 = vst [vmem:[%s394 + $0x18] sm:$0xff] %v3815
      %3834 = vst [vmem:[%s394 + $0x20] sm:$0xff] %v3784
      %3835 = vst [vmem:[%s394 + $0x28] sm:$0xff] %v3816
      %3836 = vst [vmem:[%s394 + $0x30] sm:$0xff] %v3785
      %3837 = vst [vmem:[%s394 + $0x38] sm:$0xff] %v3817
      %3838 = vxpose.xlu0.b32.start [1/16] %v3734, 128
      %3839 = vxpose.xlu0.b32.cont [2/16] %v3735, 128
      %3840 = vxpose.xlu0.b32.cont [3/16] %v3736, 128
      %3841 = vxpose.xlu0.b32.cont [4/16] %v3737, 128
      %3842 = vxpose.xlu0.b32.cont [5/16] %v3738, 128
      %3843 = vxpose.xlu0.b32.cont [6/16] %v3739, 128
      %3844 = vxpose.xlu0.b32.cont [7/16] %v3740, 128
      %3845 = vxpose.xlu0.b32.cont [8/16] %v3741, 128
      %3846 = vxpose.xlu0.b32.cont [9/16] %v3742, 128
      %3847 = vxpose.xlu0.b32.cont [10/16] %v3743, 128
      %3848 = vxpose.xlu0.b32.cont [11/16] %v3744, 128
      %3849 = vxpose.xlu0.b32.cont [12/16] %v3745, 128
      %3850 = vxpose.xlu0.b32.cont [13/16] %v3746, 128
      %3851 = vxpose.xlu0.b32.cont [14/16] %v3747, 128
      %3852 = vxpose.xlu0.b32.cont [15/16] %v3748, 128
      %3853 = vxpose.xlu0.b32.end [16/16] %v3749, 128
      %v3854 = vpop.trf.xlu0
      %v3855 = vpop.trf.xlu0
      %v3856 = vpop.trf.xlu0
      %v3857 = vpop.trf.xlu0
      %v3858 = vpop.trf.xlu0
      %v3859 = vpop.trf.xlu0
      %v3860 = vpop.trf.xlu0
      %v3861 = vpop.trf.xlu0
      %v3862 = vpop.trf.xlu0
      %v3863 = vpop.trf.xlu0
      %v3864 = vpop.trf.xlu0
      %v3865 = vpop.trf.xlu0
      %v3866 = vpop.trf.xlu0
      %v3867 = vpop.trf.xlu0
      %v3868 = vpop.trf.xlu0
      %v3869 = vpop.trf.xlu0
      %3870 = vxpose.xlu0.b32.start [1/16] %v3750, 128
      %3871 = vxpose.xlu0.b32.cont [2/16] %v3751, 128
      %3872 = vxpose.xlu0.b32.cont [3/16] %v3752, 128
      %3873 = vxpose.xlu0.b32.cont [4/16] %v3753, 128
      %3874 = vxpose.xlu0.b32.cont [5/16] %v3754, 128
      %3875 = vxpose.xlu0.b32.cont [6/16] %v3755, 128
      %3876 = vxpose.xlu0.b32.cont [7/16] %v3756, 128
      %3877 = vxpose.xlu0.b32.cont [8/16] %v3757, 128
      %3878 = vxpose.xlu0.b32.cont [9/16] %v3758, 128
      %3879 = vxpose.xlu0.b32.cont [10/16] %v3759, 128
      %3880 = vxpose.xlu0.b32.cont [11/16] %v3760, 128
      %3881 = vxpose.xlu0.b32.cont [12/16] %v3761, 128
      %3882 = vxpose.xlu0.b32.cont [13/16] %v3762, 128
      %3883 = vxpose.xlu0.b32.cont [14/16] %v3763, 128
      %3884 = vxpose.xlu0.b32.cont [15/16] %v3764, 128
      %3885 = vxpose.xlu0.b32.end [16/16] %v3765, 128
      %v3886 = vpop.trf.xlu0
      %v3887 = vpop.trf.xlu0
      %v3888 = vpop.trf.xlu0
      %v3889 = vpop.trf.xlu0
      %v3890 = vpop.trf.xlu0
      %v3891 = vpop.trf.xlu0
      %v3892 = vpop.trf.xlu0
      %v3893 = vpop.trf.xlu0
      %v3894 = vpop.trf.xlu0
      %v3895 = vpop.trf.xlu0
      %v3896 = vpop.trf.xlu0
      %v3897 = vpop.trf.xlu0
      %v3898 = vpop.trf.xlu0
      %v3899 = vpop.trf.xlu0
      %v3900 = vpop.trf.xlu0
      %v3901 = vpop.trf.xlu0
      %3902 = vst [vmem:[%s399] sm:$0xff] %v3854
      %3903 = vst [vmem:[%s399 + $0x8] sm:$0xff] %v3886
      %3904 = vst [vmem:[%s399 + $0x10] sm:$0xff] %v3855
      %3905 = vst [vmem:[%s399 + $0x18] sm:$0xff] %v3887
      %3906 = vst [vmem:[%s399 + $0x20] sm:$0xff] %v3856
      %3907 = vst [vmem:[%s399 + $0x28] sm:$0xff] %v3888
      %3908 = vst [vmem:[%s399 + $0x30] sm:$0xff] %v3857
      %3909 = vst [vmem:[%s399 + $0x38] sm:$0xff] %v3889
      %v3910 = vpack.c.bf16 %v3735, %v3734
      %v3911 = vpack.c.bf16 %v3737, %v3736
      %v3912 = vpack.c.bf16 %v3739, %v3738
      %v3913 = vpack.c.bf16 %v3741, %v3740
      %v3914 = vpack.c.bf16 %v3743, %v3742
      %v3915 = vpack.c.bf16 %v3745, %v3744
      %v3916 = vpack.c.bf16 %v3747, %v3746
      %v3917 = vpack.c.bf16 %v3749, %v3748
      %v3918 = vpack.c.bf16 %v3751, %v3750
      %v3919 = vpack.c.bf16 %v3753, %v3752
      %v3920 = vpack.c.bf16 %v3755, %v3754
      %v3921 = vpack.c.bf16 %v3757, %v3756
      %v3922 = vpack.c.bf16 %v3759, %v3758
      %v3923 = vpack.c.bf16 %v3761, %v3760
      %v3924 = vpack.c.bf16 %v3763, %v3762
      %v3925 = vpack.c.bf16 %v3765, %v3764
      %v3926 = vld [vmem:[%s5] sm:$0xf]
      %v3927 = vld [vmem:[%s5 + $0x4] sm:$0xf]
      %v3928 = vld [vmem:[%s5 + $0x8] sm:$0xf]
      %v3929 = vld [vmem:[%s5 + $0xc] sm:$0xf]
      %v3930 = vld [vmem:[%s5 + $0x10] sm:$0xf]
      %v3931 = vld [vmem:[%s5 + $0x14] sm:$0xf]
      %v3932 = vld [vmem:[%s5 + $0x18] sm:$0xf]
      %v3933 = vld [vmem:[%s5 + $0x1c] sm:$0xf]
      %v3934 = vpack.c.bf16 %v1611, %v1608
      %v3935 = vpack.c.bf16 %v1619, %v1616
      %v3936 = vpack.c.bf16 %v1627, %v1624
      %v3937 = vpack.c.bf16 %v1635, %v1632
      %v3938 = vpack.c.bf16 %v1643, %v1640
      %v3939 = vpack.c.bf16 %v1651, %v1648
      %v3940 = vpack.c.bf16 %v1659, %v1656
      %v3941 = vpack.c.bf16 %v1667, %v1664
      %v3942 = vpack.c.bf16 %v1675, %v1672
      %v3943 = vpack.c.bf16 %v1683, %v1680
      %v3944 = vpack.c.bf16 %v1691, %v1688
      %v3945 = vpack.c.bf16 %v1699, %v1696
      %v3946 = vpack.c.bf16 %v1707, %v1704
      %v3947 = vpack.c.bf16 %v1715, %v1712
      %v3948 = vpack.c.bf16 %v1723, %v1720
      %v3949 = vpack.c.bf16 %v1731, %v1728
      %v3950 = vld [vmem:[%s6] sm:$0xf]
      %v3951 = vld [vmem:[%s6 + $0x4] sm:$0xf]
      %v3952 = vld [vmem:[%s6 + $0x8] sm:$0xf]
      %v3953 = vld [vmem:[%s6 + $0xc] sm:$0xf]
      %v3954 = vld [vmem:[%s6 + $0x10] sm:$0xf]
      %v3955 = vld [vmem:[%s6 + $0x14] sm:$0xf]
      %v3956 = vld [vmem:[%s6 + $0x18] sm:$0xf]
      %v3957 = vld [vmem:[%s6 + $0x1c] sm:$0xf]
      %v3966 = vunpack.c.l.b16 %v3950
      %v3967 = vunpack.c.l.b16 %v3951
      %v3968 = vunpack.c.l.b16 %v3952
      %v3969 = vunpack.c.l.b16 %v3953
      %v3970 = vunpack.c.l.b16 %v3954
      %v3971 = vunpack.c.l.b16 %v3955
      %v3972 = vunpack.c.l.b16 %v3956
      %v3973 = vunpack.c.l.b16 %v3957
      %v3974 = vpack.c.b16 %v3967, %v3966
      %v3975 = vpack.c.b16 %v3969, %v3968
      %v3976 = vpack.c.b16 %v3971, %v3970
      %v3977 = vpack.c.b16 %v3973, %v3972
      %v3979 = vsel %vm583, %v3934, 0
      %v3982 = vsel %vm583, %v3935, 0
      %v3985 = vsel %vm583, %v3936, 0
      %v3988 = vsel %vm583, %v3937, 0
      %v3991 = vsel %vm583, %v3938, 0
      %v3994 = vsel %vm583, %v3939, 0
      %v3997 = vsel %vm583, %v3940, 0
      %v4000 = vsel %vm583, %v3941, 0
      %v4003 = vsel %vm583, %v3942, 0
      %v4006 = vsel %vm583, %v3943, 0
      %v4009 = vsel %vm583, %v3944, 0
      %v4012 = vsel %vm583, %v3945, 0
      %v4015 = vsel %vm583, %v3946, 0
      %v4018 = vsel %vm583, %v3947, 0
      %v4021 = vsel %vm583, %v3948, 0
      %v4024 = vsel %vm583, %v3949, 0
      %v4027 = vsel %vm583, %v3974, 0
      %v4030 = vsel %vm583, %v3975, 0
      %v4033 = vsel %vm583, %v3976, 0
      %v4036 = vsel %vm583, %v3977, 0
      %4038 = vmatprep.subr.bf16.mxu0 0
      %4039 = vmatpush1.bf16.xpose.msra.mxu0 %v4027
      %4040 = vmatprep.subr.bf16.mxu0 0
      %4041 = vmatpush1.bf16.xpose.msra.mxu0 %v4030
      %4042 = vmatprep.subr.bf16.mxu0 0
      %4043 = vmatpush1.bf16.xpose.msra.mxu0 %v4033
      %4044 = vmatprep.subr.bf16.mxu0 0
      %4045 = vmatpush1.bf16.xpose.msra.mxu0 %v4036
      %4046 = vmatprep.subr.bf16.mxu0 0
      %4047 = vmatpush1.bf16.xpose.msra.mxu0 0
      %4048 = vmatprep.subr.bf16.mxu0 0
      %4049 = vmatpush1.bf16.xpose.msra.mxu0 0
      %4050 = vmatprep.subr.bf16.mxu0 0
      %4051 = vmatpush1.bf16.xpose.msra.mxu0 0
      %4052 = vmatprep.subr.bf16.mxu0 0
      %4053 = vmatpush1.bf16.xpose.msra.mxu0 0
      %4054 = vmatprep.subr.bf16.mxu0 0
      %4055 = vmatpush1.bf16.xpose.msra.mxu0 0
      %4056 = vmatprep.subr.bf16.mxu0 0
      %4057 = vmatpush1.bf16.xpose.msra.mxu0 0
      %4058 = vmatprep.subr.bf16.mxu0 0
      %4059 = vmatpush1.bf16.xpose.msra.mxu0 0
      %4060 = vmatprep.subr.bf16.mxu0 0
      %4061 = vmatpush1.bf16.xpose.msra.mxu0 0
      %4062 = vmatprep.subr.bf16.mxu0 0
      %4063 = vmatpush1.bf16.xpose.msra.mxu0 0
      %4064 = vmatprep.subr.bf16.mxu0 0
      %4065 = vmatpush1.bf16.xpose.msra.mxu0 0
      %4066 = vmatprep.subr.bf16.mxu0 0
      %4067 = vmatpush1.bf16.xpose.msra.mxu0 0
      %4068 = vmatprep.subr.bf16.mxu0 0
      %4069 = vmatpush1.bf16.xpose.msra.mxu0 0
      %4070 = vmatprep.mubr.bf16.mxu0 0
      %4071 = vmatmul.mubr.bf16.gmra.mrb[0].mxu0 %v3979
      %v4072 = vpop.f32.mrb[0].mxu0
      %v4073 = vadd.f32 0.0, %v4072
      %v4074 = vpop.f32.mrb[0].mxu0
      %v4075 = vpop.f32.mrb[0].mxu0
      %v4076 = vadd.f32 0.0, %v4075
      %v4077 = vpop.f32.mrb[0].mxu0
      %4078 = vmatprep.mubr.bf16.mxu0 0
      %4079 = vmatmul.mubr.bf16.gmra.mrb[0].mxu0 %v3982
      %v4080 = vpop.f32.mrb[0].mxu0
      %v4081 = vadd.f32 0.0, %v4080
      %v4082 = vpop.f32.mrb[0].mxu0
      %v4083 = vpop.f32.mrb[0].mxu0
      %v4084 = vadd.f32 0.0, %v4083
      %v4085 = vpop.f32.mrb[0].mxu0
      %4086 = vmatprep.mubr.bf16.mxu0 0
      %4087 = vmatmul.mubr.bf16.gmra.mrb[0].mxu0 %v3985
      %v4088 = vpop.f32.mrb[0].mxu0
      %v4089 = vadd.f32 0.0, %v4088
      %v4090 = vpop.f32.mrb[0].mxu0
      %v4091 = vpop.f32.mrb[0].mxu0
      %v4092 = vadd.f32 0.0, %v4091
      %v4093 = vpop.f32.mrb[0].mxu0
      %4094 = vmatprep.mubr.bf16.mxu0 0
      %4095 = vmatmul.mubr.bf16.gmra.mrb[0].mxu0 %v3988
      %v4096 = vpop.f32.mrb[0].mxu0
      %v4097 = vadd.f32 0.0, %v4096
      %v4098 = vpop.f32.mrb[0].mxu0
      %v4099 = vpop.f32.mrb[0].mxu0
      %v4100 = vadd.f32 0.0, %v4099
      %v4101 = vpop.f32.mrb[0].mxu0
      %4102 = vmatprep.mubr.bf16.mxu0 0
      %4103 = vmatmul.mubr.bf16.gmra.mrb[0].mxu0 %v3991
      %v4104 = vpop.f32.mrb[0].mxu0
      %v4105 = vadd.f32 0.0, %v4104
      %v4106 = vpop.f32.mrb[0].mxu0
      %v4107 = vpop.f32.mrb[0].mxu0
      %v4108 = vadd.f32 0.0, %v4107
      %v4109 = vpop.f32.mrb[0].mxu0
      %4110 = vmatprep.mubr.bf16.mxu0 0
      %4111 = vmatmul.mubr.bf16.gmra.mrb[0].mxu0 %v3994
      %v4112 = vpop.f32.mrb[0].mxu0
      %v4113 = vadd.f32 0.0, %v4112
      %v4114 = vpop.f32.mrb[0].mxu0
      %v4115 = vpop.f32.mrb[0].mxu0
      %v4116 = vadd.f32 0.0, %v4115
      %v4117 = vpop.f32.mrb[0].mxu0
      %4118 = vmatprep.mubr.bf16.mxu0 0
      %4119 = vmatmul.mubr.bf16.gmra.mrb[0].mxu0 %v3997
      %v4120 = vpop.f32.mrb[0].mxu0
      %v4121 = vadd.f32 0.0, %v4120
      %v4122 = vpop.f32.mrb[0].mxu0
      %v4123 = vpop.f32.mrb[0].mxu0
      %v4124 = vadd.f32 0.0, %v4123
      %v4125 = vpop.f32.mrb[0].mxu0
      %4126 = vmatprep.mubr.bf16.mxu0 0
      %4127 = vmatmul.mubr.bf16.gmra.mrb[0].mxu0 %v4000
      %v4128 = vpop.f32.mrb[0].mxu0
      %v4129 = vadd.f32 0.0, %v4128
      %v4130 = vpop.f32.mrb[0].mxu0
      %v4131 = vpop.f32.mrb[0].mxu0
      %v4132 = vadd.f32 0.0, %v4131
      %v4133 = vpop.f32.mrb[0].mxu0
      %4134 = vmatprep.mubr.bf16.mxu0 0
      %4135 = vmatmul.mubr.bf16.gmra.mrb[0].mxu0 %v4003
      %v4136 = vpop.f32.mrb[0].mxu0
      %v4137 = vadd.f32 0.0, %v4136
      %v4138 = vpop.f32.mrb[0].mxu0
      %v4139 = vpop.f32.mrb[0].mxu0
      %v4140 = vadd.f32 0.0, %v4139
      %v4141 = vpop.f32.mrb[0].mxu0
      %4142 = vmatprep.mubr.bf16.mxu0 0
      %4143 = vmatmul.mubr.bf16.gmra.mrb[0].mxu0 %v4006
      %v4144 = vpop.f32.mrb[0].mxu0
      %v4145 = vadd.f32 0.0, %v4144
      %v4146 = vpop.f32.mrb[0].mxu0
      %v4147 = vpop.f32.mrb[0].mxu0
      %v4148 = vadd.f32 0.0, %v4147
      %v4149 = vpop.f32.mrb[0].mxu0
      %4150 = vmatprep.mubr.bf16.mxu0 0
      %4151 = vmatmul.mubr.bf16.gmra.mrb[0].mxu0 %v4009
      %v4152 = vpop.f32.mrb[0].mxu0
      %v4153 = vadd.f32 0.0, %v4152
      %v4154 = vpop.f32.mrb[0].mxu0
      %v4155 = vpop.f32.mrb[0].mxu0
      %v4156 = vadd.f32 0.0, %v4155
      %v4157 = vpop.f32.mrb[0].mxu0
      %4158 = vmatprep.mubr.bf16.mxu0 0
      %4159 = vmatmul.mubr.bf16.gmra.mrb[0].mxu0 %v4012
      %v4160 = vpop.f32.mrb[0].mxu0
      %v4161 = vadd.f32 0.0, %v4160
      %v4162 = vpop.f32.mrb[0].mxu0
      %v4163 = vpop.f32.mrb[0].mxu0
      %v4164 = vadd.f32 0.0, %v4163
      %v4165 = vpop.f32.mrb[0].mxu0
      %4166 = vmatprep.mubr.bf16.mxu0 0
      %4167 = vmatmul.mubr.bf16.gmra.mrb[0].mxu0 %v4015
      %v4168 = vpop.f32.mrb[0].mxu0
      %v4169 = vadd.f32 0.0, %v4168
      %v4170 = vpop.f32.mrb[0].mxu0
      %v4171 = vpop.f32.mrb[0].mxu0
      %v4172 = vadd.f32 0.0, %v4171
      %v4173 = vpop.f32.mrb[0].mxu0
      %4174 = vmatprep.mubr.bf16.mxu0 0
      %4175 = vmatmul.mubr.bf16.gmra.mrb[0].mxu0 %v4018
      %v4176 = vpop.f32.mrb[0].mxu0
      %v4177 = vadd.f32 0.0, %v4176
      %v4178 = vpop.f32.mrb[0].mxu0
      %v4179 = vpop.f32.mrb[0].mxu0
      %v4180 = vadd.f32 0.0, %v4179
      %v4181 = vpop.f32.mrb[0].mxu0
      %4182 = vmatprep.mubr.bf16.mxu0 0
      %4183 = vmatmul.mubr.bf16.gmra.mrb[0].mxu0 %v4021
      %v4184 = vpop.f32.mrb[0].mxu0
      %v4185 = vadd.f32 0.0, %v4184
      %v4186 = vpop.f32.mrb[0].mxu0
      %v4187 = vpop.f32.mrb[0].mxu0
      %v4188 = vadd.f32 0.0, %v4187
      %v4189 = vpop.f32.mrb[0].mxu0
      %4190 = vmatprep.mubr.bf16.mxu0 0
      %4191 = vmatmul.mubr.bf16.gmra.mrb[0].mxu0 %v4024
      %v4192 = vpop.f32.mrb[0].mxu0
      %v4193 = vadd.f32 0.0, %v4192
      %v4194 = vpop.f32.mrb[0].mxu0
      %v4195 = vpop.f32.mrb[0].mxu0
      %v4196 = vadd.f32 0.0, %v4195
      %v4197 = vpop.f32.mrb[0].mxu0
      %4198 = vdwg.mxu0
      %v4207 = vunpack.c.l.b16 %v3926
      %v4208 = vunpack.c.l.b16 %v3927
      %v4209 = vunpack.c.l.b16 %v3928
      %v4210 = vunpack.c.l.b16 %v3929
      %v4211 = vunpack.c.l.b16 %v3930
      %v4212 = vunpack.c.l.b16 %v3931
      %v4213 = vunpack.c.l.b16 %v3932
      %v4214 = vunpack.c.l.b16 %v3933
      %v4215 = vpack.c.b16 %v4208, %v4207
      %v4216 = vpack.c.b16 %v4210, %v4209
      %v4217 = vpack.c.b16 %v4212, %v4211
      %v4218 = vpack.c.b16 %v4214, %v4213
      %v4220 = vsel %vm583, %v3910, 0
      %v4223 = vsel %vm583, %v3911, 0
      %v4226 = vsel %vm583, %v3912, 0
      %v4229 = vsel %vm583, %v3913, 0
      %v4232 = vsel %vm583, %v3914, 0
      %v4235 = vsel %vm583, %v3915, 0
      %v4238 = vsel %vm583, %v3916, 0
      %v4241 = vsel %vm583, %v3917, 0
      %v4244 = vsel %vm583, %v3918, 0
      %v4247 = vsel %vm583, %v3919, 0
      %v4250 = vsel %vm583, %v3920, 0
      %v4253 = vsel %vm583, %v3921, 0
      %v4256 = vsel %vm583, %v3922, 0
      %v4259 = vsel %vm583, %v3923, 0
      %v4262 = vsel %vm583, %v3924, 0
      %v4265 = vsel %vm583, %v3925, 0
      %v4268 = vsel %vm583, %v4215, 0
      %v4271 = vsel %vm583, %v4216, 0
      %v4274 = vsel %vm583, %v4217, 0
      %v4277 = vsel %vm583, %v4218, 0
      %4279 = vmatprep.subr.bf16.mxu0 0
      %4280 = vmatpush1.bf16.xpose.msra.mxu0 %v4268
      %4281 = vmatprep.subr.bf16.mxu0 0
      %4282 = vmatpush1.bf16.xpose.msra.mxu0 %v4271
      %4283 = vmatprep.subr.bf16.mxu0 0
      %4284 = vmatpush1.bf16.xpose.msra.mxu0 %v4274
      %4285 = vmatprep.subr.bf16.mxu0 0
      %4286 = vmatpush1.bf16.xpose.msra.mxu0 %v4277
      %4287 = vmatprep.subr.bf16.mxu0 0
      %4288 = vmatpush1.bf16.xpose.msra.mxu0 0
      %4289 = vmatprep.subr.bf16.mxu0 0
      %4290 = vmatpush1.bf16.xpose.msra.mxu0 0
      %4291 = vmatprep.subr.bf16.mxu0 0
      %4292 = vmatpush1.bf16.xpose.msra.mxu0 0
      %4293 = vmatprep.subr.bf16.mxu0 0
      %4294 = vmatpush1.bf16.xpose.msra.mxu0 0
      %4295 = vmatprep.subr.bf16.mxu0 0
      %4296 = vmatpush1.bf16.xpose.msra.mxu0 0
      %4297 = vmatprep.subr.bf16.mxu0 0
      %4298 = vmatpush1.bf16.xpose.msra.mxu0 0
      %4299 = vmatprep.subr.bf16.mxu0 0
      %4300 = vmatpush1.bf16.xpose.msra.mxu0 0
      %4301 = vmatprep.subr.bf16.mxu0 0
      %4302 = vmatpush1.bf16.xpose.msra.mxu0 0
      %4303 = vmatprep.subr.bf16.mxu0 0
      %4304 = vmatpush1.bf16.xpose.msra.mxu0 0
      %4305 = vmatprep.subr.bf16.mxu0 0
      %4306 = vmatpush1.bf16.xpose.msra.mxu0 0
      %4307 = vmatprep.subr.bf16.mxu0 0
      %4308 = vmatpush1.bf16.xpose.msra.mxu0 0
      %4309 = vmatprep.subr.bf16.mxu0 0
      %4310 = vmatpush1.bf16.xpose.msra.mxu0 0
      %4311 = vmatprep.mubr.bf16.mxu0 0
      %4312 = vmatmul.mubr.bf16.gmra.mrb[0].mxu0 %v4220
      %v4313 = vpop.f32.mrb[0].mxu0
      %v4314 = vadd.f32 %v4073, %v4313
      %v4315 = vpop.f32.mrb[0].mxu0
      %v4316 = vpop.f32.mrb[0].mxu0
      %v4317 = vadd.f32 %v4076, %v4316
      %v4318 = vpop.f32.mrb[0].mxu0
      %4319 = vmatprep.mubr.bf16.mxu0 0
      %4320 = vmatmul.mubr.bf16.gmra.mrb[0].mxu0 %v4223
      %v4321 = vpop.f32.mrb[0].mxu0
      %v4322 = vadd.f32 %v4081, %v4321
      %v4323 = vpop.f32.mrb[0].mxu0
      %v4324 = vpop.f32.mrb[0].mxu0
      %v4325 = vadd.f32 %v4084, %v4324
      %v4326 = vpop.f32.mrb[0].mxu0
      %4327 = vmatprep.mubr.bf16.mxu0 0
      %4328 = vmatmul.mubr.bf16.gmra.mrb[0].mxu0 %v4226
      %v4329 = vpop.f32.mrb[0].mxu0
      %v4330 = vadd.f32 %v4089, %v4329
      %v4331 = vpop.f32.mrb[0].mxu0
      %v4332 = vpop.f32.mrb[0].mxu0
      %v4333 = vadd.f32 %v4092, %v4332
      %v4334 = vpop.f32.mrb[0].mxu0
      %4335 = vmatprep.mubr.bf16.mxu0 0
      %4336 = vmatmul.mubr.bf16.gmra.mrb[0].mxu0 %v4229
      %v4337 = vpop.f32.mrb[0].mxu0
      %v4338 = vadd.f32 %v4097, %v4337
      %v4339 = vpop.f32.mrb[0].mxu0
      %v4340 = vpop.f32.mrb[0].mxu0
      %v4341 = vadd.f32 %v4100, %v4340
      %v4342 = vpop.f32.mrb[0].mxu0
      %4343 = vmatprep.mubr.bf16.mxu0 0
      %4344 = vmatmul.mubr.bf16.gmra.mrb[0].mxu0 %v4232
      %v4345 = vpop.f32.mrb[0].mxu0
      %v4346 = vadd.f32 %v4105, %v4345
      %v4347 = vpop.f32.mrb[0].mxu0
      %v4348 = vpop.f32.mrb[0].mxu0
      %v4349 = vadd.f32 %v4108, %v4348
      %v4350 = vpop.f32.mrb[0].mxu0
      %4351 = vmatprep.mubr.bf16.mxu0 0
      %4352 = vmatmul.mubr.bf16.gmra.mrb[0].mxu0 %v4235
      %v4353 = vpop.f32.mrb[0].mxu0
      %v4354 = vadd.f32 %v4113, %v4353
      %v4355 = vpop.f32.mrb[0].mxu0
      %v4356 = vpop.f32.mrb[0].mxu0
      %v4357 = vadd.f32 %v4116, %v4356
      %v4358 = vpop.f32.mrb[0].mxu0
      %4359 = vmatprep.mubr.bf16.mxu0 0
      %4360 = vmatmul.mubr.bf16.gmra.mrb[0].mxu0 %v4238
      %v4361 = vpop.f32.mrb[0].mxu0
      %v4362 = vadd.f32 %v4121, %v4361
      %v4363 = vpop.f32.mrb[0].mxu0
      %v4364 = vpop.f32.mrb[0].mxu0
      %v4365 = vadd.f32 %v4124, %v4364
      %v4366 = vpop.f32.mrb[0].mxu0
      %4367 = vmatprep.mubr.bf16.mxu0 0
      %4368 = vmatmul.mubr.bf16.gmra.mrb[0].mxu0 %v4241
      %v4369 = vpop.f32.mrb[0].mxu0
      %v4370 = vadd.f32 %v4129, %v4369
      %v4371 = vpop.f32.mrb[0].mxu0
      %v4372 = vpop.f32.mrb[0].mxu0
      %v4373 = vadd.f32 %v4132, %v4372
      %v4374 = vpop.f32.mrb[0].mxu0
      %4375 = vmatprep.mubr.bf16.mxu0 0
      %4376 = vmatmul.mubr.bf16.gmra.mrb[0].mxu0 %v4244
      %v4377 = vpop.f32.mrb[0].mxu0
      %v4378 = vadd.f32 %v4137, %v4377
      %v4379 = vpop.f32.mrb[0].mxu0
      %v4380 = vpop.f32.mrb[0].mxu0
      %v4381 = vadd.f32 %v4140, %v4380
      %v4382 = vpop.f32.mrb[0].mxu0
      %4383 = vmatprep.mubr.bf16.mxu0 0
      %4384 = vmatmul.mubr.bf16.gmra.mrb[0].mxu0 %v4247
      %v4385 = vpop.f32.mrb[0].mxu0
      %v4386 = vadd.f32 %v4145, %v4385
      %v4387 = vpop.f32.mrb[0].mxu0
      %v4388 = vpop.f32.mrb[0].mxu0
      %v4389 = vadd.f32 %v4148, %v4388
      %v4390 = vpop.f32.mrb[0].mxu0
      %4391 = vmatprep.mubr.bf16.mxu0 0
      %4392 = vmatmul.mubr.bf16.gmra.mrb[0].mxu0 %v4250
      %v4393 = vpop.f32.mrb[0].mxu0
      %v4394 = vadd.f32 %v4153, %v4393
      %v4395 = vpop.f32.mrb[0].mxu0
      %v4396 = vpop.f32.mrb[0].mxu0
      %v4397 = vadd.f32 %v4156, %v4396
      %v4398 = vpop.f32.mrb[0].mxu0
      %4399 = vmatprep.mubr.bf16.mxu0 0
      %4400 = vmatmul.mubr.bf16.gmra.mrb[0].mxu0 %v4253
      %v4401 = vpop.f32.mrb[0].mxu0
      %v4402 = vadd.f32 %v4161, %v4401
      %v4403 = vpop.f32.mrb[0].mxu0
      %v4404 = vpop.f32.mrb[0].mxu0
      %v4405 = vadd.f32 %v4164, %v4404
      %v4406 = vpop.f32.mrb[0].mxu0
      %4407 = vmatprep.mubr.bf16.mxu0 0
      %4408 = vmatmul.mubr.bf16.gmra.mrb[0].mxu0 %v4256
      %v4409 = vpop.f32.mrb[0].mxu0
      %v4410 = vadd.f32 %v4169, %v4409
      %v4411 = vpop.f32.mrb[0].mxu0
      %v4412 = vpop.f32.mrb[0].mxu0
      %v4413 = vadd.f32 %v4172, %v4412
      %v4414 = vpop.f32.mrb[0].mxu0
      %4415 = vmatprep.mubr.bf16.mxu0 0
      %4416 = vmatmul.mubr.bf16.gmra.mrb[0].mxu0 %v4259
      %v4417 = vpop.f32.mrb[0].mxu0
      %v4418 = vadd.f32 %v4177, %v4417
      %v4419 = vpop.f32.mrb[0].mxu0
      %v4420 = vpop.f32.mrb[0].mxu0
      %v4421 = vadd.f32 %v4180, %v4420
      %v4422 = vpop.f32.mrb[0].mxu0
      %4423 = vmatprep.mubr.bf16.mxu0 0
      %4424 = vmatmul.mubr.bf16.gmra.mrb[0].mxu0 %v4262
      %v4425 = vpop.f32.mrb[0].mxu0
      %v4426 = vadd.f32 %v4185, %v4425
      %v4427 = vpop.f32.mrb[0].mxu0
      %v4428 = vpop.f32.mrb[0].mxu0
      %v4429 = vadd.f32 %v4188, %v4428
      %v4430 = vpop.f32.mrb[0].mxu0
      %4431 = vmatprep.mubr.bf16.mxu0 0
      %4432 = vmatmul.mubr.bf16.gmra.mrb[0].mxu0 %v4265
      %v4433 = vpop.f32.mrb[0].mxu0
      %v4434 = vadd.f32 %v4193, %v4433
      %v4435 = vpop.f32.mrb[0].mxu0
      %v4436 = vpop.f32.mrb[0].mxu0
      %v4437 = vadd.f32 %v4196, %v4436
      %v4438 = vpop.f32.mrb[0].mxu0
      %4439 = vdwg.mxu0
      %v4440 = vand.u32 2147483647, %v4314
      %v4441 = vand.u32 2147483647, %v4317
      %v4442 = vand.u32 2147483647, %v4322
      %v4443 = vand.u32 2147483647, %v4325
      %v4444 = vand.u32 2147483647, %v4330
      %v4445 = vand.u32 2147483647, %v4333
      %v4446 = vand.u32 2147483647, %v4338
      %v4447 = vand.u32 2147483647, %v4341
      %v4448 = vand.u32 2147483647, %v4346
      %v4449 = vand.u32 2147483647, %v4349
      %v4450 = vand.u32 2147483647, %v4354
      %v4451 = vand.u32 2147483647, %v4357
      %v4452 = vand.u32 2147483647, %v4362
      %v4453 = vand.u32 2147483647, %v4365
      %v4454 = vand.u32 2147483647, %v4370
      %v4455 = vand.u32 2147483647, %v4373
      %v4456 = vand.u32 2147483647, %v4378
      %v4457 = vand.u32 2147483647, %v4381
      %v4458 = vand.u32 2147483647, %v4386
      %v4459 = vand.u32 2147483647, %v4389
      %v4460 = vand.u32 2147483647, %v4394
      %v4461 = vand.u32 2147483647, %v4397
      %v4462 = vand.u32 2147483647, %v4402
      %v4463 = vand.u32 2147483647, %v4405
      %v4464 = vand.u32 2147483647, %v4410
      %v4465 = vand.u32 2147483647, %v4413
      %v4466 = vand.u32 2147483647, %v4418
      %v4467 = vand.u32 2147483647, %v4421
      %v4468 = vand.u32 2147483647, %v4426
      %v4469 = vand.u32 2147483647, %v4429
      %v4470 = vand.u32 2147483647, %v4434
      %v4471 = vand.u32 2147483647, %v4437
      %v4472 = vsub.f32 0.0, %v4440
      %v4473 = vsub.f32 0.0, %v4441
      %v4474 = vsub.f32 0.0, %v4442
      %v4475 = vsub.f32 0.0, %v4443
      %v4476 = vsub.f32 0.0, %v4444
      %v4477 = vsub.f32 0.0, %v4445
      %v4478 = vsub.f32 0.0, %v4446
      %v4479 = vsub.f32 0.0, %v4447
      %v4480 = vsub.f32 0.0, %v4448
      %v4481 = vsub.f32 0.0, %v4449
      %v4482 = vsub.f32 0.0, %v4450
      %v4483 = vsub.f32 0.0, %v4451
      %v4484 = vsub.f32 0.0, %v4452
      %v4485 = vsub.f32 0.0, %v4453
      %v4486 = vsub.f32 0.0, %v4454
      %v4487 = vsub.f32 0.0, %v4455
      %v4488 = vsub.f32 0.0, %v4456
      %v4489 = vsub.f32 0.0, %v4457
      %v4490 = vsub.f32 0.0, %v4458
      %v4491 = vsub.f32 0.0, %v4459
      %v4492 = vsub.f32 0.0, %v4460
      %v4493 = vsub.f32 0.0, %v4461
      %v4494 = vsub.f32 0.0, %v4462
      %v4495 = vsub.f32 0.0, %v4463
      %v4496 = vsub.f32 0.0, %v4464
      %v4497 = vsub.f32 0.0, %v4465
      %v4498 = vsub.f32 0.0, %v4466
      %v4499 = vsub.f32 0.0, %v4467
      %v4500 = vsub.f32 0.0, %v4468
      %v4501 = vsub.f32 0.0, %v4469
      %v4502 = vsub.f32 0.0, %v4470
      %v4503 = vsub.f32 0.0, %v4471
      %v4504 = vmul.f32 %v4472, 1.442695
      %v4505 = vpow.pop %v4504
      %v4506 = vmul.f32 %v4473, 1.442695
      %v4507 = vpow.pop %v4506
      %v4508 = vmul.f32 %v4474, 1.442695
      %v4509 = vpow.pop %v4508
      %v4510 = vmul.f32 %v4475, 1.442695
      %v4511 = vpow.pop %v4510
      %v4512 = vmul.f32 %v4476, 1.442695
      %v4513 = vpow.pop %v4512
      %v4514 = vmul.f32 %v4477, 1.442695
      %v4515 = vpow.pop %v4514
      %v4516 = vmul.f32 %v4478, 1.442695
      %v4517 = vpow.pop %v4516
      %v4518 = vmul.f32 %v4479, 1.442695
      %v4519 = vpow.pop %v4518
      %v4520 = vmul.f32 %v4480, 1.442695
      %v4521 = vpow.pop %v4520
      %v4522 = vmul.f32 %v4481, 1.442695
      %v4523 = vpow.pop %v4522
      %v4524 = vmul.f32 %v4482, 1.442695
      %v4525 = vpow.pop %v4524
      %v4526 = vmul.f32 %v4483, 1.442695
      %v4527 = vpow.pop %v4526
      %v4528 = vmul.f32 %v4484, 1.442695
      %v4529 = vpow.pop %v4528
      %v4530 = vmul.f32 %v4485, 1.442695
      %v4531 = vpow.pop %v4530
      %v4532 = vmul.f32 %v4486, 1.442695
      %v4533 = vpow.pop %v4532
      %v4534 = vmul.f32 %v4487, 1.442695
      %v4535 = vpow.pop %v4534
      %v4536 = vmul.f32 %v4488, 1.442695
      %v4537 = vpow.pop %v4536
      %v4538 = vmul.f32 %v4489, 1.442695
      %v4539 = vpow.pop %v4538
      %v4540 = vmul.f32 %v4490, 1.442695
      %v4541 = vpow.pop %v4540
      %v4542 = vmul.f32 %v4491, 1.442695
      %v4543 = vpow.pop %v4542
      %v4544 = vmul.f32 %v4492, 1.442695
      %v4545 = vpow.pop %v4544
      %v4546 = vmul.f32 %v4493, 1.442695
      %v4547 = vpow.pop %v4546
      %v4548 = vmul.f32 %v4494, 1.442695
      %v4549 = vpow.pop %v4548
      %v4550 = vmul.f32 %v4495, 1.442695
      %v4551 = vpow.pop %v4550
      %v4552 = vmul.f32 %v4496, 1.442695
      %v4553 = vpow.pop %v4552
      %v4554 = vmul.f32 %v4497, 1.442695
      %v4555 = vpow.pop %v4554
      %v4556 = vmul.f32 %v4498, 1.442695
      %v4557 = vpow.pop %v4556
      %v4558 = vmul.f32 %v4499, 1.442695
      %v4559 = vpow.pop %v4558
      %v4560 = vmul.f32 %v4500, 1.442695
      %v4561 = vpow.pop %v4560
      %v4562 = vmul.f32 %v4501, 1.442695
      %v4563 = vpow.pop %v4562
      %v4564 = vmul.f32 %v4502, 1.442695
      %v4565 = vpow.pop %v4564
      %v4566 = vmul.f32 %v4503, 1.442695
      %v4567 = vpow.pop %v4566
      %v4568 = vadd.f32 %v4505, 1.0
      %v4569 = vadd.f32 %v4507, 1.0
      %v4570 = vadd.f32 %v4509, 1.0
      %v4571 = vadd.f32 %v4511, 1.0
      %v4572 = vadd.f32 %v4513, 1.0
      %v4573 = vadd.f32 %v4515, 1.0
      %v4574 = vadd.f32 %v4517, 1.0
      %v4575 = vadd.f32 %v4519, 1.0
      %v4576 = vadd.f32 %v4521, 1.0
      %v4577 = vadd.f32 %v4523, 1.0
      %v4578 = vadd.f32 %v4525, 1.0
      %v4579 = vadd.f32 %v4527, 1.0
      %v4580 = vadd.f32 %v4529, 1.0
      %v4581 = vadd.f32 %v4531, 1.0
      %v4582 = vadd.f32 %v4533, 1.0
      %v4583 = vadd.f32 %v4535, 1.0
      %v4584 = vadd.f32 %v4537, 1.0
      %v4585 = vadd.f32 %v4539, 1.0
      %v4586 = vadd.f32 %v4541, 1.0
      %v4587 = vadd.f32 %v4543, 1.0
      %v4588 = vadd.f32 %v4545, 1.0
      %v4589 = vadd.f32 %v4547, 1.0
      %v4590 = vadd.f32 %v4549, 1.0
      %v4591 = vadd.f32 %v4551, 1.0
      %v4592 = vadd.f32 %v4553, 1.0
      %v4593 = vadd.f32 %v4555, 1.0
      %v4594 = vadd.f32 %v4557, 1.0
      %v4595 = vadd.f32 %v4559, 1.0
      %v4596 = vadd.f32 %v4561, 1.0
      %v4597 = vadd.f32 %v4563, 1.0
      %v4598 = vadd.f32 %v4565, 1.0
      %v4599 = vadd.f32 %v4567, 1.0
      %v4600 = vrcp.pop %v4568
      %v4601 = vrcp.pop %v4569
      %v4602 = vrcp.pop %v4570
      %v4603 = vrcp.pop %v4571
      %v4604 = vrcp.pop %v4572
      %v4605 = vrcp.pop %v4573
      %v4606 = vrcp.pop %v4574
      %v4607 = vrcp.pop %v4575
      %v4608 = vrcp.pop %v4576
      %v4609 = vrcp.pop %v4577
      %v4610 = vrcp.pop %v4578
      %v4611 = vrcp.pop %v4579
      %v4612 = vrcp.pop %v4580
      %v4613 = vrcp.pop %v4581
      %v4614 = vrcp.pop %v4582
      %v4615 = vrcp.pop %v4583
      %v4616 = vrcp.pop %v4584
      %v4617 = vrcp.pop %v4585
      %v4618 = vrcp.pop %v4586
      %v4619 = vrcp.pop %v4587
      %v4620 = vrcp.pop %v4588
      %v4621 = vrcp.pop %v4589
      %v4622 = vrcp.pop %v4590
      %v4623 = vrcp.pop %v4591
      %v4624 = vrcp.pop %v4592
      %v4625 = vrcp.pop %v4593
      %v4626 = vrcp.pop %v4594
      %v4627 = vrcp.pop %v4595
      %v4628 = vrcp.pop %v4596
      %v4629 = vrcp.pop %v4597
      %v4630 = vrcp.pop %v4598
      %v4631 = vrcp.pop %v4599
      %vm4632 = vcmp.ge.f32.partialorder %v4314, 0.0
      %vm4633 = vcmp.ge.f32.partialorder %v4317, 0.0
      %vm4634 = vcmp.ge.f32.partialorder %v4322, 0.0
      %vm4635 = vcmp.ge.f32.partialorder %v4325, 0.0
      %vm4636 = vcmp.ge.f32.partialorder %v4330, 0.0
      %vm4637 = vcmp.ge.f32.partialorder %v4333, 0.0
      %vm4638 = vcmp.ge.f32.partialorder %v4338, 0.0
      %vm4639 = vcmp.ge.f32.partialorder %v4341, 0.0
      %vm4640 = vcmp.ge.f32.partialorder %v4346, 0.0
      %vm4641 = vcmp.ge.f32.partialorder %v4349, 0.0
      %vm4642 = vcmp.ge.f32.partialorder %v4354, 0.0
      %vm4643 = vcmp.ge.f32.partialorder %v4357, 0.0
      %vm4644 = vcmp.ge.f32.partialorder %v4362, 0.0
      %vm4645 = vcmp.ge.f32.partialorder %v4365, 0.0
      %vm4646 = vcmp.ge.f32.partialorder %v4370, 0.0
      %vm4647 = vcmp.ge.f32.partialorder %v4373, 0.0
      %vm4648 = vcmp.ge.f32.partialorder %v4378, 0.0
      %vm4649 = vcmp.ge.f32.partialorder %v4381, 0.0
      %vm4650 = vcmp.ge.f32.partialorder %v4386, 0.0
      %vm4651 = vcmp.ge.f32.partialorder %v4389, 0.0
      %vm4652 = vcmp.ge.f32.partialorder %v4394, 0.0
      %vm4653 = vcmp.ge.f32.partialorder %v4397, 0.0
      %vm4654 = vcmp.ge.f32.partialorder %v4402, 0.0
      %vm4655 = vcmp.ge.f32.partialorder %v4405, 0.0
      %vm4656 = vcmp.ge.f32.partialorder %v4410, 0.0
      %vm4657 = vcmp.ge.f32.partialorder %v4413, 0.0
      %vm4658 = vcmp.ge.f32.partialorder %v4418, 0.0
      %vm4659 = vcmp.ge.f32.partialorder %v4421, 0.0
      %vm4660 = vcmp.ge.f32.partialorder %v4426, 0.0
      %vm4661 = vcmp.ge.f32.partialorder %v4429, 0.0
      %vm4662 = vcmp.ge.f32.partialorder %v4434, 0.0
      %vm4663 = vcmp.ge.f32.partialorder %v4437, 0.0
      %v4664 = vmul.f32 %v4505, %v4600
      %v4665 = vmul.f32 %v4507, %v4601
      %v4666 = vmul.f32 %v4509, %v4602
      %v4667 = vmul.f32 %v4511, %v4603
      %v4668 = vmul.f32 %v4513, %v4604
      %v4669 = vmul.f32 %v4515, %v4605
      %v4670 = vmul.f32 %v4517, %v4606
      %v4671 = vmul.f32 %v4519, %v4607
      %v4672 = vmul.f32 %v4521, %v4608
      %v4673 = vmul.f32 %v4523, %v4609
      %v4674 = vmul.f32 %v4525, %v4610
      %v4675 = vmul.f32 %v4527, %v4611
      %v4676 = vmul.f32 %v4529, %v4612
      %v4677 = vmul.f32 %v4531, %v4613
      %v4678 = vmul.f32 %v4533, %v4614
      %v4679 = vmul.f32 %v4535, %v4615
      %v4680 = vmul.f32 %v4537, %v4616
      %v4681 = vmul.f32 %v4539, %v4617
      %v4682 = vmul.f32 %v4541, %v4618
      %v4683 = vmul.f32 %v4543, %v4619
      %v4684 = vmul.f32 %v4545, %v4620
      %v4685 = vmul.f32 %v4547, %v4621
      %v4686 = vmul.f32 %v4549, %v4622
      %v4687 = vmul.f32 %v4551, %v4623
      %v4688 = vmul.f32 %v4553, %v4624
      %v4689 = vmul.f32 %v4555, %v4625
      %v4690 = vmul.f32 %v4557, %v4626
      %v4691 = vmul.f32 %v4559, %v4627
      %v4692 = vmul.f32 %v4561, %v4628
      %v4693 = vmul.f32 %v4563, %v4629
      %v4694 = vmul.f32 %v4565, %v4630
      %v4695 = vmul.f32 %v4567, %v4631
      %v4696 = vsel %vm4632, %v4600, %v4664
      %v4697 = vsel %vm4633, %v4601, %v4665
      %v4698 = vsel %vm4634, %v4602, %v4666
      %v4699 = vsel %vm4635, %v4603, %v4667
      %v4700 = vsel %vm4636, %v4604, %v4668
      %v4701 = vsel %vm4637, %v4605, %v4669
      %v4702 = vsel %vm4638, %v4606, %v4670
      %v4703 = vsel %vm4639, %v4607, %v4671
      %v4704 = vsel %vm4640, %v4608, %v4672
      %v4705 = vsel %vm4641, %v4609, %v4673
      %v4706 = vsel %vm4642, %v4610, %v4674
      %v4707 = vsel %vm4643, %v4611, %v4675
      %v4708 = vsel %vm4644, %v4612, %v4676
      %v4709 = vsel %vm4645, %v4613, %v4677
      %v4710 = vsel %vm4646, %v4614, %v4678
      %v4711 = vsel %vm4647, %v4615, %v4679
      %v4712 = vsel %vm4648, %v4616, %v4680
      %v4713 = vsel %vm4649, %v4617, %v4681
      %v4714 = vsel %vm4650, %v4618, %v4682
      %v4715 = vsel %vm4651, %v4619, %v4683
      %v4716 = vsel %vm4652, %v4620, %v4684
      %v4717 = vsel %vm4653, %v4621, %v4685
      %v4718 = vsel %vm4654, %v4622, %v4686
      %v4719 = vsel %vm4655, %v4623, %v4687
      %v4720 = vsel %vm4656, %v4624, %v4688
      %v4721 = vsel %vm4657, %v4625, %v4689
      %v4722 = vsel %vm4658, %v4626, %v4690
      %v4723 = vsel %vm4659, %v4627, %v4691
      %v4724 = vsel %vm4660, %v4628, %v4692
      %v4725 = vsel %vm4661, %v4629, %v4693
      %v4726 = vsel %vm4662, %v4630, %v4694
      %v4727 = vsel %vm4663, %v4631, %v4695
      %v4728 = vmul.f32 %v4314, %v4696
      %v4729 = vmul.f32 %v4317, %v4697
      %v4730 = vmul.f32 %v4322, %v4698
      %v4731 = vmul.f32 %v4325, %v4699
      %v4732 = vmul.f32 %v4330, %v4700
      %v4733 = vmul.f32 %v4333, %v4701
      %v4734 = vmul.f32 %v4338, %v4702
      %v4735 = vmul.f32 %v4341, %v4703
      %v4736 = vmul.f32 %v4346, %v4704
      %v4737 = vmul.f32 %v4349, %v4705
      %v4738 = vmul.f32 %v4354, %v4706
      %v4739 = vmul.f32 %v4357, %v4707
      %v4740 = vmul.f32 %v4362, %v4708
      %v4741 = vmul.f32 %v4365, %v4709
      %v4742 = vmul.f32 %v4370, %v4710
      %v4743 = vmul.f32 %v4373, %v4711
      %v4744 = vmul.f32 %v4378, %v4712
      %v4745 = vmul.f32 %v4381, %v4713
      %v4746 = vmul.f32 %v4386, %v4714
      %v4747 = vmul.f32 %v4389, %v4715
      %v4748 = vmul.f32 %v4394, %v4716
      %v4749 = vmul.f32 %v4397, %v4717
      %v4750 = vmul.f32 %v4402, %v4718
      %v4751 = vmul.f32 %v4405, %v4719
      %v4752 = vmul.f32 %v4410, %v4720
      %v4753 = vmul.f32 %v4413, %v4721
      %v4754 = vmul.f32 %v4418, %v4722
      %v4755 = vmul.f32 %v4421, %v4723
      %v4756 = vmul.f32 %v4426, %v4724
      %v4757 = vmul.f32 %v4429, %v4725
      %v4758 = vmul.f32 %v4434, %v4726
      %v4759 = vmul.f32 %v4437, %v4727
      %4760 = vst.msk [vmem:[#allocation4] sm:$0xff] %vm446, 0.0
      %4761 = vst.msk [vmem:[#allocation4 + $0x8] sm:$0xff] %vm446, 0.0
      %4762 = vst.msk [vmem:[#allocation4 + $0x10] sm:$0x3] %vm448, 0.0
      %s4763 = scalar_lea.vmem [#allocation4], 408
      %4764 = vst.msk [vmem:[%s4763] sm:$0xff] %vm446, 0.0
      %4765 = vst.msk [vmem:[%s4763 + $0x8] sm:$0xff] %vm446, 0.0
      %4766 = vst.msk [vmem:[%s4763 + $0x10] sm:$0x3] %vm448, 0.0
      %v4799 = vrot.slane %v4728, 7
      %v4800 = vrot.slane %v4729, 7
      %v4801 = vsel %vm477, %v4799, %v4800
      %v4802 = vrot.slane %v4730, 7
      %v4803 = vrot.slane %v4731, 7
      %v4804 = vsel %vm477, %v4802, %v4803
      %v4805 = vrot.slane %v4732, 7
      %v4806 = vrot.slane %v4733, 7
      %v4807 = vsel %vm477, %v4805, %v4806
      %v4808 = vrot.slane %v4734, 7
      %v4809 = vrot.slane %v4735, 7
      %v4810 = vsel %vm477, %v4808, %v4809
      %v4811 = vrot.slane %v4736, 7
      %v4812 = vrot.slane %v4737, 7
      %v4813 = vsel %vm477, %v4811, %v4812
      %v4814 = vrot.slane %v4738, 7
      %v4815 = vrot.slane %v4739, 7
      %v4816 = vsel %vm477, %v4814, %v4815
      %v4817 = vrot.slane %v4740, 7
      %v4818 = vrot.slane %v4741, 7
      %v4819 = vsel %vm477, %v4817, %v4818
      %v4820 = vrot.slane %v4742, 7
      %v4821 = vrot.slane %v4743, 7
      %v4822 = vsel %vm477, %v4820, %v4821
      %v4823 = vrot.slane %v4744, 7
      %v4824 = vrot.slane %v4745, 7
      %v4825 = vsel %vm477, %v4823, %v4824
      %v4826 = vrot.slane %v4746, 7
      %v4827 = vrot.slane %v4747, 7
      %v4828 = vsel %vm477, %v4826, %v4827
      %v4829 = vrot.slane %v4748, 7
      %v4830 = vrot.slane %v4749, 7
      %v4831 = vsel %vm477, %v4829, %v4830
      %v4832 = vrot.slane %v4750, 7
      %v4833 = vrot.slane %v4751, 7
      %v4834 = vsel %vm477, %v4832, %v4833
      %v4835 = vrot.slane %v4752, 7
      %v4836 = vrot.slane %v4753, 7
      %v4837 = vsel %vm477, %v4835, %v4836
      %v4838 = vrot.slane %v4754, 7
      %v4839 = vrot.slane %v4755, 7
      %v4840 = vsel %vm477, %v4838, %v4839
      %v4841 = vrot.slane %v4756, 7
      %v4842 = vrot.slane %v4757, 7
      %v4843 = vsel %vm477, %v4841, %v4842
      %v4844 = vrot.slane %v4758, 7
      %v4845 = vrot.slane %v4759, 7
      %v4846 = vsel %vm477, %v4844, %v4845
      %v4895 = vsel %vm477, 0.0, %v4799
      %v4896 = vsel %vm477, 0.0, %v4802
      %v4897 = vsel %vm477, 0.0, %v4805
      %v4898 = vsel %vm477, 0.0, %v4808
      %v4899 = vsel %vm477, 0.0, %v4811
      %v4900 = vsel %vm477, 0.0, %v4814
      %v4901 = vsel %vm477, 0.0, %v4817
      %v4902 = vsel %vm477, 0.0, %v4820
      %v4903 = vsel %vm477, 0.0, %v4823
      %v4904 = vsel %vm477, 0.0, %v4826
      %v4905 = vsel %vm477, 0.0, %v4829
      %v4906 = vsel %vm477, 0.0, %v4832
      %v4907 = vsel %vm477, 0.0, %v4835
      %v4908 = vsel %vm477, 0.0, %v4838
      %v4909 = vsel %vm477, 0.0, %v4841
      %v4910 = vsel %vm477, 0.0, %v4844
      %v4911 = vsel %vm477, %v4800, 0.0
      %v4912 = vsel %vm477, %v4803, 0.0
      %v4913 = vsel %vm477, %v4806, 0.0
      %v4914 = vsel %vm477, %v4809, 0.0
      %v4915 = vsel %vm477, %v4812, 0.0
      %v4916 = vsel %vm477, %v4815, 0.0
      %v4917 = vsel %vm477, %v4818, 0.0
      %v4918 = vsel %vm477, %v4821, 0.0
      %v4919 = vsel %vm477, %v4824, 0.0
      %v4920 = vsel %vm477, %v4827, 0.0
      %v4921 = vsel %vm477, %v4830, 0.0
      %v4922 = vsel %vm477, %v4833, 0.0
      %v4923 = vsel %vm477, %v4836, 0.0
      %v4924 = vsel %vm477, %v4839, 0.0
      %v4925 = vsel %vm477, %v4842, 0.0
      %v4926 = vsel %vm477, %v4845, 0.0
      %s4927 = scalar_lea.vmem [#allocation4], 24
      %4928 = vst.msk [vmem:[%s4927] sm:$0xff] %vm446, %v4895
      %4929 = vst.msk [vmem:[%s4927 + $0x8] sm:$0xff] %vm446, %v4801
      %4930 = vst.msk [vmem:[%s4927 + $0x10] sm:$0x3] %vm448, %v4911
      %4931 = vst.msk [vmem:[%s4927 + $0x18] sm:$0xff] %vm446, %v4896
      %4932 = vst.msk [vmem:[%s4927 + $0x20] sm:$0xff] %vm446, %v4804
      %4933 = vst.msk [vmem:[%s4927 + $0x28] sm:$0x3] %vm448, %v4912
      %4934 = vst.msk [vmem:[%s4927 + $0x30] sm:$0xff] %vm446, %v4897
      %4935 = vst.msk [vmem:[%s4927 + $0x38] sm:$0xff] %vm446, %v4807
      %4936 = vst.msk [vmem:[%s4927 + $0x40] sm:$0x3] %vm448, %v4913
      %4937 = vst.msk [vmem:[%s4927 + $0x48] sm:$0xff] %vm446, %v4898
      %4938 = vst.msk [vmem:[%s4927 + $0x50] sm:$0xff] %vm446, %v4810
      %4939 = vst.msk [vmem:[%s4927 + $0x58] sm:$0x3] %vm448, %v4914
      %4940 = vst.msk [vmem:[%s4927 + $0x60] sm:$0xff] %vm446, %v4899
      %4941 = vst.msk [vmem:[%s4927 + $0x68] sm:$0xff] %vm446, %v4813
      %4942 = vst.msk [vmem:[%s4927 + $0x70] sm:$0x3] %vm448, %v4915
      %4943 = vst.msk [vmem:[%s4927 + $0x78] sm:$0xff] %vm446, %v4900
      %4944 = vst.msk [vmem:[%s4927 + $0x80] sm:$0xff] %vm446, %v4816
      %4945 = vst.msk [vmem:[%s4927 + $0x88] sm:$0x3] %vm448, %v4916
      %4946 = vst.msk [vmem:[%s4927 + $0x90] sm:$0xff] %vm446, %v4901
      %4947 = vst.msk [vmem:[%s4927 + $0x98] sm:$0xff] %vm446, %v4819
      %4948 = vst.msk [vmem:[%s4927 + $0xa0] sm:$0x3] %vm448, %v4917
      %4949 = vst.msk [vmem:[%s4927 + $0xa8] sm:$0xff] %vm446, %v4902
      %4950 = vst.msk [vmem:[%s4927 + $0xb0] sm:$0xff] %vm446, %v4822
      %4951 = vst.msk [vmem:[%s4927 + $0xb8] sm:$0x3] %vm448, %v4918
      %4952 = vst.msk [vmem:[%s4927 + $0xc0] sm:$0xff] %vm446, %v4903
      %4953 = vst.msk [vmem:[%s4927 + $0xc8] sm:$0xff] %vm446, %v4825
      %4954 = vst.msk [vmem:[%s4927 + $0xd0] sm:$0x3] %vm448, %v4919
      %4955 = vst.msk [vmem:[%s4927 + $0xd8] sm:$0xff] %vm446, %v4904
      %4956 = vst.msk [vmem:[%s4927 + $0xe0] sm:$0xff] %vm446, %v4828
      %4957 = vst.msk [vmem:[%s4927 + $0xe8] sm:$0x3] %vm448, %v4920
      %4958 = vst.msk [vmem:[%s4927 + $0xf0] sm:$0xff] %vm446, %v4905
      %4959 = vst.msk [vmem:[%s4927 + $0xf8] sm:$0xff] %vm446, %v4831
      %4960 = vst.msk [vmem:[%s4927 + $0x100] sm:$0x3] %vm448, %v4921
      %4961 = vst.msk [vmem:[%s4927 + $0x108] sm:$0xff] %vm446, %v4906
      %4962 = vst.msk [vmem:[%s4927 + $0x110] sm:$0xff] %vm446, %v4834
      %4963 = vst.msk [vmem:[%s4927 + $0x118] sm:$0x3] %vm448, %v4922
      %4964 = vst.msk [vmem:[%s4927 + $0x120] sm:$0xff] %vm446, %v4907
      %4965 = vst.msk [vmem:[%s4927 + $0x128] sm:$0xff] %vm446, %v4837
      %4966 = vst.msk [vmem:[%s4927 + $0x130] sm:$0x3] %vm448, %v4923
      %4967 = vst.msk [vmem:[%s4927 + $0x138] sm:$0xff] %vm446, %v4908
      %4968 = vst.msk [vmem:[%s4927 + $0x140] sm:$0xff] %vm446, %v4840
      %4969 = vst.msk [vmem:[%s4927 + $0x148] sm:$0x3] %vm448, %v4924
      %4970 = vst.msk [vmem:[%s4927 + $0x150] sm:$0xff] %vm446, %v4909
      %4971 = vst.msk [vmem:[%s4927 + $0x158] sm:$0xff] %vm446, %v4843
      %4972 = vst.msk [vmem:[%s4927 + $0x160] sm:$0x3] %vm448, %v4925
      %4973 = vst.msk [vmem:[%s4927 + $0x168] sm:$0xff] %vm446, %v4910
      %4974 = vst.msk [vmem:[%s4927 + $0x170] sm:$0xff] %vm446, %v4846
      %4975 = vst.msk [vmem:[%s4927 + $0x178] sm:$0x3] %vm448, %v4926
      %v4976 = vld [vmem:[%s7] sm:$0xff]
      %v4977 = vld [vmem:[%s7 + $0x8] sm:$0xff]
      %v4978 = vld [vmem:[%s7 + $0x10] sm:$0xf]
      %v4979 = vld [vmem:[%s7 + $0x14] sm:$0x11]
      %v4980 = vld [vmem:[%s7 + $0x1c] sm:$0x11]
      %v4981 = vld [vmem:[%s7 + $0x24] sm:$0x1]
      %v4982 = vld [vmem:[#allocation4] sm:$0xff]
      %v4983 = vld [vmem:[#allocation4 + $0x8] sm:$0xff]
      %v4984 = vld [vmem:[#allocation4 + $0x18] sm:$0xff]
      %v4985 = vld [vmem:[#allocation4 + $0x20] sm:$0xff]
      %v4986 = vld [vmem:[#allocation4 + $0x30] sm:$0xff]
      %v4987 = vld [vmem:[#allocation4 + $0x38] sm:$0xff]
      %v4988 = vld [vmem:[#allocation4 + $0x48] sm:$0xff]
      %v4989 = vld [vmem:[#allocation4 + $0x50] sm:$0xff]
      %v4990 = vld [vmem:[#allocation4 + $0x60] sm:$0xff]
      %v4991 = vld [vmem:[#allocation4 + $0x68] sm:$0xff]
      %v4992 = vld [vmem:[#allocation4 + $0x78] sm:$0xff]
      %v4993 = vld [vmem:[#allocation4 + $0x80] sm:$0xff]
      %v4994 = vld [vmem:[#allocation4 + $0x90] sm:$0xff]
      %v4995 = vld [vmem:[#allocation4 + $0x98] sm:$0xff]
      %v4996 = vld [vmem:[#allocation4 + $0xa8] sm:$0xff]
      %v4997 = vld [vmem:[#allocation4 + $0xb0] sm:$0xff]
      %v4998 = vld [vmem:[#allocation4 + $0xc0] sm:$0xff]
      %v4999 = vld [vmem:[#allocation4 + $0xc8] sm:$0xff]
      %v5000 = vld [vmem:[#allocation4 + $0xd8] sm:$0xff]
      %v5001 = vld [vmem:[#allocation4 + $0xe0] sm:$0xff]
      %v5002 = vld [vmem:[#allocation4 + $0xf0] sm:$0xff]
      %v5003 = vld [vmem:[#allocation4 + $0xf8] sm:$0xff]
      %v5004 = vld [vmem:[#allocation4 + $0x108] sm:$0xff]
      %v5005 = vld [vmem:[#allocation4 + $0x110] sm:$0xff]
      %v5006 = vld [vmem:[#allocation4 + $0x120] sm:$0xff]
      %v5007 = vld [vmem:[#allocation4 + $0x128] sm:$0xff]
      %v5008 = vld [vmem:[#allocation4 + $0x138] sm:$0xff]
      %v5009 = vld [vmem:[#allocation4 + $0x140] sm:$0xff]
      %v5010 = vld [vmem:[#allocation4 + $0x150] sm:$0xff]
      %v5011 = vld [vmem:[#allocation4 + $0x158] sm:$0xff]
      %v5012 = vld [vmem:[#allocation4 + $0x168] sm:$0xff]
      %v5013 = vld [vmem:[#allocation4 + $0x170] sm:$0xff]
      %v5014 = vld [vmem:[#allocation4 + $0x1] sm:$0xff]
      %v5015 = vld [vmem:[#allocation4 + $0x9] sm:$0xff]
      %v5016 = vld [vmem:[#allocation4 + $0x19] sm:$0xff]
      %v5017 = vld [vmem:[#allocation4 + $0x21] sm:$0xff]
      %v5018 = vld [vmem:[#allocation4 + $0x31] sm:$0xff]
      %v5019 = vld [vmem:[#allocation4 + $0x39] sm:$0xff]
      %v5020 = vld [vmem:[#allocation4 + $0x49] sm:$0xff]
      %v5021 = vld [vmem:[#allocation4 + $0x51] sm:$0xff]
      %v5022 = vld [vmem:[#allocation4 + $0x61] sm:$0xff]
      %v5023 = vld [vmem:[#allocation4 + $0x69] sm:$0xff]
      %v5024 = vld [vmem:[#allocation4 + $0x79] sm:$0xff]
      %v5025 = vld [vmem:[#allocation4 + $0x81] sm:$0xff]
      %v5026 = vld [vmem:[#allocation4 + $0x91] sm:$0xff]
      %v5027 = vld [vmem:[#allocation4 + $0x99] sm:$0xff]
      %v5028 = vld [vmem:[#allocation4 + $0xa9] sm:$0xff]
      %v5029 = vld [vmem:[#allocation4 + $0xb1] sm:$0xff]
      %v5030 = vld [vmem:[#allocation4 + $0xc1] sm:$0xff]
      %v5031 = vld [vmem:[#allocation4 + $0xc9] sm:$0xff]
      %v5032 = vld [vmem:[#allocation4 + $0xd9] sm:$0xff]
      %v5033 = vld [vmem:[#allocation4 + $0xe1] sm:$0xff]
      %v5034 = vld [vmem:[#allocation4 + $0xf1] sm:$0xff]
      %v5035 = vld [vmem:[#allocation4 + $0xf9] sm:$0xff]
      %v5036 = vld [vmem:[#allocation4 + $0x109] sm:$0xff]
      %v5037 = vld [vmem:[#allocation4 + $0x111] sm:$0xff]
      %v5038 = vld [vmem:[#allocation4 + $0x121] sm:$0xff]
      %v5039 = vld [vmem:[#allocation4 + $0x129] sm:$0xff]
      %v5040 = vld [vmem:[#allocation4 + $0x139] sm:$0xff]
      %v5041 = vld [vmem:[#allocation4 + $0x141] sm:$0xff]
      %v5042 = vld [vmem:[#allocation4 + $0x151] sm:$0xff]
      %v5043 = vld [vmem:[#allocation4 + $0x159] sm:$0xff]
      %v5044 = vld [vmem:[#allocation4 + $0x169] sm:$0xff]
      %v5045 = vld [vmem:[#allocation4 + $0x171] sm:$0xff]
      %v5046 = vld [vmem:[#allocation4 + $0x2] sm:$0xff]
      %v5047 = vld [vmem:[#allocation4 + $0xa] sm:$0xff]
      %v5048 = vld [vmem:[#allocation4 + $0x1a] sm:$0xff]
      %v5049 = vld [vmem:[#allocation4 + $0x22] sm:$0xff]
      %v5050 = vld [vmem:[#allocation4 + $0x32] sm:$0xff]
      %v5051 = vld [vmem:[#allocation4 + $0x3a] sm:$0xff]
      %v5052 = vld [vmem:[#allocation4 + $0x4a] sm:$0xff]
      %v5053 = vld [vmem:[#allocation4 + $0x52] sm:$0xff]
      %v5054 = vld [vmem:[#allocation4 + $0x62] sm:$0xff]
      %v5055 = vld [vmem:[#allocation4 + $0x6a] sm:$0xff]
      %v5056 = vld [vmem:[#allocation4 + $0x7a] sm:$0xff]
      %v5057 = vld [vmem:[#allocation4 + $0x82] sm:$0xff]
      %v5058 = vld [vmem:[#allocation4 + $0x92] sm:$0xff]
      %v5059 = vld [vmem:[#allocation4 + $0x9a] sm:$0xff]
      %v5060 = vld [vmem:[#allocation4 + $0xaa] sm:$0xff]
      %v5061 = vld [vmem:[#allocation4 + $0xb2] sm:$0xff]
      %v5062 = vld [vmem:[#allocation4 + $0xc2] sm:$0xff]
      %v5063 = vld [vmem:[#allocation4 + $0xca] sm:$0xff]
      %v5064 = vld [vmem:[#allocation4 + $0xda] sm:$0xff]
      %v5065 = vld [vmem:[#allocation4 + $0xe2] sm:$0xff]
      %v5066 = vld [vmem:[#allocation4 + $0xf2] sm:$0xff]
      %v5067 = vld [vmem:[#allocation4 + $0xfa] sm:$0xff]
      %v5068 = vld [vmem:[#allocation4 + $0x10a] sm:$0xff]
      %v5069 = vld [vmem:[#allocation4 + $0x112] sm:$0xff]
      %v5070 = vld [vmem:[#allocation4 + $0x122] sm:$0xff]
      %v5071 = vld [vmem:[#allocation4 + $0x12a] sm:$0xff]
      %v5072 = vld [vmem:[#allocation4 + $0x13a] sm:$0xff]
      %v5073 = vld [vmem:[#allocation4 + $0x142] sm:$0xff]
      %v5074 = vld [vmem:[#allocation4 + $0x152] sm:$0xff]
      %v5075 = vld [vmem:[#allocation4 + $0x15a] sm:$0xff]
      %v5076 = vld [vmem:[#allocation4 + $0x16a] sm:$0xff]
      %v5077 = vld [vmem:[#allocation4 + $0x172] sm:$0xff]
      %v5078 = vld [vmem:[%s4927] sm:$0xff]
      %v5079 = vld [vmem:[%s4927 + $0x8] sm:$0xff]
      %v5080 = vld [vmem:[%s4927 + $0x18] sm:$0xff]
      %v5081 = vld [vmem:[%s4927 + $0x20] sm:$0xff]
      %v5082 = vld [vmem:[%s4927 + $0x30] sm:$0xff]
      %v5083 = vld [vmem:[%s4927 + $0x38] sm:$0xff]
      %v5084 = vld [vmem:[%s4927 + $0x48] sm:$0xff]
      %v5085 = vld [vmem:[%s4927 + $0x50] sm:$0xff]
      %v5086 = vld [vmem:[%s4927 + $0x60] sm:$0xff]
      %v5087 = vld [vmem:[%s4927 + $0x68] sm:$0xff]
      %v5088 = vld [vmem:[%s4927 + $0x78] sm:$0xff]
      %v5089 = vld [vmem:[%s4927 + $0x80] sm:$0xff]
      %v5090 = vld [vmem:[%s4927 + $0x90] sm:$0xff]
      %v5091 = vld [vmem:[%s4927 + $0x98] sm:$0xff]
      %v5092 = vld [vmem:[%s4927 + $0xa8] sm:$0xff]
      %v5093 = vld [vmem:[%s4927 + $0xb0] sm:$0xff]
      %v5094 = vld [vmem:[%s4927 + $0xc0] sm:$0xff]
      %v5095 = vld [vmem:[%s4927 + $0xc8] sm:$0xff]
      %v5096 = vld [vmem:[%s4927 + $0xd8] sm:$0xff]
      %v5097 = vld [vmem:[%s4927 + $0xe0] sm:$0xff]
      %v5098 = vld [vmem:[%s4927 + $0xf0] sm:$0xff]
      %v5099 = vld [vmem:[%s4927 + $0xf8] sm:$0xff]
      %v5100 = vld [vmem:[%s4927 + $0x108] sm:$0xff]
      %v5101 = vld [vmem:[%s4927 + $0x110] sm:$0xff]
      %v5102 = vld [vmem:[%s4927 + $0x120] sm:$0xff]
      %v5103 = vld [vmem:[%s4927 + $0x128] sm:$0xff]
      %v5104 = vld [vmem:[%s4927 + $0x138] sm:$0xff]
      %v5105 = vld [vmem:[%s4927 + $0x140] sm:$0xff]
      %v5106 = vld [vmem:[%s4927 + $0x150] sm:$0xff]
      %v5107 = vld [vmem:[%s4927 + $0x158] sm:$0xff]
      %v5108 = vld [vmem:[%s4927 + $0x168] sm:$0xff]
      %v5109 = vld [vmem:[%s4927 + $0x170] sm:$0xff]
      %v5110 = vld [vmem:[%s4927 + $0x1] sm:$0xff]
      %v5111 = vld [vmem:[%s4927 + $0x9] sm:$0xff]
      %v5112 = vld [vmem:[%s4927 + $0x19] sm:$0xff]
      %v5113 = vld [vmem:[%s4927 + $0x21] sm:$0xff]
      %v5114 = vld [vmem:[%s4927 + $0x31] sm:$0xff]
      %v5115 = vld [vmem:[%s4927 + $0x39] sm:$0xff]
      %v5116 = vld [vmem:[%s4927 + $0x49] sm:$0xff]
      %v5117 = vld [vmem:[%s4927 + $0x51] sm:$0xff]
      %v5118 = vld [vmem:[%s4927 + $0x61] sm:$0xff]
      %v5119 = vld [vmem:[%s4927 + $0x69] sm:$0xff]
      %v5120 = vld [vmem:[%s4927 + $0x79] sm:$0xff]
      %v5121 = vld [vmem:[%s4927 + $0x81] sm:$0xff]
      %v5122 = vld [vmem:[%s4927 + $0x91] sm:$0xff]
      %v5123 = vld [vmem:[%s4927 + $0x99] sm:$0xff]
      %v5124 = vld [vmem:[%s4927 + $0xa9] sm:$0xff]
      %v5125 = vld [vmem:[%s4927 + $0xb1] sm:$0xff]
      %v5126 = vld [vmem:[%s4927 + $0xc1] sm:$0xff]
      %v5127 = vld [vmem:[%s4927 + $0xc9] sm:$0xff]
      %v5128 = vld [vmem:[%s4927 + $0xd9] sm:$0xff]
      %v5129 = vld [vmem:[%s4927 + $0xe1] sm:$0xff]
      %v5130 = vld [vmem:[%s4927 + $0xf1] sm:$0xff]
      %v5131 = vld [vmem:[%s4927 + $0xf9] sm:$0xff]
      %v5132 = vld [vmem:[%s4927 + $0x109] sm:$0xff]
      %v5133 = vld [vmem:[%s4927 + $0x111] sm:$0xff]
      %v5134 = vld [vmem:[%s4927 + $0x121] sm:$0xff]
      %v5135 = vld [vmem:[%s4927 + $0x129] sm:$0xff]
      %v5136 = vld [vmem:[%s4927 + $0x139] sm:$0xff]
      %v5137 = vld [vmem:[%s4927 + $0x141] sm:$0xff]
      %v5138 = vld [vmem:[%s4927 + $0x151] sm:$0xff]
      %v5139 = vld [vmem:[%s4927 + $0x159] sm:$0xff]
      %v5140 = vld [vmem:[%s4927 + $0x169] sm:$0xff]
      %v5141 = vld [vmem:[%s4927 + $0x171] sm:$0xff]
      %v5142 = vld [vmem:[%s4927 + $0x2] sm:$0xff]
      %v5143 = vld [vmem:[%s4927 + $0xa] sm:$0xff]
      %v5144 = vld [vmem:[%s4927 + $0x1a] sm:$0xff]
      %v5145 = vld [vmem:[%s4927 + $0x22] sm:$0xff]
      %v5146 = vld [vmem:[%s4927 + $0x32] sm:$0xff]
      %v5147 = vld [vmem:[%s4927 + $0x3a] sm:$0xff]
      %v5148 = vld [vmem:[%s4927 + $0x4a] sm:$0xff]
      %v5149 = vld [vmem:[%s4927 + $0x52] sm:$0xff]
      %v5150 = vld [vmem:[%s4927 + $0x62] sm:$0xff]
      %v5151 = vld [vmem:[%s4927 + $0x6a] sm:$0xff]
      %v5152 = vld [vmem:[%s4927 + $0x7a] sm:$0xff]
      %v5153 = vld [vmem:[%s4927 + $0x82] sm:$0xff]
      %v5154 = vld [vmem:[%s4927 + $0x92] sm:$0xff]
      %v5155 = vld [vmem:[%s4927 + $0x9a] sm:$0xff]
      %v5156 = vld [vmem:[%s4927 + $0xaa] sm:$0xff]
      %v5157 = vld [vmem:[%s4927 + $0xb2] sm:$0xff]
      %v5158 = vld [vmem:[%s4927 + $0xc2] sm:$0xff]
      %v5159 = vld [vmem:[%s4927 + $0xca] sm:$0xff]
      %v5160 = vld [vmem:[%s4927 + $0xda] sm:$0xff]
      %v5161 = vld [vmem:[%s4927 + $0xe2] sm:$0xff]
      %v5162 = vld [vmem:[%s4927 + $0xf2] sm:$0xff]
      %v5163 = vld [vmem:[%s4927 + $0xfa] sm:$0xff]
      %v5164 = vld [vmem:[%s4927 + $0x10a] sm:$0xff]
      %v5165 = vld [vmem:[%s4927 + $0x112] sm:$0xff]
      %v5166 = vld [vmem:[%s4927 + $0x122] sm:$0xff]
      %v5167 = vld [vmem:[%s4927 + $0x12a] sm:$0xff]
      %v5168 = vld [vmem:[%s4927 + $0x13a] sm:$0xff]
      %v5169 = vld [vmem:[%s4927 + $0x142] sm:$0xff]
      %v5170 = vld [vmem:[%s4927 + $0x152] sm:$0xff]
      %v5171 = vld [vmem:[%s4927 + $0x15a] sm:$0xff]
      %v5172 = vld [vmem:[%s4927 + $0x16a] sm:$0xff]
      %v5173 = vld [vmem:[%s4927 + $0x172] sm:$0xff]
      %s5174 = scalar_lea.vmem [#allocation4], 48
      %v5175 = vld [vmem:[%s5174] sm:$0xff]
      %v5176 = vld [vmem:[%s5174 + $0x8] sm:$0xff]
      %v5177 = vld [vmem:[%s5174 + $0x18] sm:$0xff]
      %v5178 = vld [vmem:[%s5174 + $0x20] sm:$0xff]
      %v5179 = vld [vmem:[%s5174 + $0x30] sm:$0xff]
      %v5180 = vld [vmem:[%s5174 + $0x38] sm:$0xff]
      %v5181 = vld [vmem:[%s5174 + $0x48] sm:$0xff]
      %v5182 = vld [vmem:[%s5174 + $0x50] sm:$0xff]
      %v5183 = vld [vmem:[%s5174 + $0x60] sm:$0xff]
      %v5184 = vld [vmem:[%s5174 + $0x68] sm:$0xff]
      %v5185 = vld [vmem:[%s5174 + $0x78] sm:$0xff]
      %v5186 = vld [vmem:[%s5174 + $0x80] sm:$0xff]
      %v5187 = vld [vmem:[%s5174 + $0x90] sm:$0xff]
      %v5188 = vld [vmem:[%s5174 + $0x98] sm:$0xff]
      %v5189 = vld [vmem:[%s5174 + $0xa8] sm:$0xff]
      %v5190 = vld [vmem:[%s5174 + $0xb0] sm:$0xff]
      %v5191 = vld [vmem:[%s5174 + $0xc0] sm:$0xff]
      %v5192 = vld [vmem:[%s5174 + $0xc8] sm:$0xff]
      %v5193 = vld [vmem:[%s5174 + $0xd8] sm:$0xff]
      %v5194 = vld [vmem:[%s5174 + $0xe0] sm:$0xff]
      %v5195 = vld [vmem:[%s5174 + $0xf0] sm:$0xff]
      %v5196 = vld [vmem:[%s5174 + $0xf8] sm:$0xff]
      %v5197 = vld [vmem:[%s5174 + $0x108] sm:$0xff]
      %v5198 = vld [vmem:[%s5174 + $0x110] sm:$0xff]
      %v5199 = vld [vmem:[%s5174 + $0x120] sm:$0xff]
      %v5200 = vld [vmem:[%s5174 + $0x128] sm:$0xff]
      %v5201 = vld [vmem:[%s5174 + $0x138] sm:$0xff]
      %v5202 = vld [vmem:[%s5174 + $0x140] sm:$0xff]
      %v5203 = vld [vmem:[%s5174 + $0x150] sm:$0xff]
      %v5204 = vld [vmem:[%s5174 + $0x158] sm:$0xff]
      %v5205 = vld [vmem:[%s5174 + $0x168] sm:$0xff]
      %v5206 = vld [vmem:[%s5174 + $0x170] sm:$0xff]
      %v5207 = vld [vmem:[%s5174 + $0x1] sm:$0xff]
      %v5208 = vld [vmem:[%s5174 + $0x9] sm:$0xff]
      %v5209 = vld [vmem:[%s5174 + $0x19] sm:$0xff]
      %v5210 = vld [vmem:[%s5174 + $0x21] sm:$0xff]
      %v5211 = vld [vmem:[%s5174 + $0x31] sm:$0xff]
      %v5212 = vld [vmem:[%s5174 + $0x39] sm:$0xff]
      %v5213 = vld [vmem:[%s5174 + $0x49] sm:$0xff]
      %v5214 = vld [vmem:[%s5174 + $0x51] sm:$0xff]
      %v5215 = vld [vmem:[%s5174 + $0x61] sm:$0xff]
      %v5216 = vld [vmem:[%s5174 + $0x69] sm:$0xff]
      %v5217 = vld [vmem:[%s5174 + $0x79] sm:$0xff]
      %v5218 = vld [vmem:[%s5174 + $0x81] sm:$0xff]
      %v5219 = vld [vmem:[%s5174 + $0x91] sm:$0xff]
      %v5220 = vld [vmem:[%s5174 + $0x99] sm:$0xff]
      %v5221 = vld [vmem:[%s5174 + $0xa9] sm:$0xff]
      %v5222 = vld [vmem:[%s5174 + $0xb1] sm:$0xff]
      %v5223 = vld [vmem:[%s5174 + $0xc1] sm:$0xff]
      %v5224 = vld [vmem:[%s5174 + $0xc9] sm:$0xff]
      %v5225 = vld [vmem:[%s5174 + $0xd9] sm:$0xff]
      %v5226 = vld [vmem:[%s5174 + $0xe1] sm:$0xff]
      %v5227 = vld [vmem:[%s5174 + $0xf1] sm:$0xff]
      %v5228 = vld [vmem:[%s5174 + $0xf9] sm:$0xff]
      %v5229 = vld [vmem:[%s5174 + $0x109] sm:$0xff]
      %v5230 = vld [vmem:[%s5174 + $0x111] sm:$0xff]
      %v5231 = vld [vmem:[%s5174 + $0x121] sm:$0xff]
      %v5232 = vld [vmem:[%s5174 + $0x129] sm:$0xff]
      %v5233 = vld [vmem:[%s5174 + $0x139] sm:$0xff]
      %v5234 = vld [vmem:[%s5174 + $0x141] sm:$0xff]
      %v5235 = vld [vmem:[%s5174 + $0x151] sm:$0xff]
      %v5236 = vld [vmem:[%s5174 + $0x159] sm:$0xff]
      %v5237 = vld [vmem:[%s5174 + $0x169] sm:$0xff]
      %v5238 = vld [vmem:[%s5174 + $0x171] sm:$0xff]
      %v5239 = vld [vmem:[%s5174 + $0x2] sm:$0xff]
      %v5240 = vld [vmem:[%s5174 + $0xa] sm:$0xff]
      %v5241 = vld [vmem:[%s5174 + $0x1a] sm:$0xff]
      %v5242 = vld [vmem:[%s5174 + $0x22] sm:$0xff]
      %v5243 = vld [vmem:[%s5174 + $0x32] sm:$0xff]
      %v5244 = vld [vmem:[%s5174 + $0x3a] sm:$0xff]
      %v5245 = vld [vmem:[%s5174 + $0x4a] sm:$0xff]
      %v5246 = vld [vmem:[%s5174 + $0x52] sm:$0xff]
      %v5247 = vld [vmem:[%s5174 + $0x62] sm:$0xff]
      %v5248 = vld [vmem:[%s5174 + $0x6a] sm:$0xff]
      %v5249 = vld [vmem:[%s5174 + $0x7a] sm:$0xff]
      %v5250 = vld [vmem:[%s5174 + $0x82] sm:$0xff]
      %v5251 = vld [vmem:[%s5174 + $0x92] sm:$0xff]
      %v5252 = vld [vmem:[%s5174 + $0x9a] sm:$0xff]
      %v5253 = vld [vmem:[%s5174 + $0xaa] sm:$0xff]
      %v5254 = vld [vmem:[%s5174 + $0xb2] sm:$0xff]
      %v5255 = vld [vmem:[%s5174 + $0xc2] sm:$0xff]
      %v5256 = vld [vmem:[%s5174 + $0xca] sm:$0xff]
      %v5257 = vld [vmem:[%s5174 + $0xda] sm:$0xff]
      %v5258 = vld [vmem:[%s5174 + $0xe2] sm:$0xff]
      %v5259 = vld [vmem:[%s5174 + $0xf2] sm:$0xff]
      %v5260 = vld [vmem:[%s5174 + $0xfa] sm:$0xff]
      %v5261 = vld [vmem:[%s5174 + $0x10a] sm:$0xff]
      %v5262 = vld [vmem:[%s5174 + $0x112] sm:$0xff]
      %v5263 = vld [vmem:[%s5174 + $0x122] sm:$0xff]
      %v5264 = vld [vmem:[%s5174 + $0x12a] sm:$0xff]
      %v5265 = vld [vmem:[%s5174 + $0x13a] sm:$0xff]
      %v5266 = vld [vmem:[%s5174 + $0x142] sm:$0xff]
      %v5267 = vld [vmem:[%s5174 + $0x152] sm:$0xff]
      %v5268 = vld [vmem:[%s5174 + $0x15a] sm:$0xff]
      %v5269 = vld [vmem:[%s5174 + $0x16a] sm:$0xff]
      %v5270 = vld [vmem:[%s5174 + $0x172] sm:$0xff]
      %5303 = vrot.lane.b32.xlu0 %v5014, 64
      %v5304 = vpop.permute.xlu0 %5303
      %5305 = vrot.lane.b32.xlu0 %v5015, 64
      %v5306 = vpop.permute.xlu0 %5305
      %5307 = vrot.lane.b32.xlu0 %v5016, 64
      %v5308 = vpop.permute.xlu0 %5307
      %5309 = vrot.lane.b32.xlu0 %v5017, 64
      %v5310 = vpop.permute.xlu0 %5309
      %5311 = vrot.lane.b32.xlu0 %v5018, 64
      %v5312 = vpop.permute.xlu0 %5311
      %5313 = vrot.lane.b32.xlu0 %v5019, 64
      %v5314 = vpop.permute.xlu0 %5313
      %5315 = vrot.lane.b32.xlu0 %v5020, 64
      %v5316 = vpop.permute.xlu0 %5315
      %5317 = vrot.lane.b32.xlu0 %v5021, 64
      %v5318 = vpop.permute.xlu0 %5317
      %5319 = vrot.lane.b32.xlu0 %v5022, 64
      %v5320 = vpop.permute.xlu0 %5319
      %5321 = vrot.lane.b32.xlu0 %v5023, 64
      %v5322 = vpop.permute.xlu0 %5321
      %5323 = vrot.lane.b32.xlu0 %v5024, 64
      %v5324 = vpop.permute.xlu0 %5323
      %5325 = vrot.lane.b32.xlu0 %v5025, 64
      %v5326 = vpop.permute.xlu0 %5325
      %5327 = vrot.lane.b32.xlu0 %v5026, 64
      %v5328 = vpop.permute.xlu0 %5327
      %5329 = vrot.lane.b32.xlu0 %v5027, 64
      %v5330 = vpop.permute.xlu0 %5329
      %5331 = vrot.lane.b32.xlu0 %v5028, 64
      %v5332 = vpop.permute.xlu0 %5331
      %5333 = vrot.lane.b32.xlu0 %v5029, 64
      %v5334 = vpop.permute.xlu0 %5333
      %5335 = vrot.lane.b32.xlu0 %v5030, 64
      %v5336 = vpop.permute.xlu0 %5335
      %5337 = vrot.lane.b32.xlu0 %v5031, 64
      %v5338 = vpop.permute.xlu0 %5337
      %5339 = vrot.lane.b32.xlu0 %v5032, 64
      %v5340 = vpop.permute.xlu0 %5339
      %5341 = vrot.lane.b32.xlu0 %v5033, 64
      %v5342 = vpop.permute.xlu0 %5341
      %5343 = vrot.lane.b32.xlu0 %v5034, 64
      %v5344 = vpop.permute.xlu0 %5343
      %5345 = vrot.lane.b32.xlu0 %v5035, 64
      %v5346 = vpop.permute.xlu0 %5345
      %5347 = vrot.lane.b32.xlu0 %v5036, 64
      %v5348 = vpop.permute.xlu0 %5347
      %5349 = vrot.lane.b32.xlu0 %v5037, 64
      %v5350 = vpop.permute.xlu0 %5349
      %5351 = vrot.lane.b32.xlu0 %v5038, 64
      %v5352 = vpop.permute.xlu0 %5351
      %5353 = vrot.lane.b32.xlu0 %v5039, 64
      %v5354 = vpop.permute.xlu0 %5353
      %5355 = vrot.lane.b32.xlu0 %v5040, 64
      %v5356 = vpop.permute.xlu0 %5355
      %5357 = vrot.lane.b32.xlu0 %v5041, 64
      %v5358 = vpop.permute.xlu0 %5357
      %5359 = vrot.lane.b32.xlu0 %v5042, 64
      %v5360 = vpop.permute.xlu0 %5359
      %5361 = vrot.lane.b32.xlu0 %v5043, 64
      %v5362 = vpop.permute.xlu0 %5361
      %5363 = vrot.lane.b32.xlu0 %v5044, 64
      %v5364 = vpop.permute.xlu0 %5363
      %5365 = vrot.lane.b32.xlu0 %v5045, 64
      %v5366 = vpop.permute.xlu0 %5365
      %5431 = vrot.lane.b32.xlu0 %v5078, 64
      %v5432 = vpop.permute.xlu0 %5431
      %5433 = vrot.lane.b32.xlu0 %v5079, 64
      %v5434 = vpop.permute.xlu0 %5433
      %5435 = vrot.lane.b32.xlu0 %v5080, 64
      %v5436 = vpop.permute.xlu0 %5435
      %5437 = vrot.lane.b32.xlu0 %v5081, 64
      %v5438 = vpop.permute.xlu0 %5437
      %5439 = vrot.lane.b32.xlu0 %v5082, 64
      %v5440 = vpop.permute.xlu0 %5439
      %5441 = vrot.lane.b32.xlu0 %v5083, 64
      %v5442 = vpop.permute.xlu0 %5441
      %5443 = vrot.lane.b32.xlu0 %v5084, 64
      %v5444 = vpop.permute.xlu0 %5443
      %5445 = vrot.lane.b32.xlu0 %v5085, 64
      %v5446 = vpop.permute.xlu0 %5445
      %5447 = vrot.lane.b32.xlu0 %v5086, 64
      %v5448 = vpop.permute.xlu0 %5447
      %5449 = vrot.lane.b32.xlu0 %v5087, 64
      %v5450 = vpop.permute.xlu0 %5449
      %5451 = vrot.lane.b32.xlu0 %v5088, 64
      %v5452 = vpop.permute.xlu0 %5451
      %5453 = vrot.lane.b32.xlu0 %v5089, 64
      %v5454 = vpop.permute.xlu0 %5453
      %5455 = vrot.lane.b32.xlu0 %v5090, 64
      %v5456 = vpop.permute.xlu0 %5455
      %5457 = vrot.lane.b32.xlu0 %v5091, 64
      %v5458 = vpop.permute.xlu0 %5457
      %5459 = vrot.lane.b32.xlu0 %v5092, 64
      %v5460 = vpop.permute.xlu0 %5459
      %5461 = vrot.lane.b32.xlu0 %v5093, 64
      %v5462 = vpop.permute.xlu0 %5461
      %5463 = vrot.lane.b32.xlu0 %v5094, 64
      %v5464 = vpop.permute.xlu0 %5463
      %5465 = vrot.lane.b32.xlu0 %v5095, 64
      %v5466 = vpop.permute.xlu0 %5465
      %5467 = vrot.lane.b32.xlu0 %v5096, 64
      %v5468 = vpop.permute.xlu0 %5467
      %5469 = vrot.lane.b32.xlu0 %v5097, 64
      %v5470 = vpop.permute.xlu0 %5469
      %5471 = vrot.lane.b32.xlu0 %v5098, 64
      %v5472 = vpop.permute.xlu0 %5471
      %5473 = vrot.lane.b32.xlu0 %v5099, 64
      %v5474 = vpop.permute.xlu0 %5473
      %5475 = vrot.lane.b32.xlu0 %v5100, 64
      %v5476 = vpop.permute.xlu0 %5475
      %5477 = vrot.lane.b32.xlu0 %v5101, 64
      %v5478 = vpop.permute.xlu0 %5477
      %5479 = vrot.lane.b32.xlu0 %v5102, 64
      %v5480 = vpop.permute.xlu0 %5479
      %5481 = vrot.lane.b32.xlu0 %v5103, 64
      %v5482 = vpop.permute.xlu0 %5481
      %5483 = vrot.lane.b32.xlu0 %v5104, 64
      %v5484 = vpop.permute.xlu0 %5483
      %5485 = vrot.lane.b32.xlu0 %v5105, 64
      %v5486 = vpop.permute.xlu0 %5485
      %5487 = vrot.lane.b32.xlu0 %v5106, 64
      %v5488 = vpop.permute.xlu0 %5487
      %5489 = vrot.lane.b32.xlu0 %v5107, 64
      %v5490 = vpop.permute.xlu0 %5489
      %5491 = vrot.lane.b32.xlu0 %v5108, 64
      %v5492 = vpop.permute.xlu0 %5491
      %5493 = vrot.lane.b32.xlu0 %v5109, 64
      %v5494 = vpop.permute.xlu0 %5493
      %5559 = vrot.lane.b32.xlu0 %v5142, 64
      %v5560 = vpop.permute.xlu0 %5559
      %5561 = vrot.lane.b32.xlu0 %v5143, 64
      %v5562 = vpop.permute.xlu0 %5561
      %5563 = vrot.lane.b32.xlu0 %v5144, 64
      %v5564 = vpop.permute.xlu0 %5563
      %5565 = vrot.lane.b32.xlu0 %v5145, 64
      %v5566 = vpop.permute.xlu0 %5565
      %5567 = vrot.lane.b32.xlu0 %v5146, 64
      %v5568 = vpop.permute.xlu0 %5567
      %5569 = vrot.lane.b32.xlu0 %v5147, 64
      %v5570 = vpop.permute.xlu0 %5569
      %5571 = vrot.lane.b32.xlu0 %v5148, 64
      %v5572 = vpop.permute.xlu0 %5571
      %5573 = vrot.lane.b32.xlu0 %v5149, 64
      %v5574 = vpop.permute.xlu0 %5573
      %5575 = vrot.lane.b32.xlu0 %v5150, 64
      %v5576 = vpop.permute.xlu0 %5575
      %5577 = vrot.lane.b32.xlu0 %v5151, 64
      %v5578 = vpop.permute.xlu0 %5577
      %5579 = vrot.lane.b32.xlu0 %v5152, 64
      %v5580 = vpop.permute.xlu0 %5579
      %5581 = vrot.lane.b32.xlu0 %v5153, 64
      %v5582 = vpop.permute.xlu0 %5581
      %5583 = vrot.lane.b32.xlu0 %v5154, 64
      %v5584 = vpop.permute.xlu0 %5583
      %5585 = vrot.lane.b32.xlu0 %v5155, 64
      %v5586 = vpop.permute.xlu0 %5585
      %5587 = vrot.lane.b32.xlu0 %v5156, 64
      %v5588 = vpop.permute.xlu0 %5587
      %5589 = vrot.lane.b32.xlu0 %v5157, 64
      %v5590 = vpop.permute.xlu0 %5589
      %5591 = vrot.lane.b32.xlu0 %v5158, 64
      %v5592 = vpop.permute.xlu0 %5591
      %5593 = vrot.lane.b32.xlu0 %v5159, 64
      %v5594 = vpop.permute.xlu0 %5593
      %5595 = vrot.lane.b32.xlu0 %v5160, 64
      %v5596 = vpop.permute.xlu0 %5595
      %5597 = vrot.lane.b32.xlu0 %v5161, 64
      %v5598 = vpop.permute.xlu0 %5597
      %5599 = vrot.lane.b32.xlu0 %v5162, 64
      %v5600 = vpop.permute.xlu0 %5599
      %5601 = vrot.lane.b32.xlu0 %v5163, 64
      %v5602 = vpop.permute.xlu0 %5601
      %5603 = vrot.lane.b32.xlu0 %v5164, 64
      %v5604 = vpop.permute.xlu0 %5603
      %5605 = vrot.lane.b32.xlu0 %v5165, 64
      %v5606 = vpop.permute.xlu0 %5605
      %5607 = vrot.lane.b32.xlu0 %v5166, 64
      %v5608 = vpop.permute.xlu0 %5607
      %5609 = vrot.lane.b32.xlu0 %v5167, 64
      %v5610 = vpop.permute.xlu0 %5609
      %5611 = vrot.lane.b32.xlu0 %v5168, 64
      %v5612 = vpop.permute.xlu0 %5611
      %5613 = vrot.lane.b32.xlu0 %v5169, 64
      %v5614 = vpop.permute.xlu0 %5613
      %5615 = vrot.lane.b32.xlu0 %v5170, 64
      %v5616 = vpop.permute.xlu0 %5615
      %5617 = vrot.lane.b32.xlu0 %v5171, 64
      %v5618 = vpop.permute.xlu0 %5617
      %5619 = vrot.lane.b32.xlu0 %v5172, 64
      %v5620 = vpop.permute.xlu0 %5619
      %5621 = vrot.lane.b32.xlu0 %v5173, 64
      %v5622 = vpop.permute.xlu0 %5621
      %5687 = vrot.lane.b32.xlu0 %v5207, 64
      %v5688 = vpop.permute.xlu0 %5687
      %5689 = vrot.lane.b32.xlu0 %v5208, 64
      %v5690 = vpop.permute.xlu0 %5689
      %5691 = vrot.lane.b32.xlu0 %v5209, 64
      %v5692 = vpop.permute.xlu0 %5691
      %5693 = vrot.lane.b32.xlu0 %v5210, 64
      %v5694 = vpop.permute.xlu0 %5693
      %5695 = vrot.lane.b32.xlu0 %v5211, 64
      %v5696 = vpop.permute.xlu0 %5695
      %5697 = vrot.lane.b32.xlu0 %v5212, 64
      %v5698 = vpop.permute.xlu0 %5697
      %5699 = vrot.lane.b32.xlu0 %v5213, 64
      %v5700 = vpop.permute.xlu0 %5699
      %5701 = vrot.lane.b32.xlu0 %v5214, 64
      %v5702 = vpop.permute.xlu0 %5701
      %5703 = vrot.lane.b32.xlu0 %v5215, 64
      %v5704 = vpop.permute.xlu0 %5703
      %5705 = vrot.lane.b32.xlu0 %v5216, 64
      %v5706 = vpop.permute.xlu0 %5705
      %5707 = vrot.lane.b32.xlu0 %v5217, 64
      %v5708 = vpop.permute.xlu0 %5707
      %5709 = vrot.lane.b32.xlu0 %v5218, 64
      %v5710 = vpop.permute.xlu0 %5709
      %5711 = vrot.lane.b32.xlu0 %v5219, 64
      %v5712 = vpop.permute.xlu0 %5711
      %5713 = vrot.lane.b32.xlu0 %v5220, 64
      %v5714 = vpop.permute.xlu0 %5713
      %5715 = vrot.lane.b32.xlu0 %v5221, 64
      %v5716 = vpop.permute.xlu0 %5715
      %5717 = vrot.lane.b32.xlu0 %v5222, 64
      %v5718 = vpop.permute.xlu0 %5717
      %5719 = vrot.lane.b32.xlu0 %v5223, 64
      %v5720 = vpop.permute.xlu0 %5719
      %5721 = vrot.lane.b32.xlu0 %v5224, 64
      %v5722 = vpop.permute.xlu0 %5721
      %5723 = vrot.lane.b32.xlu0 %v5225, 64
      %v5724 = vpop.permute.xlu0 %5723
      %5725 = vrot.lane.b32.xlu0 %v5226, 64
      %v5726 = vpop.permute.xlu0 %5725
      %5727 = vrot.lane.b32.xlu0 %v5227, 64
      %v5728 = vpop.permute.xlu0 %5727
      %5729 = vrot.lane.b32.xlu0 %v5228, 64
      %v5730 = vpop.permute.xlu0 %5729
      %5731 = vrot.lane.b32.xlu0 %v5229, 64
      %v5732 = vpop.permute.xlu0 %5731
      %5733 = vrot.lane.b32.xlu0 %v5230, 64
      %v5734 = vpop.permute.xlu0 %5733
      %5735 = vrot.lane.b32.xlu0 %v5231, 64
      %v5736 = vpop.permute.xlu0 %5735
      %5737 = vrot.lane.b32.xlu0 %v5232, 64
      %v5738 = vpop.permute.xlu0 %5737
      %5739 = vrot.lane.b32.xlu0 %v5233, 64
      %v5740 = vpop.permute.xlu0 %5739
      %5741 = vrot.lane.b32.xlu0 %v5234, 64
      %v5742 = vpop.permute.xlu0 %5741
      %5743 = vrot.lane.b32.xlu0 %v5235, 64
      %v5744 = vpop.permute.xlu0 %5743
      %5745 = vrot.lane.b32.xlu0 %v5236, 64
      %v5746 = vpop.permute.xlu0 %5745
      %5747 = vrot.lane.b32.xlu0 %v5237, 64
      %v5748 = vpop.permute.xlu0 %5747
      %5749 = vrot.lane.b32.xlu0 %v5238, 64
      %v5750 = vpop.permute.xlu0 %5749
      %v5783 = vsel %vm446, %v4982, %v5304
      %v5784 = vsel %vm446, %v4983, %v5306
      %v5785 = vsel %vm446, %v4984, %v5308
      %v5786 = vsel %vm446, %v4985, %v5310
      %v5787 = vsel %vm446, %v4986, %v5312
      %v5788 = vsel %vm446, %v4987, %v5314
      %v5789 = vsel %vm446, %v4988, %v5316
      %v5790 = vsel %vm446, %v4989, %v5318
      %v5791 = vsel %vm446, %v4990, %v5320
      %v5792 = vsel %vm446, %v4991, %v5322
      %v5793 = vsel %vm446, %v4992, %v5324
      %v5794 = vsel %vm446, %v4993, %v5326
      %v5795 = vsel %vm446, %v4994, %v5328
      %v5796 = vsel %vm446, %v4995, %v5330
      %v5797 = vsel %vm446, %v4996, %v5332
      %v5798 = vsel %vm446, %v4997, %v5334
      %v5799 = vsel %vm446, %v4998, %v5336
      %v5800 = vsel %vm446, %v4999, %v5338
      %v5801 = vsel %vm446, %v5000, %v5340
      %v5802 = vsel %vm446, %v5001, %v5342
      %v5803 = vsel %vm446, %v5002, %v5344
      %v5804 = vsel %vm446, %v5003, %v5346
      %v5805 = vsel %vm446, %v5004, %v5348
      %v5806 = vsel %vm446, %v5005, %v5350
      %v5807 = vsel %vm446, %v5006, %v5352
      %v5808 = vsel %vm446, %v5007, %v5354
      %v5809 = vsel %vm446, %v5008, %v5356
      %v5810 = vsel %vm446, %v5009, %v5358
      %v5811 = vsel %vm446, %v5010, %v5360
      %v5812 = vsel %vm446, %v5011, %v5362
      %v5813 = vsel %vm446, %v5012, %v5364
      %v5814 = vsel %vm446, %v5013, %v5366
      %v5815 = vsel %vm446, %v5046, %v5432
      %v5816 = vsel %vm446, %v5047, %v5434
      %v5817 = vsel %vm446, %v5048, %v5436
      %v5818 = vsel %vm446, %v5049, %v5438
      %v5819 = vsel %vm446, %v5050, %v5440
      %v5820 = vsel %vm446, %v5051, %v5442
      %v5821 = vsel %vm446, %v5052, %v5444
      %v5822 = vsel %vm446, %v5053, %v5446
      %v5823 = vsel %vm446, %v5054, %v5448
      %v5824 = vsel %vm446, %v5055, %v5450
      %v5825 = vsel %vm446, %v5056, %v5452
      %v5826 = vsel %vm446, %v5057, %v5454
      %v5827 = vsel %vm446, %v5058, %v5456
      %v5828 = vsel %vm446, %v5059, %v5458
      %v5829 = vsel %vm446, %v5060, %v5460
      %v5830 = vsel %vm446, %v5061, %v5462
      %v5831 = vsel %vm446, %v5062, %v5464
      %v5832 = vsel %vm446, %v5063, %v5466
      %v5833 = vsel %vm446, %v5064, %v5468
      %v5834 = vsel %vm446, %v5065, %v5470
      %v5835 = vsel %vm446, %v5066, %v5472
      %v5836 = vsel %vm446, %v5067, %v5474
      %v5837 = vsel %vm446, %v5068, %v5476
      %v5838 = vsel %vm446, %v5069, %v5478
      %v5839 = vsel %vm446, %v5070, %v5480
      %v5840 = vsel %vm446, %v5071, %v5482
      %v5841 = vsel %vm446, %v5072, %v5484
      %v5842 = vsel %vm446, %v5073, %v5486
      %v5843 = vsel %vm446, %v5074, %v5488
      %v5844 = vsel %vm446, %v5075, %v5490
      %v5845 = vsel %vm446, %v5076, %v5492
      %v5846 = vsel %vm446, %v5077, %v5494
      %v5847 = vsel %vm446, %v5110, %v5560
      %v5848 = vsel %vm446, %v5111, %v5562
      %v5849 = vsel %vm446, %v5112, %v5564
      %v5850 = vsel %vm446, %v5113, %v5566
      %v5851 = vsel %vm446, %v5114, %v5568
      %v5852 = vsel %vm446, %v5115, %v5570
      %v5853 = vsel %vm446, %v5116, %v5572
      %v5854 = vsel %vm446, %v5117, %v5574
      %v5855 = vsel %vm446, %v5118, %v5576
      %v5856 = vsel %vm446, %v5119, %v5578
      %v5857 = vsel %vm446, %v5120, %v5580
      %v5858 = vsel %vm446, %v5121, %v5582
      %v5859 = vsel %vm446, %v5122, %v5584
      %v5860 = vsel %vm446, %v5123, %v5586
      %v5861 = vsel %vm446, %v5124, %v5588
      %v5862 = vsel %vm446, %v5125, %v5590
      %v5863 = vsel %vm446, %v5126, %v5592
      %v5864 = vsel %vm446, %v5127, %v5594
      %v5865 = vsel %vm446, %v5128, %v5596
      %v5866 = vsel %vm446, %v5129, %v5598
      %v5867 = vsel %vm446, %v5130, %v5600
      %v5868 = vsel %vm446, %v5131, %v5602
      %v5869 = vsel %vm446, %v5132, %v5604
      %v5870 = vsel %vm446, %v5133, %v5606
      %v5871 = vsel %vm446, %v5134, %v5608
      %v5872 = vsel %vm446, %v5135, %v5610
      %v5873 = vsel %vm446, %v5136, %v5612
      %v5874 = vsel %vm446, %v5137, %v5614
      %v5875 = vsel %vm446, %v5138, %v5616
      %v5876 = vsel %vm446, %v5139, %v5618
      %v5877 = vsel %vm446, %v5140, %v5620
      %v5878 = vsel %vm446, %v5141, %v5622
      %v5879 = vsel %vm446, %v5175, %v5688
      %v5880 = vsel %vm446, %v5176, %v5690
      %v5881 = vsel %vm446, %v5177, %v5692
      %v5882 = vsel %vm446, %v5178, %v5694
      %v5883 = vsel %vm446, %v5179, %v5696
      %v5884 = vsel %vm446, %v5180, %v5698
      %v5885 = vsel %vm446, %v5181, %v5700
      %v5886 = vsel %vm446, %v5182, %v5702
      %v5887 = vsel %vm446, %v5183, %v5704
      %v5888 = vsel %vm446, %v5184, %v5706
      %v5889 = vsel %vm446, %v5185, %v5708
      %v5890 = vsel %vm446, %v5186, %v5710
      %v5891 = vsel %vm446, %v5187, %v5712
      %v5892 = vsel %vm446, %v5188, %v5714
      %v5893 = vsel %vm446, %v5189, %v5716
      %v5894 = vsel %vm446, %v5190, %v5718
      %v5895 = vsel %vm446, %v5191, %v5720
      %v5896 = vsel %vm446, %v5192, %v5722
      %v5897 = vsel %vm446, %v5193, %v5724
      %v5898 = vsel %vm446, %v5194, %v5726
      %v5899 = vsel %vm446, %v5195, %v5728
      %v5900 = vsel %vm446, %v5196, %v5730
      %v5901 = vsel %vm446, %v5197, %v5732
      %v5902 = vsel %vm446, %v5198, %v5734
      %v5903 = vsel %vm446, %v5199, %v5736
      %v5904 = vsel %vm446, %v5200, %v5738
      %v5905 = vsel %vm446, %v5201, %v5740
      %v5906 = vsel %vm446, %v5202, %v5742
      %v5907 = vsel %vm446, %v5203, %v5744
      %v5908 = vsel %vm446, %v5204, %v5746
      %v5909 = vsel %vm446, %v5205, %v5748
      %v5910 = vsel %vm446, %v5206, %v5750
      %v5911 = vpack.c.bf16 %v5784, %v5783
      %v5912 = vpack.c.bf16 %v5816, %v5815
      %v5913 = vpack.c.bf16 %v5848, %v5847
      %v5914 = vpack.c.bf16 %v5880, %v5879
      %v5915 = vpack.c.bf16 %v5240, %v5239
      %v5916 = vpack.c.bf16 %v5786, %v5785
      %v5917 = vpack.c.bf16 %v5818, %v5817
      %v5918 = vpack.c.bf16 %v5850, %v5849
      %v5919 = vpack.c.bf16 %v5882, %v5881
      %v5920 = vpack.c.bf16 %v5242, %v5241
      %v5921 = vpack.c.bf16 %v5788, %v5787
      %v5922 = vpack.c.bf16 %v5820, %v5819
      %v5923 = vpack.c.bf16 %v5852, %v5851
      %v5924 = vpack.c.bf16 %v5884, %v5883
      %v5925 = vpack.c.bf16 %v5244, %v5243
      %v5926 = vpack.c.bf16 %v5790, %v5789
      %v5927 = vpack.c.bf16 %v5822, %v5821
      %v5928 = vpack.c.bf16 %v5854, %v5853
      %v5929 = vpack.c.bf16 %v5886, %v5885
      %v5930 = vpack.c.bf16 %v5246, %v5245
      %v5931 = vpack.c.bf16 %v5792, %v5791
      %v5932 = vpack.c.bf16 %v5824, %v5823
      %v5933 = vpack.c.bf16 %v5856, %v5855
      %v5934 = vpack.c.bf16 %v5888, %v5887
      %v5935 = vpack.c.bf16 %v5248, %v5247
      %v5936 = vpack.c.bf16 %v5794, %v5793
      %v5937 = vpack.c.bf16 %v5826, %v5825
      %v5938 = vpack.c.bf16 %v5858, %v5857
      %v5939 = vpack.c.bf16 %v5890, %v5889
      %v5940 = vpack.c.bf16 %v5250, %v5249
      %v5941 = vpack.c.bf16 %v5796, %v5795
      %v5942 = vpack.c.bf16 %v5828, %v5827
      %v5943 = vpack.c.bf16 %v5860, %v5859
      %v5944 = vpack.c.bf16 %v5892, %v5891
      %v5945 = vpack.c.bf16 %v5252, %v5251
      %v5946 = vpack.c.bf16 %v5798, %v5797
      %v5947 = vpack.c.bf16 %v5830, %v5829
      %v5948 = vpack.c.bf16 %v5862, %v5861
      %v5949 = vpack.c.bf16 %v5894, %v5893
      %v5950 = vpack.c.bf16 %v5254, %v5253
      %v5951 = vpack.c.bf16 %v5800, %v5799
      %v5952 = vpack.c.bf16 %v5832, %v5831
      %v5953 = vpack.c.bf16 %v5864, %v5863
      %v5954 = vpack.c.bf16 %v5896, %v5895
      %v5955 = vpack.c.bf16 %v5256, %v5255
      %v5956 = vpack.c.bf16 %v5802, %v5801
      %v5957 = vpack.c.bf16 %v5834, %v5833
      %v5958 = vpack.c.bf16 %v5866, %v5865
      %v5959 = vpack.c.bf16 %v5898, %v5897
      %v5960 = vpack.c.bf16 %v5258, %v5257
      %v5961 = vpack.c.bf16 %v5804, %v5803
      %v5962 = vpack.c.bf16 %v5836, %v5835
      %v5963 = vpack.c.bf16 %v5868, %v5867
      %v5964 = vpack.c.bf16 %v5900, %v5899
      %v5965 = vpack.c.bf16 %v5260, %v5259
      %v5966 = vpack.c.bf16 %v5806, %v5805
      %v5967 = vpack.c.bf16 %v5838, %v5837
      %v5968 = vpack.c.bf16 %v5870, %v5869
      %v5969 = vpack.c.bf16 %v5902, %v5901
      %v5970 = vpack.c.bf16 %v5262, %v5261
      %v5971 = vpack.c.bf16 %v5808, %v5807
      %v5972 = vpack.c.bf16 %v5840, %v5839
      %v5973 = vpack.c.bf16 %v5872, %v5871
      %v5974 = vpack.c.bf16 %v5904, %v5903
      %v5975 = vpack.c.bf16 %v5264, %v5263
      %v5976 = vpack.c.bf16 %v5810, %v5809
      %v5977 = vpack.c.bf16 %v5842, %v5841
      %v5978 = vpack.c.bf16 %v5874, %v5873
      %v5979 = vpack.c.bf16 %v5906, %v5905
      %v5980 = vpack.c.bf16 %v5266, %v5265
      %v5981 = vpack.c.bf16 %v5812, %v5811
      %v5982 = vpack.c.bf16 %v5844, %v5843
      %v5983 = vpack.c.bf16 %v5876, %v5875
      %v5984 = vpack.c.bf16 %v5908, %v5907
      %v5985 = vpack.c.bf16 %v5268, %v5267
      %v5986 = vpack.c.bf16 %v5814, %v5813
      %v5987 = vpack.c.bf16 %v5846, %v5845
      %v5988 = vpack.c.bf16 %v5878, %v5877
      %v5989 = vpack.c.bf16 %v5910, %v5909
      %v5990 = vpack.c.bf16 %v5270, %v5269
      %v5997 = vunpack.c.l.b16 %v4976
      %v5998 = vunpack.c.h.b16 %v4976
      %v5999 = vunpack.c.l.b16 %v4977
      %v6000 = vunpack.c.h.b16 %v4977
      %v6001 = vunpack.c.l.b16 %v4978
      %v6002 = vunpack.c.l.b16 %v4979
      %v6003 = vunpack.c.h.b16 %v4979
      %v6004 = vunpack.c.l.b16 %v4980
      %v6005 = vunpack.c.h.b16 %v4980
      %v6006 = vunpack.c.l.b16 %v4981
      %v6007 = vpack.c.b16 %v6002, %v5997
      %v6008 = vpack.c.b16 %v6003, %v5998
      %v6009 = vpack.c.b16 %v6004, %v5999
      %v6010 = vpack.c.b16 %v6005, %v6000
      %v6011 = vpack.c.b16 %v6006, %v6001
      %v6017 = vsel %vm446, %v6011, 0
      %v6020 = vsel %vm446, %v5915, 0
      %v6023 = vsel %vm446, %v5920, 0
      %v6026 = vsel %vm446, %v5925, 0
      %v6029 = vsel %vm446, %v5930, 0
      %v6032 = vsel %vm446, %v5935, 0
      %v6035 = vsel %vm446, %v5940, 0
      %v6038 = vsel %vm446, %v5945, 0
      %v6041 = vsel %vm446, %v5950, 0
      %v6044 = vsel %vm446, %v5955, 0
      %v6047 = vsel %vm446, %v5960, 0
      %v6050 = vsel %vm446, %v5965, 0
      %v6053 = vsel %vm446, %v5970, 0
      %v6056 = vsel %vm446, %v5975, 0
      %v6059 = vsel %vm446, %v5980, 0
      %v6062 = vsel %vm446, %v5985, 0
      %v6065 = vsel %vm446, %v5990, 0
      %6067 = vmatprep.subr.bf16.mxu0 %v5912
      %6068 = vmatpush1.bf16.xpose.msra.mxu0 %v5911
      %6069 = vmatprep.subr.bf16.mxu0 %v5917
      %6070 = vmatpush1.bf16.xpose.msra.mxu0 %v5916
      %6071 = vmatprep.subr.bf16.mxu0 %v5922
      %6072 = vmatpush1.bf16.xpose.msra.mxu0 %v5921
      %6073 = vmatprep.subr.bf16.mxu0 %v5927
      %6074 = vmatpush1.bf16.xpose.msra.mxu0 %v5926
      %6075 = vmatprep.subr.bf16.mxu0 %v5932
      %6076 = vmatpush1.bf16.xpose.msra.mxu0 %v5931
      %6077 = vmatprep.subr.bf16.mxu0 %v5937
      %6078 = vmatpush1.bf16.xpose.msra.mxu0 %v5936
      %6079 = vmatprep.subr.bf16.mxu0 %v5942
      %6080 = vmatpush1.bf16.xpose.msra.mxu0 %v5941
      %6081 = vmatprep.subr.bf16.mxu0 %v5947
      %6082 = vmatpush1.bf16.xpose.msra.mxu0 %v5946
      %6083 = vmatprep.subr.bf16.mxu0 %v5952
      %6084 = vmatpush1.bf16.xpose.msra.mxu0 %v5951
      %6085 = vmatprep.subr.bf16.mxu0 %v5957
      %6086 = vmatpush1.bf16.xpose.msra.mxu0 %v5956
      %6087 = vmatprep.subr.bf16.mxu0 %v5962
      %6088 = vmatpush1.bf16.xpose.msra.mxu0 %v5961
      %6089 = vmatprep.subr.bf16.mxu0 %v5967
      %6090 = vmatpush1.bf16.xpose.msra.mxu0 %v5966
      %6091 = vmatprep.subr.bf16.mxu0 %v5972
      %6092 = vmatpush1.bf16.xpose.msra.mxu0 %v5971
      %6093 = vmatprep.subr.bf16.mxu0 %v5977
      %6094 = vmatpush1.bf16.xpose.msra.mxu0 %v5976
      %6095 = vmatprep.subr.bf16.mxu0 %v5982
      %6096 = vmatpush1.bf16.xpose.msra.mxu0 %v5981
      %6097 = vmatprep.subr.bf16.mxu0 %v5987
      %6098 = vmatpush1.bf16.xpose.msra.mxu0 %v5986
      %6099 = vmatprep.mubr.bf16.mxu0 %v6008
      %6100 = vmatmul.mubr.bf16.gmra.mrb[0].mxu0 %v6007
      %v6101 = vpop.f32.mrb[0].mxu0
      %v6102 = vadd.f32 0.0, %v6101
      %v6103 = vpop.f32.mrb[0].mxu0
      %v6104 = vadd.f32 0.0, %v6103
      %v6105 = vpop.f32.mrb[0].mxu0
      %v6106 = vadd.f32 0.0, %v6105
      %v6107 = vpop.f32.mrb[0].mxu0
      %v6108 = vadd.f32 0.0, %v6107
      %6109 = vdwg.mxu0
      %6110 = vmatprep.subr.bf16.mxu0 %v5914
      %6111 = vmatpush1.bf16.xpose.msra.mxu0 %v5913
      %6112 = vmatprep.subr.bf16.mxu0 %v5919
      %6113 = vmatpush1.bf16.xpose.msra.mxu0 %v5918
      %6114 = vmatprep.subr.bf16.mxu0 %v5924
      %6115 = vmatpush1.bf16.xpose.msra.mxu0 %v5923
      %6116 = vmatprep.subr.bf16.mxu0 %v5929
      %6117 = vmatpush1.bf16.xpose.msra.mxu0 %v5928
      %6118 = vmatprep.subr.bf16.mxu0 %v5934
      %6119 = vmatpush1.bf16.xpose.msra.mxu0 %v5933
      %6120 = vmatprep.subr.bf16.mxu0 %v5939
      %6121 = vmatpush1.bf16.xpose.msra.mxu0 %v5938
      %6122 = vmatprep.subr.bf16.mxu0 %v5944
      %6123 = vmatpush1.bf16.xpose.msra.mxu0 %v5943
      %6124 = vmatprep.subr.bf16.mxu0 %v5949
      %6125 = vmatpush1.bf16.xpose.msra.mxu0 %v5948
      %6126 = vmatprep.subr.bf16.mxu0 %v5954
      %6127 = vmatpush1.bf16.xpose.msra.mxu0 %v5953
      %6128 = vmatprep.subr.bf16.mxu0 %v5959
      %6129 = vmatpush1.bf16.xpose.msra.mxu0 %v5958
      %6130 = vmatprep.subr.bf16.mxu0 %v5964
      %6131 = vmatpush1.bf16.xpose.msra.mxu0 %v5963
      %6132 = vmatprep.subr.bf16.mxu0 %v5969
      %6133 = vmatpush1.bf16.xpose.msra.mxu0 %v5968
      %6134 = vmatprep.subr.bf16.mxu0 %v5974
      %6135 = vmatpush1.bf16.xpose.msra.mxu0 %v5973
      %6136 = vmatprep.subr.bf16.mxu0 %v5979
      %6137 = vmatpush1.bf16.xpose.msra.mxu0 %v5978
      %6138 = vmatprep.subr.bf16.mxu0 %v5984
      %6139 = vmatpush1.bf16.xpose.msra.mxu0 %v5983
      %6140 = vmatprep.subr.bf16.mxu0 %v5989
      %6141 = vmatpush1.bf16.xpose.msra.mxu0 %v5988
      %6142 = vmatprep.mubr.bf16.mxu0 %v6010
      %6143 = vmatmul.mubr.bf16.gmra.mrb[0].mxu0 %v6009
      %v6144 = vpop.f32.mrb[0].mxu0
      %v6145 = vadd.f32 %v6102, %v6144
      %v6146 = vpop.f32.mrb[0].mxu0
      %v6147 = vadd.f32 %v6104, %v6146
      %v6148 = vpop.f32.mrb[0].mxu0
      %v6149 = vadd.f32 %v6106, %v6148
      %v6150 = vpop.f32.mrb[0].mxu0
      %v6151 = vadd.f32 %v6108, %v6150
      %6152 = vdwg.mxu0
      %6153 = vmatprep.subr.bf16.mxu0 0
      %6154 = vmatpush1.bf16.xpose.msra.mxu0 %v6020
      %6155 = vmatprep.subr.bf16.mxu0 0
      %6156 = vmatpush1.bf16.xpose.msra.mxu0 %v6023
      %6157 = vmatprep.subr.bf16.mxu0 0
      %6158 = vmatpush1.bf16.xpose.msra.mxu0 %v6026
      %6159 = vmatprep.subr.bf16.mxu0 0
      %6160 = vmatpush1.bf16.xpose.msra.mxu0 %v6029
      %6161 = vmatprep.subr.bf16.mxu0 0
      %6162 = vmatpush1.bf16.xpose.msra.mxu0 %v6032
      %6163 = vmatprep.subr.bf16.mxu0 0
      %6164 = vmatpush1.bf16.xpose.msra.mxu0 %v6035
      %6165 = vmatprep.subr.bf16.mxu0 0
      %6166 = vmatpush1.bf16.xpose.msra.mxu0 %v6038
      %6167 = vmatprep.subr.bf16.mxu0 0
      %6168 = vmatpush1.bf16.xpose.msra.mxu0 %v6041
      %6169 = vmatprep.subr.bf16.mxu0 0
      %6170 = vmatpush1.bf16.xpose.msra.mxu0 %v6044
      %6171 = vmatprep.subr.bf16.mxu0 0
      %6172 = vmatpush1.bf16.xpose.msra.mxu0 %v6047
      %6173 = vmatprep.subr.bf16.mxu0 0
      %6174 = vmatpush1.bf16.xpose.msra.mxu0 %v6050
      %6175 = vmatprep.subr.bf16.mxu0 0
      %6176 = vmatpush1.bf16.xpose.msra.mxu0 %v6053
      %6177 = vmatprep.subr.bf16.mxu0 0
      %6178 = vmatpush1.bf16.xpose.msra.mxu0 %v6056
      %6179 = vmatprep.subr.bf16.mxu0 0
      %6180 = vmatpush1.bf16.xpose.msra.mxu0 %v6059
      %6181 = vmatprep.subr.bf16.mxu0 0
      %6182 = vmatpush1.bf16.xpose.msra.mxu0 %v6062
      %6183 = vmatprep.subr.bf16.mxu0 0
      %6184 = vmatpush1.bf16.xpose.msra.mxu0 %v6065
      %6185 = vmatprep.mubr.bf16.mxu0 0
      %6186 = vmatmul.mubr.bf16.gmra.mrb[0].mxu0 %v6017
      %v6187 = vpop.f32.mrb[0].mxu0
      %v6188 = vadd.f32 %v6145, %v6187
      %v6189 = vpop.f32.mrb[0].mxu0
      %v6190 = vadd.f32 %v6147, %v6189
      %v6191 = vpop.f32.mrb[0].mxu0
      %v6192 = vadd.f32 %v6149, %v6191
      %v6193 = vpop.f32.mrb[0].mxu0
      %v6194 = vadd.f32 %v6151, %v6193
      %6195 = vdwg.mxu0
      %6196 = vst [vmem:[%s404] sm:$0xff] %v6188
      %6197 = vst [vmem:[%s404 + $0x8] sm:$0xff] %v6190
      %6198 = vst [vmem:[%s404 + $0x10] sm:$0x3] %v6192
      %6199 = vst [vmem:[%s404 + $0x18] sm:$0x3] %v6194
      %p6200 = scmp.lt.s32.totalorder %s22, 1
      %s6201 = scalar_select %p6200, %s22, 1
      %s6202 = smul.addr %s6201, 8
      %s6203 = smul.addr %s6202, 8
      %s6204 = scalar_lea.vmem %s8, %s6203
      %p6205 = scmp.lt.s32.totalorder %s22, 1
      %s6206 = scalar_select %p6205, %s22, 1
      %s6207 = smul.addr %s6206, 8
      %s6208 = smul.addr %s6207, 8
      %s6209 = scalar_lea.vmem %s9, %s6208
      %p6210 = scmp.lt.s32.totalorder %s22, 1
      %s6211 = scalar_select %p6210, %s22, 1
      %s6212 = smul.addr %s6211, 4
      %s6213 = smul.addr %s6212, 8
      %s6214 = scalar_lea.vmem %s10, %s6213
      // Predicated region
      $region53: #{csfcn_forward.3} parent=51 // pred_check
        %p6215 = pneg %p218
      $region54: #{csfcn_forward.3} parent=51 // pred_check_branch
        %6217 = sbr.rel (%p6215) target = $region56
      $region55: #{csfcn_forward.3} parent=51 // pred_region
        _
      $region56: #{csfcn_forward.3} parent=51 // pred_fallthru
        _
      // Predicated region
      $region57: #{csfcn_forward.3} parent=51 // pred_check
        %p6218 = pneg %p244
      $region58: #{csfcn_forward.3} parent=51 // pred_check_branch
        %6220 = sbr.rel (%p6218) target = $region60
      $region59: #{csfcn_forward.3} parent=51 // pred_region
        _
      $region60: #{csfcn_forward.3} parent=51 // pred_fallthru
        _
      // Predicated region
      $region61: #{csfcn_forward.3} parent=51 // pred_check
        %p6221 = pneg %p270
      $region62: #{csfcn_forward.3} parent=51 // pred_check_branch
        %6223 = sbr.rel (%p6221) target = $region64
      $region63: #{csfcn_forward.3} parent=51 // pred_region
        _
      $region64: #{csfcn_forward.3} parent=51 // pred_fallthru
        _
    $region52: #{csfcn_forward.3} parent=5 // pred_fallthru
      _
    %p6224 = scmp.le.s32.totalorder 2, %s17
    // Predicated region
    $region65: #{csfcn_forward.3} parent=5 // pred_check
      %p6225 = pneg %p6224
    $region66: #{csfcn_forward.3} parent=5 // pred_check_branch
      %6227 = sbr.rel (%p6225) target = $region68
    $region67: #{csfcn_forward.3} parent=5 // pred_region
      %s6228 = ssub.s32 %s17, 2
      // Predicated region
      $region69: #{csfcn_forward.3} parent=67 // pred_check
        %p6229 = pneg %p224
      $region70: #{csfcn_forward.3} parent=67 // pred_check_branch
        %6231 = sbr.rel (%p6229) target = $region72
      $region71: #{csfcn_forward.3} parent=67 // pred_region
        %p6232 = scmp.lt.s32.totalorder %s23, 1
        %s6233 = scalar_select %p6232, %s23, 1
        %s6234 = smul.addr %s6233, 8
        %s6235 = smul.addr %s6234, 8
        %s6236 = scalar_lea.vmem %s8, %s6235
      $region72: #{csfcn_forward.3} parent=67 // pred_fallthru
        _
      // Predicated region
      $region73: #{csfcn_forward.3} parent=67 // pred_check
        %p6237 = pneg %p250
      $region74: #{csfcn_forward.3} parent=67 // pred_check_branch
        %6239 = sbr.rel (%p6237) target = $region76
      $region75: #{csfcn_forward.3} parent=67 // pred_region
        %p6240 = scmp.lt.s32.totalorder %s23, 1
        %s6241 = scalar_select %p6240, %s23, 1
        %s6242 = smul.addr %s6241, 8
        %s6243 = smul.addr %s6242, 8
        %s6244 = scalar_lea.vmem %s9, %s6243
      $region76: #{csfcn_forward.3} parent=67 // pred_fallthru
        _
      // Predicated region
      $region77: #{csfcn_forward.3} parent=67 // pred_check
        %p6245 = pneg %p276
      $region78: #{csfcn_forward.3} parent=67 // pred_check_branch
        %6247 = sbr.rel (%p6245) target = $region80
      $region79: #{csfcn_forward.3} parent=67 // pred_region
        %p6248 = scmp.lt.s32.totalorder %s23, 1
        %s6249 = scalar_select %p6248, %s23, 1
        %s6250 = smul.addr %s6249, 4
        %s6251 = smul.addr %s6250, 8
        %s6252 = scalar_lea.vmem %s10, %s6251
      $region80: #{csfcn_forward.3} parent=67 // pred_fallthru
        _
    $region68: #{csfcn_forward.3} parent=5 // pred_fallthru
      _
  $region6: #{csfcn_forward.3} parent=0 // loop_footer
    %s21 = sadd.s32 1, %s17
  $region7: #{csfcn_forward.3} parent=0 // loop_footer_branch
    %16 = sbr.rel target = $region3
  $region8: #{csfcn_forward.3} parent=0 // loop_exit
    _

</llo_original>
